<compile_context>
chip_gen: v6e
topology: v6e:2x2x1
jax: 0.10.0
libtpu: 0.0.40
codegen_flags: <defaults>
</compile_context>

<pallas_src>
import jax
import jax.numpy as jnp
from jax.experimental import pallas as pl
from jax.experimental.pallas import tpu as pltpu

ENC_DIM = 2048
HID_DIM = 512
OUT_DIM = 5
OUT_PAD = 128           # lane-dense padded output width
BN_EPS = 1e-5


def _round_up(x, m):
    return (x + m - 1) // m * m


def _vmem_budget_bytes(TB, CP):
    """Explicit VMEM budget: tiles x buffer-count + resident weights + f32 temps, +50%."""
    bf16, f32 = 2, 4
    tile_in = 2 * TB * CP * bf16                        # pooled activations, double-buffered
    tile_out = 2 * TB * OUT_PAD * bf16
    weights = 2 * (CP * ENC_DIM * bf16                  # wb   (count 2 buffers even when
                   + 8 * ENC_DIM * f32                  # bb    Buffered(1) is honored --
                   + ENC_DIM * HID_DIM * bf16           # w1    conservative)
                   + 8 * HID_DIM * f32                  # b1
                   + HID_DIM * OUT_PAD * bf16           # w2
                   + 8 * OUT_PAD * f32)                 # b2
    interm = TB * (ENC_DIM + HID_DIM + 2 * OUT_PAD) * f32   # enc / h / logits f32 temps
    need = tile_in + tile_out + weights + interm
    return max(int(need * 1.5), 16 * 1024 * 1024)


def chexpert_kernel(p_ref, wb_ref, bb_ref, w1_ref, b1_ref, w2_ref, b2_ref, out_ref):
    """One batch tile: synthetic backbone projection -> decoder (BN folded into w2/b2)."""
    # Synthetic backbone projection to the 2048-d encoding (GAP already done on host).
    enc = jnp.dot(p_ref[...], wb_ref[...],
                  preferred_element_type=jnp.float32) + bb_ref[...]     # (TB, 2048) f32

    # Decoder: Dropout(id) -> Linear(2048,512) -> ReLU -> BN(folded) -> Dropout(id)
    #          -> Linear(512,5 padded to 128) -> Sigmoid
    h = jnp.dot(enc.astype(jnp.bfloat16), w1_ref[...],
                preferred_element_type=jnp.float32) + b1_ref[...]       # (TB, 512) f32
    h = jnp.maximum(h, 0.0)                                             # ReLU

    logits = jnp.dot(h.astype(jnp.bfloat16), w2_ref[...],
                     preferred_element_type=jnp.float32) + b2_ref[...]  # (TB, 128) f32
    out_ref[...] = jax.nn.sigmoid(logits).astype(out_ref.dtype)         # bf16 store


def chexpert_forward(x_nchw, params):
    B, C, H, W = x_nchw.shape
    CP = _round_up(max(C, 1), 128)             # lane-dense padded channel dim

    # Batch tile: 256 fills the 256-wide MXU of v6e/v7x; 128 matches v5e's MXU;
    # multiple-of-8 sublane granule for tiny batches.
    if B >= 256:
        TB = 256
    elif B >= 128:
        TB = 128
    else:
        TB = _round_up(B, 8)
    B_pad = _round_up(B, TB)
    grid = (B_pad // TB,)

    # ---------- host-side prep (f32 math) --------------------------------------
    # Global average pool hoisted out of the kernel: pipelined input is (B_pad, CP) bf16.
    pooled = jnp.mean(x_nchw.reshape(B, C, H * W).astype(jnp.float32), axis=-1)    # (B, C)
    pooled = jnp.pad(pooled, ((0, B_pad - B), (0, CP - C))).astype(jnp.bfloat16)   # (B_pad, CP)

    wb = jnp.pad(params["wb"], ((0, CP - C), (0, 0))).astype(jnp.bfloat16)         # (CP, 2048)
    bb = params["bb"].astype(jnp.float32)                                          # (1, 2048)
    w1 = params["w1"].astype(jnp.bfloat16)                                         # (2048, 512)
    b1 = params["b1"].astype(jnp.float32)                                          # (1, 512)

    # Fold BatchNorm1d (inference / running stats) into the second Linear.
    scale = params["gamma"] / jnp.sqrt(params["var"] + BN_EPS)                     # (1, 512)
    shift = params["beta"] - params["mean"] * scale                                # (1, 512)
    w2f = params["w2"] * scale.reshape(HID_DIM, 1)                                 # (512, 5)
    b2f = params["b2"] + shift @ params["w2"]                                      # (1, 5)
    w2 = jnp.pad(w2f, ((0, 0), (0, OUT_PAD - OUT_DIM))).astype(jnp.bfloat16)       # (512, 128)
    b2 = jnp.pad(b2f, ((0, 0), (0, OUT_PAD - OUT_DIM))).astype(jnp.float32)        # (1, 128)

    vmem_limit = _vmem_budget_bytes(TB, CP)

    def run(single_buffer_weights):
        def resident(shape):
            # Grid-invariant weights: fetched once; single-buffer to halve their VMEM.
            if single_buffer_weights:
                return pl.BlockSpec(shape, lambda i: (0, 0), pipeline_mode=pl.Buffered(1))
            return pl.BlockSpec(shape, lambda i: (0, 0))

        return pl.pallas_call(
            chexpert_kernel,
            out_shape=jax.ShapeDtypeStruct((B_pad, OUT_PAD), jnp.bfloat16),
            grid=grid,
            in_specs=[
                pl.BlockSpec((TB, CP), lambda i: (i, 0)),   # pooled acts: pipelined over batch
                resident((CP, ENC_DIM)),                    # wb
                resident((1, ENC_DIM)),                     # bb
                resident((ENC_DIM, HID_DIM)),               # w1
                resident((1, HID_DIM)),                     # b1
                resident((HID_DIM, OUT_PAD)),               # w2 (BN folded, lane-padded)
                resident((1, OUT_PAD)),                     # b2 (BN folded, lane-padded)
            ],
            out_specs=pl.BlockSpec((TB, OUT_PAD), lambda i: (i, 0)),
            compiler_params=pltpu.CompilerParams(
                dimension_semantics=("parallel",),
                vmem_limit_bytes=vmem_limit),
        )(pooled, wb, bb, w1, b1, w2, b2)

    try:
        out = jax.block_until_ready(run(single_buffer_weights=True))
    except Exception:
        # Fallback if this JAX build rejects pipeline_mode on pallas_call BlockSpecs:
        # single-buffering the invariant weights is a pure VMEM saving, never required.
        out = run(single_buffer_weights=False)

    # Slice AFTER the in-kernel sigmoid: padded columns hold sigmoid(0)=0.5, padded
    # batch rows are garbage-but-harmless; neither leaks to the caller.
    return out[:B, :OUT_DIM]


def chexpert_reference(x_nchw, params):
    """Pure-JAX f32 reference of the same forward pass (BN unfused)."""
    B, C, H, W = x_nchw.shape
    pooled = jnp.mean(x_nchw.reshape(B, C, H * W), axis=-1)
    enc = pooled @ params["wb"] + params["bb"]
    h = jnp.maximum(enc @ params["w1"] + params["b1"], 0.0)
    inv_std = jax.lax.rsqrt(params["var"] + BN_EPS)
    h = (h - params["mean"]) * inv_std * params["gamma"] + params["beta"]
    return jax.nn.sigmoid(h @ params["w2"] + params["b2"])


def init_params(key, in_channels):
    ks = jax.random.split(key, 10)
    scale_b = 1.0 / jnp.sqrt(in_channels)
    scale_1 = 1.0 / jnp.sqrt(ENC_DIM)
    scale_2 = 1.0 / jnp.sqrt(HID_DIM)
    return {
        # synthetic backbone projection: (C, 2048)
        "wb": jax.random.normal(ks[0], (in_channels, ENC_DIM), jnp.float32) * scale_b,
        "bb": jax.random.normal(ks[1], (1, ENC_DIM), jnp.float32) * 0.01,
        # Linear(2048 -> 512)
        "w1": jax.random.normal(ks[2], (ENC_DIM, HID_DIM), jnp.float32) * scale_1,
        "b1": jax.random.normal(ks[3], (1, HID_DIM), jnp.float32) * 0.01,
        # BatchNorm1d(512) — inference-mode running stats (non-trivial to exercise the fold)
        "gamma": 1.0 + 0.1 * jax.random.normal(ks[4], (1, HID_DIM), jnp.float32),
        "beta": 0.05 * jax.random.normal(ks[5], (1, HID_DIM), jnp.float32),
        "mean": 0.1 * jax.random.normal(ks[6], (1, HID_DIM), jnp.float32),
        "var": 0.9 + 0.1 * jnp.abs(jax.random.normal(ks[7], (1, HID_DIM), jnp.float32)),
        # Linear(512 -> 5)
        "w2": jax.random.normal(ks[8], (HID_DIM, OUT_DIM), jnp.float32) * scale_2,
        "b2": jax.random.normal(ks[9], (1, OUT_DIM), jnp.float32) * 0.01,
    }


if __name__ == "__main__":
    key = jax.random.PRNGKey(0)
    k_x, k_p = jax.random.split(key)

    B, C, H, W = 2, 4, 16, 16                  # small NCHW image batch
    x = jax.random.normal(k_x, (B, C, H, W), jnp.float32)
    params = init_params(k_p, C)

    out = jax.block_until_ready(chexpert_forward(x, params))
    out_f32 = out.astype(jnp.float32)
    ref = chexpert_reference(x, params)

    assert out.shape == (B, OUT_DIM)
    assert bool(jnp.all((out_f32 >= 0.0) & (out_f32 <= 1.0)))
    # bf16 activations / bf16 output vs f32 reference — deliberate accuracy trade.
    assert bool(jnp.max(jnp.abs(out_f32 - ref.astype(jnp.float32))) < 5e-2)
    print("KERNEL_OK")
</pallas_src>

<mosaic_0001>
module attributes {stable_mosaic.version = 11 : i64} {
  func.func @chexpert_kernel(%arg0: i32, %arg1: memref<8x128xbf16, #tpu.memory_space<vmem>>, %arg2: memref<128x2048xbf16, #tpu.memory_space<vmem>>, %arg3: memref<1x2048xf32, #tpu.memory_space<vmem>>, %arg4: memref<2048x512xbf16, #tpu.memory_space<vmem>>, %arg5: memref<1x512xf32, #tpu.memory_space<vmem>>, %arg6: memref<512x128xbf16, #tpu.memory_space<vmem>>, %arg7: memref<1x128xf32, #tpu.memory_space<vmem>>, %arg8: memref<8x128xbf16, #tpu.memory_space<vmem>>) attributes {dimension_semantics = [#tpu.dimension_semantics<parallel>], iteration_bounds = array<i64: 1>, scalar_prefetch = 0 : i64, scratch_operands = 0 : i64, tpu.core_type = #tpu.core_type<tc>, window_params = [{transform_indices = @transform_0, window_bounds = array<i64: 8, 128>}, {pipeline_mode = #tpu.pipeline_mode<synchronous>, transform_indices = @transform_1, window_bounds = array<i64: 128, 2048>}, {pipeline_mode = #tpu.pipeline_mode<synchronous>, transform_indices = @transform_2, window_bounds = array<i64: 1, 2048>}, {pipeline_mode = #tpu.pipeline_mode<synchronous>, transform_indices = @transform_3, window_bounds = array<i64: 2048, 512>}, {pipeline_mode = #tpu.pipeline_mode<synchronous>, transform_indices = @transform_4, window_bounds = array<i64: 1, 512>}, {pipeline_mode = #tpu.pipeline_mode<synchronous>, transform_indices = @transform_5, window_bounds = array<i64: 512, 128>}, {pipeline_mode = #tpu.pipeline_mode<synchronous>, transform_indices = @transform_6, window_bounds = array<i64: 1, 128>}, {transform_indices = @transform_7, window_bounds = array<i64: 8, 128>}]} {
    %c0 = arith.constant 0 : index
    %c0_0 = arith.constant 0 : index
    %0 = vector.load %arg1[%c0, %c0_0] : memref<8x128xbf16, #tpu.memory_space<vmem>>, vector<8x128xbf16>
    %c0_1 = arith.constant 0 : index
    %c0_2 = arith.constant 0 : index
    %1 = vector.load %arg2[%c0_1, %c0_2] : memref<128x2048xbf16, #tpu.memory_space<vmem>>, vector<128x2048xbf16>
    %cst = arith.constant dense<0.000000e+00> : vector<8x2048xf32>
    %2 = tpu.matmul %0, %1, %cst {dimension_numbers = #tpu.dot_dimension_numbers<[1], [0], [0], [1], [0, 0, 1, 1], [], []>} : vector<8x128xbf16>, vector<128x2048xbf16>, vector<8x2048xf32> -> vector<8x2048xf32>
    %c0_3 = arith.constant 0 : index
    %c0_4 = arith.constant 0 : index
    %3 = vector.load %arg3[%c0_3, %c0_4] : memref<1x2048xf32, #tpu.memory_space<vmem>>, vector<1x2048xf32>
    %4 = vector.broadcast %3 : vector<1x2048xf32> to vector<8x2048xf32>
    %5 = arith.addf %2, %4 : vector<8x2048xf32>
    %6 = arith.truncf %5 : vector<8x2048xf32> to vector<8x2048xbf16>
    %c0_5 = arith.constant 0 : index
    %c0_6 = arith.constant 0 : index
    %7 = vector.load %arg4[%c0_5, %c0_6] : memref<2048x512xbf16, #tpu.memory_space<vmem>>, vector<2048x512xbf16>
    %cst_7 = arith.constant dense<0.000000e+00> : vector<8x512xf32>
    %8 = tpu.matmul %6, %7, %cst_7 {dimension_numbers = #tpu.dot_dimension_numbers<[1], [0], [0], [1], [0, 0, 1, 1], [], []>} : vector<8x2048xbf16>, vector<2048x512xbf16>, vector<8x512xf32> -> vector<8x512xf32>
    %c0_8 = arith.constant 0 : index
    %c0_9 = arith.constant 0 : index
    %9 = vector.load %arg5[%c0_8, %c0_9] : memref<1x512xf32, #tpu.memory_space<vmem>>, vector<1x512xf32>
    %10 = vector.broadcast %9 : vector<1x512xf32> to vector<8x512xf32>
    %11 = arith.addf %8, %10 : vector<8x512xf32>
    %cst_10 = arith.constant 0.000000e+00 : f32
    %12 = vector.broadcast %cst_10 : f32 to vector<8x512xf32>
    %13 = arith.maximumf %11, %12 : vector<8x512xf32>
    %14 = arith.truncf %13 : vector<8x512xf32> to vector<8x512xbf16>
    %c0_11 = arith.constant 0 : index
    %c0_12 = arith.constant 0 : index
    %15 = vector.load %arg6[%c0_11, %c0_12] : memref<512x128xbf16, #tpu.memory_space<vmem>>, vector<512x128xbf16>
    %cst_13 = arith.constant dense<0.000000e+00> : vector<8x128xf32>
    %16 = tpu.matmul %14, %15, %cst_13 {dimension_numbers = #tpu.dot_dimension_numbers<[1], [0], [0], [1], [0, 0, 1, 1], [], []>} : vector<8x512xbf16>, vector<512x128xbf16>, vector<8x128xf32> -> vector<8x128xf32>
    %c0_14 = arith.constant 0 : index
    %c0_15 = arith.constant 0 : index
    %17 = vector.load %arg7[%c0_14, %c0_15] : memref<1x128xf32, #tpu.memory_space<vmem>>, vector<1x128xf32>
    %18 = vector.broadcast %17 : vector<1x128xf32> to vector<8x128xf32>
    %19 = arith.addf %16, %18 : vector<8x128xf32>
    %20 = arith.negf %19 : vector<8x128xf32>
    %21 = math.exp %20 : vector<8x128xf32>
    %cst_16 = arith.constant 1.000000e+00 : f32
    %22 = vector.broadcast %cst_16 : f32 to vector<8x128xf32>
    %23 = arith.addf %22, %21 : vector<8x128xf32>
    %24 = arith.divf %22, %23 : vector<8x128xf32>
    %25 = arith.truncf %24 : vector<8x128xf32> to vector<8x128xbf16>
    %c0_17 = arith.constant 0 : index
    %c0_18 = arith.constant 0 : index
    %26 = vector.load %arg8[%c0_17, %c0_18] : memref<8x128xbf16, #tpu.memory_space<vmem>>, vector<8x128xbf16>
    tpu.vector_store %arg8[%c0_17, %c0_18], %25 {strides = array<i32>} : memref<8x128xbf16, #tpu.memory_space<vmem>>, vector<8x128xbf16>,
    return
  }
  func.func @transform_0(%arg0: i32) -> (i32, i32) {
    %c0_i32 = arith.constant 0 : i32
    %c0_i32_0 = arith.constant 0 : i32
    return %arg0, %c0_i32 : i32, i32
  }
  func.func @transform_1(%arg0: i32) -> (i32, i32) {
    %c0_i32 = arith.constant 0 : i32
    %c0_i32_0 = arith.constant 0 : i32
    %c0_i32_1 = arith.constant 0 : i32
    return %c0_i32, %c0_i32_0 : i32, i32
  }
  func.func @transform_2(%arg0: i32) -> (i32, i32) {
    %c0_i32 = arith.constant 0 : i32
    %c0_i32_0 = arith.constant 0 : i32
    %c0_i32_1 = arith.constant 0 : i32
    return %c0_i32, %c0_i32_0 : i32, i32
  }
  func.func @transform_3(%arg0: i32) -> (i32, i32) {
    %c0_i32 = arith.constant 0 : i32
    %c0_i32_0 = arith.constant 0 : i32
    %c0_i32_1 = arith.constant 0 : i32
    return %c0_i32, %c0_i32_0 : i32, i32
  }
  func.func @transform_4(%arg0: i32) -> (i32, i32) {
    %c0_i32 = arith.constant 0 : i32
    %c0_i32_0 = arith.constant 0 : i32
    %c0_i32_1 = arith.constant 0 : i32
    return %c0_i32, %c0_i32_0 : i32, i32
  }
  func.func @transform_5(%arg0: i32) -> (i32, i32) {
    %c0_i32 = arith.constant 0 : i32
    %c0_i32_0 = arith.constant 0 : i32
    %c0_i32_1 = arith.constant 0 : i32
    return %c0_i32, %c0_i32_0 : i32, i32
  }
  func.func @transform_6(%arg0: i32) -> (i32, i32) {
    %c0_i32 = arith.constant 0 : i32
    %c0_i32_0 = arith.constant 0 : i32
    %c0_i32_1 = arith.constant 0 : i32
    return %c0_i32, %c0_i32_0 : i32, i32
  }
  func.func @transform_7(%arg0: i32) -> (i32, i32) {
    %c0_i32 = arith.constant 0 : i32
    %c0_i32_0 = arith.constant 0 : i32
    return %arg0, %c0_i32 : i32, i32
  }
}

module attributes {stable_mosaic.version = 11 : i64} {
  func.func @chexpert_kernel(%arg0: i32, %arg1: memref<8x128xbf16, #tpu.memory_space<vmem>>, %arg2: memref<128x2048xbf16, #tpu.memory_space<vmem>>, %arg3: memref<1x2048xf32, #tpu.memory_space<vmem>>, %arg4: memref<2048x512xbf16, #tpu.memory_space<vmem>>, %arg5: memref<1x512xf32, #tpu.memory_space<vmem>>, %arg6: memref<512x128xbf16, #tpu.memory_space<vmem>>, %arg7: memref<1x128xf32, #tpu.memory_space<vmem>>, %arg8: memref<8x128xbf16, #tpu.memory_space<vmem>>) attributes {dimension_semantics = [#tpu.dimension_semantics<parallel>], iteration_bounds = array<i64: 1>, scalar_prefetch = 0 : i64, scratch_operands = 0 : i64, tpu.core_type = #tpu.core_type<tc>, window_params = [{transform_indices = @transform_0, window_bounds = array<i64: 8, 128>}, {pipeline_mode = #tpu.pipeline_mode<synchronous>, transform_indices = @transform_1, window_bounds = array<i64: 128, 2048>}, {pipeline_mode = #tpu.pipeline_mode<synchronous>, transform_indices = @transform_2, window_bounds = array<i64: 1, 2048>}, {pipeline_mode = #tpu.pipeline_mode<synchronous>, transform_indices = @transform_3, window_bounds = array<i64: 2048, 512>}, {pipeline_mode = #tpu.pipeline_mode<synchronous>, transform_indices = @transform_4, window_bounds = array<i64: 1, 512>}, {pipeline_mode = #tpu.pipeline_mode<synchronous>, transform_indices = @transform_5, window_bounds = array<i64: 512, 128>}, {pipeline_mode = #tpu.pipeline_mode<synchronous>, transform_indices = @transform_6, window_bounds = array<i64: 1, 128>}, {transform_indices = @transform_7, window_bounds = array<i64: 8, 128>}]} {
    %c0 = arith.constant 0 : index
    %c0_0 = arith.constant 0 : index
    %0 = vector.load %arg1[%c0, %c0_0] : memref<8x128xbf16, #tpu.memory_space<vmem>>, vector<8x128xbf16>
    %c0_1 = arith.constant 0 : index
    %c0_2 = arith.constant 0 : index
    %1 = vector.load %arg2[%c0_1, %c0_2] : memref<128x2048xbf16, #tpu.memory_space<vmem>>, vector<128x2048xbf16>
    %cst = arith.constant dense<0.000000e+00> : vector<8x2048xf32>
    %2 = tpu.matmul %0, %1, %cst {dimension_numbers = #tpu.dot_dimension_numbers<[1], [0], [0], [1], [0, 0, 1, 1], [], []>} : vector<8x128xbf16>, vector<128x2048xbf16>, vector<8x2048xf32> -> vector<8x2048xf32>
    %c0_3 = arith.constant 0 : index
    %c0_4 = arith.constant 0 : index
    %3 = vector.load %arg3[%c0_3, %c0_4] : memref<1x2048xf32, #tpu.memory_space<vmem>>, vector<1x2048xf32>
    %4 = vector.broadcast %3 : vector<1x2048xf32> to vector<8x2048xf32>
    %5 = arith.addf %2, %4 : vector<8x2048xf32>
    %6 = arith.truncf %5 : vector<8x2048xf32> to vector<8x2048xbf16>
    %c0_5 = arith.constant 0 : index
    %c0_6 = arith.constant 0 : index
    %7 = vector.load %arg4[%c0_5, %c0_6] : memref<2048x512xbf16, #tpu.memory_space<vmem>>, vector<2048x512xbf16>
    %cst_7 = arith.constant dense<0.000000e+00> : vector<8x512xf32>
    %8 = tpu.matmul %6, %7, %cst_7 {dimension_numbers = #tpu.dot_dimension_numbers<[1], [0], [0], [1], [0, 0, 1, 1], [], []>} : vector<8x2048xbf16>, vector<2048x512xbf16>, vector<8x512xf32> -> vector<8x512xf32>
    %c0_8 = arith.constant 0 : index
    %c0_9 = arith.constant 0 : index
    %9 = vector.load %arg5[%c0_8, %c0_9] : memref<1x512xf32, #tpu.memory_space<vmem>>, vector<1x512xf32>
    %10 = vector.broadcast %9 : vector<1x512xf32> to vector<8x512xf32>
    %11 = arith.addf %8, %10 : vector<8x512xf32>
    %cst_10 = arith.constant 0.000000e+00 : f32
    %12 = vector.broadcast %cst_10 : f32 to vector<8x512xf32>
    %13 = arith.maximumf %11, %12 : vector<8x512xf32>
    %14 = arith.truncf %13 : vector<8x512xf32> to vector<8x512xbf16>
    %c0_11 = arith.constant 0 : index
    %c0_12 = arith.constant 0 : index
    %15 = vector.load %arg6[%c0_11, %c0_12] : memref<512x128xbf16, #tpu.memory_space<vmem>>, vector<512x128xbf16>
    %cst_13 = arith.constant dense<0.000000e+00> : vector<8x128xf32>
    %16 = tpu.matmul %14, %15, %cst_13 {dimension_numbers = #tpu.dot_dimension_numbers<[1], [0], [0], [1], [0, 0, 1, 1], [], []>} : vector<8x512xbf16>, vector<512x128xbf16>, vector<8x128xf32> -> vector<8x128xf32>
    %c0_14 = arith.constant 0 : index
    %c0_15 = arith.constant 0 : index
    %17 = vector.load %arg7[%c0_14, %c0_15] : memref<1x128xf32, #tpu.memory_space<vmem>>, vector<1x128xf32>
    %18 = vector.broadcast %17 : vector<1x128xf32> to vector<8x128xf32>
    %19 = arith.addf %16, %18 : vector<8x128xf32>
    %20 = arith.negf %19 : vector<8x128xf32>
    %21 = math.exp %20 : vector<8x128xf32>
    %cst_16 = arith.constant 1.000000e+00 : f32
    %22 = vector.broadcast %cst_16 : f32 to vector<8x128xf32>
    %23 = arith.addf %22, %21 : vector<8x128xf32>
    %24 = arith.divf %22, %23 : vector<8x128xf32>
    %25 = arith.truncf %24 : vector<8x128xf32> to vector<8x128xbf16>
    %c0_17 = arith.constant 0 : index
    %c0_18 = arith.constant 0 : index
    %26 = vector.load %arg8[%c0_17, %c0_18] : memref<8x128xbf16, #tpu.memory_space<vmem>>, vector<8x128xbf16>
    tpu.vector_store %arg8[%c0_17, %c0_18], %25 {strides = array<i32>} : memref<8x128xbf16, #tpu.memory_space<vmem>>, vector<8x128xbf16>,
    return
  }
  func.func @transform_0(%arg0: i32) -> (i32, i32) {
    %c0_i32 = arith.constant 0 : i32
    %c0_i32_0 = arith.constant 0 : i32
    return %arg0, %c0_i32 : i32, i32
  }
  func.func @transform_1(%arg0: i32) -> (i32, i32) {
    %c0_i32 = arith.constant 0 : i32
    %c0_i32_0 = arith.constant 0 : i32
    %c0_i32_1 = arith.constant 0 : i32
    return %c0_i32, %c0_i32_0 : i32, i32
  }
  func.func @transform_2(%arg0: i32) -> (i32, i32) {
    %c0_i32 = arith.constant 0 : i32
    %c0_i32_0 = arith.constant 0 : i32
    %c0_i32_1 = arith.constant 0 : i32
    return %c0_i32, %c0_i32_0 : i32, i32
  }
  func.func @transform_3(%arg0: i32) -> (i32, i32) {
    %c0_i32 = arith.constant 0 : i32
    %c0_i32_0 = arith.constant 0 : i32
    %c0_i32_1 = arith.constant 0 : i32
    return %c0_i32, %c0_i32_0 : i32, i32
  }
  func.func @transform_4(%arg0: i32) -> (i32, i32) {
    %c0_i32 = arith.constant 0 : i32
    %c0_i32_0 = arith.constant 0 : i32
    %c0_i32_1 = arith.constant 0 : i32
    return %c0_i32, %c0_i32_0 : i32, i32
  }
  func.func @transform_5(%arg0: i32) -> (i32, i32) {
    %c0_i32 = arith.constant 0 : i32
    %c0_i32_0 = arith.constant 0 : i32
    %c0_i32_1 = arith.constant 0 : i32
    return %c0_i32, %c0_i32_0 : i32, i32
  }
  func.func @transform_6(%arg0: i32) -> (i32, i32) {
    %c0_i32 = arith.constant 0 : i32
    %c0_i32_0 = arith.constant 0 : i32
    %c0_i32_1 = arith.constant 0 : i32
    return %c0_i32, %c0_i32_0 : i32, i32
  }
  func.func @transform_7(%arg0: i32) -> (i32, i32) {
    %c0_i32 = arith.constant 0 : i32
    %c0_i32_0 = arith.constant 0 : i32
    return %arg0, %c0_i32 : i32, i32
  }
}

</mosaic_0001>

<llo_original>
// kernel: tpu_custom_call.1
$region0: #{tpu_custom_call.1}
  #allocation0 [shape = 'u32[]', space=smem, size = 0x4, offset = 0x4, fixed_abs, tag = 'smem constant byte address 0x4 - core index']
  #allocation1 [shape = 'u32[144,128]{1,0:T(1,128)}', space=vmem, size = 0x12000, scoped, tag = 'internal scratch']
  %s0 = inlined_call_operand.hbm [shape: bf16[8,128], index: 0, kind: input, shape index: {}]
  %s1 = inlined_call_operand.hbm [shape: bf16[128,2048], index: 1, kind: input, shape index: {}]
  %s2 = inlined_call_operand.hbm [shape: f32[1,2048], index: 2, kind: input, shape index: {}]
  %s3 = inlined_call_operand.hbm [shape: bf16[2048,512], index: 3, kind: input, shape index: {}]
  %s4 = inlined_call_operand.hbm [shape: f32[1,512], index: 4, kind: input, shape index: {}]
  %s5 = inlined_call_operand.hbm [shape: bf16[512,128], index: 5, kind: input, shape index: {}]
  %s6 = inlined_call_operand.hbm [shape: f32[1,128], index: 6, kind: input, shape index: {}]
  %s7 = inlined_call_operand.hbm [shape: bf16[8,128], index: 7, kind: output, shape index: {}]
  %s8 = sld [smem:[#allocation0]]
  $region66: #{tpu_custom_call.1} parent=0
    _
  %s10 = ssub.s32 1, %s8
  %s11 = scalar_select 0, %s10, %s8
  $region1: #{tpu_custom_call.1} parent=0
    #allocation2 [shape = 'u8[2048]{0}', space=vmem, size = 0x800, scoped, tag = 'input window, operand 0, single buffered']
    #allocation3 [shape = 's32[1]{0}', space=sflag, size = 0x4, scoped, tag = 'scoped memory for tpu_custom_call.1']
    #allocation4 [shape = 's32[1]{0}', space=sflag, size = 0x4, scoped, tag = 'scoped memory for tpu_custom_call.1']
    #allocation5 [shape = 'u8[524288]{0}', space=vmem, size = 0x80000, scoped, tag = 'input window, operand 1, single buffered']
    #allocation6 [shape = 's32[1]{0}', space=sflag, size = 0x4, scoped, tag = 'scoped memory for tpu_custom_call.1']
    #allocation7 [shape = 'u8[8192]{0}', space=vmem, size = 0x2000, scoped, tag = 'input window, operand 2, single buffered']
    #allocation8 [shape = 'u8[2097152]{0}', space=vmem, size = 0x200000, scoped, tag = 'input window, operand 3, single buffered']
    #allocation9 [shape = 's32[1]{0}', space=sflag, size = 0x4, scoped, tag = 'scoped memory for tpu_custom_call.1']
    #allocation10 [shape = 'u8[2048]{0}', space=vmem, size = 0x800, scoped, tag = 'input window, operand 4, single buffered']
    #allocation11 [shape = 'u8[131072]{0}', space=vmem, size = 0x20000, scoped, tag = 'input window, operand 5, single buffered']
    #allocation12 [shape = 's32[1]{0}', space=sflag, size = 0x4, scoped, tag = 'scoped memory for tpu_custom_call.1']
    #allocation13 [shape = 'u8[512]{0}', space=vmem, size = 0x400, scoped, tag = 'input window, operand 6, single buffered']
    #allocation14 [shape = 'u8[2048]{0}', space=vmem, size = 0x800, scoped, tag = 'output window, operand 0, single buffered']
    %12 = vsyncpa [#allocation3], 0
    %13 = vsyncpa [#allocation6], 0
    %14 = vsyncpa [#allocation9], 0
    %15 = vsyncpa [#allocation12], 0
    %16 = vsyncpa [#allocation4], 0
    // Predicated region
    $region2: #{tpu_custom_call.1} parent=1 // pred_check
      _
    $region3: #{tpu_custom_call.1} parent=1 // pred_check_branch
      %18 = sbr.rel (0) target = $region5
    $region4: #{tpu_custom_call.1} parent=1 // pred_region
      %s20 = ssub.s32 64, 64
      %21 = vsyncadd [#allocation3], %s20
      %s23 = sshll.u32 [#allocation2], 4
      %s24 = int_to_ptr.vmem [resolvable:$true] %s23
      %26 = dma.hbm_to_vmem [thread:$0]  %s0, 64, %s24, [#allocation3]
    $region5: #{tpu_custom_call.1} parent=1 // pred_fallthru
      _
    // Predicated region
    $region6: #{tpu_custom_call.1} parent=1 // pred_check
      _
    $region7: #{tpu_custom_call.1} parent=1 // pred_check_branch
      %28 = sbr.rel (0) target = $region9
    $region8: #{tpu_custom_call.1} parent=1 // pred_region
      %s30 = ssub.s32 16384, 16384
      %31 = vsyncadd [#allocation6], %s30
      %s32 = sshll.u32 [#allocation5], 4
      %s33 = int_to_ptr.vmem [resolvable:$true] %s32
      %38 = dma.hbm_to_vmem [thread:$0]  %s1, 16384, %s33, [#allocation6], 1024, 1024, 64
    $region9: #{tpu_custom_call.1} parent=1 // pred_fallthru
      _
    // Predicated region
    $region10: #{tpu_custom_call.1} parent=1 // pred_check
      _
    $region11: #{tpu_custom_call.1} parent=1 // pred_check_branch
      %40 = sbr.rel (0) target = $region13
    $region12: #{tpu_custom_call.1} parent=1 // pred_region
      %s42 = ssub.s32 256, 256
      %43 = vsyncadd [#allocation6], %s42
      %s45 = sshll.u32 [#allocation7], 4
      %s46 = int_to_ptr.vmem [resolvable:$true] %s45
      %48 = dma.hbm_to_vmem [thread:$0]  %s2, 256, %s46, [#allocation6]
    $region13: #{tpu_custom_call.1} parent=1 // pred_fallthru
      _
    // Predicated region
    $region14: #{tpu_custom_call.1} parent=1 // pred_check
      _
    $region15: #{tpu_custom_call.1} parent=1 // pred_check_branch
      %50 = sbr.rel (0) target = $region17
    $region16: #{tpu_custom_call.1} parent=1 // pred_region
      %s52 = ssub.s32 65536, 65536
      %53 = vsyncadd [#allocation9], %s52
      %s54 = sshll.u32 [#allocation8], 4
      %s55 = int_to_ptr.vmem [resolvable:$true] %s54
      %60 = dma.hbm_to_vmem [thread:$0]  %s3, 65536, %s55, [#allocation9], 256, 256, 16
    $region17: #{tpu_custom_call.1} parent=1 // pred_fallthru
      _
    // Predicated region
    $region18: #{tpu_custom_call.1} parent=1 // pred_check
      _
    $region19: #{tpu_custom_call.1} parent=1 // pred_check_branch
      %62 = sbr.rel (0) target = $region21
    $region20: #{tpu_custom_call.1} parent=1 // pred_region
      %s64 = ssub.s32 64, 64
      %65 = vsyncadd [#allocation9], %s64
      %s67 = sshll.u32 [#allocation10], 4
      %s68 = int_to_ptr.vmem [resolvable:$true] %s67
      %70 = dma.hbm_to_vmem [thread:$0]  %s4, 64, %s68, [#allocation9]
    $region21: #{tpu_custom_call.1} parent=1 // pred_fallthru
      _
    // Predicated region
    $region22: #{tpu_custom_call.1} parent=1 // pred_check
      _
    $region23: #{tpu_custom_call.1} parent=1 // pred_check_branch
      %72 = sbr.rel (0) target = $region25
    $region24: #{tpu_custom_call.1} parent=1 // pred_region
      %s74 = ssub.s32 4096, 4096
      %75 = vsyncadd [#allocation12], %s74
      %s76 = sshll.u32 [#allocation11], 4
      %s77 = int_to_ptr.vmem [resolvable:$true] %s76
      %82 = dma.hbm_to_vmem [thread:$0]  %s5, 4096, %s77, [#allocation12], 64, 64, 4
    $region25: #{tpu_custom_call.1} parent=1 // pred_fallthru
      _
    // Predicated region
    $region26: #{tpu_custom_call.1} parent=1 // pred_check
      _
    $region27: #{tpu_custom_call.1} parent=1 // pred_check_branch
      %84 = sbr.rel (0) target = $region29
    $region28: #{tpu_custom_call.1} parent=1 // pred_region
      %s86 = ssub.s32 16, 16
      %87 = vsyncadd [#allocation12], %s86
      %s89 = sshll.u32 [#allocation13], 4
      %s90 = int_to_ptr.vmem [resolvable:$true] %s89
      %92 = dma.hbm_to_vmem [thread:$0]  %s6, 16, %s90, [#allocation12]
    $region29: #{tpu_custom_call.1} parent=1 // pred_fallthru
      _
    // Predicated region
    $region30: #{tpu_custom_call.1} parent=1 // pred_check
      _
    $region31: #{tpu_custom_call.1} parent=1 // pred_check_branch
      %94 = sbr.rel (0) target = $region33
    $region32: #{tpu_custom_call.1} parent=1 // pred_region
      %95 = dma.done [#allocation3], 64
    $region33: #{tpu_custom_call.1} parent=1 // pred_fallthru
      _
    // Predicated region
    $region34: #{tpu_custom_call.1} parent=1 // pred_check
      _
    $region35: #{tpu_custom_call.1} parent=1 // pred_check_branch
      %97 = sbr.rel (0) target = $region37
    $region36: #{tpu_custom_call.1} parent=1 // pred_region
      %98 = dma.done [#allocation6], 16384
    $region37: #{tpu_custom_call.1} parent=1 // pred_fallthru
      _
    // Predicated region
    $region38: #{tpu_custom_call.1} parent=1 // pred_check
      _
    $region39: #{tpu_custom_call.1} parent=1 // pred_check_branch
      %100 = sbr.rel (0) target = $region41
    $region40: #{tpu_custom_call.1} parent=1 // pred_region
      %101 = dma.done [#allocation6], 256
    $region41: #{tpu_custom_call.1} parent=1 // pred_fallthru
      _
    // Predicated region
    $region42: #{tpu_custom_call.1} parent=1 // pred_check
      _
    $region43: #{tpu_custom_call.1} parent=1 // pred_check_branch
      %103 = sbr.rel (0) target = $region45
    $region44: #{tpu_custom_call.1} parent=1 // pred_region
      %104 = dma.done [#allocation9], 65536
    $region45: #{tpu_custom_call.1} parent=1 // pred_fallthru
      _
    // Predicated region
    $region46: #{tpu_custom_call.1} parent=1 // pred_check
      _
    $region47: #{tpu_custom_call.1} parent=1 // pred_check_branch
      %106 = sbr.rel (0) target = $region49
    $region48: #{tpu_custom_call.1} parent=1 // pred_region
      %107 = dma.done [#allocation9], 64
    $region49: #{tpu_custom_call.1} parent=1 // pred_fallthru
      _
    // Predicated region
    $region50: #{tpu_custom_call.1} parent=1 // pred_check
      _
    $region51: #{tpu_custom_call.1} parent=1 // pred_check_branch
      %109 = sbr.rel (0) target = $region53
    $region52: #{tpu_custom_call.1} parent=1 // pred_region
      %110 = dma.done [#allocation12], 4096
    $region53: #{tpu_custom_call.1} parent=1 // pred_fallthru
      _
    // Predicated region
    $region54: #{tpu_custom_call.1} parent=1 // pred_check
      _
    $region55: #{tpu_custom_call.1} parent=1 // pred_check_branch
      %112 = sbr.rel (0) target = $region57
    $region56: #{tpu_custom_call.1} parent=1 // pred_region
      %113 = dma.done [#allocation12], 16
    $region57: #{tpu_custom_call.1} parent=1 // pred_fallthru
      _
    %v115 = vld [vmem:[#allocation2] sm:$0xf]
    %v116 = vld [vmem:[#allocation5] sm:$0xff]
    %v117 = vld [vmem:[#allocation5 + $0x8] sm:$0xff]
    %v118 = vld [vmem:[#allocation5 + $0x10] sm:$0xff]
    %v119 = vld [vmem:[#allocation5 + $0x18] sm:$0xff]
    %v120 = vld [vmem:[#allocation5 + $0x20] sm:$0xff]
    %v121 = vld [vmem:[#allocation5 + $0x28] sm:$0xff]
    %v122 = vld [vmem:[#allocation5 + $0x30] sm:$0xff]
    %v123 = vld [vmem:[#allocation5 + $0x38] sm:$0xff]
    %v124 = vld [vmem:[#allocation5 + $0x40] sm:$0xff]
    %v125 = vld [vmem:[#allocation5 + $0x48] sm:$0xff]
    %v126 = vld [vmem:[#allocation5 + $0x50] sm:$0xff]
    %v127 = vld [vmem:[#allocation5 + $0x58] sm:$0xff]
    %v128 = vld [vmem:[#allocation5 + $0x60] sm:$0xff]
    %v129 = vld [vmem:[#allocation5 + $0x68] sm:$0xff]
    %v130 = vld [vmem:[#allocation5 + $0x70] sm:$0xff]
    %v131 = vld [vmem:[#allocation5 + $0x78] sm:$0xff]
    %v132 = vld [vmem:[#allocation5 + $0x80] sm:$0xff]
    %v133 = vld [vmem:[#allocation5 + $0x88] sm:$0xff]
    %v134 = vld [vmem:[#allocation5 + $0x90] sm:$0xff]
    %v135 = vld [vmem:[#allocation5 + $0x98] sm:$0xff]
    %v136 = vld [vmem:[#allocation5 + $0xa0] sm:$0xff]
    %v137 = vld [vmem:[#allocation5 + $0xa8] sm:$0xff]
    %v138 = vld [vmem:[#allocation5 + $0xb0] sm:$0xff]
    %v139 = vld [vmem:[#allocation5 + $0xb8] sm:$0xff]
    %v140 = vld [vmem:[#allocation5 + $0xc0] sm:$0xff]
    %v141 = vld [vmem:[#allocation5 + $0xc8] sm:$0xff]
    %v142 = vld [vmem:[#allocation5 + $0xd0] sm:$0xff]
    %v143 = vld [vmem:[#allocation5 + $0xd8] sm:$0xff]
    %v144 = vld [vmem:[#allocation5 + $0xe0] sm:$0xff]
    %v145 = vld [vmem:[#allocation5 + $0xe8] sm:$0xff]
    %v146 = vld [vmem:[#allocation5 + $0xf0] sm:$0xff]
    %v147 = vld [vmem:[#allocation5 + $0xf8] sm:$0xff]
    %v148 = vld [vmem:[#allocation5 + $0x100] sm:$0xff]
    %v149 = vld [vmem:[#allocation5 + $0x108] sm:$0xff]
    %v150 = vld [vmem:[#allocation5 + $0x110] sm:$0xff]
    %v151 = vld [vmem:[#allocation5 + $0x118] sm:$0xff]
    %v152 = vld [vmem:[#allocation5 + $0x120] sm:$0xff]
    %v153 = vld [vmem:[#allocation5 + $0x128] sm:$0xff]
    %v154 = vld [vmem:[#allocation5 + $0x130] sm:$0xff]
    %v155 = vld [vmem:[#allocation5 + $0x138] sm:$0xff]
    %v156 = vld [vmem:[#allocation5 + $0x140] sm:$0xff]
    %v157 = vld [vmem:[#allocation5 + $0x148] sm:$0xff]
    %v158 = vld [vmem:[#allocation5 + $0x150] sm:$0xff]
    %v159 = vld [vmem:[#allocation5 + $0x158] sm:$0xff]
    %v160 = vld [vmem:[#allocation5 + $0x160] sm:$0xff]
    %v161 = vld [vmem:[#allocation5 + $0x168] sm:$0xff]
    %v162 = vld [vmem:[#allocation5 + $0x170] sm:$0xff]
    %v163 = vld [vmem:[#allocation5 + $0x178] sm:$0xff]
    %v164 = vld [vmem:[#allocation5 + $0x180] sm:$0xff]
    %v165 = vld [vmem:[#allocation5 + $0x188] sm:$0xff]
    %v166 = vld [vmem:[#allocation5 + $0x190] sm:$0xff]
    %v167 = vld [vmem:[#allocation5 + $0x198] sm:$0xff]
    %v168 = vld [vmem:[#allocation5 + $0x1a0] sm:$0xff]
    %v169 = vld [vmem:[#allocation5 + $0x1a8] sm:$0xff]
    %v170 = vld [vmem:[#allocation5 + $0x1b0] sm:$0xff]
    %v171 = vld [vmem:[#allocation5 + $0x1b8] sm:$0xff]
    %v172 = vld [vmem:[#allocation5 + $0x1c0] sm:$0xff]
    %v173 = vld [vmem:[#allocation5 + $0x1c8] sm:$0xff]
    %v174 = vld [vmem:[#allocation5 + $0x1d0] sm:$0xff]
    %v175 = vld [vmem:[#allocation5 + $0x1d8] sm:$0xff]
    %v176 = vld [vmem:[#allocation5 + $0x1e0] sm:$0xff]
    %v177 = vld [vmem:[#allocation5 + $0x1e8] sm:$0xff]
    %v178 = vld [vmem:[#allocation5 + $0x1f0] sm:$0xff]
    %v179 = vld [vmem:[#allocation5 + $0x1f8] sm:$0xff]
    %v180 = vld [vmem:[#allocation5 + $0x200] sm:$0xff]
    %v181 = vld [vmem:[#allocation5 + $0x208] sm:$0xff]
    %v182 = vld [vmem:[#allocation5 + $0x210] sm:$0xff]
    %v183 = vld [vmem:[#allocation5 + $0x218] sm:$0xff]
    %v184 = vld [vmem:[#allocation5 + $0x220] sm:$0xff]
    %v185 = vld [vmem:[#allocation5 + $0x228] sm:$0xff]
    %v186 = vld [vmem:[#allocation5 + $0x230] sm:$0xff]
    %v187 = vld [vmem:[#allocation5 + $0x238] sm:$0xff]
    %v188 = vld [vmem:[#allocation5 + $0x240] sm:$0xff]
    %v189 = vld [vmem:[#allocation5 + $0x248] sm:$0xff]
    %v190 = vld [vmem:[#allocation5 + $0x250] sm:$0xff]
    %v191 = vld [vmem:[#allocation5 + $0x258] sm:$0xff]
    %v192 = vld [vmem:[#allocation5 + $0x260] sm:$0xff]
    %v193 = vld [vmem:[#allocation5 + $0x268] sm:$0xff]
    %v194 = vld [vmem:[#allocation5 + $0x270] sm:$0xff]
    %v195 = vld [vmem:[#allocation5 + $0x278] sm:$0xff]
    %v196 = vld [vmem:[#allocation5 + $0x280] sm:$0xff]
    %v197 = vld [vmem:[#allocation5 + $0x288] sm:$0xff]
    %v198 = vld [vmem:[#allocation5 + $0x290] sm:$0xff]
    %v199 = vld [vmem:[#allocation5 + $0x298] sm:$0xff]
    %v200 = vld [vmem:[#allocation5 + $0x2a0] sm:$0xff]
    %v201 = vld [vmem:[#allocation5 + $0x2a8] sm:$0xff]
    %v202 = vld [vmem:[#allocation5 + $0x2b0] sm:$0xff]
    %v203 = vld [vmem:[#allocation5 + $0x2b8] sm:$0xff]
    %v204 = vld [vmem:[#allocation5 + $0x2c0] sm:$0xff]
    %v205 = vld [vmem:[#allocation5 + $0x2c8] sm:$0xff]
    %v206 = vld [vmem:[#allocation5 + $0x2d0] sm:$0xff]
    %v207 = vld [vmem:[#allocation5 + $0x2d8] sm:$0xff]
    %v208 = vld [vmem:[#allocation5 + $0x2e0] sm:$0xff]
    %v209 = vld [vmem:[#allocation5 + $0x2e8] sm:$0xff]
    %v210 = vld [vmem:[#allocation5 + $0x2f0] sm:$0xff]
    %v211 = vld [vmem:[#allocation5 + $0x2f8] sm:$0xff]
    %v212 = vld [vmem:[#allocation5 + $0x300] sm:$0xff]
    %v213 = vld [vmem:[#allocation5 + $0x308] sm:$0xff]
    %v214 = vld [vmem:[#allocation5 + $0x310] sm:$0xff]
    %v215 = vld [vmem:[#allocation5 + $0x318] sm:$0xff]
    %v216 = vld [vmem:[#allocation5 + $0x320] sm:$0xff]
    %v217 = vld [vmem:[#allocation5 + $0x328] sm:$0xff]
    %v218 = vld [vmem:[#allocation5 + $0x330] sm:$0xff]
    %v219 = vld [vmem:[#allocation5 + $0x338] sm:$0xff]
    %v220 = vld [vmem:[#allocation5 + $0x340] sm:$0xff]
    %v221 = vld [vmem:[#allocation5 + $0x348] sm:$0xff]
    %v222 = vld [vmem:[#allocation5 + $0x350] sm:$0xff]
    %v223 = vld [vmem:[#allocation5 + $0x358] sm:$0xff]
    %v224 = vld [vmem:[#allocation5 + $0x360] sm:$0xff]
    %v225 = vld [vmem:[#allocation5 + $0x368] sm:$0xff]
    %v226 = vld [vmem:[#allocation5 + $0x370] sm:$0xff]
    %v227 = vld [vmem:[#allocation5 + $0x378] sm:$0xff]
    %v228 = vld [vmem:[#allocation5 + $0x380] sm:$0xff]
    %v229 = vld [vmem:[#allocation5 + $0x388] sm:$0xff]
    %v230 = vld [vmem:[#allocation5 + $0x390] sm:$0xff]
    %v231 = vld [vmem:[#allocation5 + $0x398] sm:$0xff]
    %v232 = vld [vmem:[#allocation5 + $0x3a0] sm:$0xff]
    %v233 = vld [vmem:[#allocation5 + $0x3a8] sm:$0xff]
    %v234 = vld [vmem:[#allocation5 + $0x3b0] sm:$0xff]
    %v235 = vld [vmem:[#allocation5 + $0x3b8] sm:$0xff]
    %v236 = vld [vmem:[#allocation5 + $0x3c0] sm:$0xff]
    %v237 = vld [vmem:[#allocation5 + $0x3c8] sm:$0xff]
    %v238 = vld [vmem:[#allocation5 + $0x3d0] sm:$0xff]
    %v239 = vld [vmem:[#allocation5 + $0x3d8] sm:$0xff]
    %v240 = vld [vmem:[#allocation5 + $0x3e0] sm:$0xff]
    %v241 = vld [vmem:[#allocation5 + $0x3e8] sm:$0xff]
    %v242 = vld [vmem:[#allocation5 + $0x3f0] sm:$0xff]
    %v243 = vld [vmem:[#allocation5 + $0x3f8] sm:$0xff]
    %v244 = vld [vmem:[#allocation7] sm:$0xff]
    %v245 = vld [vmem:[#allocation7 + $0x8] sm:$0xff]
    %v248 = vlaneseq
    %v249 = vshrl.u32 %v248, 7
    %v250 = vsub.s32 0, %v249
    %v251 = vrot.slane %v244, %v250
    %v252 = vlaneseq
    %v253 = vshrl.u32 %v252, 7
    %v254 = vsub.s32 1, %v253
    %v255 = vrot.slane %v244, %v254
    %v256 = vlaneseq
    %v257 = vshrl.u32 %v256, 7
    %v258 = vsub.s32 2, %v257
    %v259 = vrot.slane %v244, %v258
    %v260 = vlaneseq
    %v261 = vshrl.u32 %v260, 7
    %v262 = vsub.s32 3, %v261
    %v263 = vrot.slane %v244, %v262
    %v264 = vlaneseq
    %v265 = vshrl.u32 %v264, 7
    %v266 = vsub.s32 4, %v265
    %v267 = vrot.slane %v244, %v266
    %v268 = vlaneseq
    %v269 = vshrl.u32 %v268, 7
    %v270 = vsub.s32 5, %v269
    %v271 = vrot.slane %v244, %v270
    %v272 = vlaneseq
    %v273 = vshrl.u32 %v272, 7
    %v274 = vsub.s32 6, %v273
    %v275 = vrot.slane %v244, %v274
    %v276 = vlaneseq
    %v277 = vshrl.u32 %v276, 7
    %v278 = vsub.s32 7, %v277
    %v279 = vrot.slane %v244, %v278
    %v280 = vlaneseq
    %v281 = vshrl.u32 %v280, 7
    %v282 = vsub.s32 0, %v281
    %v283 = vrot.slane %v245, %v282
    %v284 = vlaneseq
    %v285 = vshrl.u32 %v284, 7
    %v286 = vsub.s32 1, %v285
    %v287 = vrot.slane %v245, %v286
    %v288 = vlaneseq
    %v289 = vshrl.u32 %v288, 7
    %v290 = vsub.s32 2, %v289
    %v291 = vrot.slane %v245, %v290
    %v292 = vlaneseq
    %v293 = vshrl.u32 %v292, 7
    %v294 = vsub.s32 3, %v293
    %v295 = vrot.slane %v245, %v294
    %v296 = vlaneseq
    %v297 = vshrl.u32 %v296, 7
    %v298 = vsub.s32 4, %v297
    %v299 = vrot.slane %v245, %v298
    %v300 = vlaneseq
    %v301 = vshrl.u32 %v300, 7
    %v302 = vsub.s32 5, %v301
    %v303 = vrot.slane %v245, %v302
    %v304 = vlaneseq
    %v305 = vshrl.u32 %v304, 7
    %v306 = vsub.s32 6, %v305
    %v307 = vrot.slane %v245, %v306
    %v308 = vlaneseq
    %v309 = vshrl.u32 %v308, 7
    %v310 = vsub.s32 7, %v309
    %v311 = vrot.slane %v245, %v310
    %v456 = vunpack.c.l.b16 %v116
    %v457 = vunpack.c.h.b16 %v116
    %v458 = vunpack.c.l.b16 %v117
    %v459 = vunpack.c.h.b16 %v117
    %v460 = vunpack.c.l.b16 %v118
    %v461 = vunpack.c.h.b16 %v118
    %v462 = vunpack.c.l.b16 %v119
    %v463 = vunpack.c.h.b16 %v119
    %v464 = vunpack.c.l.b16 %v120
    %v465 = vunpack.c.h.b16 %v120
    %v466 = vunpack.c.l.b16 %v121
    %v467 = vunpack.c.h.b16 %v121
    %v468 = vunpack.c.l.b16 %v122
    %v469 = vunpack.c.h.b16 %v122
    %v470 = vunpack.c.l.b16 %v123
    %v471 = vunpack.c.h.b16 %v123
    %v472 = vunpack.c.l.b16 %v124
    %v473 = vunpack.c.h.b16 %v124
    %v474 = vunpack.c.l.b16 %v125
    %v475 = vunpack.c.h.b16 %v125
    %v476 = vunpack.c.l.b16 %v126
    %v477 = vunpack.c.h.b16 %v126
    %v478 = vunpack.c.l.b16 %v127
    %v479 = vunpack.c.h.b16 %v127
    %v480 = vunpack.c.l.b16 %v128
    %v481 = vunpack.c.h.b16 %v128
    %v482 = vunpack.c.l.b16 %v129
    %v483 = vunpack.c.h.b16 %v129
    %v484 = vunpack.c.l.b16 %v130
    %v485 = vunpack.c.h.b16 %v130
    %v486 = vunpack.c.l.b16 %v131
    %v487 = vunpack.c.h.b16 %v131
    %v488 = vunpack.c.l.b16 %v132
    %v489 = vunpack.c.h.b16 %v132
    %v490 = vunpack.c.l.b16 %v133
    %v491 = vunpack.c.h.b16 %v133
    %v492 = vunpack.c.l.b16 %v134
    %v493 = vunpack.c.h.b16 %v134
    %v494 = vunpack.c.l.b16 %v135
    %v495 = vunpack.c.h.b16 %v135
    %v496 = vunpack.c.l.b16 %v136
    %v497 = vunpack.c.h.b16 %v136
    %v498 = vunpack.c.l.b16 %v137
    %v499 = vunpack.c.h.b16 %v137
    %v500 = vunpack.c.l.b16 %v138
    %v501 = vunpack.c.h.b16 %v138
    %v502 = vunpack.c.l.b16 %v139
    %v503 = vunpack.c.h.b16 %v139
    %v504 = vunpack.c.l.b16 %v140
    %v505 = vunpack.c.h.b16 %v140
    %v506 = vunpack.c.l.b16 %v141
    %v507 = vunpack.c.h.b16 %v141
    %v508 = vunpack.c.l.b16 %v142
    %v509 = vunpack.c.h.b16 %v142
    %v510 = vunpack.c.l.b16 %v143
    %v511 = vunpack.c.h.b16 %v143
    %v512 = vunpack.c.l.b16 %v144
    %v513 = vunpack.c.h.b16 %v144
    %v514 = vunpack.c.l.b16 %v145
    %v515 = vunpack.c.h.b16 %v145
    %v516 = vunpack.c.l.b16 %v146
    %v517 = vunpack.c.h.b16 %v146
    %v518 = vunpack.c.l.b16 %v147
    %v519 = vunpack.c.h.b16 %v147
    %v520 = vunpack.c.l.b16 %v148
    %v521 = vunpack.c.h.b16 %v148
    %v522 = vunpack.c.l.b16 %v149
    %v523 = vunpack.c.h.b16 %v149
    %v524 = vunpack.c.l.b16 %v150
    %v525 = vunpack.c.h.b16 %v150
    %v526 = vunpack.c.l.b16 %v151
    %v527 = vunpack.c.h.b16 %v151
    %v528 = vunpack.c.l.b16 %v152
    %v529 = vunpack.c.h.b16 %v152
    %v530 = vunpack.c.l.b16 %v153
    %v531 = vunpack.c.h.b16 %v153
    %v532 = vunpack.c.l.b16 %v154
    %v533 = vunpack.c.h.b16 %v154
    %v534 = vunpack.c.l.b16 %v155
    %v535 = vunpack.c.h.b16 %v155
    %v536 = vunpack.c.l.b16 %v156
    %v537 = vunpack.c.h.b16 %v156
    %v538 = vunpack.c.l.b16 %v157
    %v539 = vunpack.c.h.b16 %v157
    %v540 = vunpack.c.l.b16 %v158
    %v541 = vunpack.c.h.b16 %v158
    %v542 = vunpack.c.l.b16 %v159
    %v543 = vunpack.c.h.b16 %v159
    %v544 = vunpack.c.l.b16 %v160
    %v545 = vunpack.c.h.b16 %v160
    %v546 = vunpack.c.l.b16 %v161
    %v547 = vunpack.c.h.b16 %v161
    %v548 = vunpack.c.l.b16 %v162
    %v549 = vunpack.c.h.b16 %v162
    %v550 = vunpack.c.l.b16 %v163
    %v551 = vunpack.c.h.b16 %v163
    %v552 = vunpack.c.l.b16 %v164
    %v553 = vunpack.c.h.b16 %v164
    %v554 = vunpack.c.l.b16 %v165
    %v555 = vunpack.c.h.b16 %v165
    %v556 = vunpack.c.l.b16 %v166
    %v557 = vunpack.c.h.b16 %v166
    %v558 = vunpack.c.l.b16 %v167
    %v559 = vunpack.c.h.b16 %v167
    %v560 = vunpack.c.l.b16 %v168
    %v561 = vunpack.c.h.b16 %v168
    %v562 = vunpack.c.l.b16 %v169
    %v563 = vunpack.c.h.b16 %v169
    %v564 = vunpack.c.l.b16 %v170
    %v565 = vunpack.c.h.b16 %v170
    %v566 = vunpack.c.l.b16 %v171
    %v567 = vunpack.c.h.b16 %v171
    %v568 = vunpack.c.l.b16 %v172
    %v569 = vunpack.c.h.b16 %v172
    %v570 = vunpack.c.l.b16 %v173
    %v571 = vunpack.c.h.b16 %v173
    %v572 = vunpack.c.l.b16 %v174
    %v573 = vunpack.c.h.b16 %v174
    %v574 = vunpack.c.l.b16 %v175
    %v575 = vunpack.c.h.b16 %v175
    %v576 = vunpack.c.l.b16 %v176
    %v577 = vunpack.c.h.b16 %v176
    %v578 = vunpack.c.l.b16 %v177
    %v579 = vunpack.c.h.b16 %v177
    %v580 = vunpack.c.l.b16 %v178
    %v581 = vunpack.c.h.b16 %v178
    %v582 = vunpack.c.l.b16 %v179
    %v583 = vunpack.c.h.b16 %v179
    %v584 = vunpack.c.l.b16 %v180
    %v585 = vunpack.c.h.b16 %v180
    %v586 = vunpack.c.l.b16 %v181
    %v587 = vunpack.c.h.b16 %v181
    %v588 = vunpack.c.l.b16 %v182
    %v589 = vunpack.c.h.b16 %v182
    %v590 = vunpack.c.l.b16 %v183
    %v591 = vunpack.c.h.b16 %v183
    %v592 = vunpack.c.l.b16 %v184
    %v593 = vunpack.c.h.b16 %v184
    %v594 = vunpack.c.l.b16 %v185
    %v595 = vunpack.c.h.b16 %v185
    %v596 = vunpack.c.l.b16 %v186
    %v597 = vunpack.c.h.b16 %v186
    %v598 = vunpack.c.l.b16 %v187
    %v599 = vunpack.c.h.b16 %v187
    %v600 = vunpack.c.l.b16 %v188
    %v601 = vunpack.c.h.b16 %v188
    %v602 = vunpack.c.l.b16 %v189
    %v603 = vunpack.c.h.b16 %v189
    %v604 = vunpack.c.l.b16 %v190
    %v605 = vunpack.c.h.b16 %v190
    %v606 = vunpack.c.l.b16 %v191
    %v607 = vunpack.c.h.b16 %v191
    %v608 = vunpack.c.l.b16 %v192
    %v609 = vunpack.c.h.b16 %v192
    %v610 = vunpack.c.l.b16 %v193
    %v611 = vunpack.c.h.b16 %v193
    %v612 = vunpack.c.l.b16 %v194
    %v613 = vunpack.c.h.b16 %v194
    %v614 = vunpack.c.l.b16 %v195
    %v615 = vunpack.c.h.b16 %v195
    %v616 = vunpack.c.l.b16 %v196
    %v617 = vunpack.c.h.b16 %v196
    %v618 = vunpack.c.l.b16 %v197
    %v619 = vunpack.c.h.b16 %v197
    %v620 = vunpack.c.l.b16 %v198
    %v621 = vunpack.c.h.b16 %v198
    %v622 = vunpack.c.l.b16 %v199
    %v623 = vunpack.c.h.b16 %v199
    %v624 = vunpack.c.l.b16 %v200
    %v625 = vunpack.c.h.b16 %v200
    %v626 = vunpack.c.l.b16 %v201
    %v627 = vunpack.c.h.b16 %v201
    %v628 = vunpack.c.l.b16 %v202
    %v629 = vunpack.c.h.b16 %v202
    %v630 = vunpack.c.l.b16 %v203
    %v631 = vunpack.c.h.b16 %v203
    %v632 = vunpack.c.l.b16 %v204
    %v633 = vunpack.c.h.b16 %v204
    %v634 = vunpack.c.l.b16 %v205
    %v635 = vunpack.c.h.b16 %v205
    %v636 = vunpack.c.l.b16 %v206
    %v637 = vunpack.c.h.b16 %v206
    %v638 = vunpack.c.l.b16 %v207
    %v639 = vunpack.c.h.b16 %v207
    %v640 = vunpack.c.l.b16 %v208
    %v641 = vunpack.c.h.b16 %v208
    %v642 = vunpack.c.l.b16 %v209
    %v643 = vunpack.c.h.b16 %v209
    %v644 = vunpack.c.l.b16 %v210
    %v645 = vunpack.c.h.b16 %v210
    %v646 = vunpack.c.l.b16 %v211
    %v647 = vunpack.c.h.b16 %v211
    %v648 = vunpack.c.l.b16 %v212
    %v649 = vunpack.c.h.b16 %v212
    %v650 = vunpack.c.l.b16 %v213
    %v651 = vunpack.c.h.b16 %v213
    %v652 = vunpack.c.l.b16 %v214
    %v653 = vunpack.c.h.b16 %v214
    %v654 = vunpack.c.l.b16 %v215
    %v655 = vunpack.c.h.b16 %v215
    %v656 = vunpack.c.l.b16 %v216
    %v657 = vunpack.c.h.b16 %v216
    %v658 = vunpack.c.l.b16 %v217
    %v659 = vunpack.c.h.b16 %v217
    %v660 = vunpack.c.l.b16 %v218
    %v661 = vunpack.c.h.b16 %v218
    %v662 = vunpack.c.l.b16 %v219
    %v663 = vunpack.c.h.b16 %v219
    %v664 = vunpack.c.l.b16 %v220
    %v665 = vunpack.c.h.b16 %v220
    %v666 = vunpack.c.l.b16 %v221
    %v667 = vunpack.c.h.b16 %v221
    %v668 = vunpack.c.l.b16 %v222
    %v669 = vunpack.c.h.b16 %v222
    %v670 = vunpack.c.l.b16 %v223
    %v671 = vunpack.c.h.b16 %v223
    %v672 = vunpack.c.l.b16 %v224
    %v673 = vunpack.c.h.b16 %v224
    %v674 = vunpack.c.l.b16 %v225
    %v675 = vunpack.c.h.b16 %v225
    %v676 = vunpack.c.l.b16 %v226
    %v677 = vunpack.c.h.b16 %v226
    %v678 = vunpack.c.l.b16 %v227
    %v679 = vunpack.c.h.b16 %v227
    %v680 = vunpack.c.l.b16 %v228
    %v681 = vunpack.c.h.b16 %v228
    %v682 = vunpack.c.l.b16 %v229
    %v683 = vunpack.c.h.b16 %v229
    %v684 = vunpack.c.l.b16 %v230
    %v685 = vunpack.c.h.b16 %v230
    %v686 = vunpack.c.l.b16 %v231
    %v687 = vunpack.c.h.b16 %v231
    %v688 = vunpack.c.l.b16 %v232
    %v689 = vunpack.c.h.b16 %v232
    %v690 = vunpack.c.l.b16 %v233
    %v691 = vunpack.c.h.b16 %v233
    %v692 = vunpack.c.l.b16 %v234
    %v693 = vunpack.c.h.b16 %v234
    %v694 = vunpack.c.l.b16 %v235
    %v695 = vunpack.c.h.b16 %v235
    %v696 = vunpack.c.l.b16 %v236
    %v697 = vunpack.c.h.b16 %v236
    %v698 = vunpack.c.l.b16 %v237
    %v699 = vunpack.c.h.b16 %v237
    %v700 = vunpack.c.l.b16 %v238
    %v701 = vunpack.c.h.b16 %v238
    %v702 = vunpack.c.l.b16 %v239
    %v703 = vunpack.c.h.b16 %v239
    %v704 = vunpack.c.l.b16 %v240
    %v705 = vunpack.c.h.b16 %v240
    %v706 = vunpack.c.l.b16 %v241
    %v707 = vunpack.c.h.b16 %v241
    %v708 = vunpack.c.l.b16 %v242
    %v709 = vunpack.c.h.b16 %v242
    %v710 = vunpack.c.l.b16 %v243
    %v711 = vunpack.c.h.b16 %v243
    %v712 = vpack.c.b16 %v472, %v456
    %v713 = vpack.c.b16 %v473, %v457
    %v714 = vpack.c.b16 %v474, %v458
    %v715 = vpack.c.b16 %v475, %v459
    %v716 = vpack.c.b16 %v476, %v460
    %v717 = vpack.c.b16 %v477, %v461
    %v718 = vpack.c.b16 %v478, %v462
    %v719 = vpack.c.b16 %v479, %v463
    %v720 = vpack.c.b16 %v480, %v464
    %v721 = vpack.c.b16 %v481, %v465
    %v722 = vpack.c.b16 %v482, %v466
    %v723 = vpack.c.b16 %v483, %v467
    %v724 = vpack.c.b16 %v484, %v468
    %v725 = vpack.c.b16 %v485, %v469
    %v726 = vpack.c.b16 %v486, %v470
    %v727 = vpack.c.b16 %v487, %v471
    %v728 = vpack.c.b16 %v504, %v488
    %v729 = vpack.c.b16 %v505, %v489
    %v730 = vpack.c.b16 %v506, %v490
    %v731 = vpack.c.b16 %v507, %v491
    %v732 = vpack.c.b16 %v508, %v492
    %v733 = vpack.c.b16 %v509, %v493
    %v734 = vpack.c.b16 %v510, %v494
    %v735 = vpack.c.b16 %v511, %v495
    %v736 = vpack.c.b16 %v512, %v496
    %v737 = vpack.c.b16 %v513, %v497
    %v738 = vpack.c.b16 %v514, %v498
    %v739 = vpack.c.b16 %v515, %v499
    %v740 = vpack.c.b16 %v516, %v500
    %v741 = vpack.c.b16 %v517, %v501
    %v742 = vpack.c.b16 %v518, %v502
    %v743 = vpack.c.b16 %v519, %v503
    %v744 = vpack.c.b16 %v536, %v520
    %v745 = vpack.c.b16 %v537, %v521
    %v746 = vpack.c.b16 %v538, %v522
    %v747 = vpack.c.b16 %v539, %v523
    %v748 = vpack.c.b16 %v540, %v524
    %v749 = vpack.c.b16 %v541, %v525
    %v750 = vpack.c.b16 %v542, %v526
    %v751 = vpack.c.b16 %v543, %v527
    %v752 = vpack.c.b16 %v544, %v528
    %v753 = vpack.c.b16 %v545, %v529
    %v754 = vpack.c.b16 %v546, %v530
    %v755 = vpack.c.b16 %v547, %v531
    %v756 = vpack.c.b16 %v548, %v532
    %v757 = vpack.c.b16 %v549, %v533
    %v758 = vpack.c.b16 %v550, %v534
    %v759 = vpack.c.b16 %v551, %v535
    %v760 = vpack.c.b16 %v568, %v552
    %v761 = vpack.c.b16 %v569, %v553
    %v762 = vpack.c.b16 %v570, %v554
    %v763 = vpack.c.b16 %v571, %v555
    %v764 = vpack.c.b16 %v572, %v556
    %v765 = vpack.c.b16 %v573, %v557
    %v766 = vpack.c.b16 %v574, %v558
    %v767 = vpack.c.b16 %v575, %v559
    %v768 = vpack.c.b16 %v576, %v560
    %v769 = vpack.c.b16 %v577, %v561
    %v770 = vpack.c.b16 %v578, %v562
    %v771 = vpack.c.b16 %v579, %v563
    %v772 = vpack.c.b16 %v580, %v564
    %v773 = vpack.c.b16 %v581, %v565
    %v774 = vpack.c.b16 %v582, %v566
    %v775 = vpack.c.b16 %v583, %v567
    %v776 = vpack.c.b16 %v600, %v584
    %v777 = vpack.c.b16 %v601, %v585
    %v778 = vpack.c.b16 %v602, %v586
    %v779 = vpack.c.b16 %v603, %v587
    %v780 = vpack.c.b16 %v604, %v588
    %v781 = vpack.c.b16 %v605, %v589
    %v782 = vpack.c.b16 %v606, %v590
    %v783 = vpack.c.b16 %v607, %v591
    %v784 = vpack.c.b16 %v608, %v592
    %v785 = vpack.c.b16 %v609, %v593
    %v786 = vpack.c.b16 %v610, %v594
    %v787 = vpack.c.b16 %v611, %v595
    %v788 = vpack.c.b16 %v612, %v596
    %v789 = vpack.c.b16 %v613, %v597
    %v790 = vpack.c.b16 %v614, %v598
    %v791 = vpack.c.b16 %v615, %v599
    %v792 = vpack.c.b16 %v632, %v616
    %v793 = vpack.c.b16 %v633, %v617
    %v794 = vpack.c.b16 %v634, %v618
    %v795 = vpack.c.b16 %v635, %v619
    %v796 = vpack.c.b16 %v636, %v620
    %v797 = vpack.c.b16 %v637, %v621
    %v798 = vpack.c.b16 %v638, %v622
    %v799 = vpack.c.b16 %v639, %v623
    %v800 = vpack.c.b16 %v640, %v624
    %v801 = vpack.c.b16 %v641, %v625
    %v802 = vpack.c.b16 %v642, %v626
    %v803 = vpack.c.b16 %v643, %v627
    %v804 = vpack.c.b16 %v644, %v628
    %v805 = vpack.c.b16 %v645, %v629
    %v806 = vpack.c.b16 %v646, %v630
    %v807 = vpack.c.b16 %v647, %v631
    %v808 = vpack.c.b16 %v664, %v648
    %v809 = vpack.c.b16 %v665, %v649
    %v810 = vpack.c.b16 %v666, %v650
    %v811 = vpack.c.b16 %v667, %v651
    %v812 = vpack.c.b16 %v668, %v652
    %v813 = vpack.c.b16 %v669, %v653
    %v814 = vpack.c.b16 %v670, %v654
    %v815 = vpack.c.b16 %v671, %v655
    %v816 = vpack.c.b16 %v672, %v656
    %v817 = vpack.c.b16 %v673, %v657
    %v818 = vpack.c.b16 %v674, %v658
    %v819 = vpack.c.b16 %v675, %v659
    %v820 = vpack.c.b16 %v676, %v660
    %v821 = vpack.c.b16 %v677, %v661
    %v822 = vpack.c.b16 %v678, %v662
    %v823 = vpack.c.b16 %v679, %v663
    %v824 = vpack.c.b16 %v696, %v680
    %v825 = vpack.c.b16 %v697, %v681
    %v826 = vpack.c.b16 %v698, %v682
    %v827 = vpack.c.b16 %v699, %v683
    %v828 = vpack.c.b16 %v700, %v684
    %v829 = vpack.c.b16 %v701, %v685
    %v830 = vpack.c.b16 %v702, %v686
    %v831 = vpack.c.b16 %v703, %v687
    %v832 = vpack.c.b16 %v704, %v688
    %v833 = vpack.c.b16 %v705, %v689
    %v834 = vpack.c.b16 %v706, %v690
    %v835 = vpack.c.b16 %v707, %v691
    %v836 = vpack.c.b16 %v708, %v692
    %v837 = vpack.c.b16 %v709, %v693
    %v838 = vpack.c.b16 %v710, %v694
    %v839 = vpack.c.b16 %v711, %v695
    %968 = vmatprep.subr.bf16.mxu0 %v825
    %969 = vmatpush1.bf16.msra.mxu0 %v824
    %970 = vmatprep.subr.bf16.mxu0 %v809
    %971 = vmatpush1.bf16.msra.mxu0 %v808
    %972 = vmatprep.subr.bf16.mxu0 %v793
    %973 = vmatpush1.bf16.msra.mxu0 %v792
    %974 = vmatprep.subr.bf16.mxu0 %v777
    %975 = vmatpush1.bf16.msra.mxu0 %v776
    %976 = vmatprep.subr.bf16.mxu0 %v761
    %977 = vmatpush1.bf16.msra.mxu0 %v760
    %978 = vmatprep.subr.bf16.mxu0 %v745
    %979 = vmatpush1.bf16.msra.mxu0 %v744
    %980 = vmatprep.subr.bf16.mxu0 %v729
    %981 = vmatpush1.bf16.msra.mxu0 %v728
    %982 = vmatprep.subr.bf16.mxu0 %v713
    %983 = vmatpush1.bf16.msra.mxu0 %v712
    %984 = vmatprep.subr.bf16.mxu0 0
    %985 = vmatpush2.bf16.msra.mxu0 0
    %986 = vmatprep.subr.bf16.mxu0 0
    %987 = vmatpush2.bf16.msra.mxu0 0
    %988 = vmatprep.subr.bf16.mxu0 0
    %989 = vmatpush2.bf16.msra.mxu0 0
    %990 = vmatprep.subr.bf16.mxu0 0
    %991 = vmatpush2.bf16.msra.mxu0 0
    %992 = vmatprep.subr.bf16.mxu0 0
    %993 = vmatpush2.bf16.msra.mxu0 0
    %994 = vmatprep.subr.bf16.mxu0 0
    %995 = vmatpush2.bf16.msra.mxu0 0
    %996 = vmatprep.subr.bf16.mxu0 0
    %997 = vmatpush2.bf16.msra.mxu0 0
    %998 = vmatprep.subr.bf16.mxu0 0
    %999 = vmatpush2.bf16.msra.mxu0 0
    %1000 = vmatprep.mubr.bf16.mxu0 0
    %1001 = vmatmul.mubr.bf16.gmra.mxu0 %v115
    %v1002 = vpop.f32.mrf.mxu0
    %v1003 = vadd.f32 %v251, %v1002
    %v1004 = vpop.f32.mrf.mxu0
    %v1005 = vadd.f32 %v255, %v1004
    %v1006 = vpop.f32.mrf.mxu0
    %v1007 = vpop.f32.mrf.mxu0
    %1008 = vdwg.mxu0
    %1009 = vmatprep.subr.bf16.mxu0 %v827
    %1010 = vmatpush1.bf16.msra.mxu0 %v826
    %1011 = vmatprep.subr.bf16.mxu0 %v811
    %1012 = vmatpush1.bf16.msra.mxu0 %v810
    %1013 = vmatprep.subr.bf16.mxu0 %v795
    %1014 = vmatpush1.bf16.msra.mxu0 %v794
    %1015 = vmatprep.subr.bf16.mxu0 %v779
    %1016 = vmatpush1.bf16.msra.mxu0 %v778
    %1017 = vmatprep.subr.bf16.mxu0 %v763
    %1018 = vmatpush1.bf16.msra.mxu0 %v762
    %1019 = vmatprep.subr.bf16.mxu0 %v747
    %1020 = vmatpush1.bf16.msra.mxu0 %v746
    %1021 = vmatprep.subr.bf16.mxu0 %v731
    %1022 = vmatpush1.bf16.msra.mxu0 %v730
    %1023 = vmatprep.subr.bf16.mxu0 %v715
    %1024 = vmatpush1.bf16.msra.mxu0 %v714
    %1025 = vmatprep.subr.bf16.mxu0 0
    %1026 = vmatpush2.bf16.msra.mxu0 0
    %1027 = vmatprep.subr.bf16.mxu0 0
    %1028 = vmatpush2.bf16.msra.mxu0 0
    %1029 = vmatprep.subr.bf16.mxu0 0
    %1030 = vmatpush2.bf16.msra.mxu0 0
    %1031 = vmatprep.subr.bf16.mxu0 0
    %1032 = vmatpush2.bf16.msra.mxu0 0
    %1033 = vmatprep.subr.bf16.mxu0 0
    %1034 = vmatpush2.bf16.msra.mxu0 0
    %1035 = vmatprep.subr.bf16.mxu0 0
    %1036 = vmatpush2.bf16.msra.mxu0 0
    %1037 = vmatprep.subr.bf16.mxu0 0
    %1038 = vmatpush2.bf16.msra.mxu0 0
    %1039 = vmatprep.subr.bf16.mxu0 0
    %1040 = vmatpush2.bf16.msra.mxu0 0
    %1041 = vmatprep.mubr.bf16.mxu0 0
    %1042 = vmatmul.mubr.bf16.gmra.mxu0 %v115
    %v1043 = vpop.f32.mrf.mxu0
    %v1044 = vadd.f32 %v259, %v1043
    %v1045 = vpop.f32.mrf.mxu0
    %v1046 = vadd.f32 %v263, %v1045
    %v1047 = vpop.f32.mrf.mxu0
    %v1048 = vpop.f32.mrf.mxu0
    %1049 = vdwg.mxu0
    %1050 = vmatprep.subr.bf16.mxu0 %v829
    %1051 = vmatpush1.bf16.msra.mxu0 %v828
    %1052 = vmatprep.subr.bf16.mxu0 %v813
    %1053 = vmatpush1.bf16.msra.mxu0 %v812
    %1054 = vmatprep.subr.bf16.mxu0 %v797
    %1055 = vmatpush1.bf16.msra.mxu0 %v796
    %1056 = vmatprep.subr.bf16.mxu0 %v781
    %1057 = vmatpush1.bf16.msra.mxu0 %v780
    %1058 = vmatprep.subr.bf16.mxu0 %v765
    %1059 = vmatpush1.bf16.msra.mxu0 %v764
    %1060 = vmatprep.subr.bf16.mxu0 %v749
    %1061 = vmatpush1.bf16.msra.mxu0 %v748
    %1062 = vmatprep.subr.bf16.mxu0 %v733
    %1063 = vmatpush1.bf16.msra.mxu0 %v732
    %1064 = vmatprep.subr.bf16.mxu0 %v717
    %1065 = vmatpush1.bf16.msra.mxu0 %v716
    %1066 = vmatprep.subr.bf16.mxu0 0
    %1067 = vmatpush2.bf16.msra.mxu0 0
    %1068 = vmatprep.subr.bf16.mxu0 0
    %1069 = vmatpush2.bf16.msra.mxu0 0
    %1070 = vmatprep.subr.bf16.mxu0 0
    %1071 = vmatpush2.bf16.msra.mxu0 0
    %1072 = vmatprep.subr.bf16.mxu0 0
    %1073 = vmatpush2.bf16.msra.mxu0 0
    %1074 = vmatprep.subr.bf16.mxu0 0
    %1075 = vmatpush2.bf16.msra.mxu0 0
    %1076 = vmatprep.subr.bf16.mxu0 0
    %1077 = vmatpush2.bf16.msra.mxu0 0
    %1078 = vmatprep.subr.bf16.mxu0 0
    %1079 = vmatpush2.bf16.msra.mxu0 0
    %1080 = vmatprep.subr.bf16.mxu0 0
    %1081 = vmatpush2.bf16.msra.mxu0 0
    %1082 = vmatprep.mubr.bf16.mxu0 0
    %1083 = vmatmul.mubr.bf16.gmra.mxu0 %v115
    %v1084 = vpop.f32.mrf.mxu0
    %v1085 = vadd.f32 %v267, %v1084
    %v1086 = vpop.f32.mrf.mxu0
    %v1087 = vadd.f32 %v271, %v1086
    %v1088 = vpop.f32.mrf.mxu0
    %v1089 = vpop.f32.mrf.mxu0
    %1090 = vdwg.mxu0
    %1091 = vmatprep.subr.bf16.mxu0 %v831
    %1092 = vmatpush1.bf16.msra.mxu0 %v830
    %1093 = vmatprep.subr.bf16.mxu0 %v815
    %1094 = vmatpush1.bf16.msra.mxu0 %v814
    %1095 = vmatprep.subr.bf16.mxu0 %v799
    %1096 = vmatpush1.bf16.msra.mxu0 %v798
    %1097 = vmatprep.subr.bf16.mxu0 %v783
    %1098 = vmatpush1.bf16.msra.mxu0 %v782
    %1099 = vmatprep.subr.bf16.mxu0 %v767
    %1100 = vmatpush1.bf16.msra.mxu0 %v766
    %1101 = vmatprep.subr.bf16.mxu0 %v751
    %1102 = vmatpush1.bf16.msra.mxu0 %v750
    %1103 = vmatprep.subr.bf16.mxu0 %v735
    %1104 = vmatpush1.bf16.msra.mxu0 %v734
    %1105 = vmatprep.subr.bf16.mxu0 %v719
    %1106 = vmatpush1.bf16.msra.mxu0 %v718
    %1107 = vmatprep.subr.bf16.mxu0 0
    %1108 = vmatpush2.bf16.msra.mxu0 0
    %1109 = vmatprep.subr.bf16.mxu0 0
    %1110 = vmatpush2.bf16.msra.mxu0 0
    %1111 = vmatprep.subr.bf16.mxu0 0
    %1112 = vmatpush2.bf16.msra.mxu0 0
    %1113 = vmatprep.subr.bf16.mxu0 0
    %1114 = vmatpush2.bf16.msra.mxu0 0
    %1115 = vmatprep.subr.bf16.mxu0 0
    %1116 = vmatpush2.bf16.msra.mxu0 0
    %1117 = vmatprep.subr.bf16.mxu0 0
    %1118 = vmatpush2.bf16.msra.mxu0 0
    %1119 = vmatprep.subr.bf16.mxu0 0
    %1120 = vmatpush2.bf16.msra.mxu0 0
    %1121 = vmatprep.subr.bf16.mxu0 0
    %1122 = vmatpush2.bf16.msra.mxu0 0
    %1123 = vmatprep.mubr.bf16.mxu0 0
    %1124 = vmatmul.mubr.bf16.gmra.mxu0 %v115
    %v1125 = vpop.f32.mrf.mxu0
    %v1126 = vadd.f32 %v275, %v1125
    %v1127 = vpop.f32.mrf.mxu0
    %v1128 = vadd.f32 %v279, %v1127
    %v1129 = vpop.f32.mrf.mxu0
    %v1130 = vpop.f32.mrf.mxu0
    %1131 = vdwg.mxu0
    %1132 = vmatprep.subr.bf16.mxu0 %v833
    %1133 = vmatpush1.bf16.msra.mxu0 %v832
    %1134 = vmatprep.subr.bf16.mxu0 %v817
    %1135 = vmatpush1.bf16.msra.mxu0 %v816
    %1136 = vmatprep.subr.bf16.mxu0 %v801
    %1137 = vmatpush1.bf16.msra.mxu0 %v800
    %1138 = vmatprep.subr.bf16.mxu0 %v785
    %1139 = vmatpush1.bf16.msra.mxu0 %v784
    %1140 = vmatprep.subr.bf16.mxu0 %v769
    %1141 = vmatpush1.bf16.msra.mxu0 %v768
    %1142 = vmatprep.subr.bf16.mxu0 %v753
    %1143 = vmatpush1.bf16.msra.mxu0 %v752
    %1144 = vmatprep.subr.bf16.mxu0 %v737
    %1145 = vmatpush1.bf16.msra.mxu0 %v736
    %1146 = vmatprep.subr.bf16.mxu0 %v721
    %1147 = vmatpush1.bf16.msra.mxu0 %v720
    %1148 = vmatprep.subr.bf16.mxu0 0
    %1149 = vmatpush2.bf16.msra.mxu0 0
    %1150 = vmatprep.subr.bf16.mxu0 0
    %1151 = vmatpush2.bf16.msra.mxu0 0
    %1152 = vmatprep.subr.bf16.mxu0 0
    %1153 = vmatpush2.bf16.msra.mxu0 0
    %1154 = vmatprep.subr.bf16.mxu0 0
    %1155 = vmatpush2.bf16.msra.mxu0 0
    %1156 = vmatprep.subr.bf16.mxu0 0
    %1157 = vmatpush2.bf16.msra.mxu0 0
    %1158 = vmatprep.subr.bf16.mxu0 0
    %1159 = vmatpush2.bf16.msra.mxu0 0
    %1160 = vmatprep.subr.bf16.mxu0 0
    %1161 = vmatpush2.bf16.msra.mxu0 0
    %1162 = vmatprep.subr.bf16.mxu0 0
    %1163 = vmatpush2.bf16.msra.mxu0 0
    %1164 = vmatprep.mubr.bf16.mxu0 0
    %1165 = vmatmul.mubr.bf16.gmra.mxu0 %v115
    %v1166 = vpop.f32.mrf.mxu0
    %v1167 = vadd.f32 %v283, %v1166
    %v1168 = vpop.f32.mrf.mxu0
    %v1169 = vadd.f32 %v287, %v1168
    %v1170 = vpop.f32.mrf.mxu0
    %v1171 = vpop.f32.mrf.mxu0
    %1172 = vdwg.mxu0
    %1173 = vmatprep.subr.bf16.mxu0 %v835
    %1174 = vmatpush1.bf16.msra.mxu0 %v834
    %1175 = vmatprep.subr.bf16.mxu0 %v819
    %1176 = vmatpush1.bf16.msra.mxu0 %v818
    %1177 = vmatprep.subr.bf16.mxu0 %v803
    %1178 = vmatpush1.bf16.msra.mxu0 %v802
    %1179 = vmatprep.subr.bf16.mxu0 %v787
    %1180 = vmatpush1.bf16.msra.mxu0 %v786
    %1181 = vmatprep.subr.bf16.mxu0 %v771
    %1182 = vmatpush1.bf16.msra.mxu0 %v770
    %1183 = vmatprep.subr.bf16.mxu0 %v755
    %1184 = vmatpush1.bf16.msra.mxu0 %v754
    %1185 = vmatprep.subr.bf16.mxu0 %v739
    %1186 = vmatpush1.bf16.msra.mxu0 %v738
    %1187 = vmatprep.subr.bf16.mxu0 %v723
    %1188 = vmatpush1.bf16.msra.mxu0 %v722
    %1189 = vmatprep.subr.bf16.mxu0 0
    %1190 = vmatpush2.bf16.msra.mxu0 0
    %1191 = vmatprep.subr.bf16.mxu0 0
    %1192 = vmatpush2.bf16.msra.mxu0 0
    %1193 = vmatprep.subr.bf16.mxu0 0
    %1194 = vmatpush2.bf16.msra.mxu0 0
    %1195 = vmatprep.subr.bf16.mxu0 0
    %1196 = vmatpush2.bf16.msra.mxu0 0
    %1197 = vmatprep.subr.bf16.mxu0 0
    %1198 = vmatpush2.bf16.msra.mxu0 0
    %1199 = vmatprep.subr.bf16.mxu0 0
    %1200 = vmatpush2.bf16.msra.mxu0 0
    %1201 = vmatprep.subr.bf16.mxu0 0
    %1202 = vmatpush2.bf16.msra.mxu0 0
    %1203 = vmatprep.subr.bf16.mxu0 0
    %1204 = vmatpush2.bf16.msra.mxu0 0
    %1205 = vmatprep.mubr.bf16.mxu0 0
    %1206 = vmatmul.mubr.bf16.gmra.mxu0 %v115
    %v1207 = vpop.f32.mrf.mxu0
    %v1208 = vadd.f32 %v291, %v1207
    %v1209 = vpop.f32.mrf.mxu0
    %v1210 = vadd.f32 %v295, %v1209
    %v1211 = vpop.f32.mrf.mxu0
    %v1212 = vpop.f32.mrf.mxu0
    %1213 = vdwg.mxu0
    %1214 = vmatprep.subr.bf16.mxu0 %v837
    %1215 = vmatpush1.bf16.msra.mxu0 %v836
    %1216 = vmatprep.subr.bf16.mxu0 %v821
    %1217 = vmatpush1.bf16.msra.mxu0 %v820
    %1218 = vmatprep.subr.bf16.mxu0 %v805
    %1219 = vmatpush1.bf16.msra.mxu0 %v804
    %1220 = vmatprep.subr.bf16.mxu0 %v789
    %1221 = vmatpush1.bf16.msra.mxu0 %v788
    %1222 = vmatprep.subr.bf16.mxu0 %v773
    %1223 = vmatpush1.bf16.msra.mxu0 %v772
    %1224 = vmatprep.subr.bf16.mxu0 %v757
    %1225 = vmatpush1.bf16.msra.mxu0 %v756
    %1226 = vmatprep.subr.bf16.mxu0 %v741
    %1227 = vmatpush1.bf16.msra.mxu0 %v740
    %1228 = vmatprep.subr.bf16.mxu0 %v725
    %1229 = vmatpush1.bf16.msra.mxu0 %v724
    %1230 = vmatprep.subr.bf16.mxu0 0
    %1231 = vmatpush2.bf16.msra.mxu0 0
    %1232 = vmatprep.subr.bf16.mxu0 0
    %1233 = vmatpush2.bf16.msra.mxu0 0
    %1234 = vmatprep.subr.bf16.mxu0 0
    %1235 = vmatpush2.bf16.msra.mxu0 0
    %1236 = vmatprep.subr.bf16.mxu0 0
    %1237 = vmatpush2.bf16.msra.mxu0 0
    %1238 = vmatprep.subr.bf16.mxu0 0
    %1239 = vmatpush2.bf16.msra.mxu0 0
    %1240 = vmatprep.subr.bf16.mxu0 0
    %1241 = vmatpush2.bf16.msra.mxu0 0
    %1242 = vmatprep.subr.bf16.mxu0 0
    %1243 = vmatpush2.bf16.msra.mxu0 0
    %1244 = vmatprep.subr.bf16.mxu0 0
    %1245 = vmatpush2.bf16.msra.mxu0 0
    %1246 = vmatprep.mubr.bf16.mxu0 0
    %1247 = vmatmul.mubr.bf16.gmra.mxu0 %v115
    %v1248 = vpop.f32.mrf.mxu0
    %v1249 = vadd.f32 %v299, %v1248
    %v1250 = vpop.f32.mrf.mxu0
    %v1251 = vadd.f32 %v303, %v1250
    %v1252 = vpop.f32.mrf.mxu0
    %v1253 = vpop.f32.mrf.mxu0
    %1254 = vdwg.mxu0
    %1255 = vmatprep.subr.bf16.mxu0 %v839
    %1256 = vmatpush1.bf16.msra.mxu0 %v838
    %1257 = vmatprep.subr.bf16.mxu0 %v823
    %1258 = vmatpush1.bf16.msra.mxu0 %v822
    %1259 = vmatprep.subr.bf16.mxu0 %v807
    %1260 = vmatpush1.bf16.msra.mxu0 %v806
    %1261 = vmatprep.subr.bf16.mxu0 %v791
    %1262 = vmatpush1.bf16.msra.mxu0 %v790
    %1263 = vmatprep.subr.bf16.mxu0 %v775
    %1264 = vmatpush1.bf16.msra.mxu0 %v774
    %1265 = vmatprep.subr.bf16.mxu0 %v759
    %1266 = vmatpush1.bf16.msra.mxu0 %v758
    %1267 = vmatprep.subr.bf16.mxu0 %v743
    %1268 = vmatpush1.bf16.msra.mxu0 %v742
    %1269 = vmatprep.subr.bf16.mxu0 %v727
    %1270 = vmatpush1.bf16.msra.mxu0 %v726
    %1271 = vmatprep.subr.bf16.mxu0 0
    %1272 = vmatpush2.bf16.msra.mxu0 0
    %1273 = vmatprep.subr.bf16.mxu0 0
    %1274 = vmatpush2.bf16.msra.mxu0 0
    %1275 = vmatprep.subr.bf16.mxu0 0
    %1276 = vmatpush2.bf16.msra.mxu0 0
    %1277 = vmatprep.subr.bf16.mxu0 0
    %1278 = vmatpush2.bf16.msra.mxu0 0
    %1279 = vmatprep.subr.bf16.mxu0 0
    %1280 = vmatpush2.bf16.msra.mxu0 0
    %1281 = vmatprep.subr.bf16.mxu0 0
    %1282 = vmatpush2.bf16.msra.mxu0 0
    %1283 = vmatprep.subr.bf16.mxu0 0
    %1284 = vmatpush2.bf16.msra.mxu0 0
    %1285 = vmatprep.subr.bf16.mxu0 0
    %1286 = vmatpush2.bf16.msra.mxu0 0
    %1287 = vmatprep.mubr.bf16.mxu0 0
    %1288 = vmatmul.mubr.bf16.gmra.mxu0 %v115
    %v1289 = vpop.f32.mrf.mxu0
    %v1290 = vadd.f32 %v307, %v1289
    %v1291 = vpop.f32.mrf.mxu0
    %v1292 = vadd.f32 %v311, %v1291
    %v1293 = vpop.f32.mrf.mxu0
    %v1294 = vpop.f32.mrf.mxu0
    %1295 = vdwg.mxu0
    %v1296 = vpack.c.bf16 %v1003, %v1003
    %v1297 = vpack.c.bf16 %v1005, %v1005
    %v1298 = vpack.c.bf16 %v1044, %v1044
    %v1299 = vpack.c.bf16 %v1046, %v1046
    %v1300 = vpack.c.bf16 %v1085, %v1085
    %v1301 = vpack.c.bf16 %v1087, %v1087
    %v1302 = vpack.c.bf16 %v1126, %v1126
    %v1303 = vpack.c.bf16 %v1128, %v1128
    %v1304 = vpack.c.bf16 %v1167, %v1167
    %v1305 = vpack.c.bf16 %v1169, %v1169
    %v1306 = vpack.c.bf16 %v1208, %v1208
    %v1307 = vpack.c.bf16 %v1210, %v1210
    %v1308 = vpack.c.bf16 %v1249, %v1249
    %v1309 = vpack.c.bf16 %v1251, %v1251
    %v1310 = vpack.c.bf16 %v1290, %v1290
    %v1311 = vpack.c.bf16 %v1292, %v1292
    %v1312 = vld [vmem:[#allocation8] sm:$0xff]
    %v1313 = vld [vmem:[#allocation8 + $0x8] sm:$0xff]
    %v1314 = vld [vmem:[#allocation8 + $0x10] sm:$0xff]
    %v1315 = vld [vmem:[#allocation8 + $0x18] sm:$0xff]
    %v1316 = vld [vmem:[#allocation8 + $0x20] sm:$0xff]
    %v1317 = vld [vmem:[#allocation8 + $0x28] sm:$0xff]
    %v1318 = vld [vmem:[#allocation8 + $0x30] sm:$0xff]
    %v1319 = vld [vmem:[#allocation8 + $0x38] sm:$0xff]
    %v1320 = vld [vmem:[#allocation8 + $0x40] sm:$0xff]
    %v1321 = vld [vmem:[#allocation8 + $0x48] sm:$0xff]
    %v1322 = vld [vmem:[#allocation8 + $0x50] sm:$0xff]
    %v1323 = vld [vmem:[#allocation8 + $0x58] sm:$0xff]
    %v1324 = vld [vmem:[#allocation8 + $0x60] sm:$0xff]
    %v1325 = vld [vmem:[#allocation8 + $0x68] sm:$0xff]
    %v1326 = vld [vmem:[#allocation8 + $0x70] sm:$0xff]
    %v1327 = vld [vmem:[#allocation8 + $0x78] sm:$0xff]
    %v1328 = vld [vmem:[#allocation8 + $0x80] sm:$0xff]
    %v1329 = vld [vmem:[#allocation8 + $0x88] sm:$0xff]
    %v1330 = vld [vmem:[#allocation8 + $0x90] sm:$0xff]
    %v1331 = vld [vmem:[#allocation8 + $0x98] sm:$0xff]
    %v1332 = vld [vmem:[#allocation8 + $0xa0] sm:$0xff]
    %v1333 = vld [vmem:[#allocation8 + $0xa8] sm:$0xff]
    %v1334 = vld [vmem:[#allocation8 + $0xb0] sm:$0xff]
    %v1335 = vld [vmem:[#allocation8 + $0xb8] sm:$0xff]
    %v1336 = vld [vmem:[#allocation8 + $0xc0] sm:$0xff]
    %v1337 = vld [vmem:[#allocation8 + $0xc8] sm:$0xff]
    %v1338 = vld [vmem:[#allocation8 + $0xd0] sm:$0xff]
    %v1339 = vld [vmem:[#allocation8 + $0xd8] sm:$0xff]
    %v1340 = vld [vmem:[#allocation8 + $0xe0] sm:$0xff]
    %v1341 = vld [vmem:[#allocation8 + $0xe8] sm:$0xff]
    %v1342 = vld [vmem:[#allocation8 + $0xf0] sm:$0xff]
    %v1343 = vld [vmem:[#allocation8 + $0xf8] sm:$0xff]
    %v1344 = vld [vmem:[#allocation8 + $0x100] sm:$0xff]
    %v1345 = vld [vmem:[#allocation8 + $0x108] sm:$0xff]
    %v1346 = vld [vmem:[#allocation8 + $0x110] sm:$0xff]
    %v1347 = vld [vmem:[#allocation8 + $0x118] sm:$0xff]
    %v1348 = vld [vmem:[#allocation8 + $0x120] sm:$0xff]
    %v1349 = vld [vmem:[#allocation8 + $0x128] sm:$0xff]
    %v1350 = vld [vmem:[#allocation8 + $0x130] sm:$0xff]
    %v1351 = vld [vmem:[#allocation8 + $0x138] sm:$0xff]
    %v1352 = vld [vmem:[#allocation8 + $0x140] sm:$0xff]
    %v1353 = vld [vmem:[#allocation8 + $0x148] sm:$0xff]
    %v1354 = vld [vmem:[#allocation8 + $0x150] sm:$0xff]
    %v1355 = vld [vmem:[#allocation8 + $0x158] sm:$0xff]
    %v1356 = vld [vmem:[#allocation8 + $0x160] sm:$0xff]
    %v1357 = vld [vmem:[#allocation8 + $0x168] sm:$0xff]
    %v1358 = vld [vmem:[#allocation8 + $0x170] sm:$0xff]
    %v1359 = vld [vmem:[#allocation8 + $0x178] sm:$0xff]
    %v1360 = vld [vmem:[#allocation8 + $0x180] sm:$0xff]
    %v1361 = vld [vmem:[#allocation8 + $0x188] sm:$0xff]
    %v1362 = vld [vmem:[#allocation8 + $0x190] sm:$0xff]
    %v1363 = vld [vmem:[#allocation8 + $0x198] sm:$0xff]
    %v1364 = vld [vmem:[#allocation8 + $0x1a0] sm:$0xff]
    %v1365 = vld [vmem:[#allocation8 + $0x1a8] sm:$0xff]
    %v1366 = vld [vmem:[#allocation8 + $0x1b0] sm:$0xff]
    %v1367 = vld [vmem:[#allocation8 + $0x1b8] sm:$0xff]
    %v1368 = vld [vmem:[#allocation8 + $0x1c0] sm:$0xff]
    %v1369 = vld [vmem:[#allocation8 + $0x1c8] sm:$0xff]
    %v1370 = vld [vmem:[#allocation8 + $0x1d0] sm:$0xff]
    %v1371 = vld [vmem:[#allocation8 + $0x1d8] sm:$0xff]
    %v1372 = vld [vmem:[#allocation8 + $0x1e0] sm:$0xff]
    %v1373 = vld [vmem:[#allocation8 + $0x1e8] sm:$0xff]
    %v1374 = vld [vmem:[#allocation8 + $0x1f0] sm:$0xff]
    %v1375 = vld [vmem:[#allocation8 + $0x1f8] sm:$0xff]
    %v1376 = vld [vmem:[#allocation8 + $0x200] sm:$0xff]
    %v1377 = vld [vmem:[#allocation8 + $0x208] sm:$0xff]
    %v1378 = vld [vmem:[#allocation8 + $0x210] sm:$0xff]
    %v1379 = vld [vmem:[#allocation8 + $0x218] sm:$0xff]
    %v1380 = vld [vmem:[#allocation8 + $0x220] sm:$0xff]
    %v1381 = vld [vmem:[#allocation8 + $0x228] sm:$0xff]
    %v1382 = vld [vmem:[#allocation8 + $0x230] sm:$0xff]
    %v1383 = vld [vmem:[#allocation8 + $0x238] sm:$0xff]
    %v1384 = vld [vmem:[#allocation8 + $0x240] sm:$0xff]
    %v1385 = vld [vmem:[#allocation8 + $0x248] sm:$0xff]
    %v1386 = vld [vmem:[#allocation8 + $0x250] sm:$0xff]
    %v1387 = vld [vmem:[#allocation8 + $0x258] sm:$0xff]
    %v1388 = vld [vmem:[#allocation8 + $0x260] sm:$0xff]
    %v1389 = vld [vmem:[#allocation8 + $0x268] sm:$0xff]
    %v1390 = vld [vmem:[#allocation8 + $0x270] sm:$0xff]
    %v1391 = vld [vmem:[#allocation8 + $0x278] sm:$0xff]
    %v1392 = vld [vmem:[#allocation8 + $0x280] sm:$0xff]
    %v1393 = vld [vmem:[#allocation8 + $0x288] sm:$0xff]
    %v1394 = vld [vmem:[#allocation8 + $0x290] sm:$0xff]
    %v1395 = vld [vmem:[#allocation8 + $0x298] sm:$0xff]
    %v1396 = vld [vmem:[#allocation8 + $0x2a0] sm:$0xff]
    %v1397 = vld [vmem:[#allocation8 + $0x2a8] sm:$0xff]
    %v1398 = vld [vmem:[#allocation8 + $0x2b0] sm:$0xff]
    %v1399 = vld [vmem:[#allocation8 + $0x2b8] sm:$0xff]
    %v1400 = vld [vmem:[#allocation8 + $0x2c0] sm:$0xff]
    %v1401 = vld [vmem:[#allocation8 + $0x2c8] sm:$0xff]
    %v1402 = vld [vmem:[#allocation8 + $0x2d0] sm:$0xff]
    %v1403 = vld [vmem:[#allocation8 + $0x2d8] sm:$0xff]
    %v1404 = vld [vmem:[#allocation8 + $0x2e0] sm:$0xff]
    %v1405 = vld [vmem:[#allocation8 + $0x2e8] sm:$0xff]
    %v1406 = vld [vmem:[#allocation8 + $0x2f0] sm:$0xff]
    %v1407 = vld [vmem:[#allocation8 + $0x2f8] sm:$0xff]
    %v1408 = vld [vmem:[#allocation8 + $0x300] sm:$0xff]
    %v1409 = vld [vmem:[#allocation8 + $0x308] sm:$0xff]
    %v1410 = vld [vmem:[#allocation8 + $0x310] sm:$0xff]
    %v1411 = vld [vmem:[#allocation8 + $0x318] sm:$0xff]
    %v1412 = vld [vmem:[#allocation8 + $0x320] sm:$0xff]
    %v1413 = vld [vmem:[#allocation8 + $0x328] sm:$0xff]
    %v1414 = vld [vmem:[#allocation8 + $0x330] sm:$0xff]
    %v1415 = vld [vmem:[#allocation8 + $0x338] sm:$0xff]
    %v1416 = vld [vmem:[#allocation8 + $0x340] sm:$0xff]
    %v1417 = vld [vmem:[#allocation8 + $0x348] sm:$0xff]
    %v1418 = vld [vmem:[#allocation8 + $0x350] sm:$0xff]
    %v1419 = vld [vmem:[#allocation8 + $0x358] sm:$0xff]
    %v1420 = vld [vmem:[#allocation8 + $0x360] sm:$0xff]
    %v1421 = vld [vmem:[#allocation8 + $0x368] sm:$0xff]
    %v1422 = vld [vmem:[#allocation8 + $0x370] sm:$0xff]
    %v1423 = vld [vmem:[#allocation8 + $0x378] sm:$0xff]
    %v1424 = vld [vmem:[#allocation8 + $0x380] sm:$0xff]
    %v1425 = vld [vmem:[#allocation8 + $0x388] sm:$0xff]
    %v1426 = vld [vmem:[#allocation8 + $0x390] sm:$0xff]
    %v1427 = vld [vmem:[#allocation8 + $0x398] sm:$0xff]
    %v1428 = vld [vmem:[#allocation8 + $0x3a0] sm:$0xff]
    %v1429 = vld [vmem:[#allocation8 + $0x3a8] sm:$0xff]
    %v1430 = vld [vmem:[#allocation8 + $0x3b0] sm:$0xff]
    %v1431 = vld [vmem:[#allocation8 + $0x3b8] sm:$0xff]
    %v1432 = vld [vmem:[#allocation8 + $0x3c0] sm:$0xff]
    %v1433 = vld [vmem:[#allocation8 + $0x3c8] sm:$0xff]
    %v1434 = vld [vmem:[#allocation8 + $0x3d0] sm:$0xff]
    %v1435 = vld [vmem:[#allocation8 + $0x3d8] sm:$0xff]
    %v1436 = vld [vmem:[#allocation8 + $0x3e0] sm:$0xff]
    %v1437 = vld [vmem:[#allocation8 + $0x3e8] sm:$0xff]
    %v1438 = vld [vmem:[#allocation8 + $0x3f0] sm:$0xff]
    %v1439 = vld [vmem:[#allocation8 + $0x3f8] sm:$0xff]
    %v1440 = vld [vmem:[#allocation8 + $0x400] sm:$0xff]
    %v1441 = vld [vmem:[#allocation8 + $0x408] sm:$0xff]
    %v1442 = vld [vmem:[#allocation8 + $0x410] sm:$0xff]
    %v1443 = vld [vmem:[#allocation8 + $0x418] sm:$0xff]
    %v1444 = vld [vmem:[#allocation8 + $0x420] sm:$0xff]
    %v1445 = vld [vmem:[#allocation8 + $0x428] sm:$0xff]
    %v1446 = vld [vmem:[#allocation8 + $0x430] sm:$0xff]
    %v1447 = vld [vmem:[#allocation8 + $0x438] sm:$0xff]
    %v1448 = vld [vmem:[#allocation8 + $0x440] sm:$0xff]
    %v1449 = vld [vmem:[#allocation8 + $0x448] sm:$0xff]
    %v1450 = vld [vmem:[#allocation8 + $0x450] sm:$0xff]
    %v1451 = vld [vmem:[#allocation8 + $0x458] sm:$0xff]
    %v1452 = vld [vmem:[#allocation8 + $0x460] sm:$0xff]
    %v1453 = vld [vmem:[#allocation8 + $0x468] sm:$0xff]
    %v1454 = vld [vmem:[#allocation8 + $0x470] sm:$0xff]
    %v1455 = vld [vmem:[#allocation8 + $0x478] sm:$0xff]
    %v1456 = vld [vmem:[#allocation8 + $0x480] sm:$0xff]
    %v1457 = vld [vmem:[#allocation8 + $0x488] sm:$0xff]
    %v1458 = vld [vmem:[#allocation8 + $0x490] sm:$0xff]
    %v1459 = vld [vmem:[#allocation8 + $0x498] sm:$0xff]
    %v1460 = vld [vmem:[#allocation8 + $0x4a0] sm:$0xff]
    %v1461 = vld [vmem:[#allocation8 + $0x4a8] sm:$0xff]
    %v1462 = vld [vmem:[#allocation8 + $0x4b0] sm:$0xff]
    %v1463 = vld [vmem:[#allocation8 + $0x4b8] sm:$0xff]
    %v1464 = vld [vmem:[#allocation8 + $0x4c0] sm:$0xff]
    %v1465 = vld [vmem:[#allocation8 + $0x4c8] sm:$0xff]
    %v1466 = vld [vmem:[#allocation8 + $0x4d0] sm:$0xff]
    %v1467 = vld [vmem:[#allocation8 + $0x4d8] sm:$0xff]
    %v1468 = vld [vmem:[#allocation8 + $0x4e0] sm:$0xff]
    %v1469 = vld [vmem:[#allocation8 + $0x4e8] sm:$0xff]
    %v1470 = vld [vmem:[#allocation8 + $0x4f0] sm:$0xff]
    %v1471 = vld [vmem:[#allocation8 + $0x4f8] sm:$0xff]
    %v1472 = vld [vmem:[#allocation8 + $0x500] sm:$0xff]
    %v1473 = vld [vmem:[#allocation8 + $0x508] sm:$0xff]
    %v1474 = vld [vmem:[#allocation8 + $0x510] sm:$0xff]
    %v1475 = vld [vmem:[#allocation8 + $0x518] sm:$0xff]
    %v1476 = vld [vmem:[#allocation8 + $0x520] sm:$0xff]
    %v1477 = vld [vmem:[#allocation8 + $0x528] sm:$0xff]
    %v1478 = vld [vmem:[#allocation8 + $0x530] sm:$0xff]
    %v1479 = vld [vmem:[#allocation8 + $0x538] sm:$0xff]
    %v1480 = vld [vmem:[#allocation8 + $0x540] sm:$0xff]
    %v1481 = vld [vmem:[#allocation8 + $0x548] sm:$0xff]
    %v1482 = vld [vmem:[#allocation8 + $0x550] sm:$0xff]
    %v1483 = vld [vmem:[#allocation8 + $0x558] sm:$0xff]
    %v1484 = vld [vmem:[#allocation8 + $0x560] sm:$0xff]
    %v1485 = vld [vmem:[#allocation8 + $0x568] sm:$0xff]
    %v1486 = vld [vmem:[#allocation8 + $0x570] sm:$0xff]
    %v1487 = vld [vmem:[#allocation8 + $0x578] sm:$0xff]
    %v1488 = vld [vmem:[#allocation8 + $0x580] sm:$0xff]
    %v1489 = vld [vmem:[#allocation8 + $0x588] sm:$0xff]
    %v1490 = vld [vmem:[#allocation8 + $0x590] sm:$0xff]
    %v1491 = vld [vmem:[#allocation8 + $0x598] sm:$0xff]
    %v1492 = vld [vmem:[#allocation8 + $0x5a0] sm:$0xff]
    %v1493 = vld [vmem:[#allocation8 + $0x5a8] sm:$0xff]
    %v1494 = vld [vmem:[#allocation8 + $0x5b0] sm:$0xff]
    %v1495 = vld [vmem:[#allocation8 + $0x5b8] sm:$0xff]
    %v1496 = vld [vmem:[#allocation8 + $0x5c0] sm:$0xff]
    %v1497 = vld [vmem:[#allocation8 + $0x5c8] sm:$0xff]
    %v1498 = vld [vmem:[#allocation8 + $0x5d0] sm:$0xff]
    %v1499 = vld [vmem:[#allocation8 + $0x5d8] sm:$0xff]
    %v1500 = vld [vmem:[#allocation8 + $0x5e0] sm:$0xff]
    %v1501 = vld [vmem:[#allocation8 + $0x5e8] sm:$0xff]
    %v1502 = vld [vmem:[#allocation8 + $0x5f0] sm:$0xff]
    %v1503 = vld [vmem:[#allocation8 + $0x5f8] sm:$0xff]
    %v1504 = vld [vmem:[#allocation8 + $0x600] sm:$0xff]
    %v1505 = vld [vmem:[#allocation8 + $0x608] sm:$0xff]
    %v1506 = vld [vmem:[#allocation8 + $0x610] sm:$0xff]
    %v1507 = vld [vmem:[#allocation8 + $0x618] sm:$0xff]
    %v1508 = vld [vmem:[#allocation8 + $0x620] sm:$0xff]
    %v1509 = vld [vmem:[#allocation8 + $0x628] sm:$0xff]
    %v1510 = vld [vmem:[#allocation8 + $0x630] sm:$0xff]
    %v1511 = vld [vmem:[#allocation8 + $0x638] sm:$0xff]
    %v1512 = vld [vmem:[#allocation8 + $0x640] sm:$0xff]
    %v1513 = vld [vmem:[#allocation8 + $0x648] sm:$0xff]
    %v1514 = vld [vmem:[#allocation8 + $0x650] sm:$0xff]
    %v1515 = vld [vmem:[#allocation8 + $0x658] sm:$0xff]
    %v1516 = vld [vmem:[#allocation8 + $0x660] sm:$0xff]
    %v1517 = vld [vmem:[#allocation8 + $0x668] sm:$0xff]
    %v1518 = vld [vmem:[#allocation8 + $0x670] sm:$0xff]
    %v1519 = vld [vmem:[#allocation8 + $0x678] sm:$0xff]
    %v1520 = vld [vmem:[#allocation8 + $0x680] sm:$0xff]
    %v1521 = vld [vmem:[#allocation8 + $0x688] sm:$0xff]
    %v1522 = vld [vmem:[#allocation8 + $0x690] sm:$0xff]
    %v1523 = vld [vmem:[#allocation8 + $0x698] sm:$0xff]
    %v1524 = vld [vmem:[#allocation8 + $0x6a0] sm:$0xff]
    %v1525 = vld [vmem:[#allocation8 + $0x6a8] sm:$0xff]
    %v1526 = vld [vmem:[#allocation8 + $0x6b0] sm:$0xff]
    %v1527 = vld [vmem:[#allocation8 + $0x6b8] sm:$0xff]
    %v1528 = vld [vmem:[#allocation8 + $0x6c0] sm:$0xff]
    %v1529 = vld [vmem:[#allocation8 + $0x6c8] sm:$0xff]
    %v1530 = vld [vmem:[#allocation8 + $0x6d0] sm:$0xff]
    %v1531 = vld [vmem:[#allocation8 + $0x6d8] sm:$0xff]
    %v1532 = vld [vmem:[#allocation8 + $0x6e0] sm:$0xff]
    %v1533 = vld [vmem:[#allocation8 + $0x6e8] sm:$0xff]
    %v1534 = vld [vmem:[#allocation8 + $0x6f0] sm:$0xff]
    %v1535 = vld [vmem:[#allocation8 + $0x6f8] sm:$0xff]
    %v1536 = vld [vmem:[#allocation8 + $0x700] sm:$0xff]
    %v1537 = vld [vmem:[#allocation8 + $0x708] sm:$0xff]
    %v1538 = vld [vmem:[#allocation8 + $0x710] sm:$0xff]
    %v1539 = vld [vmem:[#allocation8 + $0x718] sm:$0xff]
    %v1540 = vld [vmem:[#allocation8 + $0x720] sm:$0xff]
    %v1541 = vld [vmem:[#allocation8 + $0x728] sm:$0xff]
    %v1542 = vld [vmem:[#allocation8 + $0x730] sm:$0xff]
    %v1543 = vld [vmem:[#allocation8 + $0x738] sm:$0xff]
    %v1544 = vld [vmem:[#allocation8 + $0x740] sm:$0xff]
    %v1545 = vld [vmem:[#allocation8 + $0x748] sm:$0xff]
    %v1546 = vld [vmem:[#allocation8 + $0x750] sm:$0xff]
    %v1547 = vld [vmem:[#allocation8 + $0x758] sm:$0xff]
    %v1548 = vld [vmem:[#allocation8 + $0x760] sm:$0xff]
    %v1549 = vld [vmem:[#allocation8 + $0x768] sm:$0xff]
    %v1550 = vld [vmem:[#allocation8 + $0x770] sm:$0xff]
    %v1551 = vld [vmem:[#allocation8 + $0x778] sm:$0xff]
    %v1552 = vld [vmem:[#allocation8 + $0x780] sm:$0xff]
    %v1553 = vld [vmem:[#allocation8 + $0x788] sm:$0xff]
    %v1554 = vld [vmem:[#allocation8 + $0x790] sm:$0xff]
    %v1555 = vld [vmem:[#allocation8 + $0x798] sm:$0xff]
    %v1556 = vld [vmem:[#allocation8 + $0x7a0] sm:$0xff]
    %v1557 = vld [vmem:[#allocation8 + $0x7a8] sm:$0xff]
    %v1558 = vld [vmem:[#allocation8 + $0x7b0] sm:$0xff]
    %v1559 = vld [vmem:[#allocation8 + $0x7b8] sm:$0xff]
    %v1560 = vld [vmem:[#allocation8 + $0x7c0] sm:$0xff]
    %v1561 = vld [vmem:[#allocation8 + $0x7c8] sm:$0xff]
    %v1562 = vld [vmem:[#allocation8 + $0x7d0] sm:$0xff]
    %v1563 = vld [vmem:[#allocation8 + $0x7d8] sm:$0xff]
    %v1564 = vld [vmem:[#allocation8 + $0x7e0] sm:$0xff]
    %v1565 = vld [vmem:[#allocation8 + $0x7e8] sm:$0xff]
    %v1566 = vld [vmem:[#allocation8 + $0x7f0] sm:$0xff]
    %v1567 = vld [vmem:[#allocation8 + $0x7f8] sm:$0xff]
    %v1568 = vld [vmem:[#allocation8 + $0x800] sm:$0xff]
    %v1569 = vld [vmem:[#allocation8 + $0x808] sm:$0xff]
    %v1570 = vld [vmem:[#allocation8 + $0x810] sm:$0xff]
    %v1571 = vld [vmem:[#allocation8 + $0x818] sm:$0xff]
    %v1572 = vld [vmem:[#allocation8 + $0x820] sm:$0xff]
    %v1573 = vld [vmem:[#allocation8 + $0x828] sm:$0xff]
    %v1574 = vld [vmem:[#allocation8 + $0x830] sm:$0xff]
    %v1575 = vld [vmem:[#allocation8 + $0x838] sm:$0xff]
    %v1576 = vld [vmem:[#allocation8 + $0x840] sm:$0xff]
    %v1577 = vld [vmem:[#allocation8 + $0x848] sm:$0xff]
    %v1578 = vld [vmem:[#allocation8 + $0x850] sm:$0xff]
    %v1579 = vld [vmem:[#allocation8 + $0x858] sm:$0xff]
    %v1580 = vld [vmem:[#allocation8 + $0x860] sm:$0xff]
    %v1581 = vld [vmem:[#allocation8 + $0x868] sm:$0xff]
    %v1582 = vld [vmem:[#allocation8 + $0x870] sm:$0xff]
    %v1583 = vld [vmem:[#allocation8 + $0x878] sm:$0xff]
    %v1584 = vld [vmem:[#allocation8 + $0x880] sm:$0xff]
    %v1585 = vld [vmem:[#allocation8 + $0x888] sm:$0xff]
    %v1586 = vld [vmem:[#allocation8 + $0x890] sm:$0xff]
    %v1587 = vld [vmem:[#allocation8 + $0x898] sm:$0xff]
    %v1588 = vld [vmem:[#allocation8 + $0x8a0] sm:$0xff]
    %v1589 = vld [vmem:[#allocation8 + $0x8a8] sm:$0xff]
    %v1590 = vld [vmem:[#allocation8 + $0x8b0] sm:$0xff]
    %v1591 = vld [vmem:[#allocation8 + $0x8b8] sm:$0xff]
    %v1592 = vld [vmem:[#allocation8 + $0x8c0] sm:$0xff]
    %v1593 = vld [vmem:[#allocation8 + $0x8c8] sm:$0xff]
    %v1594 = vld [vmem:[#allocation8 + $0x8d0] sm:$0xff]
    %v1595 = vld [vmem:[#allocation8 + $0x8d8] sm:$0xff]
    %v1596 = vld [vmem:[#allocation8 + $0x8e0] sm:$0xff]
    %v1597 = vld [vmem:[#allocation8 + $0x8e8] sm:$0xff]
    %v1598 = vld [vmem:[#allocation8 + $0x8f0] sm:$0xff]
    %v1599 = vld [vmem:[#allocation8 + $0x8f8] sm:$0xff]
    %v1600 = vld [vmem:[#allocation8 + $0x900] sm:$0xff]
    %v1601 = vld [vmem:[#allocation8 + $0x908] sm:$0xff]
    %v1602 = vld [vmem:[#allocation8 + $0x910] sm:$0xff]
    %v1603 = vld [vmem:[#allocation8 + $0x918] sm:$0xff]
    %v1604 = vld [vmem:[#allocation8 + $0x920] sm:$0xff]
    %v1605 = vld [vmem:[#allocation8 + $0x928] sm:$0xff]
    %v1606 = vld [vmem:[#allocation8 + $0x930] sm:$0xff]
    %v1607 = vld [vmem:[#allocation8 + $0x938] sm:$0xff]
    %v1608 = vld [vmem:[#allocation8 + $0x940] sm:$0xff]
    %v1609 = vld [vmem:[#allocation8 + $0x948] sm:$0xff]
    %v1610 = vld [vmem:[#allocation8 + $0x950] sm:$0xff]
    %v1611 = vld [vmem:[#allocation8 + $0x958] sm:$0xff]
    %v1612 = vld [vmem:[#allocation8 + $0x960] sm:$0xff]
    %v1613 = vld [vmem:[#allocation8 + $0x968] sm:$0xff]
    %v1614 = vld [vmem:[#allocation8 + $0x970] sm:$0xff]
    %v1615 = vld [vmem:[#allocation8 + $0x978] sm:$0xff]
    %v1616 = vld [vmem:[#allocation8 + $0x980] sm:$0xff]
    %v1617 = vld [vmem:[#allocation8 + $0x988] sm:$0xff]
    %v1618 = vld [vmem:[#allocation8 + $0x990] sm:$0xff]
    %v1619 = vld [vmem:[#allocation8 + $0x998] sm:$0xff]
    %v1620 = vld [vmem:[#allocation8 + $0x9a0] sm:$0xff]
    %v1621 = vld [vmem:[#allocation8 + $0x9a8] sm:$0xff]
    %v1622 = vld [vmem:[#allocation8 + $0x9b0] sm:$0xff]
    %v1623 = vld [vmem:[#allocation8 + $0x9b8] sm:$0xff]
    %v1624 = vld [vmem:[#allocation8 + $0x9c0] sm:$0xff]
    %v1625 = vld [vmem:[#allocation8 + $0x9c8] sm:$0xff]
    %v1626 = vld [vmem:[#allocation8 + $0x9d0] sm:$0xff]
    %v1627 = vld [vmem:[#allocation8 + $0x9d8] sm:$0xff]
    %v1628 = vld [vmem:[#allocation8 + $0x9e0] sm:$0xff]
    %v1629 = vld [vmem:[#allocation8 + $0x9e8] sm:$0xff]
    %v1630 = vld [vmem:[#allocation8 + $0x9f0] sm:$0xff]
    %v1631 = vld [vmem:[#allocation8 + $0x9f8] sm:$0xff]
    %v1632 = vld [vmem:[#allocation8 + $0xa00] sm:$0xff]
    %v1633 = vld [vmem:[#allocation8 + $0xa08] sm:$0xff]
    %v1634 = vld [vmem:[#allocation8 + $0xa10] sm:$0xff]
    %v1635 = vld [vmem:[#allocation8 + $0xa18] sm:$0xff]
    %v1636 = vld [vmem:[#allocation8 + $0xa20] sm:$0xff]
    %v1637 = vld [vmem:[#allocation8 + $0xa28] sm:$0xff]
    %v1638 = vld [vmem:[#allocation8 + $0xa30] sm:$0xff]
    %v1639 = vld [vmem:[#allocation8 + $0xa38] sm:$0xff]
    %v1640 = vld [vmem:[#allocation8 + $0xa40] sm:$0xff]
    %v1641 = vld [vmem:[#allocation8 + $0xa48] sm:$0xff]
    %v1642 = vld [vmem:[#allocation8 + $0xa50] sm:$0xff]
    %v1643 = vld [vmem:[#allocation8 + $0xa58] sm:$0xff]
    %v1644 = vld [vmem:[#allocation8 + $0xa60] sm:$0xff]
    %v1645 = vld [vmem:[#allocation8 + $0xa68] sm:$0xff]
    %v1646 = vld [vmem:[#allocation8 + $0xa70] sm:$0xff]
    %v1647 = vld [vmem:[#allocation8 + $0xa78] sm:$0xff]
    %v1648 = vld [vmem:[#allocation8 + $0xa80] sm:$0xff]
    %v1649 = vld [vmem:[#allocation8 + $0xa88] sm:$0xff]
    %v1650 = vld [vmem:[#allocation8 + $0xa90] sm:$0xff]
    %v1651 = vld [vmem:[#allocation8 + $0xa98] sm:$0xff]
    %v1652 = vld [vmem:[#allocation8 + $0xaa0] sm:$0xff]
    %v1653 = vld [vmem:[#allocation8 + $0xaa8] sm:$0xff]
    %v1654 = vld [vmem:[#allocation8 + $0xab0] sm:$0xff]
    %v1655 = vld [vmem:[#allocation8 + $0xab8] sm:$0xff]
    %v1656 = vld [vmem:[#allocation8 + $0xac0] sm:$0xff]
    %v1657 = vld [vmem:[#allocation8 + $0xac8] sm:$0xff]
    %v1658 = vld [vmem:[#allocation8 + $0xad0] sm:$0xff]
    %v1659 = vld [vmem:[#allocation8 + $0xad8] sm:$0xff]
    %v1660 = vld [vmem:[#allocation8 + $0xae0] sm:$0xff]
    %v1661 = vld [vmem:[#allocation8 + $0xae8] sm:$0xff]
    %v1662 = vld [vmem:[#allocation8 + $0xaf0] sm:$0xff]
    %v1663 = vld [vmem:[#allocation8 + $0xaf8] sm:$0xff]
    %v1664 = vld [vmem:[#allocation8 + $0xb00] sm:$0xff]
    %v1665 = vld [vmem:[#allocation8 + $0xb08] sm:$0xff]
    %v1666 = vld [vmem:[#allocation8 + $0xb10] sm:$0xff]
    %v1667 = vld [vmem:[#allocation8 + $0xb18] sm:$0xff]
    %v1668 = vld [vmem:[#allocation8 + $0xb20] sm:$0xff]
    %v1669 = vld [vmem:[#allocation8 + $0xb28] sm:$0xff]
    %v1670 = vld [vmem:[#allocation8 + $0xb30] sm:$0xff]
    %v1671 = vld [vmem:[#allocation8 + $0xb38] sm:$0xff]
    %v1672 = vld [vmem:[#allocation8 + $0xb40] sm:$0xff]
    %v1673 = vld [vmem:[#allocation8 + $0xb48] sm:$0xff]
    %v1674 = vld [vmem:[#allocation8 + $0xb50] sm:$0xff]
    %v1675 = vld [vmem:[#allocation8 + $0xb58] sm:$0xff]
    %v1676 = vld [vmem:[#allocation8 + $0xb60] sm:$0xff]
    %v1677 = vld [vmem:[#allocation8 + $0xb68] sm:$0xff]
    %v1678 = vld [vmem:[#allocation8 + $0xb70] sm:$0xff]
    %v1679 = vld [vmem:[#allocation8 + $0xb78] sm:$0xff]
    %v1680 = vld [vmem:[#allocation8 + $0xb80] sm:$0xff]
    %v1681 = vld [vmem:[#allocation8 + $0xb88] sm:$0xff]
    %v1682 = vld [vmem:[#allocation8 + $0xb90] sm:$0xff]
    %v1683 = vld [vmem:[#allocation8 + $0xb98] sm:$0xff]
    %v1684 = vld [vmem:[#allocation8 + $0xba0] sm:$0xff]
    %v1685 = vld [vmem:[#allocation8 + $0xba8] sm:$0xff]
    %v1686 = vld [vmem:[#allocation8 + $0xbb0] sm:$0xff]
    %v1687 = vld [vmem:[#allocation8 + $0xbb8] sm:$0xff]
    %v1688 = vld [vmem:[#allocation8 + $0xbc0] sm:$0xff]
    %v1689 = vld [vmem:[#allocation8 + $0xbc8] sm:$0xff]
    %v1690 = vld [vmem:[#allocation8 + $0xbd0] sm:$0xff]
    %v1691 = vld [vmem:[#allocation8 + $0xbd8] sm:$0xff]
    %v1692 = vld [vmem:[#allocation8 + $0xbe0] sm:$0xff]
    %v1693 = vld [vmem:[#allocation8 + $0xbe8] sm:$0xff]
    %v1694 = vld [vmem:[#allocation8 + $0xbf0] sm:$0xff]
    %v1695 = vld [vmem:[#allocation8 + $0xbf8] sm:$0xff]
    %v1696 = vld [vmem:[#allocation8 + $0xc00] sm:$0xff]
    %v1697 = vld [vmem:[#allocation8 + $0xc08] sm:$0xff]
    %v1698 = vld [vmem:[#allocation8 + $0xc10] sm:$0xff]
    %v1699 = vld [vmem:[#allocation8 + $0xc18] sm:$0xff]
    %v1700 = vld [vmem:[#allocation8 + $0xc20] sm:$0xff]
    %v1701 = vld [vmem:[#allocation8 + $0xc28] sm:$0xff]
    %v1702 = vld [vmem:[#allocation8 + $0xc30] sm:$0xff]
    %v1703 = vld [vmem:[#allocation8 + $0xc38] sm:$0xff]
    %v1704 = vld [vmem:[#allocation8 + $0xc40] sm:$0xff]
    %v1705 = vld [vmem:[#allocation8 + $0xc48] sm:$0xff]
    %v1706 = vld [vmem:[#allocation8 + $0xc50] sm:$0xff]
    %v1707 = vld [vmem:[#allocation8 + $0xc58] sm:$0xff]
    %v1708 = vld [vmem:[#allocation8 + $0xc60] sm:$0xff]
    %v1709 = vld [vmem:[#allocation8 + $0xc68] sm:$0xff]
    %v1710 = vld [vmem:[#allocation8 + $0xc70] sm:$0xff]
    %v1711 = vld [vmem:[#allocation8 + $0xc78] sm:$0xff]
    %v1712 = vld [vmem:[#allocation8 + $0xc80] sm:$0xff]
    %v1713 = vld [vmem:[#allocation8 + $0xc88] sm:$0xff]
    %v1714 = vld [vmem:[#allocation8 + $0xc90] sm:$0xff]
    %v1715 = vld [vmem:[#allocation8 + $0xc98] sm:$0xff]
    %v1716 = vld [vmem:[#allocation8 + $0xca0] sm:$0xff]
    %v1717 = vld [vmem:[#allocation8 + $0xca8] sm:$0xff]
    %v1718 = vld [vmem:[#allocation8 + $0xcb0] sm:$0xff]
    %v1719 = vld [vmem:[#allocation8 + $0xcb8] sm:$0xff]
    %v1720 = vld [vmem:[#allocation8 + $0xcc0] sm:$0xff]
    %v1721 = vld [vmem:[#allocation8 + $0xcc8] sm:$0xff]
    %v1722 = vld [vmem:[#allocation8 + $0xcd0] sm:$0xff]
    %v1723 = vld [vmem:[#allocation8 + $0xcd8] sm:$0xff]
    %v1724 = vld [vmem:[#allocation8 + $0xce0] sm:$0xff]
    %v1725 = vld [vmem:[#allocation8 + $0xce8] sm:$0xff]
    %v1726 = vld [vmem:[#allocation8 + $0xcf0] sm:$0xff]
    %v1727 = vld [vmem:[#allocation8 + $0xcf8] sm:$0xff]
    %v1728 = vld [vmem:[#allocation8 + $0xd00] sm:$0xff]
    %v1729 = vld [vmem:[#allocation8 + $0xd08] sm:$0xff]
    %v1730 = vld [vmem:[#allocation8 + $0xd10] sm:$0xff]
    %v1731 = vld [vmem:[#allocation8 + $0xd18] sm:$0xff]
    %v1732 = vld [vmem:[#allocation8 + $0xd20] sm:$0xff]
    %v1733 = vld [vmem:[#allocation8 + $0xd28] sm:$0xff]
    %v1734 = vld [vmem:[#allocation8 + $0xd30] sm:$0xff]
    %v1735 = vld [vmem:[#allocation8 + $0xd38] sm:$0xff]
    %v1736 = vld [vmem:[#allocation8 + $0xd40] sm:$0xff]
    %v1737 = vld [vmem:[#allocation8 + $0xd48] sm:$0xff]
    %v1738 = vld [vmem:[#allocation8 + $0xd50] sm:$0xff]
    %v1739 = vld [vmem:[#allocation8 + $0xd58] sm:$0xff]
    %v1740 = vld [vmem:[#allocation8 + $0xd60] sm:$0xff]
    %v1741 = vld [vmem:[#allocation8 + $0xd68] sm:$0xff]
    %v1742 = vld [vmem:[#allocation8 + $0xd70] sm:$0xff]
    %v1743 = vld [vmem:[#allocation8 + $0xd78] sm:$0xff]
    %v1744 = vld [vmem:[#allocation8 + $0xd80] sm:$0xff]
    %v1745 = vld [vmem:[#allocation8 + $0xd88] sm:$0xff]
    %v1746 = vld [vmem:[#allocation8 + $0xd90] sm:$0xff]
    %v1747 = vld [vmem:[#allocation8 + $0xd98] sm:$0xff]
    %v1748 = vld [vmem:[#allocation8 + $0xda0] sm:$0xff]
    %v1749 = vld [vmem:[#allocation8 + $0xda8] sm:$0xff]
    %v1750 = vld [vmem:[#allocation8 + $0xdb0] sm:$0xff]
    %v1751 = vld [vmem:[#allocation8 + $0xdb8] sm:$0xff]
    %v1752 = vld [vmem:[#allocation8 + $0xdc0] sm:$0xff]
    %v1753 = vld [vmem:[#allocation8 + $0xdc8] sm:$0xff]
    %v1754 = vld [vmem:[#allocation8 + $0xdd0] sm:$0xff]
    %v1755 = vld [vmem:[#allocation8 + $0xdd8] sm:$0xff]
    %v1756 = vld [vmem:[#allocation8 + $0xde0] sm:$0xff]
    %v1757 = vld [vmem:[#allocation8 + $0xde8] sm:$0xff]
    %v1758 = vld [vmem:[#allocation8 + $0xdf0] sm:$0xff]
    %v1759 = vld [vmem:[#allocation8 + $0xdf8] sm:$0xff]
    %v1760 = vld [vmem:[#allocation8 + $0xe00] sm:$0xff]
    %v1761 = vld [vmem:[#allocation8 + $0xe08] sm:$0xff]
    %v1762 = vld [vmem:[#allocation8 + $0xe10] sm:$0xff]
    %v1763 = vld [vmem:[#allocation8 + $0xe18] sm:$0xff]
    %v1764 = vld [vmem:[#allocation8 + $0xe20] sm:$0xff]
    %v1765 = vld [vmem:[#allocation8 + $0xe28] sm:$0xff]
    %v1766 = vld [vmem:[#allocation8 + $0xe30] sm:$0xff]
    %v1767 = vld [vmem:[#allocation8 + $0xe38] sm:$0xff]
    %v1768 = vld [vmem:[#allocation8 + $0xe40] sm:$0xff]
    %v1769 = vld [vmem:[#allocation8 + $0xe48] sm:$0xff]
    %v1770 = vld [vmem:[#allocation8 + $0xe50] sm:$0xff]
    %v1771 = vld [vmem:[#allocation8 + $0xe58] sm:$0xff]
    %v1772 = vld [vmem:[#allocation8 + $0xe60] sm:$0xff]
    %v1773 = vld [vmem:[#allocation8 + $0xe68] sm:$0xff]
    %v1774 = vld [vmem:[#allocation8 + $0xe70] sm:$0xff]
    %v1775 = vld [vmem:[#allocation8 + $0xe78] sm:$0xff]
    %v1776 = vld [vmem:[#allocation8 + $0xe80] sm:$0xff]
    %v1777 = vld [vmem:[#allocation8 + $0xe88] sm:$0xff]
    %v1778 = vld [vmem:[#allocation8 + $0xe90] sm:$0xff]
    %v1779 = vld [vmem:[#allocation8 + $0xe98] sm:$0xff]
    %v1780 = vld [vmem:[#allocation8 + $0xea0] sm:$0xff]
    %v1781 = vld [vmem:[#allocation8 + $0xea8] sm:$0xff]
    %v1782 = vld [vmem:[#allocation8 + $0xeb0] sm:$0xff]
    %v1783 = vld [vmem:[#allocation8 + $0xeb8] sm:$0xff]
    %v1784 = vld [vmem:[#allocation8 + $0xec0] sm:$0xff]
    %v1785 = vld [vmem:[#allocation8 + $0xec8] sm:$0xff]
    %v1786 = vld [vmem:[#allocation8 + $0xed0] sm:$0xff]
    %v1787 = vld [vmem:[#allocation8 + $0xed8] sm:$0xff]
    %v1788 = vld [vmem:[#allocation8 + $0xee0] sm:$0xff]
    %v1789 = vld [vmem:[#allocation8 + $0xee8] sm:$0xff]
    %v1790 = vld [vmem:[#allocation8 + $0xef0] sm:$0xff]
    %v1791 = vld [vmem:[#allocation8 + $0xef8] sm:$0xff]
    %v1792 = vld [vmem:[#allocation8 + $0xf00] sm:$0xff]
    %v1793 = vld [vmem:[#allocation8 + $0xf08] sm:$0xff]
    %v1794 = vld [vmem:[#allocation8 + $0xf10] sm:$0xff]
    %v1795 = vld [vmem:[#allocation8 + $0xf18] sm:$0xff]
    %v1796 = vld [vmem:[#allocation8 + $0xf20] sm:$0xff]
    %v1797 = vld [vmem:[#allocation8 + $0xf28] sm:$0xff]
    %v1798 = vld [vmem:[#allocation8 + $0xf30] sm:$0xff]
    %v1799 = vld [vmem:[#allocation8 + $0xf38] sm:$0xff]
    %v1800 = vld [vmem:[#allocation8 + $0xf40] sm:$0xff]
    %v1801 = vld [vmem:[#allocation8 + $0xf48] sm:$0xff]
    %v1802 = vld [vmem:[#allocation8 + $0xf50] sm:$0xff]
    %v1803 = vld [vmem:[#allocation8 + $0xf58] sm:$0xff]
    %v1804 = vld [vmem:[#allocation8 + $0xf60] sm:$0xff]
    %v1805 = vld [vmem:[#allocation8 + $0xf68] sm:$0xff]
    %v1806 = vld [vmem:[#allocation8 + $0xf70] sm:$0xff]
    %v1807 = vld [vmem:[#allocation8 + $0xf78] sm:$0xff]
    %v1808 = vld [vmem:[#allocation8 + $0xf80] sm:$0xff]
    %v1809 = vld [vmem:[#allocation8 + $0xf88] sm:$0xff]
    %v1810 = vld [vmem:[#allocation8 + $0xf90] sm:$0xff]
    %v1811 = vld [vmem:[#allocation8 + $0xf98] sm:$0xff]
    %v1812 = vld [vmem:[#allocation8 + $0xfa0] sm:$0xff]
    %v1813 = vld [vmem:[#allocation8 + $0xfa8] sm:$0xff]
    %v1814 = vld [vmem:[#allocation8 + $0xfb0] sm:$0xff]
    %v1815 = vld [vmem:[#allocation8 + $0xfb8] sm:$0xff]
    %v1816 = vld [vmem:[#allocation8 + $0xfc0] sm:$0xff]
    %v1817 = vld [vmem:[#allocation8 + $0xfc8] sm:$0xff]
    %v1818 = vld [vmem:[#allocation8 + $0xfd0] sm:$0xff]
    %v1819 = vld [vmem:[#allocation8 + $0xfd8] sm:$0xff]
    %v1820 = vld [vmem:[#allocation8 + $0xfe0] sm:$0xff]
    %v1821 = vld [vmem:[#allocation8 + $0xfe8] sm:$0xff]
    %v1822 = vld [vmem:[#allocation8 + $0xff0] sm:$0xff]
    %v1823 = vld [vmem:[#allocation8 + $0xff8] sm:$0xff]
    %v1824 = vld [vmem:[#allocation10] sm:$0xf]
    %v1826 = vlaneseq
    %v1827 = vshrl.u32 %v1826, 7
    %v1828 = vsub.s32 0, %v1827
    %v1829 = vrot.slane %v1824, %v1828
    %v1830 = vlaneseq
    %v1831 = vshrl.u32 %v1830, 7
    %v1832 = vsub.s32 1, %v1831
    %v1833 = vrot.slane %v1824, %v1832
    %v1834 = vlaneseq
    %v1835 = vshrl.u32 %v1834, 7
    %v1836 = vsub.s32 2, %v1835
    %v1837 = vrot.slane %v1824, %v1836
    %v1838 = vlaneseq
    %v1839 = vshrl.u32 %v1838, 7
    %v1840 = vsub.s32 3, %v1839
    %v1841 = vrot.slane %v1824, %v1840
    %v2358 = vunpack.c.l.b16 %v1312
    %v2359 = vunpack.c.h.b16 %v1312
    %v2360 = vunpack.c.l.b16 %v1313
    %v2361 = vunpack.c.h.b16 %v1313
    %v2362 = vunpack.c.l.b16 %v1314
    %v2363 = vunpack.c.h.b16 %v1314
    %v2364 = vunpack.c.l.b16 %v1315
    %v2365 = vunpack.c.h.b16 %v1315
    %v2366 = vunpack.c.l.b16 %v1316
    %v2367 = vunpack.c.h.b16 %v1316
    %v2368 = vunpack.c.l.b16 %v1317
    %v2369 = vunpack.c.h.b16 %v1317
    %v2370 = vunpack.c.l.b16 %v1318
    %v2371 = vunpack.c.h.b16 %v1318
    %v2372 = vunpack.c.l.b16 %v1319
    %v2373 = vunpack.c.h.b16 %v1319
    %v2374 = vunpack.c.l.b16 %v1320
    %v2375 = vunpack.c.h.b16 %v1320
    %v2376 = vunpack.c.l.b16 %v1321
    %v2377 = vunpack.c.h.b16 %v1321
    %v2378 = vunpack.c.l.b16 %v1322
    %v2379 = vunpack.c.h.b16 %v1322
    %v2380 = vunpack.c.l.b16 %v1323
    %v2381 = vunpack.c.h.b16 %v1323
    %v2382 = vunpack.c.l.b16 %v1324
    %v2383 = vunpack.c.h.b16 %v1324
    %v2384 = vunpack.c.l.b16 %v1325
    %v2385 = vunpack.c.h.b16 %v1325
    %v2386 = vunpack.c.l.b16 %v1326
    %v2387 = vunpack.c.h.b16 %v1326
    %v2388 = vunpack.c.l.b16 %v1327
    %v2389 = vunpack.c.h.b16 %v1327
    %v2390 = vunpack.c.l.b16 %v1328
    %v2391 = vunpack.c.h.b16 %v1328
    %v2392 = vunpack.c.l.b16 %v1329
    %v2393 = vunpack.c.h.b16 %v1329
    %v2394 = vunpack.c.l.b16 %v1330
    %v2395 = vunpack.c.h.b16 %v1330
    %v2396 = vunpack.c.l.b16 %v1331
    %v2397 = vunpack.c.h.b16 %v1331
    %v2398 = vunpack.c.l.b16 %v1332
    %v2399 = vunpack.c.h.b16 %v1332
    %v2400 = vunpack.c.l.b16 %v1333
    %v2401 = vunpack.c.h.b16 %v1333
    %v2402 = vunpack.c.l.b16 %v1334
    %v2403 = vunpack.c.h.b16 %v1334
    %v2404 = vunpack.c.l.b16 %v1335
    %v2405 = vunpack.c.h.b16 %v1335
    %v2406 = vunpack.c.l.b16 %v1336
    %v2407 = vunpack.c.h.b16 %v1336
    %v2408 = vunpack.c.l.b16 %v1337
    %v2409 = vunpack.c.h.b16 %v1337
    %v2410 = vunpack.c.l.b16 %v1338
    %v2411 = vunpack.c.h.b16 %v1338
    %v2412 = vunpack.c.l.b16 %v1339
    %v2413 = vunpack.c.h.b16 %v1339
    %v2414 = vunpack.c.l.b16 %v1340
    %v2415 = vunpack.c.h.b16 %v1340
    %v2416 = vunpack.c.l.b16 %v1341
    %v2417 = vunpack.c.h.b16 %v1341
    %v2418 = vunpack.c.l.b16 %v1342
    %v2419 = vunpack.c.h.b16 %v1342
    %v2420 = vunpack.c.l.b16 %v1343
    %v2421 = vunpack.c.h.b16 %v1343
    %v2422 = vunpack.c.l.b16 %v1344
    %v2423 = vunpack.c.h.b16 %v1344
    %v2424 = vunpack.c.l.b16 %v1345
    %v2425 = vunpack.c.h.b16 %v1345
    %v2426 = vunpack.c.l.b16 %v1346
    %v2427 = vunpack.c.h.b16 %v1346
    %v2428 = vunpack.c.l.b16 %v1347
    %v2429 = vunpack.c.h.b16 %v1347
    %v2430 = vunpack.c.l.b16 %v1348
    %v2431 = vunpack.c.h.b16 %v1348
    %v2432 = vunpack.c.l.b16 %v1349
    %v2433 = vunpack.c.h.b16 %v1349
    %v2434 = vunpack.c.l.b16 %v1350
    %v2435 = vunpack.c.h.b16 %v1350
    %v2436 = vunpack.c.l.b16 %v1351
    %v2437 = vunpack.c.h.b16 %v1351
    %v2438 = vunpack.c.l.b16 %v1352
    %v2439 = vunpack.c.h.b16 %v1352
    %v2440 = vunpack.c.l.b16 %v1353
    %v2441 = vunpack.c.h.b16 %v1353
    %v2442 = vunpack.c.l.b16 %v1354
    %v2443 = vunpack.c.h.b16 %v1354
    %v2444 = vunpack.c.l.b16 %v1355
    %v2445 = vunpack.c.h.b16 %v1355
    %v2446 = vunpack.c.l.b16 %v1356
    %v2447 = vunpack.c.h.b16 %v1356
    %v2448 = vunpack.c.l.b16 %v1357
    %v2449 = vunpack.c.h.b16 %v1357
    %v2450 = vunpack.c.l.b16 %v1358
    %v2451 = vunpack.c.h.b16 %v1358
    %v2452 = vunpack.c.l.b16 %v1359
    %v2453 = vunpack.c.h.b16 %v1359
    %v2454 = vunpack.c.l.b16 %v1360
    %v2455 = vunpack.c.h.b16 %v1360
    %v2456 = vunpack.c.l.b16 %v1361
    %v2457 = vunpack.c.h.b16 %v1361
    %v2458 = vunpack.c.l.b16 %v1362
    %v2459 = vunpack.c.h.b16 %v1362
    %v2460 = vunpack.c.l.b16 %v1363
    %v2461 = vunpack.c.h.b16 %v1363
    %v2462 = vunpack.c.l.b16 %v1364
    %v2463 = vunpack.c.h.b16 %v1364
    %v2464 = vunpack.c.l.b16 %v1365
    %v2465 = vunpack.c.h.b16 %v1365
    %v2466 = vunpack.c.l.b16 %v1366
    %v2467 = vunpack.c.h.b16 %v1366
    %v2468 = vunpack.c.l.b16 %v1367
    %v2469 = vunpack.c.h.b16 %v1367
    %v2470 = vunpack.c.l.b16 %v1368
    %v2471 = vunpack.c.h.b16 %v1368
    %v2472 = vunpack.c.l.b16 %v1369
    %v2473 = vunpack.c.h.b16 %v1369
    %v2474 = vunpack.c.l.b16 %v1370
    %v2475 = vunpack.c.h.b16 %v1370
    %v2476 = vunpack.c.l.b16 %v1371
    %v2477 = vunpack.c.h.b16 %v1371
    %v2478 = vunpack.c.l.b16 %v1372
    %v2479 = vunpack.c.h.b16 %v1372
    %v2480 = vunpack.c.l.b16 %v1373
    %v2481 = vunpack.c.h.b16 %v1373
    %v2482 = vunpack.c.l.b16 %v1374
    %v2483 = vunpack.c.h.b16 %v1374
    %v2484 = vunpack.c.l.b16 %v1375
    %v2485 = vunpack.c.h.b16 %v1375
    %v2486 = vunpack.c.l.b16 %v1376
    %v2487 = vunpack.c.h.b16 %v1376
    %v2488 = vunpack.c.l.b16 %v1377
    %v2489 = vunpack.c.h.b16 %v1377
    %v2490 = vunpack.c.l.b16 %v1378
    %v2491 = vunpack.c.h.b16 %v1378
    %v2492 = vunpack.c.l.b16 %v1379
    %v2493 = vunpack.c.h.b16 %v1379
    %v2494 = vunpack.c.l.b16 %v1380
    %v2495 = vunpack.c.h.b16 %v1380
    %v2496 = vunpack.c.l.b16 %v1381
    %v2497 = vunpack.c.h.b16 %v1381
    %v2498 = vunpack.c.l.b16 %v1382
    %v2499 = vunpack.c.h.b16 %v1382
    %v2500 = vunpack.c.l.b16 %v1383
    %v2501 = vunpack.c.h.b16 %v1383
    %v2502 = vunpack.c.l.b16 %v1384
    %v2503 = vunpack.c.h.b16 %v1384
    %v2504 = vunpack.c.l.b16 %v1385
    %v2505 = vunpack.c.h.b16 %v1385
    %v2506 = vunpack.c.l.b16 %v1386
    %v2507 = vunpack.c.h.b16 %v1386
    %v2508 = vunpack.c.l.b16 %v1387
    %v2509 = vunpack.c.h.b16 %v1387
    %v2510 = vunpack.c.l.b16 %v1388
    %v2511 = vunpack.c.h.b16 %v1388
    %v2512 = vunpack.c.l.b16 %v1389
    %v2513 = vunpack.c.h.b16 %v1389
    %v2514 = vunpack.c.l.b16 %v1390
    %v2515 = vunpack.c.h.b16 %v1390
    %v2516 = vunpack.c.l.b16 %v1391
    %v2517 = vunpack.c.h.b16 %v1391
    %v2518 = vunpack.c.l.b16 %v1392
    %v2519 = vunpack.c.h.b16 %v1392
    %v2520 = vunpack.c.l.b16 %v1393
    %v2521 = vunpack.c.h.b16 %v1393
    %v2522 = vunpack.c.l.b16 %v1394
    %v2523 = vunpack.c.h.b16 %v1394
    %v2524 = vunpack.c.l.b16 %v1395
    %v2525 = vunpack.c.h.b16 %v1395
    %v2526 = vunpack.c.l.b16 %v1396
    %v2527 = vunpack.c.h.b16 %v1396
    %v2528 = vunpack.c.l.b16 %v1397
    %v2529 = vunpack.c.h.b16 %v1397
    %v2530 = vunpack.c.l.b16 %v1398
    %v2531 = vunpack.c.h.b16 %v1398
    %v2532 = vunpack.c.l.b16 %v1399
    %v2533 = vunpack.c.h.b16 %v1399
    %v2534 = vunpack.c.l.b16 %v1400
    %v2535 = vunpack.c.h.b16 %v1400
    %v2536 = vunpack.c.l.b16 %v1401
    %v2537 = vunpack.c.h.b16 %v1401
    %v2538 = vunpack.c.l.b16 %v1402
    %v2539 = vunpack.c.h.b16 %v1402
    %v2540 = vunpack.c.l.b16 %v1403
    %v2541 = vunpack.c.h.b16 %v1403
    %v2542 = vunpack.c.l.b16 %v1404
    %v2543 = vunpack.c.h.b16 %v1404
    %v2544 = vunpack.c.l.b16 %v1405
    %v2545 = vunpack.c.h.b16 %v1405
    %v2546 = vunpack.c.l.b16 %v1406
    %v2547 = vunpack.c.h.b16 %v1406
    %v2548 = vunpack.c.l.b16 %v1407
    %v2549 = vunpack.c.h.b16 %v1407
    %v2550 = vunpack.c.l.b16 %v1408
    %v2551 = vunpack.c.h.b16 %v1408
    %v2552 = vunpack.c.l.b16 %v1409
    %v2553 = vunpack.c.h.b16 %v1409
    %v2554 = vunpack.c.l.b16 %v1410
    %v2555 = vunpack.c.h.b16 %v1410
    %v2556 = vunpack.c.l.b16 %v1411
    %v2557 = vunpack.c.h.b16 %v1411
    %v2558 = vunpack.c.l.b16 %v1412
    %v2559 = vunpack.c.h.b16 %v1412
    %v2560 = vunpack.c.l.b16 %v1413
    %v2561 = vunpack.c.h.b16 %v1413
    %v2562 = vunpack.c.l.b16 %v1414
    %v2563 = vunpack.c.h.b16 %v1414
    %v2564 = vunpack.c.l.b16 %v1415
    %v2565 = vunpack.c.h.b16 %v1415
    %v2566 = vunpack.c.l.b16 %v1416
    %v2567 = vunpack.c.h.b16 %v1416
    %v2568 = vunpack.c.l.b16 %v1417
    %v2569 = vunpack.c.h.b16 %v1417
    %v2570 = vunpack.c.l.b16 %v1418
    %v2571 = vunpack.c.h.b16 %v1418
    %v2572 = vunpack.c.l.b16 %v1419
    %v2573 = vunpack.c.h.b16 %v1419
    %v2574 = vunpack.c.l.b16 %v1420
    %v2575 = vunpack.c.h.b16 %v1420
    %v2576 = vunpack.c.l.b16 %v1421
    %v2577 = vunpack.c.h.b16 %v1421
    %v2578 = vunpack.c.l.b16 %v1422
    %v2579 = vunpack.c.h.b16 %v1422
    %v2580 = vunpack.c.l.b16 %v1423
    %v2581 = vunpack.c.h.b16 %v1423
    %v2582 = vunpack.c.l.b16 %v1424
    %v2583 = vunpack.c.h.b16 %v1424
    %v2584 = vunpack.c.l.b16 %v1425
    %v2585 = vunpack.c.h.b16 %v1425
    %v2586 = vunpack.c.l.b16 %v1426
    %v2587 = vunpack.c.h.b16 %v1426
    %v2588 = vunpack.c.l.b16 %v1427
    %v2589 = vunpack.c.h.b16 %v1427
    %v2590 = vunpack.c.l.b16 %v1428
    %v2591 = vunpack.c.h.b16 %v1428
    %v2592 = vunpack.c.l.b16 %v1429
    %v2593 = vunpack.c.h.b16 %v1429
    %v2594 = vunpack.c.l.b16 %v1430
    %v2595 = vunpack.c.h.b16 %v1430
    %v2596 = vunpack.c.l.b16 %v1431
    %v2597 = vunpack.c.h.b16 %v1431
    %v2598 = vunpack.c.l.b16 %v1432
    %v2599 = vunpack.c.h.b16 %v1432
    %v2600 = vunpack.c.l.b16 %v1433
    %v2601 = vunpack.c.h.b16 %v1433
    %v2602 = vunpack.c.l.b16 %v1434
    %v2603 = vunpack.c.h.b16 %v1434
    %v2604 = vunpack.c.l.b16 %v1435
    %v2605 = vunpack.c.h.b16 %v1435
    %v2606 = vunpack.c.l.b16 %v1436
    %v2607 = vunpack.c.h.b16 %v1436
    %v2608 = vunpack.c.l.b16 %v1437
    %v2609 = vunpack.c.h.b16 %v1437
    %v2610 = vunpack.c.l.b16 %v1438
    %v2611 = vunpack.c.h.b16 %v1438
    %v2612 = vunpack.c.l.b16 %v1439
    %v2613 = vunpack.c.h.b16 %v1439
    %v2614 = vunpack.c.l.b16 %v1440
    %v2615 = vunpack.c.h.b16 %v1440
    %v2616 = vunpack.c.l.b16 %v1441
    %v2617 = vunpack.c.h.b16 %v1441
    %v2618 = vunpack.c.l.b16 %v1442
    %v2619 = vunpack.c.h.b16 %v1442
    %v2620 = vunpack.c.l.b16 %v1443
    %v2621 = vunpack.c.h.b16 %v1443
    %v2622 = vunpack.c.l.b16 %v1444
    %v2623 = vunpack.c.h.b16 %v1444
    %v2624 = vunpack.c.l.b16 %v1445
    %v2625 = vunpack.c.h.b16 %v1445
    %v2626 = vunpack.c.l.b16 %v1446
    %v2627 = vunpack.c.h.b16 %v1446
    %v2628 = vunpack.c.l.b16 %v1447
    %v2629 = vunpack.c.h.b16 %v1447
    %v2630 = vunpack.c.l.b16 %v1448
    %v2631 = vunpack.c.h.b16 %v1448
    %v2632 = vunpack.c.l.b16 %v1449
    %v2633 = vunpack.c.h.b16 %v1449
    %v2634 = vunpack.c.l.b16 %v1450
    %v2635 = vunpack.c.h.b16 %v1450
    %v2636 = vunpack.c.l.b16 %v1451
    %v2637 = vunpack.c.h.b16 %v1451
    %v2638 = vunpack.c.l.b16 %v1452
    %v2639 = vunpack.c.h.b16 %v1452
    %v2640 = vunpack.c.l.b16 %v1453
    %v2641 = vunpack.c.h.b16 %v1453
    %v2642 = vunpack.c.l.b16 %v1454
    %v2643 = vunpack.c.h.b16 %v1454
    %v2644 = vunpack.c.l.b16 %v1455
    %v2645 = vunpack.c.h.b16 %v1455
    %v2646 = vunpack.c.l.b16 %v1456
    %v2647 = vunpack.c.h.b16 %v1456
    %v2648 = vunpack.c.l.b16 %v1457
    %v2649 = vunpack.c.h.b16 %v1457
    %v2650 = vunpack.c.l.b16 %v1458
    %v2651 = vunpack.c.h.b16 %v1458
    %v2652 = vunpack.c.l.b16 %v1459
    %v2653 = vunpack.c.h.b16 %v1459
    %v2654 = vunpack.c.l.b16 %v1460
    %v2655 = vunpack.c.h.b16 %v1460
    %v2656 = vunpack.c.l.b16 %v1461
    %v2657 = vunpack.c.h.b16 %v1461
    %v2658 = vunpack.c.l.b16 %v1462
    %v2659 = vunpack.c.h.b16 %v1462
    %v2660 = vunpack.c.l.b16 %v1463
    %v2661 = vunpack.c.h.b16 %v1463
    %v2662 = vunpack.c.l.b16 %v1464
    %v2663 = vunpack.c.h.b16 %v1464
    %v2664 = vunpack.c.l.b16 %v1465
    %v2665 = vunpack.c.h.b16 %v1465
    %v2666 = vunpack.c.l.b16 %v1466
    %v2667 = vunpack.c.h.b16 %v1466
    %v2668 = vunpack.c.l.b16 %v1467
    %v2669 = vunpack.c.h.b16 %v1467
    %v2670 = vunpack.c.l.b16 %v1468
    %v2671 = vunpack.c.h.b16 %v1468
    %v2672 = vunpack.c.l.b16 %v1469
    %v2673 = vunpack.c.h.b16 %v1469
    %v2674 = vunpack.c.l.b16 %v1470
    %v2675 = vunpack.c.h.b16 %v1470
    %v2676 = vunpack.c.l.b16 %v1471
    %v2677 = vunpack.c.h.b16 %v1471
    %v2678 = vunpack.c.l.b16 %v1472
    %v2679 = vunpack.c.h.b16 %v1472
    %v2680 = vunpack.c.l.b16 %v1473
    %v2681 = vunpack.c.h.b16 %v1473
    %v2682 = vunpack.c.l.b16 %v1474
    %v2683 = vunpack.c.h.b16 %v1474
    %v2684 = vunpack.c.l.b16 %v1475
    %v2685 = vunpack.c.h.b16 %v1475
    %v2686 = vunpack.c.l.b16 %v1476
    %v2687 = vunpack.c.h.b16 %v1476
    %v2688 = vunpack.c.l.b16 %v1477
    %v2689 = vunpack.c.h.b16 %v1477
    %v2690 = vunpack.c.l.b16 %v1478
    %v2691 = vunpack.c.h.b16 %v1478
    %v2692 = vunpack.c.l.b16 %v1479
    %v2693 = vunpack.c.h.b16 %v1479
    %v2694 = vunpack.c.l.b16 %v1480
    %v2695 = vunpack.c.h.b16 %v1480
    %v2696 = vunpack.c.l.b16 %v1481
    %v2697 = vunpack.c.h.b16 %v1481
    %v2698 = vunpack.c.l.b16 %v1482
    %v2699 = vunpack.c.h.b16 %v1482
    %v2700 = vunpack.c.l.b16 %v1483
    %v2701 = vunpack.c.h.b16 %v1483
    %v2702 = vunpack.c.l.b16 %v1484
    %v2703 = vunpack.c.h.b16 %v1484
    %v2704 = vunpack.c.l.b16 %v1485
    %v2705 = vunpack.c.h.b16 %v1485
    %v2706 = vunpack.c.l.b16 %v1486
    %v2707 = vunpack.c.h.b16 %v1486
    %v2708 = vunpack.c.l.b16 %v1487
    %v2709 = vunpack.c.h.b16 %v1487
    %v2710 = vunpack.c.l.b16 %v1488
    %v2711 = vunpack.c.h.b16 %v1488
    %v2712 = vunpack.c.l.b16 %v1489
    %v2713 = vunpack.c.h.b16 %v1489
    %v2714 = vunpack.c.l.b16 %v1490
    %v2715 = vunpack.c.h.b16 %v1490
    %v2716 = vunpack.c.l.b16 %v1491
    %v2717 = vunpack.c.h.b16 %v1491
    %v2718 = vunpack.c.l.b16 %v1492
    %v2719 = vunpack.c.h.b16 %v1492
    %v2720 = vunpack.c.l.b16 %v1493
    %v2721 = vunpack.c.h.b16 %v1493
    %v2722 = vunpack.c.l.b16 %v1494
    %v2723 = vunpack.c.h.b16 %v1494
    %v2724 = vunpack.c.l.b16 %v1495
    %v2725 = vunpack.c.h.b16 %v1495
    %v2726 = vunpack.c.l.b16 %v1496
    %v2727 = vunpack.c.h.b16 %v1496
    %v2728 = vunpack.c.l.b16 %v1497
    %v2729 = vunpack.c.h.b16 %v1497
    %v2730 = vunpack.c.l.b16 %v1498
    %v2731 = vunpack.c.h.b16 %v1498
    %v2732 = vunpack.c.l.b16 %v1499
    %v2733 = vunpack.c.h.b16 %v1499
    %v2734 = vunpack.c.l.b16 %v1500
    %v2735 = vunpack.c.h.b16 %v1500
    %v2736 = vunpack.c.l.b16 %v1501
    %v2737 = vunpack.c.h.b16 %v1501
    %v2738 = vunpack.c.l.b16 %v1502
    %v2739 = vunpack.c.h.b16 %v1502
    %v2740 = vunpack.c.l.b16 %v1503
    %v2741 = vunpack.c.h.b16 %v1503
    %v2742 = vunpack.c.l.b16 %v1504
    %v2743 = vunpack.c.h.b16 %v1504
    %v2744 = vunpack.c.l.b16 %v1505
    %v2745 = vunpack.c.h.b16 %v1505
    %v2746 = vunpack.c.l.b16 %v1506
    %v2747 = vunpack.c.h.b16 %v1506
    %v2748 = vunpack.c.l.b16 %v1507
    %v2749 = vunpack.c.h.b16 %v1507
    %v2750 = vunpack.c.l.b16 %v1508
    %v2751 = vunpack.c.h.b16 %v1508
    %v2752 = vunpack.c.l.b16 %v1509
    %v2753 = vunpack.c.h.b16 %v1509
    %v2754 = vunpack.c.l.b16 %v1510
    %v2755 = vunpack.c.h.b16 %v1510
    %v2756 = vunpack.c.l.b16 %v1511
    %v2757 = vunpack.c.h.b16 %v1511
    %v2758 = vunpack.c.l.b16 %v1512
    %v2759 = vunpack.c.h.b16 %v1512
    %v2760 = vunpack.c.l.b16 %v1513
    %v2761 = vunpack.c.h.b16 %v1513
    %v2762 = vunpack.c.l.b16 %v1514
    %v2763 = vunpack.c.h.b16 %v1514
    %v2764 = vunpack.c.l.b16 %v1515
    %v2765 = vunpack.c.h.b16 %v1515
    %v2766 = vunpack.c.l.b16 %v1516
    %v2767 = vunpack.c.h.b16 %v1516
    %v2768 = vunpack.c.l.b16 %v1517
    %v2769 = vunpack.c.h.b16 %v1517
    %v2770 = vunpack.c.l.b16 %v1518
    %v2771 = vunpack.c.h.b16 %v1518
    %v2772 = vunpack.c.l.b16 %v1519
    %v2773 = vunpack.c.h.b16 %v1519
    %v2774 = vunpack.c.l.b16 %v1520
    %v2775 = vunpack.c.h.b16 %v1520
    %v2776 = vunpack.c.l.b16 %v1521
    %v2777 = vunpack.c.h.b16 %v1521
    %v2778 = vunpack.c.l.b16 %v1522
    %v2779 = vunpack.c.h.b16 %v1522
    %v2780 = vunpack.c.l.b16 %v1523
    %v2781 = vunpack.c.h.b16 %v1523
    %v2782 = vunpack.c.l.b16 %v1524
    %v2783 = vunpack.c.h.b16 %v1524
    %v2784 = vunpack.c.l.b16 %v1525
    %v2785 = vunpack.c.h.b16 %v1525
    %v2786 = vunpack.c.l.b16 %v1526
    %v2787 = vunpack.c.h.b16 %v1526
    %v2788 = vunpack.c.l.b16 %v1527
    %v2789 = vunpack.c.h.b16 %v1527
    %v2790 = vunpack.c.l.b16 %v1528
    %v2791 = vunpack.c.h.b16 %v1528
    %v2792 = vunpack.c.l.b16 %v1529
    %v2793 = vunpack.c.h.b16 %v1529
    %v2794 = vunpack.c.l.b16 %v1530
    %v2795 = vunpack.c.h.b16 %v1530
    %v2796 = vunpack.c.l.b16 %v1531
    %v2797 = vunpack.c.h.b16 %v1531
    %v2798 = vunpack.c.l.b16 %v1532
    %v2799 = vunpack.c.h.b16 %v1532
    %v2800 = vunpack.c.l.b16 %v1533
    %v2801 = vunpack.c.h.b16 %v1533
    %v2802 = vunpack.c.l.b16 %v1534
    %v2803 = vunpack.c.h.b16 %v1534
    %v2804 = vunpack.c.l.b16 %v1535
    %v2805 = vunpack.c.h.b16 %v1535
    %v2806 = vunpack.c.l.b16 %v1536
    %v2807 = vunpack.c.h.b16 %v1536
    %v2808 = vunpack.c.l.b16 %v1537
    %v2809 = vunpack.c.h.b16 %v1537
    %v2810 = vunpack.c.l.b16 %v1538
    %v2811 = vunpack.c.h.b16 %v1538
    %v2812 = vunpack.c.l.b16 %v1539
    %v2813 = vunpack.c.h.b16 %v1539
    %v2814 = vunpack.c.l.b16 %v1540
    %v2815 = vunpack.c.h.b16 %v1540
    %v2816 = vunpack.c.l.b16 %v1541
    %v2817 = vunpack.c.h.b16 %v1541
    %v2818 = vunpack.c.l.b16 %v1542
    %v2819 = vunpack.c.h.b16 %v1542
    %v2820 = vunpack.c.l.b16 %v1543
    %v2821 = vunpack.c.h.b16 %v1543
    %v2822 = vunpack.c.l.b16 %v1544
    %v2823 = vunpack.c.h.b16 %v1544
    %v2824 = vunpack.c.l.b16 %v1545
    %v2825 = vunpack.c.h.b16 %v1545
    %v2826 = vunpack.c.l.b16 %v1546
    %v2827 = vunpack.c.h.b16 %v1546
    %v2828 = vunpack.c.l.b16 %v1547
    %v2829 = vunpack.c.h.b16 %v1547
    %v2830 = vunpack.c.l.b16 %v1548
    %v2831 = vunpack.c.h.b16 %v1548
    %v2832 = vunpack.c.l.b16 %v1549
    %v2833 = vunpack.c.h.b16 %v1549
    %v2834 = vunpack.c.l.b16 %v1550
    %v2835 = vunpack.c.h.b16 %v1550
    %v2836 = vunpack.c.l.b16 %v1551
    %v2837 = vunpack.c.h.b16 %v1551
    %v2838 = vunpack.c.l.b16 %v1552
    %v2839 = vunpack.c.h.b16 %v1552
    %v2840 = vunpack.c.l.b16 %v1553
    %v2841 = vunpack.c.h.b16 %v1553
    %v2842 = vunpack.c.l.b16 %v1554
    %v2843 = vunpack.c.h.b16 %v1554
    %v2844 = vunpack.c.l.b16 %v1555
    %v2845 = vunpack.c.h.b16 %v1555
    %v2846 = vunpack.c.l.b16 %v1556
    %v2847 = vunpack.c.h.b16 %v1556
    %v2848 = vunpack.c.l.b16 %v1557
    %v2849 = vunpack.c.h.b16 %v1557
    %v2850 = vunpack.c.l.b16 %v1558
    %v2851 = vunpack.c.h.b16 %v1558
    %v2852 = vunpack.c.l.b16 %v1559
    %v2853 = vunpack.c.h.b16 %v1559
    %v2854 = vunpack.c.l.b16 %v1560
    %v2855 = vunpack.c.h.b16 %v1560
    %v2856 = vunpack.c.l.b16 %v1561
    %v2857 = vunpack.c.h.b16 %v1561
    %v2858 = vunpack.c.l.b16 %v1562
    %v2859 = vunpack.c.h.b16 %v1562
    %v2860 = vunpack.c.l.b16 %v1563
    %v2861 = vunpack.c.h.b16 %v1563
    %v2862 = vunpack.c.l.b16 %v1564
    %v2863 = vunpack.c.h.b16 %v1564
    %v2864 = vunpack.c.l.b16 %v1565
    %v2865 = vunpack.c.h.b16 %v1565
    %v2866 = vunpack.c.l.b16 %v1566
    %v2867 = vunpack.c.h.b16 %v1566
    %v2868 = vunpack.c.l.b16 %v1567
    %v2869 = vunpack.c.h.b16 %v1567
    %v2870 = vunpack.c.l.b16 %v1568
    %v2871 = vunpack.c.h.b16 %v1568
    %v2872 = vunpack.c.l.b16 %v1569
    %v2873 = vunpack.c.h.b16 %v1569
    %v2874 = vunpack.c.l.b16 %v1570
    %v2875 = vunpack.c.h.b16 %v1570
    %v2876 = vunpack.c.l.b16 %v1571
    %v2877 = vunpack.c.h.b16 %v1571
    %v2878 = vunpack.c.l.b16 %v1572
    %v2879 = vunpack.c.h.b16 %v1572
    %v2880 = vunpack.c.l.b16 %v1573
    %v2881 = vunpack.c.h.b16 %v1573
    %v2882 = vunpack.c.l.b16 %v1574
    %v2883 = vunpack.c.h.b16 %v1574
    %v2884 = vunpack.c.l.b16 %v1575
    %v2885 = vunpack.c.h.b16 %v1575
    %v2886 = vunpack.c.l.b16 %v1576
    %v2887 = vunpack.c.h.b16 %v1576
    %v2888 = vunpack.c.l.b16 %v1577
    %v2889 = vunpack.c.h.b16 %v1577
    %v2890 = vunpack.c.l.b16 %v1578
    %v2891 = vunpack.c.h.b16 %v1578
    %v2892 = vunpack.c.l.b16 %v1579
    %v2893 = vunpack.c.h.b16 %v1579
    %v2894 = vunpack.c.l.b16 %v1580
    %v2895 = vunpack.c.h.b16 %v1580
    %v2896 = vunpack.c.l.b16 %v1581
    %v2897 = vunpack.c.h.b16 %v1581
    %v2898 = vunpack.c.l.b16 %v1582
    %v2899 = vunpack.c.h.b16 %v1582
    %v2900 = vunpack.c.l.b16 %v1583
    %v2901 = vunpack.c.h.b16 %v1583
    %v2902 = vunpack.c.l.b16 %v1584
    %v2903 = vunpack.c.h.b16 %v1584
    %v2904 = vunpack.c.l.b16 %v1585
    %v2905 = vunpack.c.h.b16 %v1585
    %v2906 = vunpack.c.l.b16 %v1586
    %v2907 = vunpack.c.h.b16 %v1586
    %v2908 = vunpack.c.l.b16 %v1587
    %v2909 = vunpack.c.h.b16 %v1587
    %v2910 = vunpack.c.l.b16 %v1588
    %v2911 = vunpack.c.h.b16 %v1588
    %v2912 = vunpack.c.l.b16 %v1589
    %v2913 = vunpack.c.h.b16 %v1589
    %v2914 = vunpack.c.l.b16 %v1590
    %v2915 = vunpack.c.h.b16 %v1590
    %v2916 = vunpack.c.l.b16 %v1591
    %v2917 = vunpack.c.h.b16 %v1591
    %v2918 = vunpack.c.l.b16 %v1592
    %v2919 = vunpack.c.h.b16 %v1592
    %v2920 = vunpack.c.l.b16 %v1593
    %v2921 = vunpack.c.h.b16 %v1593
    %v2922 = vunpack.c.l.b16 %v1594
    %v2923 = vunpack.c.h.b16 %v1594
    %v2924 = vunpack.c.l.b16 %v1595
    %v2925 = vunpack.c.h.b16 %v1595
    %v2926 = vunpack.c.l.b16 %v1596
    %v2927 = vunpack.c.h.b16 %v1596
    %v2928 = vunpack.c.l.b16 %v1597
    %v2929 = vunpack.c.h.b16 %v1597
    %v2930 = vunpack.c.l.b16 %v1598
    %v2931 = vunpack.c.h.b16 %v1598
    %v2932 = vunpack.c.l.b16 %v1599
    %v2933 = vunpack.c.h.b16 %v1599
    %v2934 = vunpack.c.l.b16 %v1600
    %v2935 = vunpack.c.h.b16 %v1600
    %v2936 = vunpack.c.l.b16 %v1601
    %v2937 = vunpack.c.h.b16 %v1601
    %v2938 = vunpack.c.l.b16 %v1602
    %v2939 = vunpack.c.h.b16 %v1602
    %v2940 = vunpack.c.l.b16 %v1603
    %v2941 = vunpack.c.h.b16 %v1603
    %v2942 = vunpack.c.l.b16 %v1604
    %v2943 = vunpack.c.h.b16 %v1604
    %v2944 = vunpack.c.l.b16 %v1605
    %v2945 = vunpack.c.h.b16 %v1605
    %v2946 = vunpack.c.l.b16 %v1606
    %v2947 = vunpack.c.h.b16 %v1606
    %v2948 = vunpack.c.l.b16 %v1607
    %v2949 = vunpack.c.h.b16 %v1607
    %v2950 = vunpack.c.l.b16 %v1608
    %v2951 = vunpack.c.h.b16 %v1608
    %v2952 = vunpack.c.l.b16 %v1609
    %v2953 = vunpack.c.h.b16 %v1609
    %v2954 = vunpack.c.l.b16 %v1610
    %v2955 = vunpack.c.h.b16 %v1610
    %v2956 = vunpack.c.l.b16 %v1611
    %v2957 = vunpack.c.h.b16 %v1611
    %v2958 = vunpack.c.l.b16 %v1612
    %v2959 = vunpack.c.h.b16 %v1612
    %v2960 = vunpack.c.l.b16 %v1613
    %v2961 = vunpack.c.h.b16 %v1613
    %v2962 = vunpack.c.l.b16 %v1614
    %v2963 = vunpack.c.h.b16 %v1614
    %v2964 = vunpack.c.l.b16 %v1615
    %v2965 = vunpack.c.h.b16 %v1615
    %v2966 = vunpack.c.l.b16 %v1616
    %v2967 = vunpack.c.h.b16 %v1616
    %v2968 = vunpack.c.l.b16 %v1617
    %v2969 = vunpack.c.h.b16 %v1617
    %v2970 = vunpack.c.l.b16 %v1618
    %v2971 = vunpack.c.h.b16 %v1618
    %v2972 = vunpack.c.l.b16 %v1619
    %v2973 = vunpack.c.h.b16 %v1619
    %v2974 = vunpack.c.l.b16 %v1620
    %v2975 = vunpack.c.h.b16 %v1620
    %v2976 = vunpack.c.l.b16 %v1621
    %v2977 = vunpack.c.h.b16 %v1621
    %v2978 = vunpack.c.l.b16 %v1622
    %v2979 = vunpack.c.h.b16 %v1622
    %v2980 = vunpack.c.l.b16 %v1623
    %v2981 = vunpack.c.h.b16 %v1623
    %v2982 = vunpack.c.l.b16 %v1624
    %v2983 = vunpack.c.h.b16 %v1624
    %v2984 = vunpack.c.l.b16 %v1625
    %v2985 = vunpack.c.h.b16 %v1625
    %v2986 = vunpack.c.l.b16 %v1626
    %v2987 = vunpack.c.h.b16 %v1626
    %v2988 = vunpack.c.l.b16 %v1627
    %v2989 = vunpack.c.h.b16 %v1627
    %v2990 = vunpack.c.l.b16 %v1628
    %v2991 = vunpack.c.h.b16 %v1628
    %v2992 = vunpack.c.l.b16 %v1629
    %v2993 = vunpack.c.h.b16 %v1629
    %v2994 = vunpack.c.l.b16 %v1630
    %v2995 = vunpack.c.h.b16 %v1630
    %v2996 = vunpack.c.l.b16 %v1631
    %v2997 = vunpack.c.h.b16 %v1631
    %v2998 = vunpack.c.l.b16 %v1632
    %v2999 = vunpack.c.h.b16 %v1632
    %v3000 = vunpack.c.l.b16 %v1633
    %v3001 = vunpack.c.h.b16 %v1633
    %v3002 = vunpack.c.l.b16 %v1634
    %v3003 = vunpack.c.h.b16 %v1634
    %v3004 = vunpack.c.l.b16 %v1635
    %v3005 = vunpack.c.h.b16 %v1635
    %v3006 = vunpack.c.l.b16 %v1636
    %v3007 = vunpack.c.h.b16 %v1636
    %v3008 = vunpack.c.l.b16 %v1637
    %v3009 = vunpack.c.h.b16 %v1637
    %v3010 = vunpack.c.l.b16 %v1638
    %v3011 = vunpack.c.h.b16 %v1638
    %v3012 = vunpack.c.l.b16 %v1639
    %v3013 = vunpack.c.h.b16 %v1639
    %v3014 = vunpack.c.l.b16 %v1640
    %v3015 = vunpack.c.h.b16 %v1640
    %v3016 = vunpack.c.l.b16 %v1641
    %v3017 = vunpack.c.h.b16 %v1641
    %v3018 = vunpack.c.l.b16 %v1642
    %v3019 = vunpack.c.h.b16 %v1642
    %v3020 = vunpack.c.l.b16 %v1643
    %v3021 = vunpack.c.h.b16 %v1643
    %v3022 = vunpack.c.l.b16 %v1644
    %v3023 = vunpack.c.h.b16 %v1644
    %v3024 = vunpack.c.l.b16 %v1645
    %v3025 = vunpack.c.h.b16 %v1645
    %v3026 = vunpack.c.l.b16 %v1646
    %v3027 = vunpack.c.h.b16 %v1646
    %v3028 = vunpack.c.l.b16 %v1647
    %v3029 = vunpack.c.h.b16 %v1647
    %v3030 = vunpack.c.l.b16 %v1648
    %v3031 = vunpack.c.h.b16 %v1648
    %v3032 = vunpack.c.l.b16 %v1649
    %v3033 = vunpack.c.h.b16 %v1649
    %v3034 = vunpack.c.l.b16 %v1650
    %v3035 = vunpack.c.h.b16 %v1650
    %v3036 = vunpack.c.l.b16 %v1651
    %v3037 = vunpack.c.h.b16 %v1651
    %v3038 = vunpack.c.l.b16 %v1652
    %v3039 = vunpack.c.h.b16 %v1652
    %v3040 = vunpack.c.l.b16 %v1653
    %v3041 = vunpack.c.h.b16 %v1653
    %v3042 = vunpack.c.l.b16 %v1654
    %v3043 = vunpack.c.h.b16 %v1654
    %v3044 = vunpack.c.l.b16 %v1655
    %v3045 = vunpack.c.h.b16 %v1655
    %v3046 = vunpack.c.l.b16 %v1656
    %v3047 = vunpack.c.h.b16 %v1656
    %v3048 = vunpack.c.l.b16 %v1657
    %v3049 = vunpack.c.h.b16 %v1657
    %v3050 = vunpack.c.l.b16 %v1658
    %v3051 = vunpack.c.h.b16 %v1658
    %v3052 = vunpack.c.l.b16 %v1659
    %v3053 = vunpack.c.h.b16 %v1659
    %v3054 = vunpack.c.l.b16 %v1660
    %v3055 = vunpack.c.h.b16 %v1660
    %v3056 = vunpack.c.l.b16 %v1661
    %v3057 = vunpack.c.h.b16 %v1661
    %v3058 = vunpack.c.l.b16 %v1662
    %v3059 = vunpack.c.h.b16 %v1662
    %v3060 = vunpack.c.l.b16 %v1663
    %v3061 = vunpack.c.h.b16 %v1663
    %v3062 = vunpack.c.l.b16 %v1664
    %v3063 = vunpack.c.h.b16 %v1664
    %v3064 = vunpack.c.l.b16 %v1665
    %v3065 = vunpack.c.h.b16 %v1665
    %v3066 = vunpack.c.l.b16 %v1666
    %v3067 = vunpack.c.h.b16 %v1666
    %v3068 = vunpack.c.l.b16 %v1667
    %v3069 = vunpack.c.h.b16 %v1667
    %v3070 = vunpack.c.l.b16 %v1668
    %v3071 = vunpack.c.h.b16 %v1668
    %v3072 = vunpack.c.l.b16 %v1669
    %v3073 = vunpack.c.h.b16 %v1669
    %v3074 = vunpack.c.l.b16 %v1670
    %v3075 = vunpack.c.h.b16 %v1670
    %v3076 = vunpack.c.l.b16 %v1671
    %v3077 = vunpack.c.h.b16 %v1671
    %v3078 = vunpack.c.l.b16 %v1672
    %v3079 = vunpack.c.h.b16 %v1672
    %v3080 = vunpack.c.l.b16 %v1673
    %v3081 = vunpack.c.h.b16 %v1673
    %v3082 = vunpack.c.l.b16 %v1674
    %v3083 = vunpack.c.h.b16 %v1674
    %v3084 = vunpack.c.l.b16 %v1675
    %v3085 = vunpack.c.h.b16 %v1675
    %v3086 = vunpack.c.l.b16 %v1676
    %v3087 = vunpack.c.h.b16 %v1676
    %v3088 = vunpack.c.l.b16 %v1677
    %v3089 = vunpack.c.h.b16 %v1677
    %v3090 = vunpack.c.l.b16 %v1678
    %v3091 = vunpack.c.h.b16 %v1678
    %v3092 = vunpack.c.l.b16 %v1679
    %v3093 = vunpack.c.h.b16 %v1679
    %v3094 = vunpack.c.l.b16 %v1680
    %v3095 = vunpack.c.h.b16 %v1680
    %v3096 = vunpack.c.l.b16 %v1681
    %v3097 = vunpack.c.h.b16 %v1681
    %v3098 = vunpack.c.l.b16 %v1682
    %v3099 = vunpack.c.h.b16 %v1682
    %v3100 = vunpack.c.l.b16 %v1683
    %v3101 = vunpack.c.h.b16 %v1683
    %v3102 = vunpack.c.l.b16 %v1684
    %v3103 = vunpack.c.h.b16 %v1684
    %v3104 = vunpack.c.l.b16 %v1685
    %v3105 = vunpack.c.h.b16 %v1685
    %v3106 = vunpack.c.l.b16 %v1686
    %v3107 = vunpack.c.h.b16 %v1686
    %v3108 = vunpack.c.l.b16 %v1687
    %v3109 = vunpack.c.h.b16 %v1687
    %v3110 = vunpack.c.l.b16 %v1688
    %v3111 = vunpack.c.h.b16 %v1688
    %v3112 = vunpack.c.l.b16 %v1689
    %v3113 = vunpack.c.h.b16 %v1689
    %v3114 = vunpack.c.l.b16 %v1690
    %v3115 = vunpack.c.h.b16 %v1690
    %v3116 = vunpack.c.l.b16 %v1691
    %v3117 = vunpack.c.h.b16 %v1691
    %v3118 = vunpack.c.l.b16 %v1692
    %v3119 = vunpack.c.h.b16 %v1692
    %v3120 = vunpack.c.l.b16 %v1693
    %v3121 = vunpack.c.h.b16 %v1693
    %v3122 = vunpack.c.l.b16 %v1694
    %v3123 = vunpack.c.h.b16 %v1694
    %v3124 = vunpack.c.l.b16 %v1695
    %v3125 = vunpack.c.h.b16 %v1695
    %v3126 = vunpack.c.l.b16 %v1696
    %v3127 = vunpack.c.h.b16 %v1696
    %v3128 = vunpack.c.l.b16 %v1697
    %v3129 = vunpack.c.h.b16 %v1697
    %v3130 = vunpack.c.l.b16 %v1698
    %v3131 = vunpack.c.h.b16 %v1698
    %v3132 = vunpack.c.l.b16 %v1699
    %v3133 = vunpack.c.h.b16 %v1699
    %v3134 = vunpack.c.l.b16 %v1700
    %v3135 = vunpack.c.h.b16 %v1700
    %v3136 = vunpack.c.l.b16 %v1701
    %v3137 = vunpack.c.h.b16 %v1701
    %v3138 = vunpack.c.l.b16 %v1702
    %v3139 = vunpack.c.h.b16 %v1702
    %v3140 = vunpack.c.l.b16 %v1703
    %v3141 = vunpack.c.h.b16 %v1703
    %v3142 = vunpack.c.l.b16 %v1704
    %v3143 = vunpack.c.h.b16 %v1704
    %v3144 = vunpack.c.l.b16 %v1705
    %v3145 = vunpack.c.h.b16 %v1705
    %v3146 = vunpack.c.l.b16 %v1706
    %v3147 = vunpack.c.h.b16 %v1706
    %v3148 = vunpack.c.l.b16 %v1707
    %v3149 = vunpack.c.h.b16 %v1707
    %v3150 = vunpack.c.l.b16 %v1708
    %v3151 = vunpack.c.h.b16 %v1708
    %v3152 = vunpack.c.l.b16 %v1709
    %v3153 = vunpack.c.h.b16 %v1709
    %v3154 = vunpack.c.l.b16 %v1710
    %v3155 = vunpack.c.h.b16 %v1710
    %v3156 = vunpack.c.l.b16 %v1711
    %v3157 = vunpack.c.h.b16 %v1711
    %v3158 = vunpack.c.l.b16 %v1712
    %v3159 = vunpack.c.h.b16 %v1712
    %v3160 = vunpack.c.l.b16 %v1713
    %v3161 = vunpack.c.h.b16 %v1713
    %v3162 = vunpack.c.l.b16 %v1714
    %v3163 = vunpack.c.h.b16 %v1714
    %v3164 = vunpack.c.l.b16 %v1715
    %v3165 = vunpack.c.h.b16 %v1715
    %v3166 = vunpack.c.l.b16 %v1716
    %v3167 = vunpack.c.h.b16 %v1716
    %v3168 = vunpack.c.l.b16 %v1717
    %v3169 = vunpack.c.h.b16 %v1717
    %v3170 = vunpack.c.l.b16 %v1718
    %v3171 = vunpack.c.h.b16 %v1718
    %v3172 = vunpack.c.l.b16 %v1719
    %v3173 = vunpack.c.h.b16 %v1719
    %v3174 = vunpack.c.l.b16 %v1720
    %v3175 = vunpack.c.h.b16 %v1720
    %v3176 = vunpack.c.l.b16 %v1721
    %v3177 = vunpack.c.h.b16 %v1721
    %v3178 = vunpack.c.l.b16 %v1722
    %v3179 = vunpack.c.h.b16 %v1722
    %v3180 = vunpack.c.l.b16 %v1723
    %v3181 = vunpack.c.h.b16 %v1723
    %v3182 = vunpack.c.l.b16 %v1724
    %v3183 = vunpack.c.h.b16 %v1724
    %v3184 = vunpack.c.l.b16 %v1725
    %v3185 = vunpack.c.h.b16 %v1725
    %v3186 = vunpack.c.l.b16 %v1726
    %v3187 = vunpack.c.h.b16 %v1726
    %v3188 = vunpack.c.l.b16 %v1727
    %v3189 = vunpack.c.h.b16 %v1727
    %v3190 = vunpack.c.l.b16 %v1728
    %v3191 = vunpack.c.h.b16 %v1728
    %v3192 = vunpack.c.l.b16 %v1729
    %v3193 = vunpack.c.h.b16 %v1729
    %v3194 = vunpack.c.l.b16 %v1730
    %v3195 = vunpack.c.h.b16 %v1730
    %v3196 = vunpack.c.l.b16 %v1731
    %v3197 = vunpack.c.h.b16 %v1731
    %v3198 = vunpack.c.l.b16 %v1732
    %v3199 = vunpack.c.h.b16 %v1732
    %v3200 = vunpack.c.l.b16 %v1733
    %v3201 = vunpack.c.h.b16 %v1733
    %v3202 = vunpack.c.l.b16 %v1734
    %v3203 = vunpack.c.h.b16 %v1734
    %v3204 = vunpack.c.l.b16 %v1735
    %v3205 = vunpack.c.h.b16 %v1735
    %v3206 = vunpack.c.l.b16 %v1736
    %v3207 = vunpack.c.h.b16 %v1736
    %v3208 = vunpack.c.l.b16 %v1737
    %v3209 = vunpack.c.h.b16 %v1737
    %v3210 = vunpack.c.l.b16 %v1738
    %v3211 = vunpack.c.h.b16 %v1738
    %v3212 = vunpack.c.l.b16 %v1739
    %v3213 = vunpack.c.h.b16 %v1739
    %v3214 = vunpack.c.l.b16 %v1740
    %v3215 = vunpack.c.h.b16 %v1740
    %v3216 = vunpack.c.l.b16 %v1741
    %v3217 = vunpack.c.h.b16 %v1741
    %v3218 = vunpack.c.l.b16 %v1742
    %v3219 = vunpack.c.h.b16 %v1742
    %v3220 = vunpack.c.l.b16 %v1743
    %v3221 = vunpack.c.h.b16 %v1743
    %v3222 = vunpack.c.l.b16 %v1744
    %v3223 = vunpack.c.h.b16 %v1744
    %v3224 = vunpack.c.l.b16 %v1745
    %v3225 = vunpack.c.h.b16 %v1745
    %v3226 = vunpack.c.l.b16 %v1746
    %v3227 = vunpack.c.h.b16 %v1746
    %v3228 = vunpack.c.l.b16 %v1747
    %v3229 = vunpack.c.h.b16 %v1747
    %v3230 = vunpack.c.l.b16 %v1748
    %v3231 = vunpack.c.h.b16 %v1748
    %v3232 = vunpack.c.l.b16 %v1749
    %v3233 = vunpack.c.h.b16 %v1749
    %v3234 = vunpack.c.l.b16 %v1750
    %v3235 = vunpack.c.h.b16 %v1750
    %v3236 = vunpack.c.l.b16 %v1751
    %v3237 = vunpack.c.h.b16 %v1751
    %v3238 = vunpack.c.l.b16 %v1752
    %v3239 = vunpack.c.h.b16 %v1752
    %v3240 = vunpack.c.l.b16 %v1753
    %v3241 = vunpack.c.h.b16 %v1753
    %v3242 = vunpack.c.l.b16 %v1754
    %v3243 = vunpack.c.h.b16 %v1754
    %v3244 = vunpack.c.l.b16 %v1755
    %v3245 = vunpack.c.h.b16 %v1755
    %v3246 = vunpack.c.l.b16 %v1756
    %v3247 = vunpack.c.h.b16 %v1756
    %v3248 = vunpack.c.l.b16 %v1757
    %v3249 = vunpack.c.h.b16 %v1757
    %v3250 = vunpack.c.l.b16 %v1758
    %v3251 = vunpack.c.h.b16 %v1758
    %v3252 = vunpack.c.l.b16 %v1759
    %v3253 = vunpack.c.h.b16 %v1759
    %v3254 = vunpack.c.l.b16 %v1760
    %v3255 = vunpack.c.h.b16 %v1760
    %v3256 = vunpack.c.l.b16 %v1761
    %v3257 = vunpack.c.h.b16 %v1761
    %v3258 = vunpack.c.l.b16 %v1762
    %v3259 = vunpack.c.h.b16 %v1762
    %v3260 = vunpack.c.l.b16 %v1763
    %v3261 = vunpack.c.h.b16 %v1763
    %v3262 = vunpack.c.l.b16 %v1764
    %v3263 = vunpack.c.h.b16 %v1764
    %v3264 = vunpack.c.l.b16 %v1765
    %v3265 = vunpack.c.h.b16 %v1765
    %v3266 = vunpack.c.l.b16 %v1766
    %v3267 = vunpack.c.h.b16 %v1766
    %v3268 = vunpack.c.l.b16 %v1767
    %v3269 = vunpack.c.h.b16 %v1767
    %v3270 = vunpack.c.l.b16 %v1768
    %v3271 = vunpack.c.h.b16 %v1768
    %v3272 = vunpack.c.l.b16 %v1769
    %v3273 = vunpack.c.h.b16 %v1769
    %v3274 = vunpack.c.l.b16 %v1770
    %v3275 = vunpack.c.h.b16 %v1770
    %v3276 = vunpack.c.l.b16 %v1771
    %v3277 = vunpack.c.h.b16 %v1771
    %v3278 = vunpack.c.l.b16 %v1772
    %v3279 = vunpack.c.h.b16 %v1772
    %v3280 = vunpack.c.l.b16 %v1773
    %v3281 = vunpack.c.h.b16 %v1773
    %v3282 = vunpack.c.l.b16 %v1774
    %v3283 = vunpack.c.h.b16 %v1774
    %v3284 = vunpack.c.l.b16 %v1775
    %v3285 = vunpack.c.h.b16 %v1775
    %v3286 = vunpack.c.l.b16 %v1776
    %v3287 = vunpack.c.h.b16 %v1776
    %v3288 = vunpack.c.l.b16 %v1777
    %v3289 = vunpack.c.h.b16 %v1777
    %v3290 = vunpack.c.l.b16 %v1778
    %v3291 = vunpack.c.h.b16 %v1778
    %v3292 = vunpack.c.l.b16 %v1779
    %v3293 = vunpack.c.h.b16 %v1779
    %v3294 = vunpack.c.l.b16 %v1780
    %v3295 = vunpack.c.h.b16 %v1780
    %v3296 = vunpack.c.l.b16 %v1781
    %v3297 = vunpack.c.h.b16 %v1781
    %v3298 = vunpack.c.l.b16 %v1782
    %v3299 = vunpack.c.h.b16 %v1782
    %v3300 = vunpack.c.l.b16 %v1783
    %v3301 = vunpack.c.h.b16 %v1783
    %v3302 = vunpack.c.l.b16 %v1784
    %v3303 = vunpack.c.h.b16 %v1784
    %v3304 = vunpack.c.l.b16 %v1785
    %v3305 = vunpack.c.h.b16 %v1785
    %v3306 = vunpack.c.l.b16 %v1786
    %v3307 = vunpack.c.h.b16 %v1786
    %v3308 = vunpack.c.l.b16 %v1787
    %v3309 = vunpack.c.h.b16 %v1787
    %v3310 = vunpack.c.l.b16 %v1788
    %v3311 = vunpack.c.h.b16 %v1788
    %v3312 = vunpack.c.l.b16 %v1789
    %v3313 = vunpack.c.h.b16 %v1789
    %v3314 = vunpack.c.l.b16 %v1790
    %v3315 = vunpack.c.h.b16 %v1790
    %v3316 = vunpack.c.l.b16 %v1791
    %v3317 = vunpack.c.h.b16 %v1791
    %v3318 = vunpack.c.l.b16 %v1792
    %v3319 = vunpack.c.h.b16 %v1792
    %v3320 = vunpack.c.l.b16 %v1793
    %v3321 = vunpack.c.h.b16 %v1793
    %v3322 = vunpack.c.l.b16 %v1794
    %v3323 = vunpack.c.h.b16 %v1794
    %v3324 = vunpack.c.l.b16 %v1795
    %v3325 = vunpack.c.h.b16 %v1795
    %v3326 = vunpack.c.l.b16 %v1796
    %v3327 = vunpack.c.h.b16 %v1796
    %v3328 = vunpack.c.l.b16 %v1797
    %v3329 = vunpack.c.h.b16 %v1797
    %v3330 = vunpack.c.l.b16 %v1798
    %v3331 = vunpack.c.h.b16 %v1798
    %v3332 = vunpack.c.l.b16 %v1799
    %v3333 = vunpack.c.h.b16 %v1799
    %v3334 = vunpack.c.l.b16 %v1800
    %v3335 = vunpack.c.h.b16 %v1800
    %v3336 = vunpack.c.l.b16 %v1801
    %v3337 = vunpack.c.h.b16 %v1801
    %v3338 = vunpack.c.l.b16 %v1802
    %v3339 = vunpack.c.h.b16 %v1802
    %v3340 = vunpack.c.l.b16 %v1803
    %v3341 = vunpack.c.h.b16 %v1803
    %v3342 = vunpack.c.l.b16 %v1804
    %v3343 = vunpack.c.h.b16 %v1804
    %v3344 = vunpack.c.l.b16 %v1805
    %v3345 = vunpack.c.h.b16 %v1805
    %v3346 = vunpack.c.l.b16 %v1806
    %v3347 = vunpack.c.h.b16 %v1806
    %v3348 = vunpack.c.l.b16 %v1807
    %v3349 = vunpack.c.h.b16 %v1807
    %v3350 = vunpack.c.l.b16 %v1808
    %v3351 = vunpack.c.h.b16 %v1808
    %v3352 = vunpack.c.l.b16 %v1809
    %v3353 = vunpack.c.h.b16 %v1809
    %v3354 = vunpack.c.l.b16 %v1810
    %v3355 = vunpack.c.h.b16 %v1810
    %v3356 = vunpack.c.l.b16 %v1811
    %v3357 = vunpack.c.h.b16 %v1811
    %v3358 = vunpack.c.l.b16 %v1812
    %v3359 = vunpack.c.h.b16 %v1812
    %v3360 = vunpack.c.l.b16 %v1813
    %v3361 = vunpack.c.h.b16 %v1813
    %v3362 = vunpack.c.l.b16 %v1814
    %v3363 = vunpack.c.h.b16 %v1814
    %v3364 = vunpack.c.l.b16 %v1815
    %v3365 = vunpack.c.h.b16 %v1815
    %v3366 = vunpack.c.l.b16 %v1816
    %v3367 = vunpack.c.h.b16 %v1816
    %v3368 = vunpack.c.l.b16 %v1817
    %v3369 = vunpack.c.h.b16 %v1817
    %v3370 = vunpack.c.l.b16 %v1818
    %v3371 = vunpack.c.h.b16 %v1818
    %v3372 = vunpack.c.l.b16 %v1819
    %v3373 = vunpack.c.h.b16 %v1819
    %v3374 = vunpack.c.l.b16 %v1820
    %v3375 = vunpack.c.h.b16 %v1820
    %v3376 = vunpack.c.l.b16 %v1821
    %v3377 = vunpack.c.h.b16 %v1821
    %v3378 = vunpack.c.l.b16 %v1822
    %v3379 = vunpack.c.h.b16 %v1822
    %v3380 = vunpack.c.l.b16 %v1823
    %v3381 = vunpack.c.h.b16 %v1823
    %v3382 = vpack.c.b16 %v2362, %v2358
    %v3383 = vpack.c.b16 %v2363, %v2359
    %v3384 = vpack.c.b16 %v2364, %v2360
    %v3385 = vpack.c.b16 %v2365, %v2361
    %v3386 = vpack.c.b16 %v2370, %v2366
    %v3387 = vpack.c.b16 %v2371, %v2367
    %v3388 = vpack.c.b16 %v2372, %v2368
    %v3389 = vpack.c.b16 %v2373, %v2369
    %v3390 = vpack.c.b16 %v2378, %v2374
    %v3391 = vpack.c.b16 %v2379, %v2375
    %v3392 = vpack.c.b16 %v2380, %v2376
    %v3393 = vpack.c.b16 %v2381, %v2377
    %v3394 = vpack.c.b16 %v2386, %v2382
    %v3395 = vpack.c.b16 %v2387, %v2383
    %v3396 = vpack.c.b16 %v2388, %v2384
    %v3397 = vpack.c.b16 %v2389, %v2385
    %v3398 = vpack.c.b16 %v2394, %v2390
    %v3399 = vpack.c.b16 %v2395, %v2391
    %v3400 = vpack.c.b16 %v2396, %v2392
    %v3401 = vpack.c.b16 %v2397, %v2393
    %v3402 = vpack.c.b16 %v2402, %v2398
    %v3403 = vpack.c.b16 %v2403, %v2399
    %v3404 = vpack.c.b16 %v2404, %v2400
    %v3405 = vpack.c.b16 %v2405, %v2401
    %v3406 = vpack.c.b16 %v2410, %v2406
    %v3407 = vpack.c.b16 %v2411, %v2407
    %v3408 = vpack.c.b16 %v2412, %v2408
    %v3409 = vpack.c.b16 %v2413, %v2409
    %v3410 = vpack.c.b16 %v2418, %v2414
    %v3411 = vpack.c.b16 %v2419, %v2415
    %v3412 = vpack.c.b16 %v2420, %v2416
    %v3413 = vpack.c.b16 %v2421, %v2417
    %v3414 = vpack.c.b16 %v2426, %v2422
    %v3415 = vpack.c.b16 %v2427, %v2423
    %v3416 = vpack.c.b16 %v2428, %v2424
    %v3417 = vpack.c.b16 %v2429, %v2425
    %v3418 = vpack.c.b16 %v2434, %v2430
    %v3419 = vpack.c.b16 %v2435, %v2431
    %v3420 = vpack.c.b16 %v2436, %v2432
    %v3421 = vpack.c.b16 %v2437, %v2433
    %v3422 = vpack.c.b16 %v2442, %v2438
    %v3423 = vpack.c.b16 %v2443, %v2439
    %v3424 = vpack.c.b16 %v2444, %v2440
    %v3425 = vpack.c.b16 %v2445, %v2441
    %v3426 = vpack.c.b16 %v2450, %v2446
    %v3427 = vpack.c.b16 %v2451, %v2447
    %v3428 = vpack.c.b16 %v2452, %v2448
    %v3429 = vpack.c.b16 %v2453, %v2449
    %v3430 = vpack.c.b16 %v2458, %v2454
    %v3431 = vpack.c.b16 %v2459, %v2455
    %v3432 = vpack.c.b16 %v2460, %v2456
    %v3433 = vpack.c.b16 %v2461, %v2457
    %v3434 = vpack.c.b16 %v2466, %v2462
    %v3435 = vpack.c.b16 %v2467, %v2463
    %v3436 = vpack.c.b16 %v2468, %v2464
    %v3437 = vpack.c.b16 %v2469, %v2465
    %v3438 = vpack.c.b16 %v2474, %v2470
    %v3439 = vpack.c.b16 %v2475, %v2471
    %v3440 = vpack.c.b16 %v2476, %v2472
    %v3441 = vpack.c.b16 %v2477, %v2473
    %v3442 = vpack.c.b16 %v2482, %v2478
    %v3443 = vpack.c.b16 %v2483, %v2479
    %v3444 = vpack.c.b16 %v2484, %v2480
    %v3445 = vpack.c.b16 %v2485, %v2481
    %v3446 = vpack.c.b16 %v2490, %v2486
    %v3447 = vpack.c.b16 %v2491, %v2487
    %v3448 = vpack.c.b16 %v2492, %v2488
    %v3449 = vpack.c.b16 %v2493, %v2489
    %v3450 = vpack.c.b16 %v2498, %v2494
    %v3451 = vpack.c.b16 %v2499, %v2495
    %v3452 = vpack.c.b16 %v2500, %v2496
    %v3453 = vpack.c.b16 %v2501, %v2497
    %v3454 = vpack.c.b16 %v2506, %v2502
    %v3455 = vpack.c.b16 %v2507, %v2503
    %v3456 = vpack.c.b16 %v2508, %v2504
    %v3457 = vpack.c.b16 %v2509, %v2505
    %v3458 = vpack.c.b16 %v2514, %v2510
    %v3459 = vpack.c.b16 %v2515, %v2511
    %v3460 = vpack.c.b16 %v2516, %v2512
    %v3461 = vpack.c.b16 %v2517, %v2513
    %v3462 = vpack.c.b16 %v2522, %v2518
    %v3463 = vpack.c.b16 %v2523, %v2519
    %v3464 = vpack.c.b16 %v2524, %v2520
    %v3465 = vpack.c.b16 %v2525, %v2521
    %v3466 = vpack.c.b16 %v2530, %v2526
    %v3467 = vpack.c.b16 %v2531, %v2527
    %v3468 = vpack.c.b16 %v2532, %v2528
    %v3469 = vpack.c.b16 %v2533, %v2529
    %v3470 = vpack.c.b16 %v2538, %v2534
    %v3471 = vpack.c.b16 %v2539, %v2535
    %v3472 = vpack.c.b16 %v2540, %v2536
    %v3473 = vpack.c.b16 %v2541, %v2537
    %v3474 = vpack.c.b16 %v2546, %v2542
    %v3475 = vpack.c.b16 %v2547, %v2543
    %v3476 = vpack.c.b16 %v2548, %v2544
    %v3477 = vpack.c.b16 %v2549, %v2545
    %v3478 = vpack.c.b16 %v2554, %v2550
    %v3479 = vpack.c.b16 %v2555, %v2551
    %v3480 = vpack.c.b16 %v2556, %v2552
    %v3481 = vpack.c.b16 %v2557, %v2553
    %v3482 = vpack.c.b16 %v2562, %v2558
    %v3483 = vpack.c.b16 %v2563, %v2559
    %v3484 = vpack.c.b16 %v2564, %v2560
    %v3485 = vpack.c.b16 %v2565, %v2561
    %v3486 = vpack.c.b16 %v2570, %v2566
    %v3487 = vpack.c.b16 %v2571, %v2567
    %v3488 = vpack.c.b16 %v2572, %v2568
    %v3489 = vpack.c.b16 %v2573, %v2569
    %v3490 = vpack.c.b16 %v2578, %v2574
    %v3491 = vpack.c.b16 %v2579, %v2575
    %v3492 = vpack.c.b16 %v2580, %v2576
    %v3493 = vpack.c.b16 %v2581, %v2577
    %v3494 = vpack.c.b16 %v2586, %v2582
    %v3495 = vpack.c.b16 %v2587, %v2583
    %v3496 = vpack.c.b16 %v2588, %v2584
    %v3497 = vpack.c.b16 %v2589, %v2585
    %v3498 = vpack.c.b16 %v2594, %v2590
    %v3499 = vpack.c.b16 %v2595, %v2591
    %v3500 = vpack.c.b16 %v2596, %v2592
    %v3501 = vpack.c.b16 %v2597, %v2593
    %v3502 = vpack.c.b16 %v2602, %v2598
    %v3503 = vpack.c.b16 %v2603, %v2599
    %v3504 = vpack.c.b16 %v2604, %v2600
    %v3505 = vpack.c.b16 %v2605, %v2601
    %v3506 = vpack.c.b16 %v2610, %v2606
    %v3507 = vpack.c.b16 %v2611, %v2607
    %v3508 = vpack.c.b16 %v2612, %v2608
    %v3509 = vpack.c.b16 %v2613, %v2609
    %v3510 = vpack.c.b16 %v2618, %v2614
    %v3511 = vpack.c.b16 %v2619, %v2615
    %v3512 = vpack.c.b16 %v2620, %v2616
    %v3513 = vpack.c.b16 %v2621, %v2617
    %v3514 = vpack.c.b16 %v2626, %v2622
    %v3515 = vpack.c.b16 %v2627, %v2623
    %v3516 = vpack.c.b16 %v2628, %v2624
    %v3517 = vpack.c.b16 %v2629, %v2625
    %v3518 = vpack.c.b16 %v2634, %v2630
    %v3519 = vpack.c.b16 %v2635, %v2631
    %v3520 = vpack.c.b16 %v2636, %v2632
    %v3521 = vpack.c.b16 %v2637, %v2633
    %v3522 = vpack.c.b16 %v2642, %v2638
    %v3523 = vpack.c.b16 %v2643, %v2639
    %v3524 = vpack.c.b16 %v2644, %v2640
    %v3525 = vpack.c.b16 %v2645, %v2641
    %v3526 = vpack.c.b16 %v2650, %v2646
    %v3527 = vpack.c.b16 %v2651, %v2647
    %v3528 = vpack.c.b16 %v2652, %v2648
    %v3529 = vpack.c.b16 %v2653, %v2649
    %v3530 = vpack.c.b16 %v2658, %v2654
    %v3531 = vpack.c.b16 %v2659, %v2655
    %v3532 = vpack.c.b16 %v2660, %v2656
    %v3533 = vpack.c.b16 %v2661, %v2657
    %v3534 = vpack.c.b16 %v2666, %v2662
    %v3535 = vpack.c.b16 %v2667, %v2663
    %v3536 = vpack.c.b16 %v2668, %v2664
    %v3537 = vpack.c.b16 %v2669, %v2665
    %v3538 = vpack.c.b16 %v2674, %v2670
    %v3539 = vpack.c.b16 %v2675, %v2671
    %v3540 = vpack.c.b16 %v2676, %v2672
    %v3541 = vpack.c.b16 %v2677, %v2673
    %v3542 = vpack.c.b16 %v2682, %v2678
    %v3543 = vpack.c.b16 %v2683, %v2679
    %v3544 = vpack.c.b16 %v2684, %v2680
    %v3545 = vpack.c.b16 %v2685, %v2681
    %v3546 = vpack.c.b16 %v2690, %v2686
    %v3547 = vpack.c.b16 %v2691, %v2687
    %v3548 = vpack.c.b16 %v2692, %v2688
    %v3549 = vpack.c.b16 %v2693, %v2689
    %v3550 = vpack.c.b16 %v2698, %v2694
    %v3551 = vpack.c.b16 %v2699, %v2695
    %v3552 = vpack.c.b16 %v2700, %v2696
    %v3553 = vpack.c.b16 %v2701, %v2697
    %v3554 = vpack.c.b16 %v2706, %v2702
    %v3555 = vpack.c.b16 %v2707, %v2703
    %v3556 = vpack.c.b16 %v2708, %v2704
    %v3557 = vpack.c.b16 %v2709, %v2705
    %v3558 = vpack.c.b16 %v2714, %v2710
    %v3559 = vpack.c.b16 %v2715, %v2711
    %v3560 = vpack.c.b16 %v2716, %v2712
    %v3561 = vpack.c.b16 %v2717, %v2713
    %v3562 = vpack.c.b16 %v2722, %v2718
    %v3563 = vpack.c.b16 %v2723, %v2719
    %v3564 = vpack.c.b16 %v2724, %v2720
    %v3565 = vpack.c.b16 %v2725, %v2721
    %v3566 = vpack.c.b16 %v2730, %v2726
    %v3567 = vpack.c.b16 %v2731, %v2727
    %v3568 = vpack.c.b16 %v2732, %v2728
    %v3569 = vpack.c.b16 %v2733, %v2729
    %v3570 = vpack.c.b16 %v2738, %v2734
    %v3571 = vpack.c.b16 %v2739, %v2735
    %v3572 = vpack.c.b16 %v2740, %v2736
    %v3573 = vpack.c.b16 %v2741, %v2737
    %v3574 = vpack.c.b16 %v2746, %v2742
    %v3575 = vpack.c.b16 %v2747, %v2743
    %v3576 = vpack.c.b16 %v2748, %v2744
    %v3577 = vpack.c.b16 %v2749, %v2745
    %v3578 = vpack.c.b16 %v2754, %v2750
    %v3579 = vpack.c.b16 %v2755, %v2751
    %v3580 = vpack.c.b16 %v2756, %v2752
    %v3581 = vpack.c.b16 %v2757, %v2753
    %v3582 = vpack.c.b16 %v2762, %v2758
    %v3583 = vpack.c.b16 %v2763, %v2759
    %v3584 = vpack.c.b16 %v2764, %v2760
    %v3585 = vpack.c.b16 %v2765, %v2761
    %v3586 = vpack.c.b16 %v2770, %v2766
    %v3587 = vpack.c.b16 %v2771, %v2767
    %v3588 = vpack.c.b16 %v2772, %v2768
    %v3589 = vpack.c.b16 %v2773, %v2769
    %v3590 = vpack.c.b16 %v2778, %v2774
    %v3591 = vpack.c.b16 %v2779, %v2775
    %v3592 = vpack.c.b16 %v2780, %v2776
    %v3593 = vpack.c.b16 %v2781, %v2777
    %v3594 = vpack.c.b16 %v2786, %v2782
    %v3595 = vpack.c.b16 %v2787, %v2783
    %v3596 = vpack.c.b16 %v2788, %v2784
    %v3597 = vpack.c.b16 %v2789, %v2785
    %v3598 = vpack.c.b16 %v2794, %v2790
    %v3599 = vpack.c.b16 %v2795, %v2791
    %v3600 = vpack.c.b16 %v2796, %v2792
    %v3601 = vpack.c.b16 %v2797, %v2793
    %v3602 = vpack.c.b16 %v2802, %v2798
    %v3603 = vpack.c.b16 %v2803, %v2799
    %v3604 = vpack.c.b16 %v2804, %v2800
    %v3605 = vpack.c.b16 %v2805, %v2801
    %v3606 = vpack.c.b16 %v2810, %v2806
    %v3607 = vpack.c.b16 %v2811, %v2807
    %v3608 = vpack.c.b16 %v2812, %v2808
    %v3609 = vpack.c.b16 %v2813, %v2809
    %v3610 = vpack.c.b16 %v2818, %v2814
    %v3611 = vpack.c.b16 %v2819, %v2815
    %v3612 = vpack.c.b16 %v2820, %v2816
    %v3613 = vpack.c.b16 %v2821, %v2817
    %v3614 = vpack.c.b16 %v2826, %v2822
    %v3615 = vpack.c.b16 %v2827, %v2823
    %v3616 = vpack.c.b16 %v2828, %v2824
    %v3617 = vpack.c.b16 %v2829, %v2825
    %v3618 = vpack.c.b16 %v2834, %v2830
    %v3619 = vpack.c.b16 %v2835, %v2831
    %v3620 = vpack.c.b16 %v2836, %v2832
    %v3621 = vpack.c.b16 %v2837, %v2833
    %v3622 = vpack.c.b16 %v2842, %v2838
    %v3623 = vpack.c.b16 %v2843, %v2839
    %v3624 = vpack.c.b16 %v2844, %v2840
    %v3625 = vpack.c.b16 %v2845, %v2841
    %v3626 = vpack.c.b16 %v2850, %v2846
    %v3627 = vpack.c.b16 %v2851, %v2847
    %v3628 = vpack.c.b16 %v2852, %v2848
    %v3629 = vpack.c.b16 %v2853, %v2849
    %v3630 = vpack.c.b16 %v2858, %v2854
    %v3631 = vpack.c.b16 %v2859, %v2855
    %v3632 = vpack.c.b16 %v2860, %v2856
    %v3633 = vpack.c.b16 %v2861, %v2857
    %v3634 = vpack.c.b16 %v2866, %v2862
    %v3635 = vpack.c.b16 %v2867, %v2863
    %v3636 = vpack.c.b16 %v2868, %v2864
    %v3637 = vpack.c.b16 %v2869, %v2865
    %v3638 = vpack.c.b16 %v2874, %v2870
    %v3639 = vpack.c.b16 %v2875, %v2871
    %v3640 = vpack.c.b16 %v2876, %v2872
    %v3641 = vpack.c.b16 %v2877, %v2873
    %v3642 = vpack.c.b16 %v2882, %v2878
    %v3643 = vpack.c.b16 %v2883, %v2879
    %v3644 = vpack.c.b16 %v2884, %v2880
    %v3645 = vpack.c.b16 %v2885, %v2881
    %v3646 = vpack.c.b16 %v2890, %v2886
    %v3647 = vpack.c.b16 %v2891, %v2887
    %v3648 = vpack.c.b16 %v2892, %v2888
    %v3649 = vpack.c.b16 %v2893, %v2889
    %v3650 = vpack.c.b16 %v2898, %v2894
    %v3651 = vpack.c.b16 %v2899, %v2895
    %v3652 = vpack.c.b16 %v2900, %v2896
    %v3653 = vpack.c.b16 %v2901, %v2897
    %v3654 = vpack.c.b16 %v2906, %v2902
    %v3655 = vpack.c.b16 %v2907, %v2903
    %v3656 = vpack.c.b16 %v2908, %v2904
    %v3657 = vpack.c.b16 %v2909, %v2905
    %v3658 = vpack.c.b16 %v2914, %v2910
    %v3659 = vpack.c.b16 %v2915, %v2911
    %v3660 = vpack.c.b16 %v2916, %v2912
    %v3661 = vpack.c.b16 %v2917, %v2913
    %v3662 = vpack.c.b16 %v2922, %v2918
    %v3663 = vpack.c.b16 %v2923, %v2919
    %v3664 = vpack.c.b16 %v2924, %v2920
    %v3665 = vpack.c.b16 %v2925, %v2921
    %v3666 = vpack.c.b16 %v2930, %v2926
    %v3667 = vpack.c.b16 %v2931, %v2927
    %v3668 = vpack.c.b16 %v2932, %v2928
    %v3669 = vpack.c.b16 %v2933, %v2929
    %v3670 = vpack.c.b16 %v2938, %v2934
    %v3671 = vpack.c.b16 %v2939, %v2935
    %v3672 = vpack.c.b16 %v2940, %v2936
    %v3673 = vpack.c.b16 %v2941, %v2937
    %v3674 = vpack.c.b16 %v2946, %v2942
    %v3675 = vpack.c.b16 %v2947, %v2943
    %v3676 = vpack.c.b16 %v2948, %v2944
    %v3677 = vpack.c.b16 %v2949, %v2945
    %v3678 = vpack.c.b16 %v2954, %v2950
    %v3679 = vpack.c.b16 %v2955, %v2951
    %v3680 = vpack.c.b16 %v2956, %v2952
    %v3681 = vpack.c.b16 %v2957, %v2953
    %v3682 = vpack.c.b16 %v2962, %v2958
    %v3683 = vpack.c.b16 %v2963, %v2959
    %v3684 = vpack.c.b16 %v2964, %v2960
    %v3685 = vpack.c.b16 %v2965, %v2961
    %v3686 = vpack.c.b16 %v2970, %v2966
    %v3687 = vpack.c.b16 %v2971, %v2967
    %v3688 = vpack.c.b16 %v2972, %v2968
    %v3689 = vpack.c.b16 %v2973, %v2969
    %v3690 = vpack.c.b16 %v2978, %v2974
    %v3691 = vpack.c.b16 %v2979, %v2975
    %v3692 = vpack.c.b16 %v2980, %v2976
    %v3693 = vpack.c.b16 %v2981, %v2977
    %v3694 = vpack.c.b16 %v2986, %v2982
    %v3695 = vpack.c.b16 %v2987, %v2983
    %v3696 = vpack.c.b16 %v2988, %v2984
    %v3697 = vpack.c.b16 %v2989, %v2985
    %v3698 = vpack.c.b16 %v2994, %v2990
    %v3699 = vpack.c.b16 %v2995, %v2991
    %v3700 = vpack.c.b16 %v2996, %v2992
    %v3701 = vpack.c.b16 %v2997, %v2993
    %v3702 = vpack.c.b16 %v3002, %v2998
    %v3703 = vpack.c.b16 %v3003, %v2999
    %v3704 = vpack.c.b16 %v3004, %v3000
    %v3705 = vpack.c.b16 %v3005, %v3001
    %v3706 = vpack.c.b16 %v3010, %v3006
    %v3707 = vpack.c.b16 %v3011, %v3007
    %v3708 = vpack.c.b16 %v3012, %v3008
    %v3709 = vpack.c.b16 %v3013, %v3009
    %v3710 = vpack.c.b16 %v3018, %v3014
    %v3711 = vpack.c.b16 %v3019, %v3015
    %v3712 = vpack.c.b16 %v3020, %v3016
    %v3713 = vpack.c.b16 %v3021, %v3017
    %v3714 = vpack.c.b16 %v3026, %v3022
    %v3715 = vpack.c.b16 %v3027, %v3023
    %v3716 = vpack.c.b16 %v3028, %v3024
    %v3717 = vpack.c.b16 %v3029, %v3025
    %v3718 = vpack.c.b16 %v3034, %v3030
    %v3719 = vpack.c.b16 %v3035, %v3031
    %v3720 = vpack.c.b16 %v3036, %v3032
    %v3721 = vpack.c.b16 %v3037, %v3033
    %v3722 = vpack.c.b16 %v3042, %v3038
    %v3723 = vpack.c.b16 %v3043, %v3039
    %v3724 = vpack.c.b16 %v3044, %v3040
    %v3725 = vpack.c.b16 %v3045, %v3041
    %v3726 = vpack.c.b16 %v3050, %v3046
    %v3727 = vpack.c.b16 %v3051, %v3047
    %v3728 = vpack.c.b16 %v3052, %v3048
    %v3729 = vpack.c.b16 %v3053, %v3049
    %v3730 = vpack.c.b16 %v3058, %v3054
    %v3731 = vpack.c.b16 %v3059, %v3055
    %v3732 = vpack.c.b16 %v3060, %v3056
    %v3733 = vpack.c.b16 %v3061, %v3057
    %v3734 = vpack.c.b16 %v3066, %v3062
    %v3735 = vpack.c.b16 %v3067, %v3063
    %v3736 = vpack.c.b16 %v3068, %v3064
    %v3737 = vpack.c.b16 %v3069, %v3065
    %v3738 = vpack.c.b16 %v3074, %v3070
    %v3739 = vpack.c.b16 %v3075, %v3071
    %v3740 = vpack.c.b16 %v3076, %v3072
    %v3741 = vpack.c.b16 %v3077, %v3073
    %v3742 = vpack.c.b16 %v3082, %v3078
    %v3743 = vpack.c.b16 %v3083, %v3079
    %v3744 = vpack.c.b16 %v3084, %v3080
    %v3745 = vpack.c.b16 %v3085, %v3081
    %v3746 = vpack.c.b16 %v3090, %v3086
    %v3747 = vpack.c.b16 %v3091, %v3087
    %v3748 = vpack.c.b16 %v3092, %v3088
    %v3749 = vpack.c.b16 %v3093, %v3089
    %v3750 = vpack.c.b16 %v3098, %v3094
    %v3751 = vpack.c.b16 %v3099, %v3095
    %v3752 = vpack.c.b16 %v3100, %v3096
    %v3753 = vpack.c.b16 %v3101, %v3097
    %v3754 = vpack.c.b16 %v3106, %v3102
    %v3755 = vpack.c.b16 %v3107, %v3103
    %v3756 = vpack.c.b16 %v3108, %v3104
    %v3757 = vpack.c.b16 %v3109, %v3105
    %v3758 = vpack.c.b16 %v3114, %v3110
    %v3759 = vpack.c.b16 %v3115, %v3111
    %v3760 = vpack.c.b16 %v3116, %v3112
    %v3761 = vpack.c.b16 %v3117, %v3113
    %v3762 = vpack.c.b16 %v3122, %v3118
    %v3763 = vpack.c.b16 %v3123, %v3119
    %v3764 = vpack.c.b16 %v3124, %v3120
    %v3765 = vpack.c.b16 %v3125, %v3121
    %v3766 = vpack.c.b16 %v3130, %v3126
    %v3767 = vpack.c.b16 %v3131, %v3127
    %v3768 = vpack.c.b16 %v3132, %v3128
    %v3769 = vpack.c.b16 %v3133, %v3129
    %v3770 = vpack.c.b16 %v3138, %v3134
    %v3771 = vpack.c.b16 %v3139, %v3135
    %v3772 = vpack.c.b16 %v3140, %v3136
    %v3773 = vpack.c.b16 %v3141, %v3137
    %v3774 = vpack.c.b16 %v3146, %v3142
    %v3775 = vpack.c.b16 %v3147, %v3143
    %v3776 = vpack.c.b16 %v3148, %v3144
    %v3777 = vpack.c.b16 %v3149, %v3145
    %v3778 = vpack.c.b16 %v3154, %v3150
    %v3779 = vpack.c.b16 %v3155, %v3151
    %v3780 = vpack.c.b16 %v3156, %v3152
    %v3781 = vpack.c.b16 %v3157, %v3153
    %v3782 = vpack.c.b16 %v3162, %v3158
    %v3783 = vpack.c.b16 %v3163, %v3159
    %v3784 = vpack.c.b16 %v3164, %v3160
    %v3785 = vpack.c.b16 %v3165, %v3161
    %v3786 = vpack.c.b16 %v3170, %v3166
    %v3787 = vpack.c.b16 %v3171, %v3167
    %v3788 = vpack.c.b16 %v3172, %v3168
    %v3789 = vpack.c.b16 %v3173, %v3169
    %v3790 = vpack.c.b16 %v3178, %v3174
    %v3791 = vpack.c.b16 %v3179, %v3175
    %v3792 = vpack.c.b16 %v3180, %v3176
    %v3793 = vpack.c.b16 %v3181, %v3177
    %v3794 = vpack.c.b16 %v3186, %v3182
    %v3795 = vpack.c.b16 %v3187, %v3183
    %v3796 = vpack.c.b16 %v3188, %v3184
    %v3797 = vpack.c.b16 %v3189, %v3185
    %v3798 = vpack.c.b16 %v3194, %v3190
    %v3799 = vpack.c.b16 %v3195, %v3191
    %v3800 = vpack.c.b16 %v3196, %v3192
    %v3801 = vpack.c.b16 %v3197, %v3193
    %v3802 = vpack.c.b16 %v3202, %v3198
    %v3803 = vpack.c.b16 %v3203, %v3199
    %v3804 = vpack.c.b16 %v3204, %v3200
    %v3805 = vpack.c.b16 %v3205, %v3201
    %v3806 = vpack.c.b16 %v3210, %v3206
    %v3807 = vpack.c.b16 %v3211, %v3207
    %v3808 = vpack.c.b16 %v3212, %v3208
    %v3809 = vpack.c.b16 %v3213, %v3209
    %v3810 = vpack.c.b16 %v3218, %v3214
    %v3811 = vpack.c.b16 %v3219, %v3215
    %v3812 = vpack.c.b16 %v3220, %v3216
    %v3813 = vpack.c.b16 %v3221, %v3217
    %v3814 = vpack.c.b16 %v3226, %v3222
    %v3815 = vpack.c.b16 %v3227, %v3223
    %v3816 = vpack.c.b16 %v3228, %v3224
    %v3817 = vpack.c.b16 %v3229, %v3225
    %v3818 = vpack.c.b16 %v3234, %v3230
    %v3819 = vpack.c.b16 %v3235, %v3231
    %v3820 = vpack.c.b16 %v3236, %v3232
    %v3821 = vpack.c.b16 %v3237, %v3233
    %v3822 = vpack.c.b16 %v3242, %v3238
    %v3823 = vpack.c.b16 %v3243, %v3239
    %v3824 = vpack.c.b16 %v3244, %v3240
    %v3825 = vpack.c.b16 %v3245, %v3241
    %v3826 = vpack.c.b16 %v3250, %v3246
    %v3827 = vpack.c.b16 %v3251, %v3247
    %v3828 = vpack.c.b16 %v3252, %v3248
    %v3829 = vpack.c.b16 %v3253, %v3249
    %v3830 = vpack.c.b16 %v3258, %v3254
    %v3831 = vpack.c.b16 %v3259, %v3255
    %v3832 = vpack.c.b16 %v3260, %v3256
    %v3833 = vpack.c.b16 %v3261, %v3257
    %v3834 = vpack.c.b16 %v3266, %v3262
    %v3835 = vpack.c.b16 %v3267, %v3263
    %v3836 = vpack.c.b16 %v3268, %v3264
    %v3837 = vpack.c.b16 %v3269, %v3265
    %v3838 = vpack.c.b16 %v3274, %v3270
    %v3839 = vpack.c.b16 %v3275, %v3271
    %v3840 = vpack.c.b16 %v3276, %v3272
    %v3841 = vpack.c.b16 %v3277, %v3273
    %v3842 = vpack.c.b16 %v3282, %v3278
    %v3843 = vpack.c.b16 %v3283, %v3279
    %v3844 = vpack.c.b16 %v3284, %v3280
    %v3845 = vpack.c.b16 %v3285, %v3281
    %v3846 = vpack.c.b16 %v3290, %v3286
    %v3847 = vpack.c.b16 %v3291, %v3287
    %v3848 = vpack.c.b16 %v3292, %v3288
    %v3849 = vpack.c.b16 %v3293, %v3289
    %v3850 = vpack.c.b16 %v3298, %v3294
    %v3851 = vpack.c.b16 %v3299, %v3295
    %v3852 = vpack.c.b16 %v3300, %v3296
    %v3853 = vpack.c.b16 %v3301, %v3297
    %v3854 = vpack.c.b16 %v3306, %v3302
    %v3855 = vpack.c.b16 %v3307, %v3303
    %v3856 = vpack.c.b16 %v3308, %v3304
    %v3857 = vpack.c.b16 %v3309, %v3305
    %v3858 = vpack.c.b16 %v3314, %v3310
    %v3859 = vpack.c.b16 %v3315, %v3311
    %v3860 = vpack.c.b16 %v3316, %v3312
    %v3861 = vpack.c.b16 %v3317, %v3313
    %v3862 = vpack.c.b16 %v3322, %v3318
    %v3863 = vpack.c.b16 %v3323, %v3319
    %v3864 = vpack.c.b16 %v3324, %v3320
    %v3865 = vpack.c.b16 %v3325, %v3321
    %v3866 = vpack.c.b16 %v3330, %v3326
    %v3867 = vpack.c.b16 %v3331, %v3327
    %v3868 = vpack.c.b16 %v3332, %v3328
    %v3869 = vpack.c.b16 %v3333, %v3329
    %v3870 = vpack.c.b16 %v3338, %v3334
    %v3871 = vpack.c.b16 %v3339, %v3335
    %v3872 = vpack.c.b16 %v3340, %v3336
    %v3873 = vpack.c.b16 %v3341, %v3337
    %v3874 = vpack.c.b16 %v3346, %v3342
    %v3875 = vpack.c.b16 %v3347, %v3343
    %v3876 = vpack.c.b16 %v3348, %v3344
    %v3877 = vpack.c.b16 %v3349, %v3345
    %v3878 = vpack.c.b16 %v3354, %v3350
    %v3879 = vpack.c.b16 %v3355, %v3351
    %v3880 = vpack.c.b16 %v3356, %v3352
    %v3881 = vpack.c.b16 %v3357, %v3353
    %v3882 = vpack.c.b16 %v3362, %v3358
    %v3883 = vpack.c.b16 %v3363, %v3359
    %v3884 = vpack.c.b16 %v3364, %v3360
    %v3885 = vpack.c.b16 %v3365, %v3361
    %v3886 = vpack.c.b16 %v3370, %v3366
    %v3887 = vpack.c.b16 %v3371, %v3367
    %v3888 = vpack.c.b16 %v3372, %v3368
    %v3889 = vpack.c.b16 %v3373, %v3369
    %v3890 = vpack.c.b16 %v3378, %v3374
    %v3891 = vpack.c.b16 %v3379, %v3375
    %v3892 = vpack.c.b16 %v3380, %v3376
    %v3893 = vpack.c.b16 %v3381, %v3377
    %4406 = vmatprep.subr.bf16.mxu0 %v3411
    %4407 = vmatpush1.bf16.msra.mxu0 %v3410
    %4408 = vmatprep.subr.bf16.mxu0 %v3407
    %4409 = vmatpush1.bf16.msra.mxu0 %v3406
    %4410 = vmatprep.subr.bf16.mxu0 %v3403
    %4411 = vmatpush1.bf16.msra.mxu0 %v3402
    %4412 = vmatprep.subr.bf16.mxu0 %v3399
    %4413 = vmatpush1.bf16.msra.mxu0 %v3398
    %4414 = vmatprep.subr.bf16.mxu0 %v3395
    %4415 = vmatpush1.bf16.msra.mxu0 %v3394
    %4416 = vmatprep.subr.bf16.mxu0 %v3391
    %4417 = vmatpush1.bf16.msra.mxu0 %v3390
    %4418 = vmatprep.subr.bf16.mxu0 %v3387
    %4419 = vmatpush1.bf16.msra.mxu0 %v3386
    %4420 = vmatprep.subr.bf16.mxu0 %v3383
    %4421 = vmatpush1.bf16.msra.mxu0 %v3382
    %4422 = vmatprep.subr.bf16.mxu0 %v3443
    %4423 = vmatpush2.bf16.msra.mxu0 %v3442
    %4424 = vmatprep.subr.bf16.mxu0 %v3439
    %4425 = vmatpush2.bf16.msra.mxu0 %v3438
    %4426 = vmatprep.subr.bf16.mxu0 %v3435
    %4427 = vmatpush2.bf16.msra.mxu0 %v3434
    %4428 = vmatprep.subr.bf16.mxu0 %v3431
    %4429 = vmatpush2.bf16.msra.mxu0 %v3430
    %4430 = vmatprep.subr.bf16.mxu0 %v3427
    %4431 = vmatpush2.bf16.msra.mxu0 %v3426
    %4432 = vmatprep.subr.bf16.mxu0 %v3423
    %4433 = vmatpush2.bf16.msra.mxu0 %v3422
    %4434 = vmatprep.subr.bf16.mxu0 %v3419
    %4435 = vmatpush2.bf16.msra.mxu0 %v3418
    %4436 = vmatprep.subr.bf16.mxu0 %v3415
    %4437 = vmatpush2.bf16.msra.mxu0 %v3414
    %4438 = vmatprep.mubr.bf16.mxu0 %v1297
    %4439 = vmatmul.mubr.bf16.gmra.mxu0 %v1296
    %v4440 = vpop.f32.mrf.mxu0
    %v4441 = vadd.f32 %v1829, %v4440
    %v4442 = vpop.f32.mrf.mxu0
    %v4443 = vadd.f32 %v1833, %v4442
    %v4444 = vpop.f32.mrf.mxu0
    %v4445 = vpop.f32.mrf.mxu0
    %4446 = vdwg.mxu0
    %4447 = vmatprep.subr.bf16.mxu0 %v3475
    %4448 = vmatpush1.bf16.msra.mxu0 %v3474
    %4449 = vmatprep.subr.bf16.mxu0 %v3471
    %4450 = vmatpush1.bf16.msra.mxu0 %v3470
    %4451 = vmatprep.subr.bf16.mxu0 %v3467
    %4452 = vmatpush1.bf16.msra.mxu0 %v3466
    %4453 = vmatprep.subr.bf16.mxu0 %v3463
    %4454 = vmatpush1.bf16.msra.mxu0 %v3462
    %4455 = vmatprep.subr.bf16.mxu0 %v3459
    %4456 = vmatpush1.bf16.msra.mxu0 %v3458
    %4457 = vmatprep.subr.bf16.mxu0 %v3455
    %4458 = vmatpush1.bf16.msra.mxu0 %v3454
    %4459 = vmatprep.subr.bf16.mxu0 %v3451
    %4460 = vmatpush1.bf16.msra.mxu0 %v3450
    %4461 = vmatprep.subr.bf16.mxu0 %v3447
    %4462 = vmatpush1.bf16.msra.mxu0 %v3446
    %4463 = vmatprep.subr.bf16.mxu0 %v3507
    %4464 = vmatpush2.bf16.msra.mxu0 %v3506
    %4465 = vmatprep.subr.bf16.mxu0 %v3503
    %4466 = vmatpush2.bf16.msra.mxu0 %v3502
    %4467 = vmatprep.subr.bf16.mxu0 %v3499
    %4468 = vmatpush2.bf16.msra.mxu0 %v3498
    %4469 = vmatprep.subr.bf16.mxu0 %v3495
    %4470 = vmatpush2.bf16.msra.mxu0 %v3494
    %4471 = vmatprep.subr.bf16.mxu0 %v3491
    %4472 = vmatpush2.bf16.msra.mxu0 %v3490
    %4473 = vmatprep.subr.bf16.mxu0 %v3487
    %4474 = vmatpush2.bf16.msra.mxu0 %v3486
    %4475 = vmatprep.subr.bf16.mxu0 %v3483
    %4476 = vmatpush2.bf16.msra.mxu0 %v3482
    %4477 = vmatprep.subr.bf16.mxu0 %v3479
    %4478 = vmatpush2.bf16.msra.mxu0 %v3478
    %4479 = vmatprep.mubr.bf16.mxu0 %v1299
    %4480 = vmatmul.mubr.bf16.gmra.mxu0 %v1298
    %v4481 = vpop.f32.mrf.mxu0
    %v4482 = vadd.f32 %v4441, %v4481
    %v4483 = vpop.f32.mrf.mxu0
    %v4484 = vadd.f32 %v4443, %v4483
    %v4485 = vpop.f32.mrf.mxu0
    %v4486 = vpop.f32.mrf.mxu0
    %4487 = vdwg.mxu0
    %4488 = vmatprep.subr.bf16.mxu0 %v3539
    %4489 = vmatpush1.bf16.msra.mxu0 %v3538
    %4490 = vmatprep.subr.bf16.mxu0 %v3535
    %4491 = vmatpush1.bf16.msra.mxu0 %v3534
    %4492 = vmatprep.subr.bf16.mxu0 %v3531
    %4493 = vmatpush1.bf16.msra.mxu0 %v3530
    %4494 = vmatprep.subr.bf16.mxu0 %v3527
    %4495 = vmatpush1.bf16.msra.mxu0 %v3526
    %4496 = vmatprep.subr.bf16.mxu0 %v3523
    %4497 = vmatpush1.bf16.msra.mxu0 %v3522
    %4498 = vmatprep.subr.bf16.mxu0 %v3519
    %4499 = vmatpush1.bf16.msra.mxu0 %v3518
    %4500 = vmatprep.subr.bf16.mxu0 %v3515
    %4501 = vmatpush1.bf16.msra.mxu0 %v3514
    %4502 = vmatprep.subr.bf16.mxu0 %v3511
    %4503 = vmatpush1.bf16.msra.mxu0 %v3510
    %4504 = vmatprep.subr.bf16.mxu0 %v3571
    %4505 = vmatpush2.bf16.msra.mxu0 %v3570
    %4506 = vmatprep.subr.bf16.mxu0 %v3567
    %4507 = vmatpush2.bf16.msra.mxu0 %v3566
    %4508 = vmatprep.subr.bf16.mxu0 %v3563
    %4509 = vmatpush2.bf16.msra.mxu0 %v3562
    %4510 = vmatprep.subr.bf16.mxu0 %v3559
    %4511 = vmatpush2.bf16.msra.mxu0 %v3558
    %4512 = vmatprep.subr.bf16.mxu0 %v3555
    %4513 = vmatpush2.bf16.msra.mxu0 %v3554
    %4514 = vmatprep.subr.bf16.mxu0 %v3551
    %4515 = vmatpush2.bf16.msra.mxu0 %v3550
    %4516 = vmatprep.subr.bf16.mxu0 %v3547
    %4517 = vmatpush2.bf16.msra.mxu0 %v3546
    %4518 = vmatprep.subr.bf16.mxu0 %v3543
    %4519 = vmatpush2.bf16.msra.mxu0 %v3542
    %4520 = vmatprep.mubr.bf16.mxu0 %v1301
    %4521 = vmatmul.mubr.bf16.gmra.mxu0 %v1300
    %v4522 = vpop.f32.mrf.mxu0
    %v4523 = vadd.f32 %v4482, %v4522
    %v4524 = vpop.f32.mrf.mxu0
    %v4525 = vadd.f32 %v4484, %v4524
    %v4526 = vpop.f32.mrf.mxu0
    %v4527 = vpop.f32.mrf.mxu0
    %4528 = vdwg.mxu0
    %4529 = vmatprep.subr.bf16.mxu0 %v3603
    %4530 = vmatpush1.bf16.msra.mxu0 %v3602
    %4531 = vmatprep.subr.bf16.mxu0 %v3599
    %4532 = vmatpush1.bf16.msra.mxu0 %v3598
    %4533 = vmatprep.subr.bf16.mxu0 %v3595
    %4534 = vmatpush1.bf16.msra.mxu0 %v3594
    %4535 = vmatprep.subr.bf16.mxu0 %v3591
    %4536 = vmatpush1.bf16.msra.mxu0 %v3590
    %4537 = vmatprep.subr.bf16.mxu0 %v3587
    %4538 = vmatpush1.bf16.msra.mxu0 %v3586
    %4539 = vmatprep.subr.bf16.mxu0 %v3583
    %4540 = vmatpush1.bf16.msra.mxu0 %v3582
    %4541 = vmatprep.subr.bf16.mxu0 %v3579
    %4542 = vmatpush1.bf16.msra.mxu0 %v3578
    %4543 = vmatprep.subr.bf16.mxu0 %v3575
    %4544 = vmatpush1.bf16.msra.mxu0 %v3574
    %4545 = vmatprep.subr.bf16.mxu0 %v3635
    %4546 = vmatpush2.bf16.msra.mxu0 %v3634
    %4547 = vmatprep.subr.bf16.mxu0 %v3631
    %4548 = vmatpush2.bf16.msra.mxu0 %v3630
    %4549 = vmatprep.subr.bf16.mxu0 %v3627
    %4550 = vmatpush2.bf16.msra.mxu0 %v3626
    %4551 = vmatprep.subr.bf16.mxu0 %v3623
    %4552 = vmatpush2.bf16.msra.mxu0 %v3622
    %4553 = vmatprep.subr.bf16.mxu0 %v3619
    %4554 = vmatpush2.bf16.msra.mxu0 %v3618
    %4555 = vmatprep.subr.bf16.mxu0 %v3615
    %4556 = vmatpush2.bf16.msra.mxu0 %v3614
    %4557 = vmatprep.subr.bf16.mxu0 %v3611
    %4558 = vmatpush2.bf16.msra.mxu0 %v3610
    %4559 = vmatprep.subr.bf16.mxu0 %v3607
    %4560 = vmatpush2.bf16.msra.mxu0 %v3606
    %4561 = vmatprep.mubr.bf16.mxu0 %v1303
    %4562 = vmatmul.mubr.bf16.gmra.mxu0 %v1302
    %v4563 = vpop.f32.mrf.mxu0
    %v4564 = vadd.f32 %v4523, %v4563
    %v4565 = vpop.f32.mrf.mxu0
    %v4566 = vadd.f32 %v4525, %v4565
    %v4567 = vpop.f32.mrf.mxu0
    %v4568 = vpop.f32.mrf.mxu0
    %4569 = vdwg.mxu0
    %4570 = vmatprep.subr.bf16.mxu0 %v3667
    %4571 = vmatpush1.bf16.msra.mxu0 %v3666
    %4572 = vmatprep.subr.bf16.mxu0 %v3663
    %4573 = vmatpush1.bf16.msra.mxu0 %v3662
    %4574 = vmatprep.subr.bf16.mxu0 %v3659
    %4575 = vmatpush1.bf16.msra.mxu0 %v3658
    %4576 = vmatprep.subr.bf16.mxu0 %v3655
    %4577 = vmatpush1.bf16.msra.mxu0 %v3654
    %4578 = vmatprep.subr.bf16.mxu0 %v3651
    %4579 = vmatpush1.bf16.msra.mxu0 %v3650
    %4580 = vmatprep.subr.bf16.mxu0 %v3647
    %4581 = vmatpush1.bf16.msra.mxu0 %v3646
    %4582 = vmatprep.subr.bf16.mxu0 %v3643
    %4583 = vmatpush1.bf16.msra.mxu0 %v3642
    %4584 = vmatprep.subr.bf16.mxu0 %v3639
    %4585 = vmatpush1.bf16.msra.mxu0 %v3638
    %4586 = vmatprep.subr.bf16.mxu0 %v3699
    %4587 = vmatpush2.bf16.msra.mxu0 %v3698
    %4588 = vmatprep.subr.bf16.mxu0 %v3695
    %4589 = vmatpush2.bf16.msra.mxu0 %v3694
    %4590 = vmatprep.subr.bf16.mxu0 %v3691
    %4591 = vmatpush2.bf16.msra.mxu0 %v3690
    %4592 = vmatprep.subr.bf16.mxu0 %v3687
    %4593 = vmatpush2.bf16.msra.mxu0 %v3686
    %4594 = vmatprep.subr.bf16.mxu0 %v3683
    %4595 = vmatpush2.bf16.msra.mxu0 %v3682
    %4596 = vmatprep.subr.bf16.mxu0 %v3679
    %4597 = vmatpush2.bf16.msra.mxu0 %v3678
    %4598 = vmatprep.subr.bf16.mxu0 %v3675
    %4599 = vmatpush2.bf16.msra.mxu0 %v3674
    %4600 = vmatprep.subr.bf16.mxu0 %v3671
    %4601 = vmatpush2.bf16.msra.mxu0 %v3670
    %4602 = vmatprep.mubr.bf16.mxu0 %v1305
    %4603 = vmatmul.mubr.bf16.gmra.mxu0 %v1304
    %v4604 = vpop.f32.mrf.mxu0
    %v4605 = vadd.f32 %v4564, %v4604
    %v4606 = vpop.f32.mrf.mxu0
    %v4607 = vadd.f32 %v4566, %v4606
    %v4608 = vpop.f32.mrf.mxu0
    %v4609 = vpop.f32.mrf.mxu0
    %4610 = vdwg.mxu0
    %4611 = vmatprep.subr.bf16.mxu0 %v3731
    %4612 = vmatpush1.bf16.msra.mxu0 %v3730
    %4613 = vmatprep.subr.bf16.mxu0 %v3727
    %4614 = vmatpush1.bf16.msra.mxu0 %v3726
    %4615 = vmatprep.subr.bf16.mxu0 %v3723
    %4616 = vmatpush1.bf16.msra.mxu0 %v3722
    %4617 = vmatprep.subr.bf16.mxu0 %v3719
    %4618 = vmatpush1.bf16.msra.mxu0 %v3718
    %4619 = vmatprep.subr.bf16.mxu0 %v3715
    %4620 = vmatpush1.bf16.msra.mxu0 %v3714
    %4621 = vmatprep.subr.bf16.mxu0 %v3711
    %4622 = vmatpush1.bf16.msra.mxu0 %v3710
    %4623 = vmatprep.subr.bf16.mxu0 %v3707
    %4624 = vmatpush1.bf16.msra.mxu0 %v3706
    %4625 = vmatprep.subr.bf16.mxu0 %v3703
    %4626 = vmatpush1.bf16.msra.mxu0 %v3702
    %4627 = vmatprep.subr.bf16.mxu0 %v3763
    %4628 = vmatpush2.bf16.msra.mxu0 %v3762
    %4629 = vmatprep.subr.bf16.mxu0 %v3759
    %4630 = vmatpush2.bf16.msra.mxu0 %v3758
    %4631 = vmatprep.subr.bf16.mxu0 %v3755
    %4632 = vmatpush2.bf16.msra.mxu0 %v3754
    %4633 = vmatprep.subr.bf16.mxu0 %v3751
    %4634 = vmatpush2.bf16.msra.mxu0 %v3750
    %4635 = vmatprep.subr.bf16.mxu0 %v3747
    %4636 = vmatpush2.bf16.msra.mxu0 %v3746
    %4637 = vmatprep.subr.bf16.mxu0 %v3743
    %4638 = vmatpush2.bf16.msra.mxu0 %v3742
    %4639 = vmatprep.subr.bf16.mxu0 %v3739
    %4640 = vmatpush2.bf16.msra.mxu0 %v3738
    %4641 = vmatprep.subr.bf16.mxu0 %v3735
    %4642 = vmatpush2.bf16.msra.mxu0 %v3734
    %4643 = vmatprep.mubr.bf16.mxu0 %v1307
    %4644 = vmatmul.mubr.bf16.gmra.mxu0 %v1306
    %v4645 = vpop.f32.mrf.mxu0
    %v4646 = vadd.f32 %v4605, %v4645
    %v4647 = vpop.f32.mrf.mxu0
    %v4648 = vadd.f32 %v4607, %v4647
    %v4649 = vpop.f32.mrf.mxu0
    %v4650 = vpop.f32.mrf.mxu0
    %4651 = vdwg.mxu0
    %4652 = vmatprep.subr.bf16.mxu0 %v3795
    %4653 = vmatpush1.bf16.msra.mxu0 %v3794
    %4654 = vmatprep.subr.bf16.mxu0 %v3791
    %4655 = vmatpush1.bf16.msra.mxu0 %v3790
    %4656 = vmatprep.subr.bf16.mxu0 %v3787
    %4657 = vmatpush1.bf16.msra.mxu0 %v3786
    %4658 = vmatprep.subr.bf16.mxu0 %v3783
    %4659 = vmatpush1.bf16.msra.mxu0 %v3782
    %4660 = vmatprep.subr.bf16.mxu0 %v3779
    %4661 = vmatpush1.bf16.msra.mxu0 %v3778
    %4662 = vmatprep.subr.bf16.mxu0 %v3775
    %4663 = vmatpush1.bf16.msra.mxu0 %v3774
    %4664 = vmatprep.subr.bf16.mxu0 %v3771
    %4665 = vmatpush1.bf16.msra.mxu0 %v3770
    %4666 = vmatprep.subr.bf16.mxu0 %v3767
    %4667 = vmatpush1.bf16.msra.mxu0 %v3766
    %4668 = vmatprep.subr.bf16.mxu0 %v3827
    %4669 = vmatpush2.bf16.msra.mxu0 %v3826
    %4670 = vmatprep.subr.bf16.mxu0 %v3823
    %4671 = vmatpush2.bf16.msra.mxu0 %v3822
    %4672 = vmatprep.subr.bf16.mxu0 %v3819
    %4673 = vmatpush2.bf16.msra.mxu0 %v3818
    %4674 = vmatprep.subr.bf16.mxu0 %v3815
    %4675 = vmatpush2.bf16.msra.mxu0 %v3814
    %4676 = vmatprep.subr.bf16.mxu0 %v3811
    %4677 = vmatpush2.bf16.msra.mxu0 %v3810
    %4678 = vmatprep.subr.bf16.mxu0 %v3807
    %4679 = vmatpush2.bf16.msra.mxu0 %v3806
    %4680 = vmatprep.subr.bf16.mxu0 %v3803
    %4681 = vmatpush2.bf16.msra.mxu0 %v3802
    %4682 = vmatprep.subr.bf16.mxu0 %v3799
    %4683 = vmatpush2.bf16.msra.mxu0 %v3798
    %4684 = vmatprep.mubr.bf16.mxu0 %v1309
    %4685 = vmatmul.mubr.bf16.gmra.mxu0 %v1308
    %v4686 = vpop.f32.mrf.mxu0
    %v4687 = vadd.f32 %v4646, %v4686
    %v4688 = vpop.f32.mrf.mxu0
    %v4689 = vadd.f32 %v4648, %v4688
    %v4690 = vpop.f32.mrf.mxu0
    %v4691 = vpop.f32.mrf.mxu0
    %4692 = vdwg.mxu0
    %4693 = vmatprep.subr.bf16.mxu0 %v3859
    %4694 = vmatpush1.bf16.msra.mxu0 %v3858
    %4695 = vmatprep.subr.bf16.mxu0 %v3855
    %4696 = vmatpush1.bf16.msra.mxu0 %v3854
    %4697 = vmatprep.subr.bf16.mxu0 %v3851
    %4698 = vmatpush1.bf16.msra.mxu0 %v3850
    %4699 = vmatprep.subr.bf16.mxu0 %v3847
    %4700 = vmatpush1.bf16.msra.mxu0 %v3846
    %4701 = vmatprep.subr.bf16.mxu0 %v3843
    %4702 = vmatpush1.bf16.msra.mxu0 %v3842
    %4703 = vmatprep.subr.bf16.mxu0 %v3839
    %4704 = vmatpush1.bf16.msra.mxu0 %v3838
    %4705 = vmatprep.subr.bf16.mxu0 %v3835
    %4706 = vmatpush1.bf16.msra.mxu0 %v3834
    %4707 = vmatprep.subr.bf16.mxu0 %v3831
    %4708 = vmatpush1.bf16.msra.mxu0 %v3830
    %4709 = vmatprep.subr.bf16.mxu0 %v3891
    %4710 = vmatpush2.bf16.msra.mxu0 %v3890
    %4711 = vmatprep.subr.bf16.mxu0 %v3887
    %4712 = vmatpush2.bf16.msra.mxu0 %v3886
    %4713 = vmatprep.subr.bf16.mxu0 %v3883
    %4714 = vmatpush2.bf16.msra.mxu0 %v3882
    %4715 = vmatprep.subr.bf16.mxu0 %v3879
    %4716 = vmatpush2.bf16.msra.mxu0 %v3878
    %4717 = vmatprep.subr.bf16.mxu0 %v3875
    %4718 = vmatpush2.bf16.msra.mxu0 %v3874
    %4719 = vmatprep.subr.bf16.mxu0 %v3871
    %4720 = vmatpush2.bf16.msra.mxu0 %v3870
    %4721 = vmatprep.subr.bf16.mxu0 %v3867
    %4722 = vmatpush2.bf16.msra.mxu0 %v3866
    %4723 = vmatprep.subr.bf16.mxu0 %v3863
    %4724 = vmatpush2.bf16.msra.mxu0 %v3862
    %4725 = vmatprep.mubr.bf16.mxu0 %v1311
    %4726 = vmatmul.mubr.bf16.gmra.mxu0 %v1310
    %v4727 = vpop.f32.mrf.mxu0
    %v4728 = vadd.f32 %v4687, %v4727
    %v4729 = vpop.f32.mrf.mxu0
    %v4730 = vadd.f32 %v4689, %v4729
    %v4731 = vpop.f32.mrf.mxu0
    %v4732 = vpop.f32.mrf.mxu0
    %4733 = vdwg.mxu0
    %4734 = vmatprep.subr.bf16.mxu0 %v3413
    %4735 = vmatpush1.bf16.msra.mxu0 %v3412
    %4736 = vmatprep.subr.bf16.mxu0 %v3409
    %4737 = vmatpush1.bf16.msra.mxu0 %v3408
    %4738 = vmatprep.subr.bf16.mxu0 %v3405
    %4739 = vmatpush1.bf16.msra.mxu0 %v3404
    %4740 = vmatprep.subr.bf16.mxu0 %v3401
    %4741 = vmatpush1.bf16.msra.mxu0 %v3400
    %4742 = vmatprep.subr.bf16.mxu0 %v3397
    %4743 = vmatpush1.bf16.msra.mxu0 %v3396
    %4744 = vmatprep.subr.bf16.mxu0 %v3393
    %4745 = vmatpush1.bf16.msra.mxu0 %v3392
    %4746 = vmatprep.subr.bf16.mxu0 %v3389
    %4747 = vmatpush1.bf16.msra.mxu0 %v3388
    %4748 = vmatprep.subr.bf16.mxu0 %v3385
    %4749 = vmatpush1.bf16.msra.mxu0 %v3384
    %4750 = vmatprep.subr.bf16.mxu0 %v3445
    %4751 = vmatpush2.bf16.msra.mxu0 %v3444
    %4752 = vmatprep.subr.bf16.mxu0 %v3441
    %4753 = vmatpush2.bf16.msra.mxu0 %v3440
    %4754 = vmatprep.subr.bf16.mxu0 %v3437
    %4755 = vmatpush2.bf16.msra.mxu0 %v3436
    %4756 = vmatprep.subr.bf16.mxu0 %v3433
    %4757 = vmatpush2.bf16.msra.mxu0 %v3432
    %4758 = vmatprep.subr.bf16.mxu0 %v3429
    %4759 = vmatpush2.bf16.msra.mxu0 %v3428
    %4760 = vmatprep.subr.bf16.mxu0 %v3425
    %4761 = vmatpush2.bf16.msra.mxu0 %v3424
    %4762 = vmatprep.subr.bf16.mxu0 %v3421
    %4763 = vmatpush2.bf16.msra.mxu0 %v3420
    %4764 = vmatprep.subr.bf16.mxu0 %v3417
    %4765 = vmatpush2.bf16.msra.mxu0 %v3416
    %4766 = vmatprep.mubr.bf16.mxu0 %v1297
    %4767 = vmatmul.mubr.bf16.gmra.mxu0 %v1296
    %v4768 = vpop.f32.mrf.mxu0
    %v4769 = vadd.f32 %v1837, %v4768
    %v4770 = vpop.f32.mrf.mxu0
    %v4771 = vadd.f32 %v1841, %v4770
    %v4772 = vpop.f32.mrf.mxu0
    %v4773 = vpop.f32.mrf.mxu0
    %4774 = vdwg.mxu0
    %4775 = vmatprep.subr.bf16.mxu0 %v3477
    %4776 = vmatpush1.bf16.msra.mxu0 %v3476
    %4777 = vmatprep.subr.bf16.mxu0 %v3473
    %4778 = vmatpush1.bf16.msra.mxu0 %v3472
    %4779 = vmatprep.subr.bf16.mxu0 %v3469
    %4780 = vmatpush1.bf16.msra.mxu0 %v3468
    %4781 = vmatprep.subr.bf16.mxu0 %v3465
    %4782 = vmatpush1.bf16.msra.mxu0 %v3464
    %4783 = vmatprep.subr.bf16.mxu0 %v3461
    %4784 = vmatpush1.bf16.msra.mxu0 %v3460
    %4785 = vmatprep.subr.bf16.mxu0 %v3457
    %4786 = vmatpush1.bf16.msra.mxu0 %v3456
    %4787 = vmatprep.subr.bf16.mxu0 %v3453
    %4788 = vmatpush1.bf16.msra.mxu0 %v3452
    %4789 = vmatprep.subr.bf16.mxu0 %v3449
    %4790 = vmatpush1.bf16.msra.mxu0 %v3448
    %4791 = vmatprep.subr.bf16.mxu0 %v3509
    %4792 = vmatpush2.bf16.msra.mxu0 %v3508
    %4793 = vmatprep.subr.bf16.mxu0 %v3505
    %4794 = vmatpush2.bf16.msra.mxu0 %v3504
    %4795 = vmatprep.subr.bf16.mxu0 %v3501
    %4796 = vmatpush2.bf16.msra.mxu0 %v3500
    %4797 = vmatprep.subr.bf16.mxu0 %v3497
    %4798 = vmatpush2.bf16.msra.mxu0 %v3496
    %4799 = vmatprep.subr.bf16.mxu0 %v3493
    %4800 = vmatpush2.bf16.msra.mxu0 %v3492
    %4801 = vmatprep.subr.bf16.mxu0 %v3489
    %4802 = vmatpush2.bf16.msra.mxu0 %v3488
    %4803 = vmatprep.subr.bf16.mxu0 %v3485
    %4804 = vmatpush2.bf16.msra.mxu0 %v3484
    %4805 = vmatprep.subr.bf16.mxu0 %v3481
    %4806 = vmatpush2.bf16.msra.mxu0 %v3480
    %4807 = vmatprep.mubr.bf16.mxu0 %v1299
    %4808 = vmatmul.mubr.bf16.gmra.mxu0 %v1298
    %v4809 = vpop.f32.mrf.mxu0
    %v4810 = vadd.f32 %v4769, %v4809
    %v4811 = vpop.f32.mrf.mxu0
    %v4812 = vadd.f32 %v4771, %v4811
    %v4813 = vpop.f32.mrf.mxu0
    %v4814 = vpop.f32.mrf.mxu0
    %4815 = vdwg.mxu0
    %4816 = vmatprep.subr.bf16.mxu0 %v3541
    %4817 = vmatpush1.bf16.msra.mxu0 %v3540
    %4818 = vmatprep.subr.bf16.mxu0 %v3537
    %4819 = vmatpush1.bf16.msra.mxu0 %v3536
    %4820 = vmatprep.subr.bf16.mxu0 %v3533
    %4821 = vmatpush1.bf16.msra.mxu0 %v3532
    %4822 = vmatprep.subr.bf16.mxu0 %v3529
    %4823 = vmatpush1.bf16.msra.mxu0 %v3528
    %4824 = vmatprep.subr.bf16.mxu0 %v3525
    %4825 = vmatpush1.bf16.msra.mxu0 %v3524
    %4826 = vmatprep.subr.bf16.mxu0 %v3521
    %4827 = vmatpush1.bf16.msra.mxu0 %v3520
    %4828 = vmatprep.subr.bf16.mxu0 %v3517
    %4829 = vmatpush1.bf16.msra.mxu0 %v3516
    %4830 = vmatprep.subr.bf16.mxu0 %v3513
    %4831 = vmatpush1.bf16.msra.mxu0 %v3512
    %4832 = vmatprep.subr.bf16.mxu0 %v3573
    %4833 = vmatpush2.bf16.msra.mxu0 %v3572
    %4834 = vmatprep.subr.bf16.mxu0 %v3569
    %4835 = vmatpush2.bf16.msra.mxu0 %v3568
    %4836 = vmatprep.subr.bf16.mxu0 %v3565
    %4837 = vmatpush2.bf16.msra.mxu0 %v3564
    %4838 = vmatprep.subr.bf16.mxu0 %v3561
    %4839 = vmatpush2.bf16.msra.mxu0 %v3560
    %4840 = vmatprep.subr.bf16.mxu0 %v3557
    %4841 = vmatpush2.bf16.msra.mxu0 %v3556
    %4842 = vmatprep.subr.bf16.mxu0 %v3553
    %4843 = vmatpush2.bf16.msra.mxu0 %v3552
    %4844 = vmatprep.subr.bf16.mxu0 %v3549
    %4845 = vmatpush2.bf16.msra.mxu0 %v3548
    %4846 = vmatprep.subr.bf16.mxu0 %v3545
    %4847 = vmatpush2.bf16.msra.mxu0 %v3544
    %4848 = vmatprep.mubr.bf16.mxu0 %v1301
    %4849 = vmatmul.mubr.bf16.gmra.mxu0 %v1300
    %v4850 = vpop.f32.mrf.mxu0
    %v4851 = vadd.f32 %v4810, %v4850
    %v4852 = vpop.f32.mrf.mxu0
    %v4853 = vadd.f32 %v4812, %v4852
    %v4854 = vpop.f32.mrf.mxu0
    %v4855 = vpop.f32.mrf.mxu0
    %4856 = vdwg.mxu0
    %4857 = vmatprep.subr.bf16.mxu0 %v3605
    %4858 = vmatpush1.bf16.msra.mxu0 %v3604
    %4859 = vmatprep.subr.bf16.mxu0 %v3601
    %4860 = vmatpush1.bf16.msra.mxu0 %v3600
    %4861 = vmatprep.subr.bf16.mxu0 %v3597
    %4862 = vmatpush1.bf16.msra.mxu0 %v3596
    %4863 = vmatprep.subr.bf16.mxu0 %v3593
    %4864 = vmatpush1.bf16.msra.mxu0 %v3592
    %4865 = vmatprep.subr.bf16.mxu0 %v3589
    %4866 = vmatpush1.bf16.msra.mxu0 %v3588
    %4867 = vmatprep.subr.bf16.mxu0 %v3585
    %4868 = vmatpush1.bf16.msra.mxu0 %v3584
    %4869 = vmatprep.subr.bf16.mxu0 %v3581
    %4870 = vmatpush1.bf16.msra.mxu0 %v3580
    %4871 = vmatprep.subr.bf16.mxu0 %v3577
    %4872 = vmatpush1.bf16.msra.mxu0 %v3576
    %4873 = vmatprep.subr.bf16.mxu0 %v3637
    %4874 = vmatpush2.bf16.msra.mxu0 %v3636
    %4875 = vmatprep.subr.bf16.mxu0 %v3633
    %4876 = vmatpush2.bf16.msra.mxu0 %v3632
    %4877 = vmatprep.subr.bf16.mxu0 %v3629
    %4878 = vmatpush2.bf16.msra.mxu0 %v3628
    %4879 = vmatprep.subr.bf16.mxu0 %v3625
    %4880 = vmatpush2.bf16.msra.mxu0 %v3624
    %4881 = vmatprep.subr.bf16.mxu0 %v3621
    %4882 = vmatpush2.bf16.msra.mxu0 %v3620
    %4883 = vmatprep.subr.bf16.mxu0 %v3617
    %4884 = vmatpush2.bf16.msra.mxu0 %v3616
    %4885 = vmatprep.subr.bf16.mxu0 %v3613
    %4886 = vmatpush2.bf16.msra.mxu0 %v3612
    %4887 = vmatprep.subr.bf16.mxu0 %v3609
    %4888 = vmatpush2.bf16.msra.mxu0 %v3608
    %4889 = vmatprep.mubr.bf16.mxu0 %v1303
    %4890 = vmatmul.mubr.bf16.gmra.mxu0 %v1302
    %v4891 = vpop.f32.mrf.mxu0
    %v4892 = vadd.f32 %v4851, %v4891
    %v4893 = vpop.f32.mrf.mxu0
    %v4894 = vadd.f32 %v4853, %v4893
    %v4895 = vpop.f32.mrf.mxu0
    %v4896 = vpop.f32.mrf.mxu0
    %4897 = vdwg.mxu0
    %4898 = vmatprep.subr.bf16.mxu0 %v3669
    %4899 = vmatpush1.bf16.msra.mxu0 %v3668
    %4900 = vmatprep.subr.bf16.mxu0 %v3665
    %4901 = vmatpush1.bf16.msra.mxu0 %v3664
    %4902 = vmatprep.subr.bf16.mxu0 %v3661
    %4903 = vmatpush1.bf16.msra.mxu0 %v3660
    %4904 = vmatprep.subr.bf16.mxu0 %v3657
    %4905 = vmatpush1.bf16.msra.mxu0 %v3656
    %4906 = vmatprep.subr.bf16.mxu0 %v3653
    %4907 = vmatpush1.bf16.msra.mxu0 %v3652
    %4908 = vmatprep.subr.bf16.mxu0 %v3649
    %4909 = vmatpush1.bf16.msra.mxu0 %v3648
    %4910 = vmatprep.subr.bf16.mxu0 %v3645
    %4911 = vmatpush1.bf16.msra.mxu0 %v3644
    %4912 = vmatprep.subr.bf16.mxu0 %v3641
    %4913 = vmatpush1.bf16.msra.mxu0 %v3640
    %4914 = vmatprep.subr.bf16.mxu0 %v3701
    %4915 = vmatpush2.bf16.msra.mxu0 %v3700
    %4916 = vmatprep.subr.bf16.mxu0 %v3697
    %4917 = vmatpush2.bf16.msra.mxu0 %v3696
    %4918 = vmatprep.subr.bf16.mxu0 %v3693
    %4919 = vmatpush2.bf16.msra.mxu0 %v3692
    %4920 = vmatprep.subr.bf16.mxu0 %v3689
    %4921 = vmatpush2.bf16.msra.mxu0 %v3688
    %4922 = vmatprep.subr.bf16.mxu0 %v3685
    %4923 = vmatpush2.bf16.msra.mxu0 %v3684
    %4924 = vmatprep.subr.bf16.mxu0 %v3681
    %4925 = vmatpush2.bf16.msra.mxu0 %v3680
    %4926 = vmatprep.subr.bf16.mxu0 %v3677
    %4927 = vmatpush2.bf16.msra.mxu0 %v3676
    %4928 = vmatprep.subr.bf16.mxu0 %v3673
    %4929 = vmatpush2.bf16.msra.mxu0 %v3672
    %4930 = vmatprep.mubr.bf16.mxu0 %v1305
    %4931 = vmatmul.mubr.bf16.gmra.mxu0 %v1304
    %v4932 = vpop.f32.mrf.mxu0
    %v4933 = vadd.f32 %v4892, %v4932
    %v4934 = vpop.f32.mrf.mxu0
    %v4935 = vadd.f32 %v4894, %v4934
    %v4936 = vpop.f32.mrf.mxu0
    %v4937 = vpop.f32.mrf.mxu0
    %4938 = vdwg.mxu0
    %4939 = vmatprep.subr.bf16.mxu0 %v3733
    %4940 = vmatpush1.bf16.msra.mxu0 %v3732
    %4941 = vmatprep.subr.bf16.mxu0 %v3729
    %4942 = vmatpush1.bf16.msra.mxu0 %v3728
    %4943 = vmatprep.subr.bf16.mxu0 %v3725
    %4944 = vmatpush1.bf16.msra.mxu0 %v3724
    %4945 = vmatprep.subr.bf16.mxu0 %v3721
    %4946 = vmatpush1.bf16.msra.mxu0 %v3720
    %4947 = vmatprep.subr.bf16.mxu0 %v3717
    %4948 = vmatpush1.bf16.msra.mxu0 %v3716
    %4949 = vmatprep.subr.bf16.mxu0 %v3713
    %4950 = vmatpush1.bf16.msra.mxu0 %v3712
    %4951 = vmatprep.subr.bf16.mxu0 %v3709
    %4952 = vmatpush1.bf16.msra.mxu0 %v3708
    %4953 = vmatprep.subr.bf16.mxu0 %v3705
    %4954 = vmatpush1.bf16.msra.mxu0 %v3704
    %4955 = vmatprep.subr.bf16.mxu0 %v3765
    %4956 = vmatpush2.bf16.msra.mxu0 %v3764
    %4957 = vmatprep.subr.bf16.mxu0 %v3761
    %4958 = vmatpush2.bf16.msra.mxu0 %v3760
    %4959 = vmatprep.subr.bf16.mxu0 %v3757
    %4960 = vmatpush2.bf16.msra.mxu0 %v3756
    %4961 = vmatprep.subr.bf16.mxu0 %v3753
    %4962 = vmatpush2.bf16.msra.mxu0 %v3752
    %4963 = vmatprep.subr.bf16.mxu0 %v3749
    %4964 = vmatpush2.bf16.msra.mxu0 %v3748
    %4965 = vmatprep.subr.bf16.mxu0 %v3745
    %4966 = vmatpush2.bf16.msra.mxu0 %v3744
    %4967 = vmatprep.subr.bf16.mxu0 %v3741
    %4968 = vmatpush2.bf16.msra.mxu0 %v3740
    %4969 = vmatprep.subr.bf16.mxu0 %v3737
    %4970 = vmatpush2.bf16.msra.mxu0 %v3736
    %4971 = vmatprep.mubr.bf16.mxu0 %v1307
    %4972 = vmatmul.mubr.bf16.gmra.mxu0 %v1306
    %v4973 = vpop.f32.mrf.mxu0
    %v4974 = vadd.f32 %v4933, %v4973
    %v4975 = vpop.f32.mrf.mxu0
    %v4976 = vadd.f32 %v4935, %v4975
    %v4977 = vpop.f32.mrf.mxu0
    %v4978 = vpop.f32.mrf.mxu0
    %4979 = vdwg.mxu0
    %4980 = vmatprep.subr.bf16.mxu0 %v3797
    %4981 = vmatpush1.bf16.msra.mxu0 %v3796
    %4982 = vmatprep.subr.bf16.mxu0 %v3793
    %4983 = vmatpush1.bf16.msra.mxu0 %v3792
    %4984 = vmatprep.subr.bf16.mxu0 %v3789
    %4985 = vmatpush1.bf16.msra.mxu0 %v3788
    %4986 = vmatprep.subr.bf16.mxu0 %v3785
    %4987 = vmatpush1.bf16.msra.mxu0 %v3784
    %4988 = vmatprep.subr.bf16.mxu0 %v3781
    %4989 = vmatpush1.bf16.msra.mxu0 %v3780
    %4990 = vmatprep.subr.bf16.mxu0 %v3777
    %4991 = vmatpush1.bf16.msra.mxu0 %v3776
    %4992 = vmatprep.subr.bf16.mxu0 %v3773
    %4993 = vmatpush1.bf16.msra.mxu0 %v3772
    %4994 = vmatprep.subr.bf16.mxu0 %v3769
    %4995 = vmatpush1.bf16.msra.mxu0 %v3768
    %4996 = vmatprep.subr.bf16.mxu0 %v3829
    %4997 = vmatpush2.bf16.msra.mxu0 %v3828
    %4998 = vmatprep.subr.bf16.mxu0 %v3825
    %4999 = vmatpush2.bf16.msra.mxu0 %v3824
    %5000 = vmatprep.subr.bf16.mxu0 %v3821
    %5001 = vmatpush2.bf16.msra.mxu0 %v3820
    %5002 = vmatprep.subr.bf16.mxu0 %v3817
    %5003 = vmatpush2.bf16.msra.mxu0 %v3816
    %5004 = vmatprep.subr.bf16.mxu0 %v3813
    %5005 = vmatpush2.bf16.msra.mxu0 %v3812
    %5006 = vmatprep.subr.bf16.mxu0 %v3809
    %5007 = vmatpush2.bf16.msra.mxu0 %v3808
    %5008 = vmatprep.subr.bf16.mxu0 %v3805
    %5009 = vmatpush2.bf16.msra.mxu0 %v3804
    %5010 = vmatprep.subr.bf16.mxu0 %v3801
    %5011 = vmatpush2.bf16.msra.mxu0 %v3800
    %5012 = vmatprep.mubr.bf16.mxu0 %v1309
    %5013 = vmatmul.mubr.bf16.gmra.mxu0 %v1308
    %v5014 = vpop.f32.mrf.mxu0
    %v5015 = vadd.f32 %v4974, %v5014
    %v5016 = vpop.f32.mrf.mxu0
    %v5017 = vadd.f32 %v4976, %v5016
    %v5018 = vpop.f32.mrf.mxu0
    %v5019 = vpop.f32.mrf.mxu0
    %5020 = vdwg.mxu0
    %5021 = vmatprep.subr.bf16.mxu0 %v3861
    %5022 = vmatpush1.bf16.msra.mxu0 %v3860
    %5023 = vmatprep.subr.bf16.mxu0 %v3857
    %5024 = vmatpush1.bf16.msra.mxu0 %v3856
    %5025 = vmatprep.subr.bf16.mxu0 %v3853
    %5026 = vmatpush1.bf16.msra.mxu0 %v3852
    %5027 = vmatprep.subr.bf16.mxu0 %v3849
    %5028 = vmatpush1.bf16.msra.mxu0 %v3848
    %5029 = vmatprep.subr.bf16.mxu0 %v3845
    %5030 = vmatpush1.bf16.msra.mxu0 %v3844
    %5031 = vmatprep.subr.bf16.mxu0 %v3841
    %5032 = vmatpush1.bf16.msra.mxu0 %v3840
    %5033 = vmatprep.subr.bf16.mxu0 %v3837
    %5034 = vmatpush1.bf16.msra.mxu0 %v3836
    %5035 = vmatprep.subr.bf16.mxu0 %v3833
    %5036 = vmatpush1.bf16.msra.mxu0 %v3832
    %5037 = vmatprep.subr.bf16.mxu0 %v3893
    %5038 = vmatpush2.bf16.msra.mxu0 %v3892
    %5039 = vmatprep.subr.bf16.mxu0 %v3889
    %5040 = vmatpush2.bf16.msra.mxu0 %v3888
    %5041 = vmatprep.subr.bf16.mxu0 %v3885
    %5042 = vmatpush2.bf16.msra.mxu0 %v3884
    %5043 = vmatprep.subr.bf16.mxu0 %v3881
    %5044 = vmatpush2.bf16.msra.mxu0 %v3880
    %5045 = vmatprep.subr.bf16.mxu0 %v3877
    %5046 = vmatpush2.bf16.msra.mxu0 %v3876
    %5047 = vmatprep.subr.bf16.mxu0 %v3873
    %5048 = vmatpush2.bf16.msra.mxu0 %v3872
    %5049 = vmatprep.subr.bf16.mxu0 %v3869
    %5050 = vmatpush2.bf16.msra.mxu0 %v3868
    %5051 = vmatprep.subr.bf16.mxu0 %v3865
    %5052 = vmatpush2.bf16.msra.mxu0 %v3864
    %5053 = vmatprep.mubr.bf16.mxu0 %v1311
    %5054 = vmatmul.mubr.bf16.gmra.mxu0 %v1310
    %v5055 = vpop.f32.mrf.mxu0
    %v5056 = vadd.f32 %v5015, %v5055
    %v5057 = vpop.f32.mrf.mxu0
    %v5058 = vadd.f32 %v5017, %v5057
    %v5059 = vpop.f32.mrf.mxu0
    %v5060 = vpop.f32.mrf.mxu0
    %5061 = vdwg.mxu0
    %v5062 = vmax.f32 %v4728, 0.0
    %v5063 = vmax.f32 %v4730, 0.0
    %v5064 = vmax.f32 %v5056, 0.0
    %v5065 = vmax.f32 %v5058, 0.0
    %v5066 = vpack.c.bf16 %v5062, %v5062
    %v5067 = vpack.c.bf16 %v5063, %v5063
    %v5068 = vpack.c.bf16 %v5064, %v5064
    %v5069 = vpack.c.bf16 %v5065, %v5065
    %v5070 = vld [vmem:[#allocation11] sm:$0xf]
    %v5071 = vld [vmem:[#allocation11 + $0x4] sm:$0xf]
    %v5072 = vld [vmem:[#allocation11 + $0x8] sm:$0xf]
    %v5073 = vld [vmem:[#allocation11 + $0xc] sm:$0xf]
    %v5074 = vld [vmem:[#allocation11 + $0x10] sm:$0xf]
    %v5075 = vld [vmem:[#allocation11 + $0x14] sm:$0xf]
    %v5076 = vld [vmem:[#allocation11 + $0x18] sm:$0xf]
    %v5077 = vld [vmem:[#allocation11 + $0x1c] sm:$0xf]
    %v5078 = vld [vmem:[#allocation11 + $0x20] sm:$0xf]
    %v5079 = vld [vmem:[#allocation11 + $0x24] sm:$0xf]
    %v5080 = vld [vmem:[#allocation11 + $0x28] sm:$0xf]
    %v5081 = vld [vmem:[#allocation11 + $0x2c] sm:$0xf]
    %v5082 = vld [vmem:[#allocation11 + $0x30] sm:$0xf]
    %v5083 = vld [vmem:[#allocation11 + $0x34] sm:$0xf]
    %v5084 = vld [vmem:[#allocation11 + $0x38] sm:$0xf]
    %v5085 = vld [vmem:[#allocation11 + $0x3c] sm:$0xf]
    %v5086 = vld [vmem:[#allocation11 + $0x40] sm:$0xf]
    %v5087 = vld [vmem:[#allocation11 + $0x44] sm:$0xf]
    %v5088 = vld [vmem:[#allocation11 + $0x48] sm:$0xf]
    %v5089 = vld [vmem:[#allocation11 + $0x4c] sm:$0xf]
    %v5090 = vld [vmem:[#allocation11 + $0x50] sm:$0xf]
    %v5091 = vld [vmem:[#allocation11 + $0x54] sm:$0xf]
    %v5092 = vld [vmem:[#allocation11 + $0x58] sm:$0xf]
    %v5093 = vld [vmem:[#allocation11 + $0x5c] sm:$0xf]
    %v5094 = vld [vmem:[#allocation11 + $0x60] sm:$0xf]
    %v5095 = vld [vmem:[#allocation11 + $0x64] sm:$0xf]
    %v5096 = vld [vmem:[#allocation11 + $0x68] sm:$0xf]
    %v5097 = vld [vmem:[#allocation11 + $0x6c] sm:$0xf]
    %v5098 = vld [vmem:[#allocation11 + $0x70] sm:$0xf]
    %v5099 = vld [vmem:[#allocation11 + $0x74] sm:$0xf]
    %v5100 = vld [vmem:[#allocation11 + $0x78] sm:$0xf]
    %v5101 = vld [vmem:[#allocation11 + $0x7c] sm:$0xf]
    %v5102 = vld [vmem:[#allocation11 + $0x80] sm:$0xf]
    %v5103 = vld [vmem:[#allocation11 + $0x84] sm:$0xf]
    %v5104 = vld [vmem:[#allocation11 + $0x88] sm:$0xf]
    %v5105 = vld [vmem:[#allocation11 + $0x8c] sm:$0xf]
    %v5106 = vld [vmem:[#allocation11 + $0x90] sm:$0xf]
    %v5107 = vld [vmem:[#allocation11 + $0x94] sm:$0xf]
    %v5108 = vld [vmem:[#allocation11 + $0x98] sm:$0xf]
    %v5109 = vld [vmem:[#allocation11 + $0x9c] sm:$0xf]
    %v5110 = vld [vmem:[#allocation11 + $0xa0] sm:$0xf]
    %v5111 = vld [vmem:[#allocation11 + $0xa4] sm:$0xf]
    %v5112 = vld [vmem:[#allocation11 + $0xa8] sm:$0xf]
    %v5113 = vld [vmem:[#allocation11 + $0xac] sm:$0xf]
    %v5114 = vld [vmem:[#allocation11 + $0xb0] sm:$0xf]
    %v5115 = vld [vmem:[#allocation11 + $0xb4] sm:$0xf]
    %v5116 = vld [vmem:[#allocation11 + $0xb8] sm:$0xf]
    %v5117 = vld [vmem:[#allocation11 + $0xbc] sm:$0xf]
    %v5118 = vld [vmem:[#allocation11 + $0xc0] sm:$0xf]
    %v5119 = vld [vmem:[#allocation11 + $0xc4] sm:$0xf]
    %v5120 = vld [vmem:[#allocation11 + $0xc8] sm:$0xf]
    %v5121 = vld [vmem:[#allocation11 + $0xcc] sm:$0xf]
    %v5122 = vld [vmem:[#allocation11 + $0xd0] sm:$0xf]
    %v5123 = vld [vmem:[#allocation11 + $0xd4] sm:$0xf]
    %v5124 = vld [vmem:[#allocation11 + $0xd8] sm:$0xf]
    %v5125 = vld [vmem:[#allocation11 + $0xdc] sm:$0xf]
    %v5126 = vld [vmem:[#allocation11 + $0xe0] sm:$0xf]
    %v5127 = vld [vmem:[#allocation11 + $0xe4] sm:$0xf]
    %v5128 = vld [vmem:[#allocation11 + $0xe8] sm:$0xf]
    %v5129 = vld [vmem:[#allocation11 + $0xec] sm:$0xf]
    %v5130 = vld [vmem:[#allocation11 + $0xf0] sm:$0xf]
    %v5131 = vld [vmem:[#allocation11 + $0xf4] sm:$0xf]
    %v5132 = vld [vmem:[#allocation11 + $0xf8] sm:$0xf]
    %v5133 = vld [vmem:[#allocation11 + $0xfc] sm:$0xf]
    %v5134 = vld [vmem:[#allocation13] sm:$0x1]
    %v5136 = vlaneseq
    %v5137 = vshrl.u32 %v5136, 7
    %v5138 = vsub.s32 0, %v5137
    %v5139 = vrot.slane %v5134, %v5138
    %v5205 = vunpack.c.l.b16 %v5070
    %v5206 = vunpack.c.l.b16 %v5071
    %v5207 = vunpack.c.l.b16 %v5072
    %v5208 = vunpack.c.l.b16 %v5073
    %v5209 = vunpack.c.l.b16 %v5074
    %v5210 = vunpack.c.l.b16 %v5075
    %v5211 = vunpack.c.l.b16 %v5076
    %v5212 = vunpack.c.l.b16 %v5077
    %v5213 = vunpack.c.l.b16 %v5078
    %v5214 = vunpack.c.l.b16 %v5079
    %v5215 = vunpack.c.l.b16 %v5080
    %v5216 = vunpack.c.l.b16 %v5081
    %v5217 = vunpack.c.l.b16 %v5082
    %v5218 = vunpack.c.l.b16 %v5083
    %v5219 = vunpack.c.l.b16 %v5084
    %v5220 = vunpack.c.l.b16 %v5085
    %v5221 = vunpack.c.l.b16 %v5086
    %v5222 = vunpack.c.l.b16 %v5087
    %v5223 = vunpack.c.l.b16 %v5088
    %v5224 = vunpack.c.l.b16 %v5089
    %v5225 = vunpack.c.l.b16 %v5090
    %v5226 = vunpack.c.l.b16 %v5091
    %v5227 = vunpack.c.l.b16 %v5092
    %v5228 = vunpack.c.l.b16 %v5093
    %v5229 = vunpack.c.l.b16 %v5094
    %v5230 = vunpack.c.l.b16 %v5095
    %v5231 = vunpack.c.l.b16 %v5096
    %v5232 = vunpack.c.l.b16 %v5097
    %v5233 = vunpack.c.l.b16 %v5098
    %v5234 = vunpack.c.l.b16 %v5099
    %v5235 = vunpack.c.l.b16 %v5100
    %v5236 = vunpack.c.l.b16 %v5101
    %v5237 = vunpack.c.l.b16 %v5102
    %v5238 = vunpack.c.l.b16 %v5103
    %v5239 = vunpack.c.l.b16 %v5104
    %v5240 = vunpack.c.l.b16 %v5105
    %v5241 = vunpack.c.l.b16 %v5106
    %v5242 = vunpack.c.l.b16 %v5107
    %v5243 = vunpack.c.l.b16 %v5108
    %v5244 = vunpack.c.l.b16 %v5109
    %v5245 = vunpack.c.l.b16 %v5110
    %v5246 = vunpack.c.l.b16 %v5111
    %v5247 = vunpack.c.l.b16 %v5112
    %v5248 = vunpack.c.l.b16 %v5113
    %v5249 = vunpack.c.l.b16 %v5114
    %v5250 = vunpack.c.l.b16 %v5115
    %v5251 = vunpack.c.l.b16 %v5116
    %v5252 = vunpack.c.l.b16 %v5117
    %v5253 = vunpack.c.l.b16 %v5118
    %v5254 = vunpack.c.l.b16 %v5119
    %v5255 = vunpack.c.l.b16 %v5120
    %v5256 = vunpack.c.l.b16 %v5121
    %v5257 = vunpack.c.l.b16 %v5122
    %v5258 = vunpack.c.l.b16 %v5123
    %v5259 = vunpack.c.l.b16 %v5124
    %v5260 = vunpack.c.l.b16 %v5125
    %v5261 = vunpack.c.l.b16 %v5126
    %v5262 = vunpack.c.l.b16 %v5127
    %v5263 = vunpack.c.l.b16 %v5128
    %v5264 = vunpack.c.l.b16 %v5129
    %v5265 = vunpack.c.l.b16 %v5130
    %v5266 = vunpack.c.l.b16 %v5131
    %v5267 = vunpack.c.l.b16 %v5132
    %v5268 = vunpack.c.l.b16 %v5133
    %v5269 = vpack.c.b16 %v5206, %v5205
    %v5270 = vpack.c.b16 %v5208, %v5207
    %v5271 = vpack.c.b16 %v5210, %v5209
    %v5272 = vpack.c.b16 %v5212, %v5211
    %v5273 = vpack.c.b16 %v5214, %v5213
    %v5274 = vpack.c.b16 %v5216, %v5215
    %v5275 = vpack.c.b16 %v5218, %v5217
    %v5276 = vpack.c.b16 %v5220, %v5219
    %v5277 = vpack.c.b16 %v5222, %v5221
    %v5278 = vpack.c.b16 %v5224, %v5223
    %v5279 = vpack.c.b16 %v5226, %v5225
    %v5280 = vpack.c.b16 %v5228, %v5227
    %v5281 = vpack.c.b16 %v5230, %v5229
    %v5282 = vpack.c.b16 %v5232, %v5231
    %v5283 = vpack.c.b16 %v5234, %v5233
    %v5284 = vpack.c.b16 %v5236, %v5235
    %v5285 = vpack.c.b16 %v5238, %v5237
    %v5286 = vpack.c.b16 %v5240, %v5239
    %v5287 = vpack.c.b16 %v5242, %v5241
    %v5288 = vpack.c.b16 %v5244, %v5243
    %v5289 = vpack.c.b16 %v5246, %v5245
    %v5290 = vpack.c.b16 %v5248, %v5247
    %v5291 = vpack.c.b16 %v5250, %v5249
    %v5292 = vpack.c.b16 %v5252, %v5251
    %v5293 = vpack.c.b16 %v5254, %v5253
    %v5294 = vpack.c.b16 %v5256, %v5255
    %v5295 = vpack.c.b16 %v5258, %v5257
    %v5296 = vpack.c.b16 %v5260, %v5259
    %v5297 = vpack.c.b16 %v5262, %v5261
    %v5298 = vpack.c.b16 %v5264, %v5263
    %v5299 = vpack.c.b16 %v5266, %v5265
    %v5300 = vpack.c.b16 %v5268, %v5267
    %5333 = vmatprep.subr.bf16.mxu0 0
    %5334 = vmatpush1.bf16.msra.mxu0 %v5276
    %5335 = vmatprep.subr.bf16.mxu0 0
    %5336 = vmatpush1.bf16.msra.mxu0 %v5275
    %5337 = vmatprep.subr.bf16.mxu0 0
    %5338 = vmatpush1.bf16.msra.mxu0 %v5274
    %5339 = vmatprep.subr.bf16.mxu0 0
    %5340 = vmatpush1.bf16.msra.mxu0 %v5273
    %5341 = vmatprep.subr.bf16.mxu0 0
    %5342 = vmatpush1.bf16.msra.mxu0 %v5272
    %5343 = vmatprep.subr.bf16.mxu0 0
    %5344 = vmatpush1.bf16.msra.mxu0 %v5271
    %5345 = vmatprep.subr.bf16.mxu0 0
    %5346 = vmatpush1.bf16.msra.mxu0 %v5270
    %5347 = vmatprep.subr.bf16.mxu0 0
    %5348 = vmatpush1.bf16.msra.mxu0 %v5269
    %5349 = vmatprep.subr.bf16.mxu0 0
    %5350 = vmatpush2.bf16.msra.mxu0 %v5284
    %5351 = vmatprep.subr.bf16.mxu0 0
    %5352 = vmatpush2.bf16.msra.mxu0 %v5283
    %5353 = vmatprep.subr.bf16.mxu0 0
    %5354 = vmatpush2.bf16.msra.mxu0 %v5282
    %5355 = vmatprep.subr.bf16.mxu0 0
    %5356 = vmatpush2.bf16.msra.mxu0 %v5281
    %5357 = vmatprep.subr.bf16.mxu0 0
    %5358 = vmatpush2.bf16.msra.mxu0 %v5280
    %5359 = vmatprep.subr.bf16.mxu0 0
    %5360 = vmatpush2.bf16.msra.mxu0 %v5279
    %5361 = vmatprep.subr.bf16.mxu0 0
    %5362 = vmatpush2.bf16.msra.mxu0 %v5278
    %5363 = vmatprep.subr.bf16.mxu0 0
    %5364 = vmatpush2.bf16.msra.mxu0 %v5277
    %5365 = vmatprep.mubr.bf16.mxu0 %v5067
    %5366 = vmatmul.mubr.bf16.gmra.mxu0 %v5066
    %v5367 = vpop.f32.mrf.mxu0
    %v5368 = vadd.f32 %v5139, %v5367
    %v5369 = vpop.f32.mrf.mxu0
    %v5370 = vpop.f32.mrf.mxu0
    %v5371 = vpop.f32.mrf.mxu0
    %5372 = vdwg.mxu0
    %5373 = vmatprep.subr.bf16.mxu0 0
    %5374 = vmatpush1.bf16.msra.mxu0 %v5292
    %5375 = vmatprep.subr.bf16.mxu0 0
    %5376 = vmatpush1.bf16.msra.mxu0 %v5291
    %5377 = vmatprep.subr.bf16.mxu0 0
    %5378 = vmatpush1.bf16.msra.mxu0 %v5290
    %5379 = vmatprep.subr.bf16.mxu0 0
    %5380 = vmatpush1.bf16.msra.mxu0 %v5289
    %5381 = vmatprep.subr.bf16.mxu0 0
    %5382 = vmatpush1.bf16.msra.mxu0 %v5288
    %5383 = vmatprep.subr.bf16.mxu0 0
    %5384 = vmatpush1.bf16.msra.mxu0 %v5287
    %5385 = vmatprep.subr.bf16.mxu0 0
    %5386 = vmatpush1.bf16.msra.mxu0 %v5286
    %5387 = vmatprep.subr.bf16.mxu0 0
    %5388 = vmatpush1.bf16.msra.mxu0 %v5285
    %5389 = vmatprep.subr.bf16.mxu0 0
    %5390 = vmatpush2.bf16.msra.mxu0 %v5300
    %5391 = vmatprep.subr.bf16.mxu0 0
    %5392 = vmatpush2.bf16.msra.mxu0 %v5299
    %5393 = vmatprep.subr.bf16.mxu0 0
    %5394 = vmatpush2.bf16.msra.mxu0 %v5298
    %5395 = vmatprep.subr.bf16.mxu0 0
    %5396 = vmatpush2.bf16.msra.mxu0 %v5297
    %5397 = vmatprep.subr.bf16.mxu0 0
    %5398 = vmatpush2.bf16.msra.mxu0 %v5296
    %5399 = vmatprep.subr.bf16.mxu0 0
    %5400 = vmatpush2.bf16.msra.mxu0 %v5295
    %5401 = vmatprep.subr.bf16.mxu0 0
    %5402 = vmatpush2.bf16.msra.mxu0 %v5294
    %5403 = vmatprep.subr.bf16.mxu0 0
    %5404 = vmatpush2.bf16.msra.mxu0 %v5293
    %5405 = vmatprep.mubr.bf16.mxu0 %v5069
    %5406 = vmatmul.mubr.bf16.gmra.mxu0 %v5068
    %v5407 = vpop.f32.mrf.mxu0
    %v5408 = vadd.f32 %v5368, %v5407
    %v5409 = vpop.f32.mrf.mxu0
    %v5410 = vpop.f32.mrf.mxu0
    %v5411 = vpop.f32.mrf.mxu0
    %5412 = vdwg.mxu0
    %v5413 = vxor.u32 %v5408, 2147483648
    %v5414 = vmul.f32 %v5413, 1.442695
    %v5415 = vpow.pop %v5414
    %v5416 = vadd.f32 %v5415, 1.0
    %v5417 = vrcp.pop %v5416
    %v5418 = vmul.f32 1.0, %v5417
    %v5419 = vpack.c.bf16 %v5418, %v5418
    %5420 = vst [vmem:[#allocation14] sm:$0xf] %v5419
    // Predicated region
    $region58: #{tpu_custom_call.1} parent=1 // pred_check
      _
    $region59: #{tpu_custom_call.1} parent=1 // pred_check_branch
      %5422 = sbr.rel (0) target = $region61
    $region60: #{tpu_custom_call.1} parent=1 // pred_region
      %s5424 = ssub.s32 64, 64
      %5425 = vsyncadd [#allocation4], %s5424
      %s5427 = sshll.u32 [#allocation14], 4
      %s5428 = int_to_ptr.vmem [resolvable:$true] %s5427
      %5430 = dma.vmem_to_hbm [thread:$0]  %s5428, 64, %s7, [#allocation4]
    $region61: #{tpu_custom_call.1} parent=1 // pred_fallthru
      _
    // Predicated region
    $region62: #{tpu_custom_call.1} parent=1 // pred_check
      _
    $region63: #{tpu_custom_call.1} parent=1 // pred_check_branch
      %5432 = sbr.rel (0) target = $region65
    $region64: #{tpu_custom_call.1} parent=1 // pred_region
      %5433 = dma.done [#allocation4], 64
    $region65: #{tpu_custom_call.1} parent=1 // pred_fallthru
      _
    %5434 = vsyncpa [#allocation3], 1
    %5435 = vsyncpa [#allocation6], 1
    %5436 = vsyncpa [#allocation9], 1
    %5437 = vsyncpa [#allocation12], 1
    %5438 = vsyncpa [#allocation4], 1

// kernel: tpu_custom_call.1
$region0: #{tpu_custom_call.1}
  #allocation0 [shape = 'u32[]', space=smem, size = 0x4, offset = 0x4, fixed_abs, tag = 'smem constant byte address 0x4 - core index']
  #allocation1 [shape = 'u32[144,128]{1,0:T(1,128)}', space=vmem, size = 0x12000, scoped, tag = 'internal scratch']
  %s0 = inlined_call_operand.hbm [shape: bf16[8,128], index: 0, kind: input, shape index: {}]
  %s1 = inlined_call_operand.hbm [shape: bf16[128,2048], index: 1, kind: input, shape index: {}]
  %s2 = inlined_call_operand.hbm [shape: f32[1,2048], index: 2, kind: input, shape index: {}]
  %s3 = inlined_call_operand.hbm [shape: bf16[2048,512], index: 3, kind: input, shape index: {}]
  %s4 = inlined_call_operand.hbm [shape: f32[1,512], index: 4, kind: input, shape index: {}]
  %s5 = inlined_call_operand.hbm [shape: bf16[512,128], index: 5, kind: input, shape index: {}]
  %s6 = inlined_call_operand.hbm [shape: f32[1,128], index: 6, kind: input, shape index: {}]
  %s7 = inlined_call_operand.hbm [shape: bf16[8,128], index: 7, kind: output, shape index: {}]
  %s8 = sld [smem:[#allocation0]]
  $region66: #{tpu_custom_call.1} parent=0
    _
  %s10 = ssub.s32 1, %s8
  %s11 = scalar_select 0, %s10, %s8
  $region1: #{tpu_custom_call.1} parent=0
    #allocation2 [shape = 'u8[2048]{0}', space=vmem, size = 0x800, scoped, tag = 'input window, operand 0, single buffered']
    #allocation3 [shape = 's32[1]{0}', space=sflag, size = 0x4, scoped, tag = 'scoped memory for tpu_custom_call.1']
    #allocation4 [shape = 's32[1]{0}', space=sflag, size = 0x4, scoped, tag = 'scoped memory for tpu_custom_call.1']
    #allocation5 [shape = 'u8[524288]{0}', space=vmem, size = 0x80000, scoped, tag = 'input window, operand 1, single buffered']
    #allocation6 [shape = 's32[1]{0}', space=sflag, size = 0x4, scoped, tag = 'scoped memory for tpu_custom_call.1']
    #allocation7 [shape = 'u8[8192]{0}', space=vmem, size = 0x2000, scoped, tag = 'input window, operand 2, single buffered']
    #allocation8 [shape = 'u8[2097152]{0}', space=vmem, size = 0x200000, scoped, tag = 'input window, operand 3, single buffered']
    #allocation9 [shape = 's32[1]{0}', space=sflag, size = 0x4, scoped, tag = 'scoped memory for tpu_custom_call.1']
    #allocation10 [shape = 'u8[2048]{0}', space=vmem, size = 0x800, scoped, tag = 'input window, operand 4, single buffered']
    #allocation11 [shape = 'u8[131072]{0}', space=vmem, size = 0x20000, scoped, tag = 'input window, operand 5, single buffered']
    #allocation12 [shape = 's32[1]{0}', space=sflag, size = 0x4, scoped, tag = 'scoped memory for tpu_custom_call.1']
    #allocation13 [shape = 'u8[512]{0}', space=vmem, size = 0x400, scoped, tag = 'input window, operand 6, single buffered']
    #allocation14 [shape = 'u8[2048]{0}', space=vmem, size = 0x800, scoped, tag = 'output window, operand 0, single buffered']
    %12 = vsyncpa [#allocation3], 0
    %13 = vsyncpa [#allocation6], 0
    %14 = vsyncpa [#allocation9], 0
    %15 = vsyncpa [#allocation12], 0
    %16 = vsyncpa [#allocation4], 0
    // Predicated region
    $region2: #{tpu_custom_call.1} parent=1 // pred_check
      _
    $region3: #{tpu_custom_call.1} parent=1 // pred_check_branch
      %18 = sbr.rel (0) target = $region5
    $region4: #{tpu_custom_call.1} parent=1 // pred_region
      %s20 = ssub.s32 64, 64
      %21 = vsyncadd [#allocation3], %s20
      %s23 = sshll.u32 [#allocation2], 4
      %s24 = int_to_ptr.vmem [resolvable:$true] %s23
      %26 = dma.hbm_to_vmem [thread:$0]  %s0, 64, %s24, [#allocation3]
    $region5: #{tpu_custom_call.1} parent=1 // pred_fallthru
      _
    // Predicated region
    $region6: #{tpu_custom_call.1} parent=1 // pred_check
      _
    $region7: #{tpu_custom_call.1} parent=1 // pred_check_branch
      %28 = sbr.rel (0) target = $region9
    $region8: #{tpu_custom_call.1} parent=1 // pred_region
      %s30 = ssub.s32 16384, 16384
      %31 = vsyncadd [#allocation6], %s30
      %s32 = sshll.u32 [#allocation5], 4
      %s33 = int_to_ptr.vmem [resolvable:$true] %s32
      %38 = dma.hbm_to_vmem [thread:$0]  %s1, 16384, %s33, [#allocation6], 1024, 1024, 64
    $region9: #{tpu_custom_call.1} parent=1 // pred_fallthru
      _
    // Predicated region
    $region10: #{tpu_custom_call.1} parent=1 // pred_check
      _
    $region11: #{tpu_custom_call.1} parent=1 // pred_check_branch
      %40 = sbr.rel (0) target = $region13
    $region12: #{tpu_custom_call.1} parent=1 // pred_region
      %s42 = ssub.s32 256, 256
      %43 = vsyncadd [#allocation6], %s42
      %s45 = sshll.u32 [#allocation7], 4
      %s46 = int_to_ptr.vmem [resolvable:$true] %s45
      %48 = dma.hbm_to_vmem [thread:$0]  %s2, 256, %s46, [#allocation6]
    $region13: #{tpu_custom_call.1} parent=1 // pred_fallthru
      _
    // Predicated region
    $region14: #{tpu_custom_call.1} parent=1 // pred_check
      _
    $region15: #{tpu_custom_call.1} parent=1 // pred_check_branch
      %50 = sbr.rel (0) target = $region17
    $region16: #{tpu_custom_call.1} parent=1 // pred_region
      %s52 = ssub.s32 65536, 65536
      %53 = vsyncadd [#allocation9], %s52
      %s54 = sshll.u32 [#allocation8], 4
      %s55 = int_to_ptr.vmem [resolvable:$true] %s54
      %60 = dma.hbm_to_vmem [thread:$0]  %s3, 65536, %s55, [#allocation9], 256, 256, 16
    $region17: #{tpu_custom_call.1} parent=1 // pred_fallthru
      _
    // Predicated region
    $region18: #{tpu_custom_call.1} parent=1 // pred_check
      _
    $region19: #{tpu_custom_call.1} parent=1 // pred_check_branch
      %62 = sbr.rel (0) target = $region21
    $region20: #{tpu_custom_call.1} parent=1 // pred_region
      %s64 = ssub.s32 64, 64
      %65 = vsyncadd [#allocation9], %s64
      %s67 = sshll.u32 [#allocation10], 4
      %s68 = int_to_ptr.vmem [resolvable:$true] %s67
      %70 = dma.hbm_to_vmem [thread:$0]  %s4, 64, %s68, [#allocation9]
    $region21: #{tpu_custom_call.1} parent=1 // pred_fallthru
      _
    // Predicated region
    $region22: #{tpu_custom_call.1} parent=1 // pred_check
      _
    $region23: #{tpu_custom_call.1} parent=1 // pred_check_branch
      %72 = sbr.rel (0) target = $region25
    $region24: #{tpu_custom_call.1} parent=1 // pred_region
      %s74 = ssub.s32 4096, 4096
      %75 = vsyncadd [#allocation12], %s74
      %s76 = sshll.u32 [#allocation11], 4
      %s77 = int_to_ptr.vmem [resolvable:$true] %s76
      %82 = dma.hbm_to_vmem [thread:$0]  %s5, 4096, %s77, [#allocation12], 64, 64, 4
    $region25: #{tpu_custom_call.1} parent=1 // pred_fallthru
      _
    // Predicated region
    $region26: #{tpu_custom_call.1} parent=1 // pred_check
      _
    $region27: #{tpu_custom_call.1} parent=1 // pred_check_branch
      %84 = sbr.rel (0) target = $region29
    $region28: #{tpu_custom_call.1} parent=1 // pred_region
      %s86 = ssub.s32 16, 16
      %87 = vsyncadd [#allocation12], %s86
      %s89 = sshll.u32 [#allocation13], 4
      %s90 = int_to_ptr.vmem [resolvable:$true] %s89
      %92 = dma.hbm_to_vmem [thread:$0]  %s6, 16, %s90, [#allocation12]
    $region29: #{tpu_custom_call.1} parent=1 // pred_fallthru
      _
    // Predicated region
    $region30: #{tpu_custom_call.1} parent=1 // pred_check
      _
    $region31: #{tpu_custom_call.1} parent=1 // pred_check_branch
      %94 = sbr.rel (0) target = $region33
    $region32: #{tpu_custom_call.1} parent=1 // pred_region
      %95 = dma.done [#allocation3], 64
    $region33: #{tpu_custom_call.1} parent=1 // pred_fallthru
      _
    // Predicated region
    $region34: #{tpu_custom_call.1} parent=1 // pred_check
      _
    $region35: #{tpu_custom_call.1} parent=1 // pred_check_branch
      %97 = sbr.rel (0) target = $region37
    $region36: #{tpu_custom_call.1} parent=1 // pred_region
      %98 = dma.done [#allocation6], 16384
    $region37: #{tpu_custom_call.1} parent=1 // pred_fallthru
      _
    // Predicated region
    $region38: #{tpu_custom_call.1} parent=1 // pred_check
      _
    $region39: #{tpu_custom_call.1} parent=1 // pred_check_branch
      %100 = sbr.rel (0) target = $region41
    $region40: #{tpu_custom_call.1} parent=1 // pred_region
      %101 = dma.done [#allocation6], 256
    $region41: #{tpu_custom_call.1} parent=1 // pred_fallthru
      _
    // Predicated region
    $region42: #{tpu_custom_call.1} parent=1 // pred_check
      _
    $region43: #{tpu_custom_call.1} parent=1 // pred_check_branch
      %103 = sbr.rel (0) target = $region45
    $region44: #{tpu_custom_call.1} parent=1 // pred_region
      %104 = dma.done [#allocation9], 65536
    $region45: #{tpu_custom_call.1} parent=1 // pred_fallthru
      _
    // Predicated region
    $region46: #{tpu_custom_call.1} parent=1 // pred_check
      _
    $region47: #{tpu_custom_call.1} parent=1 // pred_check_branch
      %106 = sbr.rel (0) target = $region49
    $region48: #{tpu_custom_call.1} parent=1 // pred_region
      %107 = dma.done [#allocation9], 64
    $region49: #{tpu_custom_call.1} parent=1 // pred_fallthru
      _
    // Predicated region
    $region50: #{tpu_custom_call.1} parent=1 // pred_check
      _
    $region51: #{tpu_custom_call.1} parent=1 // pred_check_branch
      %109 = sbr.rel (0) target = $region53
    $region52: #{tpu_custom_call.1} parent=1 // pred_region
      %110 = dma.done [#allocation12], 4096
    $region53: #{tpu_custom_call.1} parent=1 // pred_fallthru
      _
    // Predicated region
    $region54: #{tpu_custom_call.1} parent=1 // pred_check
      _
    $region55: #{tpu_custom_call.1} parent=1 // pred_check_branch
      %112 = sbr.rel (0) target = $region57
    $region56: #{tpu_custom_call.1} parent=1 // pred_region
      %113 = dma.done [#allocation12], 16
    $region57: #{tpu_custom_call.1} parent=1 // pred_fallthru
      _
    %v115 = vld [vmem:[#allocation2] sm:$0xf]
    %v116 = vld [vmem:[#allocation5] sm:$0xff]
    %v117 = vld [vmem:[#allocation5 + $0x8] sm:$0xff]
    %v118 = vld [vmem:[#allocation5 + $0x10] sm:$0xff]
    %v119 = vld [vmem:[#allocation5 + $0x18] sm:$0xff]
    %v120 = vld [vmem:[#allocation5 + $0x20] sm:$0xff]
    %v121 = vld [vmem:[#allocation5 + $0x28] sm:$0xff]
    %v122 = vld [vmem:[#allocation5 + $0x30] sm:$0xff]
    %v123 = vld [vmem:[#allocation5 + $0x38] sm:$0xff]
    %v124 = vld [vmem:[#allocation5 + $0x40] sm:$0xff]
    %v125 = vld [vmem:[#allocation5 + $0x48] sm:$0xff]
    %v126 = vld [vmem:[#allocation5 + $0x50] sm:$0xff]
    %v127 = vld [vmem:[#allocation5 + $0x58] sm:$0xff]
    %v128 = vld [vmem:[#allocation5 + $0x60] sm:$0xff]
    %v129 = vld [vmem:[#allocation5 + $0x68] sm:$0xff]
    %v130 = vld [vmem:[#allocation5 + $0x70] sm:$0xff]
    %v131 = vld [vmem:[#allocation5 + $0x78] sm:$0xff]
    %v132 = vld [vmem:[#allocation5 + $0x80] sm:$0xff]
    %v133 = vld [vmem:[#allocation5 + $0x88] sm:$0xff]
    %v134 = vld [vmem:[#allocation5 + $0x90] sm:$0xff]
    %v135 = vld [vmem:[#allocation5 + $0x98] sm:$0xff]
    %v136 = vld [vmem:[#allocation5 + $0xa0] sm:$0xff]
    %v137 = vld [vmem:[#allocation5 + $0xa8] sm:$0xff]
    %v138 = vld [vmem:[#allocation5 + $0xb0] sm:$0xff]
    %v139 = vld [vmem:[#allocation5 + $0xb8] sm:$0xff]
    %v140 = vld [vmem:[#allocation5 + $0xc0] sm:$0xff]
    %v141 = vld [vmem:[#allocation5 + $0xc8] sm:$0xff]
    %v142 = vld [vmem:[#allocation5 + $0xd0] sm:$0xff]
    %v143 = vld [vmem:[#allocation5 + $0xd8] sm:$0xff]
    %v144 = vld [vmem:[#allocation5 + $0xe0] sm:$0xff]
    %v145 = vld [vmem:[#allocation5 + $0xe8] sm:$0xff]
    %v146 = vld [vmem:[#allocation5 + $0xf0] sm:$0xff]
    %v147 = vld [vmem:[#allocation5 + $0xf8] sm:$0xff]
    %v148 = vld [vmem:[#allocation5 + $0x100] sm:$0xff]
    %v149 = vld [vmem:[#allocation5 + $0x108] sm:$0xff]
    %v150 = vld [vmem:[#allocation5 + $0x110] sm:$0xff]
    %v151 = vld [vmem:[#allocation5 + $0x118] sm:$0xff]
    %v152 = vld [vmem:[#allocation5 + $0x120] sm:$0xff]
    %v153 = vld [vmem:[#allocation5 + $0x128] sm:$0xff]
    %v154 = vld [vmem:[#allocation5 + $0x130] sm:$0xff]
    %v155 = vld [vmem:[#allocation5 + $0x138] sm:$0xff]
    %v156 = vld [vmem:[#allocation5 + $0x140] sm:$0xff]
    %v157 = vld [vmem:[#allocation5 + $0x148] sm:$0xff]
    %v158 = vld [vmem:[#allocation5 + $0x150] sm:$0xff]
    %v159 = vld [vmem:[#allocation5 + $0x158] sm:$0xff]
    %v160 = vld [vmem:[#allocation5 + $0x160] sm:$0xff]
    %v161 = vld [vmem:[#allocation5 + $0x168] sm:$0xff]
    %v162 = vld [vmem:[#allocation5 + $0x170] sm:$0xff]
    %v163 = vld [vmem:[#allocation5 + $0x178] sm:$0xff]
    %v164 = vld [vmem:[#allocation5 + $0x180] sm:$0xff]
    %v165 = vld [vmem:[#allocation5 + $0x188] sm:$0xff]
    %v166 = vld [vmem:[#allocation5 + $0x190] sm:$0xff]
    %v167 = vld [vmem:[#allocation5 + $0x198] sm:$0xff]
    %v168 = vld [vmem:[#allocation5 + $0x1a0] sm:$0xff]
    %v169 = vld [vmem:[#allocation5 + $0x1a8] sm:$0xff]
    %v170 = vld [vmem:[#allocation5 + $0x1b0] sm:$0xff]
    %v171 = vld [vmem:[#allocation5 + $0x1b8] sm:$0xff]
    %v172 = vld [vmem:[#allocation5 + $0x1c0] sm:$0xff]
    %v173 = vld [vmem:[#allocation5 + $0x1c8] sm:$0xff]
    %v174 = vld [vmem:[#allocation5 + $0x1d0] sm:$0xff]
    %v175 = vld [vmem:[#allocation5 + $0x1d8] sm:$0xff]
    %v176 = vld [vmem:[#allocation5 + $0x1e0] sm:$0xff]
    %v177 = vld [vmem:[#allocation5 + $0x1e8] sm:$0xff]
    %v178 = vld [vmem:[#allocation5 + $0x1f0] sm:$0xff]
    %v179 = vld [vmem:[#allocation5 + $0x1f8] sm:$0xff]
    %v180 = vld [vmem:[#allocation5 + $0x200] sm:$0xff]
    %v181 = vld [vmem:[#allocation5 + $0x208] sm:$0xff]
    %v182 = vld [vmem:[#allocation5 + $0x210] sm:$0xff]
    %v183 = vld [vmem:[#allocation5 + $0x218] sm:$0xff]
    %v184 = vld [vmem:[#allocation5 + $0x220] sm:$0xff]
    %v185 = vld [vmem:[#allocation5 + $0x228] sm:$0xff]
    %v186 = vld [vmem:[#allocation5 + $0x230] sm:$0xff]
    %v187 = vld [vmem:[#allocation5 + $0x238] sm:$0xff]
    %v188 = vld [vmem:[#allocation5 + $0x240] sm:$0xff]
    %v189 = vld [vmem:[#allocation5 + $0x248] sm:$0xff]
    %v190 = vld [vmem:[#allocation5 + $0x250] sm:$0xff]
    %v191 = vld [vmem:[#allocation5 + $0x258] sm:$0xff]
    %v192 = vld [vmem:[#allocation5 + $0x260] sm:$0xff]
    %v193 = vld [vmem:[#allocation5 + $0x268] sm:$0xff]
    %v194 = vld [vmem:[#allocation5 + $0x270] sm:$0xff]
    %v195 = vld [vmem:[#allocation5 + $0x278] sm:$0xff]
    %v196 = vld [vmem:[#allocation5 + $0x280] sm:$0xff]
    %v197 = vld [vmem:[#allocation5 + $0x288] sm:$0xff]
    %v198 = vld [vmem:[#allocation5 + $0x290] sm:$0xff]
    %v199 = vld [vmem:[#allocation5 + $0x298] sm:$0xff]
    %v200 = vld [vmem:[#allocation5 + $0x2a0] sm:$0xff]
    %v201 = vld [vmem:[#allocation5 + $0x2a8] sm:$0xff]
    %v202 = vld [vmem:[#allocation5 + $0x2b0] sm:$0xff]
    %v203 = vld [vmem:[#allocation5 + $0x2b8] sm:$0xff]
    %v204 = vld [vmem:[#allocation5 + $0x2c0] sm:$0xff]
    %v205 = vld [vmem:[#allocation5 + $0x2c8] sm:$0xff]
    %v206 = vld [vmem:[#allocation5 + $0x2d0] sm:$0xff]
    %v207 = vld [vmem:[#allocation5 + $0x2d8] sm:$0xff]
    %v208 = vld [vmem:[#allocation5 + $0x2e0] sm:$0xff]
    %v209 = vld [vmem:[#allocation5 + $0x2e8] sm:$0xff]
    %v210 = vld [vmem:[#allocation5 + $0x2f0] sm:$0xff]
    %v211 = vld [vmem:[#allocation5 + $0x2f8] sm:$0xff]
    %v212 = vld [vmem:[#allocation5 + $0x300] sm:$0xff]
    %v213 = vld [vmem:[#allocation5 + $0x308] sm:$0xff]
    %v214 = vld [vmem:[#allocation5 + $0x310] sm:$0xff]
    %v215 = vld [vmem:[#allocation5 + $0x318] sm:$0xff]
    %v216 = vld [vmem:[#allocation5 + $0x320] sm:$0xff]
    %v217 = vld [vmem:[#allocation5 + $0x328] sm:$0xff]
    %v218 = vld [vmem:[#allocation5 + $0x330] sm:$0xff]
    %v219 = vld [vmem:[#allocation5 + $0x338] sm:$0xff]
    %v220 = vld [vmem:[#allocation5 + $0x340] sm:$0xff]
    %v221 = vld [vmem:[#allocation5 + $0x348] sm:$0xff]
    %v222 = vld [vmem:[#allocation5 + $0x350] sm:$0xff]
    %v223 = vld [vmem:[#allocation5 + $0x358] sm:$0xff]
    %v224 = vld [vmem:[#allocation5 + $0x360] sm:$0xff]
    %v225 = vld [vmem:[#allocation5 + $0x368] sm:$0xff]
    %v226 = vld [vmem:[#allocation5 + $0x370] sm:$0xff]
    %v227 = vld [vmem:[#allocation5 + $0x378] sm:$0xff]
    %v228 = vld [vmem:[#allocation5 + $0x380] sm:$0xff]
    %v229 = vld [vmem:[#allocation5 + $0x388] sm:$0xff]
    %v230 = vld [vmem:[#allocation5 + $0x390] sm:$0xff]
    %v231 = vld [vmem:[#allocation5 + $0x398] sm:$0xff]
    %v232 = vld [vmem:[#allocation5 + $0x3a0] sm:$0xff]
    %v233 = vld [vmem:[#allocation5 + $0x3a8] sm:$0xff]
    %v234 = vld [vmem:[#allocation5 + $0x3b0] sm:$0xff]
    %v235 = vld [vmem:[#allocation5 + $0x3b8] sm:$0xff]
    %v236 = vld [vmem:[#allocation5 + $0x3c0] sm:$0xff]
    %v237 = vld [vmem:[#allocation5 + $0x3c8] sm:$0xff]
    %v238 = vld [vmem:[#allocation5 + $0x3d0] sm:$0xff]
    %v239 = vld [vmem:[#allocation5 + $0x3d8] sm:$0xff]
    %v240 = vld [vmem:[#allocation5 + $0x3e0] sm:$0xff]
    %v241 = vld [vmem:[#allocation5 + $0x3e8] sm:$0xff]
    %v242 = vld [vmem:[#allocation5 + $0x3f0] sm:$0xff]
    %v243 = vld [vmem:[#allocation5 + $0x3f8] sm:$0xff]
    %v244 = vld [vmem:[#allocation7] sm:$0xff]
    %v245 = vld [vmem:[#allocation7 + $0x8] sm:$0xff]
    %v248 = vlaneseq
    %v249 = vshrl.u32 %v248, 7
    %v250 = vsub.s32 0, %v249
    %v251 = vrot.slane %v244, %v250
    %v252 = vlaneseq
    %v253 = vshrl.u32 %v252, 7
    %v254 = vsub.s32 1, %v253
    %v255 = vrot.slane %v244, %v254
    %v256 = vlaneseq
    %v257 = vshrl.u32 %v256, 7
    %v258 = vsub.s32 2, %v257
    %v259 = vrot.slane %v244, %v258
    %v260 = vlaneseq
    %v261 = vshrl.u32 %v260, 7
    %v262 = vsub.s32 3, %v261
    %v263 = vrot.slane %v244, %v262
    %v264 = vlaneseq
    %v265 = vshrl.u32 %v264, 7
    %v266 = vsub.s32 4, %v265
    %v267 = vrot.slane %v244, %v266
    %v268 = vlaneseq
    %v269 = vshrl.u32 %v268, 7
    %v270 = vsub.s32 5, %v269
    %v271 = vrot.slane %v244, %v270
    %v272 = vlaneseq
    %v273 = vshrl.u32 %v272, 7
    %v274 = vsub.s32 6, %v273
    %v275 = vrot.slane %v244, %v274
    %v276 = vlaneseq
    %v277 = vshrl.u32 %v276, 7
    %v278 = vsub.s32 7, %v277
    %v279 = vrot.slane %v244, %v278
    %v280 = vlaneseq
    %v281 = vshrl.u32 %v280, 7
    %v282 = vsub.s32 0, %v281
    %v283 = vrot.slane %v245, %v282
    %v284 = vlaneseq
    %v285 = vshrl.u32 %v284, 7
    %v286 = vsub.s32 1, %v285
    %v287 = vrot.slane %v245, %v286
    %v288 = vlaneseq
    %v289 = vshrl.u32 %v288, 7
    %v290 = vsub.s32 2, %v289
    %v291 = vrot.slane %v245, %v290
    %v292 = vlaneseq
    %v293 = vshrl.u32 %v292, 7
    %v294 = vsub.s32 3, %v293
    %v295 = vrot.slane %v245, %v294
    %v296 = vlaneseq
    %v297 = vshrl.u32 %v296, 7
    %v298 = vsub.s32 4, %v297
    %v299 = vrot.slane %v245, %v298
    %v300 = vlaneseq
    %v301 = vshrl.u32 %v300, 7
    %v302 = vsub.s32 5, %v301
    %v303 = vrot.slane %v245, %v302
    %v304 = vlaneseq
    %v305 = vshrl.u32 %v304, 7
    %v306 = vsub.s32 6, %v305
    %v307 = vrot.slane %v245, %v306
    %v308 = vlaneseq
    %v309 = vshrl.u32 %v308, 7
    %v310 = vsub.s32 7, %v309
    %v311 = vrot.slane %v245, %v310
    %v456 = vunpack.c.l.b16 %v116
    %v457 = vunpack.c.h.b16 %v116
    %v458 = vunpack.c.l.b16 %v117
    %v459 = vunpack.c.h.b16 %v117
    %v460 = vunpack.c.l.b16 %v118
    %v461 = vunpack.c.h.b16 %v118
    %v462 = vunpack.c.l.b16 %v119
    %v463 = vunpack.c.h.b16 %v119
    %v464 = vunpack.c.l.b16 %v120
    %v465 = vunpack.c.h.b16 %v120
    %v466 = vunpack.c.l.b16 %v121
    %v467 = vunpack.c.h.b16 %v121
    %v468 = vunpack.c.l.b16 %v122
    %v469 = vunpack.c.h.b16 %v122
    %v470 = vunpack.c.l.b16 %v123
    %v471 = vunpack.c.h.b16 %v123
    %v472 = vunpack.c.l.b16 %v124
    %v473 = vunpack.c.h.b16 %v124
    %v474 = vunpack.c.l.b16 %v125
    %v475 = vunpack.c.h.b16 %v125
    %v476 = vunpack.c.l.b16 %v126
    %v477 = vunpack.c.h.b16 %v126
    %v478 = vunpack.c.l.b16 %v127
    %v479 = vunpack.c.h.b16 %v127
    %v480 = vunpack.c.l.b16 %v128
    %v481 = vunpack.c.h.b16 %v128
    %v482 = vunpack.c.l.b16 %v129
    %v483 = vunpack.c.h.b16 %v129
    %v484 = vunpack.c.l.b16 %v130
    %v485 = vunpack.c.h.b16 %v130
    %v486 = vunpack.c.l.b16 %v131
    %v487 = vunpack.c.h.b16 %v131
    %v488 = vunpack.c.l.b16 %v132
    %v489 = vunpack.c.h.b16 %v132
    %v490 = vunpack.c.l.b16 %v133
    %v491 = vunpack.c.h.b16 %v133
    %v492 = vunpack.c.l.b16 %v134
    %v493 = vunpack.c.h.b16 %v134
    %v494 = vunpack.c.l.b16 %v135
    %v495 = vunpack.c.h.b16 %v135
    %v496 = vunpack.c.l.b16 %v136
    %v497 = vunpack.c.h.b16 %v136
    %v498 = vunpack.c.l.b16 %v137
    %v499 = vunpack.c.h.b16 %v137
    %v500 = vunpack.c.l.b16 %v138
    %v501 = vunpack.c.h.b16 %v138
    %v502 = vunpack.c.l.b16 %v139
    %v503 = vunpack.c.h.b16 %v139
    %v504 = vunpack.c.l.b16 %v140
    %v505 = vunpack.c.h.b16 %v140
    %v506 = vunpack.c.l.b16 %v141
    %v507 = vunpack.c.h.b16 %v141
    %v508 = vunpack.c.l.b16 %v142
    %v509 = vunpack.c.h.b16 %v142
    %v510 = vunpack.c.l.b16 %v143
    %v511 = vunpack.c.h.b16 %v143
    %v512 = vunpack.c.l.b16 %v144
    %v513 = vunpack.c.h.b16 %v144
    %v514 = vunpack.c.l.b16 %v145
    %v515 = vunpack.c.h.b16 %v145
    %v516 = vunpack.c.l.b16 %v146
    %v517 = vunpack.c.h.b16 %v146
    %v518 = vunpack.c.l.b16 %v147
    %v519 = vunpack.c.h.b16 %v147
    %v520 = vunpack.c.l.b16 %v148
    %v521 = vunpack.c.h.b16 %v148
    %v522 = vunpack.c.l.b16 %v149
    %v523 = vunpack.c.h.b16 %v149
    %v524 = vunpack.c.l.b16 %v150
    %v525 = vunpack.c.h.b16 %v150
    %v526 = vunpack.c.l.b16 %v151
    %v527 = vunpack.c.h.b16 %v151
    %v528 = vunpack.c.l.b16 %v152
    %v529 = vunpack.c.h.b16 %v152
    %v530 = vunpack.c.l.b16 %v153
    %v531 = vunpack.c.h.b16 %v153
    %v532 = vunpack.c.l.b16 %v154
    %v533 = vunpack.c.h.b16 %v154
    %v534 = vunpack.c.l.b16 %v155
    %v535 = vunpack.c.h.b16 %v155
    %v536 = vunpack.c.l.b16 %v156
    %v537 = vunpack.c.h.b16 %v156
    %v538 = vunpack.c.l.b16 %v157
    %v539 = vunpack.c.h.b16 %v157
    %v540 = vunpack.c.l.b16 %v158
    %v541 = vunpack.c.h.b16 %v158
    %v542 = vunpack.c.l.b16 %v159
    %v543 = vunpack.c.h.b16 %v159
    %v544 = vunpack.c.l.b16 %v160
    %v545 = vunpack.c.h.b16 %v160
    %v546 = vunpack.c.l.b16 %v161
    %v547 = vunpack.c.h.b16 %v161
    %v548 = vunpack.c.l.b16 %v162
    %v549 = vunpack.c.h.b16 %v162
    %v550 = vunpack.c.l.b16 %v163
    %v551 = vunpack.c.h.b16 %v163
    %v552 = vunpack.c.l.b16 %v164
    %v553 = vunpack.c.h.b16 %v164
    %v554 = vunpack.c.l.b16 %v165
    %v555 = vunpack.c.h.b16 %v165
    %v556 = vunpack.c.l.b16 %v166
    %v557 = vunpack.c.h.b16 %v166
    %v558 = vunpack.c.l.b16 %v167
    %v559 = vunpack.c.h.b16 %v167
    %v560 = vunpack.c.l.b16 %v168
    %v561 = vunpack.c.h.b16 %v168
    %v562 = vunpack.c.l.b16 %v169
    %v563 = vunpack.c.h.b16 %v169
    %v564 = vunpack.c.l.b16 %v170
    %v565 = vunpack.c.h.b16 %v170
    %v566 = vunpack.c.l.b16 %v171
    %v567 = vunpack.c.h.b16 %v171
    %v568 = vunpack.c.l.b16 %v172
    %v569 = vunpack.c.h.b16 %v172
    %v570 = vunpack.c.l.b16 %v173
    %v571 = vunpack.c.h.b16 %v173
    %v572 = vunpack.c.l.b16 %v174
    %v573 = vunpack.c.h.b16 %v174
    %v574 = vunpack.c.l.b16 %v175
    %v575 = vunpack.c.h.b16 %v175
    %v576 = vunpack.c.l.b16 %v176
    %v577 = vunpack.c.h.b16 %v176
    %v578 = vunpack.c.l.b16 %v177
    %v579 = vunpack.c.h.b16 %v177
    %v580 = vunpack.c.l.b16 %v178
    %v581 = vunpack.c.h.b16 %v178
    %v582 = vunpack.c.l.b16 %v179
    %v583 = vunpack.c.h.b16 %v179
    %v584 = vunpack.c.l.b16 %v180
    %v585 = vunpack.c.h.b16 %v180
    %v586 = vunpack.c.l.b16 %v181
    %v587 = vunpack.c.h.b16 %v181
    %v588 = vunpack.c.l.b16 %v182
    %v589 = vunpack.c.h.b16 %v182
    %v590 = vunpack.c.l.b16 %v183
    %v591 = vunpack.c.h.b16 %v183
    %v592 = vunpack.c.l.b16 %v184
    %v593 = vunpack.c.h.b16 %v184
    %v594 = vunpack.c.l.b16 %v185
    %v595 = vunpack.c.h.b16 %v185
    %v596 = vunpack.c.l.b16 %v186
    %v597 = vunpack.c.h.b16 %v186
    %v598 = vunpack.c.l.b16 %v187
    %v599 = vunpack.c.h.b16 %v187
    %v600 = vunpack.c.l.b16 %v188
    %v601 = vunpack.c.h.b16 %v188
    %v602 = vunpack.c.l.b16 %v189
    %v603 = vunpack.c.h.b16 %v189
    %v604 = vunpack.c.l.b16 %v190
    %v605 = vunpack.c.h.b16 %v190
    %v606 = vunpack.c.l.b16 %v191
    %v607 = vunpack.c.h.b16 %v191
    %v608 = vunpack.c.l.b16 %v192
    %v609 = vunpack.c.h.b16 %v192
    %v610 = vunpack.c.l.b16 %v193
    %v611 = vunpack.c.h.b16 %v193
    %v612 = vunpack.c.l.b16 %v194
    %v613 = vunpack.c.h.b16 %v194
    %v614 = vunpack.c.l.b16 %v195
    %v615 = vunpack.c.h.b16 %v195
    %v616 = vunpack.c.l.b16 %v196
    %v617 = vunpack.c.h.b16 %v196
    %v618 = vunpack.c.l.b16 %v197
    %v619 = vunpack.c.h.b16 %v197
    %v620 = vunpack.c.l.b16 %v198
    %v621 = vunpack.c.h.b16 %v198
    %v622 = vunpack.c.l.b16 %v199
    %v623 = vunpack.c.h.b16 %v199
    %v624 = vunpack.c.l.b16 %v200
    %v625 = vunpack.c.h.b16 %v200
    %v626 = vunpack.c.l.b16 %v201
    %v627 = vunpack.c.h.b16 %v201
    %v628 = vunpack.c.l.b16 %v202
    %v629 = vunpack.c.h.b16 %v202
    %v630 = vunpack.c.l.b16 %v203
    %v631 = vunpack.c.h.b16 %v203
    %v632 = vunpack.c.l.b16 %v204
    %v633 = vunpack.c.h.b16 %v204
    %v634 = vunpack.c.l.b16 %v205
    %v635 = vunpack.c.h.b16 %v205
    %v636 = vunpack.c.l.b16 %v206
    %v637 = vunpack.c.h.b16 %v206
    %v638 = vunpack.c.l.b16 %v207
    %v639 = vunpack.c.h.b16 %v207
    %v640 = vunpack.c.l.b16 %v208
    %v641 = vunpack.c.h.b16 %v208
    %v642 = vunpack.c.l.b16 %v209
    %v643 = vunpack.c.h.b16 %v209
    %v644 = vunpack.c.l.b16 %v210
    %v645 = vunpack.c.h.b16 %v210
    %v646 = vunpack.c.l.b16 %v211
    %v647 = vunpack.c.h.b16 %v211
    %v648 = vunpack.c.l.b16 %v212
    %v649 = vunpack.c.h.b16 %v212
    %v650 = vunpack.c.l.b16 %v213
    %v651 = vunpack.c.h.b16 %v213
    %v652 = vunpack.c.l.b16 %v214
    %v653 = vunpack.c.h.b16 %v214
    %v654 = vunpack.c.l.b16 %v215
    %v655 = vunpack.c.h.b16 %v215
    %v656 = vunpack.c.l.b16 %v216
    %v657 = vunpack.c.h.b16 %v216
    %v658 = vunpack.c.l.b16 %v217
    %v659 = vunpack.c.h.b16 %v217
    %v660 = vunpack.c.l.b16 %v218
    %v661 = vunpack.c.h.b16 %v218
    %v662 = vunpack.c.l.b16 %v219
    %v663 = vunpack.c.h.b16 %v219
    %v664 = vunpack.c.l.b16 %v220
    %v665 = vunpack.c.h.b16 %v220
    %v666 = vunpack.c.l.b16 %v221
    %v667 = vunpack.c.h.b16 %v221
    %v668 = vunpack.c.l.b16 %v222
    %v669 = vunpack.c.h.b16 %v222
    %v670 = vunpack.c.l.b16 %v223
    %v671 = vunpack.c.h.b16 %v223
    %v672 = vunpack.c.l.b16 %v224
    %v673 = vunpack.c.h.b16 %v224
    %v674 = vunpack.c.l.b16 %v225
    %v675 = vunpack.c.h.b16 %v225
    %v676 = vunpack.c.l.b16 %v226
    %v677 = vunpack.c.h.b16 %v226
    %v678 = vunpack.c.l.b16 %v227
    %v679 = vunpack.c.h.b16 %v227
    %v680 = vunpack.c.l.b16 %v228
    %v681 = vunpack.c.h.b16 %v228
    %v682 = vunpack.c.l.b16 %v229
    %v683 = vunpack.c.h.b16 %v229
    %v684 = vunpack.c.l.b16 %v230
    %v685 = vunpack.c.h.b16 %v230
    %v686 = vunpack.c.l.b16 %v231
    %v687 = vunpack.c.h.b16 %v231
    %v688 = vunpack.c.l.b16 %v232
    %v689 = vunpack.c.h.b16 %v232
    %v690 = vunpack.c.l.b16 %v233
    %v691 = vunpack.c.h.b16 %v233
    %v692 = vunpack.c.l.b16 %v234
    %v693 = vunpack.c.h.b16 %v234
    %v694 = vunpack.c.l.b16 %v235
    %v695 = vunpack.c.h.b16 %v235
    %v696 = vunpack.c.l.b16 %v236
    %v697 = vunpack.c.h.b16 %v236
    %v698 = vunpack.c.l.b16 %v237
    %v699 = vunpack.c.h.b16 %v237
    %v700 = vunpack.c.l.b16 %v238
    %v701 = vunpack.c.h.b16 %v238
    %v702 = vunpack.c.l.b16 %v239
    %v703 = vunpack.c.h.b16 %v239
    %v704 = vunpack.c.l.b16 %v240
    %v705 = vunpack.c.h.b16 %v240
    %v706 = vunpack.c.l.b16 %v241
    %v707 = vunpack.c.h.b16 %v241
    %v708 = vunpack.c.l.b16 %v242
    %v709 = vunpack.c.h.b16 %v242
    %v710 = vunpack.c.l.b16 %v243
    %v711 = vunpack.c.h.b16 %v243
    %v712 = vpack.c.b16 %v472, %v456
    %v713 = vpack.c.b16 %v473, %v457
    %v714 = vpack.c.b16 %v474, %v458
    %v715 = vpack.c.b16 %v475, %v459
    %v716 = vpack.c.b16 %v476, %v460
    %v717 = vpack.c.b16 %v477, %v461
    %v718 = vpack.c.b16 %v478, %v462
    %v719 = vpack.c.b16 %v479, %v463
    %v720 = vpack.c.b16 %v480, %v464
    %v721 = vpack.c.b16 %v481, %v465
    %v722 = vpack.c.b16 %v482, %v466
    %v723 = vpack.c.b16 %v483, %v467
    %v724 = vpack.c.b16 %v484, %v468
    %v725 = vpack.c.b16 %v485, %v469
    %v726 = vpack.c.b16 %v486, %v470
    %v727 = vpack.c.b16 %v487, %v471
    %v728 = vpack.c.b16 %v504, %v488
    %v729 = vpack.c.b16 %v505, %v489
    %v730 = vpack.c.b16 %v506, %v490
    %v731 = vpack.c.b16 %v507, %v491
    %v732 = vpack.c.b16 %v508, %v492
    %v733 = vpack.c.b16 %v509, %v493
    %v734 = vpack.c.b16 %v510, %v494
    %v735 = vpack.c.b16 %v511, %v495
    %v736 = vpack.c.b16 %v512, %v496
    %v737 = vpack.c.b16 %v513, %v497
    %v738 = vpack.c.b16 %v514, %v498
    %v739 = vpack.c.b16 %v515, %v499
    %v740 = vpack.c.b16 %v516, %v500
    %v741 = vpack.c.b16 %v517, %v501
    %v742 = vpack.c.b16 %v518, %v502
    %v743 = vpack.c.b16 %v519, %v503
    %v744 = vpack.c.b16 %v536, %v520
    %v745 = vpack.c.b16 %v537, %v521
    %v746 = vpack.c.b16 %v538, %v522
    %v747 = vpack.c.b16 %v539, %v523
    %v748 = vpack.c.b16 %v540, %v524
    %v749 = vpack.c.b16 %v541, %v525
    %v750 = vpack.c.b16 %v542, %v526
    %v751 = vpack.c.b16 %v543, %v527
    %v752 = vpack.c.b16 %v544, %v528
    %v753 = vpack.c.b16 %v545, %v529
    %v754 = vpack.c.b16 %v546, %v530
    %v755 = vpack.c.b16 %v547, %v531
    %v756 = vpack.c.b16 %v548, %v532
    %v757 = vpack.c.b16 %v549, %v533
    %v758 = vpack.c.b16 %v550, %v534
    %v759 = vpack.c.b16 %v551, %v535
    %v760 = vpack.c.b16 %v568, %v552
    %v761 = vpack.c.b16 %v569, %v553
    %v762 = vpack.c.b16 %v570, %v554
    %v763 = vpack.c.b16 %v571, %v555
    %v764 = vpack.c.b16 %v572, %v556
    %v765 = vpack.c.b16 %v573, %v557
    %v766 = vpack.c.b16 %v574, %v558
    %v767 = vpack.c.b16 %v575, %v559
    %v768 = vpack.c.b16 %v576, %v560
    %v769 = vpack.c.b16 %v577, %v561
    %v770 = vpack.c.b16 %v578, %v562
    %v771 = vpack.c.b16 %v579, %v563
    %v772 = vpack.c.b16 %v580, %v564
    %v773 = vpack.c.b16 %v581, %v565
    %v774 = vpack.c.b16 %v582, %v566
    %v775 = vpack.c.b16 %v583, %v567
    %v776 = vpack.c.b16 %v600, %v584
    %v777 = vpack.c.b16 %v601, %v585
    %v778 = vpack.c.b16 %v602, %v586
    %v779 = vpack.c.b16 %v603, %v587
    %v780 = vpack.c.b16 %v604, %v588
    %v781 = vpack.c.b16 %v605, %v589
    %v782 = vpack.c.b16 %v606, %v590
    %v783 = vpack.c.b16 %v607, %v591
    %v784 = vpack.c.b16 %v608, %v592
    %v785 = vpack.c.b16 %v609, %v593
    %v786 = vpack.c.b16 %v610, %v594
    %v787 = vpack.c.b16 %v611, %v595
    %v788 = vpack.c.b16 %v612, %v596
    %v789 = vpack.c.b16 %v613, %v597
    %v790 = vpack.c.b16 %v614, %v598
    %v791 = vpack.c.b16 %v615, %v599
    %v792 = vpack.c.b16 %v632, %v616
    %v793 = vpack.c.b16 %v633, %v617
    %v794 = vpack.c.b16 %v634, %v618
    %v795 = vpack.c.b16 %v635, %v619
    %v796 = vpack.c.b16 %v636, %v620
    %v797 = vpack.c.b16 %v637, %v621
    %v798 = vpack.c.b16 %v638, %v622
    %v799 = vpack.c.b16 %v639, %v623
    %v800 = vpack.c.b16 %v640, %v624
    %v801 = vpack.c.b16 %v641, %v625
    %v802 = vpack.c.b16 %v642, %v626
    %v803 = vpack.c.b16 %v643, %v627
    %v804 = vpack.c.b16 %v644, %v628
    %v805 = vpack.c.b16 %v645, %v629
    %v806 = vpack.c.b16 %v646, %v630
    %v807 = vpack.c.b16 %v647, %v631
    %v808 = vpack.c.b16 %v664, %v648
    %v809 = vpack.c.b16 %v665, %v649
    %v810 = vpack.c.b16 %v666, %v650
    %v811 = vpack.c.b16 %v667, %v651
    %v812 = vpack.c.b16 %v668, %v652
    %v813 = vpack.c.b16 %v669, %v653
    %v814 = vpack.c.b16 %v670, %v654
    %v815 = vpack.c.b16 %v671, %v655
    %v816 = vpack.c.b16 %v672, %v656
    %v817 = vpack.c.b16 %v673, %v657
    %v818 = vpack.c.b16 %v674, %v658
    %v819 = vpack.c.b16 %v675, %v659
    %v820 = vpack.c.b16 %v676, %v660
    %v821 = vpack.c.b16 %v677, %v661
    %v822 = vpack.c.b16 %v678, %v662
    %v823 = vpack.c.b16 %v679, %v663
    %v824 = vpack.c.b16 %v696, %v680
    %v825 = vpack.c.b16 %v697, %v681
    %v826 = vpack.c.b16 %v698, %v682
    %v827 = vpack.c.b16 %v699, %v683
    %v828 = vpack.c.b16 %v700, %v684
    %v829 = vpack.c.b16 %v701, %v685
    %v830 = vpack.c.b16 %v702, %v686
    %v831 = vpack.c.b16 %v703, %v687
    %v832 = vpack.c.b16 %v704, %v688
    %v833 = vpack.c.b16 %v705, %v689
    %v834 = vpack.c.b16 %v706, %v690
    %v835 = vpack.c.b16 %v707, %v691
    %v836 = vpack.c.b16 %v708, %v692
    %v837 = vpack.c.b16 %v709, %v693
    %v838 = vpack.c.b16 %v710, %v694
    %v839 = vpack.c.b16 %v711, %v695
    %968 = vmatprep.subr.bf16.mxu0 %v825
    %969 = vmatpush1.bf16.msra.mxu0 %v824
    %970 = vmatprep.subr.bf16.mxu0 %v809
    %971 = vmatpush1.bf16.msra.mxu0 %v808
    %972 = vmatprep.subr.bf16.mxu0 %v793
    %973 = vmatpush1.bf16.msra.mxu0 %v792
    %974 = vmatprep.subr.bf16.mxu0 %v777
    %975 = vmatpush1.bf16.msra.mxu0 %v776
    %976 = vmatprep.subr.bf16.mxu0 %v761
    %977 = vmatpush1.bf16.msra.mxu0 %v760
    %978 = vmatprep.subr.bf16.mxu0 %v745
    %979 = vmatpush1.bf16.msra.mxu0 %v744
    %980 = vmatprep.subr.bf16.mxu0 %v729
    %981 = vmatpush1.bf16.msra.mxu0 %v728
    %982 = vmatprep.subr.bf16.mxu0 %v713
    %983 = vmatpush1.bf16.msra.mxu0 %v712
    %984 = vmatprep.subr.bf16.mxu0 0
    %985 = vmatpush2.bf16.msra.mxu0 0
    %986 = vmatprep.subr.bf16.mxu0 0
    %987 = vmatpush2.bf16.msra.mxu0 0
    %988 = vmatprep.subr.bf16.mxu0 0
    %989 = vmatpush2.bf16.msra.mxu0 0
    %990 = vmatprep.subr.bf16.mxu0 0
    %991 = vmatpush2.bf16.msra.mxu0 0
    %992 = vmatprep.subr.bf16.mxu0 0
    %993 = vmatpush2.bf16.msra.mxu0 0
    %994 = vmatprep.subr.bf16.mxu0 0
    %995 = vmatpush2.bf16.msra.mxu0 0
    %996 = vmatprep.subr.bf16.mxu0 0
    %997 = vmatpush2.bf16.msra.mxu0 0
    %998 = vmatprep.subr.bf16.mxu0 0
    %999 = vmatpush2.bf16.msra.mxu0 0
    %1000 = vmatprep.mubr.bf16.mxu0 0
    %1001 = vmatmul.mubr.bf16.gmra.mxu0 %v115
    %v1002 = vpop.f32.mrf.mxu0
    %v1003 = vadd.f32 %v251, %v1002
    %v1004 = vpop.f32.mrf.mxu0
    %v1005 = vadd.f32 %v255, %v1004
    %v1006 = vpop.f32.mrf.mxu0
    %v1007 = vpop.f32.mrf.mxu0
    %1008 = vdwg.mxu0
    %1009 = vmatprep.subr.bf16.mxu0 %v827
    %1010 = vmatpush1.bf16.msra.mxu0 %v826
    %1011 = vmatprep.subr.bf16.mxu0 %v811
    %1012 = vmatpush1.bf16.msra.mxu0 %v810
    %1013 = vmatprep.subr.bf16.mxu0 %v795
    %1014 = vmatpush1.bf16.msra.mxu0 %v794
    %1015 = vmatprep.subr.bf16.mxu0 %v779
    %1016 = vmatpush1.bf16.msra.mxu0 %v778
    %1017 = vmatprep.subr.bf16.mxu0 %v763
    %1018 = vmatpush1.bf16.msra.mxu0 %v762
    %1019 = vmatprep.subr.bf16.mxu0 %v747
    %1020 = vmatpush1.bf16.msra.mxu0 %v746
    %1021 = vmatprep.subr.bf16.mxu0 %v731
    %1022 = vmatpush1.bf16.msra.mxu0 %v730
    %1023 = vmatprep.subr.bf16.mxu0 %v715
    %1024 = vmatpush1.bf16.msra.mxu0 %v714
    %1025 = vmatprep.subr.bf16.mxu0 0
    %1026 = vmatpush2.bf16.msra.mxu0 0
    %1027 = vmatprep.subr.bf16.mxu0 0
    %1028 = vmatpush2.bf16.msra.mxu0 0
    %1029 = vmatprep.subr.bf16.mxu0 0
    %1030 = vmatpush2.bf16.msra.mxu0 0
    %1031 = vmatprep.subr.bf16.mxu0 0
    %1032 = vmatpush2.bf16.msra.mxu0 0
    %1033 = vmatprep.subr.bf16.mxu0 0
    %1034 = vmatpush2.bf16.msra.mxu0 0
    %1035 = vmatprep.subr.bf16.mxu0 0
    %1036 = vmatpush2.bf16.msra.mxu0 0
    %1037 = vmatprep.subr.bf16.mxu0 0
    %1038 = vmatpush2.bf16.msra.mxu0 0
    %1039 = vmatprep.subr.bf16.mxu0 0
    %1040 = vmatpush2.bf16.msra.mxu0 0
    %1041 = vmatprep.mubr.bf16.mxu0 0
    %1042 = vmatmul.mubr.bf16.gmra.mxu0 %v115
    %v1043 = vpop.f32.mrf.mxu0
    %v1044 = vadd.f32 %v259, %v1043
    %v1045 = vpop.f32.mrf.mxu0
    %v1046 = vadd.f32 %v263, %v1045
    %v1047 = vpop.f32.mrf.mxu0
    %v1048 = vpop.f32.mrf.mxu0
    %1049 = vdwg.mxu0
    %1050 = vmatprep.subr.bf16.mxu0 %v829
    %1051 = vmatpush1.bf16.msra.mxu0 %v828
    %1052 = vmatprep.subr.bf16.mxu0 %v813
    %1053 = vmatpush1.bf16.msra.mxu0 %v812
    %1054 = vmatprep.subr.bf16.mxu0 %v797
    %1055 = vmatpush1.bf16.msra.mxu0 %v796
    %1056 = vmatprep.subr.bf16.mxu0 %v781
    %1057 = vmatpush1.bf16.msra.mxu0 %v780
    %1058 = vmatprep.subr.bf16.mxu0 %v765
    %1059 = vmatpush1.bf16.msra.mxu0 %v764
    %1060 = vmatprep.subr.bf16.mxu0 %v749
    %1061 = vmatpush1.bf16.msra.mxu0 %v748
    %1062 = vmatprep.subr.bf16.mxu0 %v733
    %1063 = vmatpush1.bf16.msra.mxu0 %v732
    %1064 = vmatprep.subr.bf16.mxu0 %v717
    %1065 = vmatpush1.bf16.msra.mxu0 %v716
    %1066 = vmatprep.subr.bf16.mxu0 0
    %1067 = vmatpush2.bf16.msra.mxu0 0
    %1068 = vmatprep.subr.bf16.mxu0 0
    %1069 = vmatpush2.bf16.msra.mxu0 0
    %1070 = vmatprep.subr.bf16.mxu0 0
    %1071 = vmatpush2.bf16.msra.mxu0 0
    %1072 = vmatprep.subr.bf16.mxu0 0
    %1073 = vmatpush2.bf16.msra.mxu0 0
    %1074 = vmatprep.subr.bf16.mxu0 0
    %1075 = vmatpush2.bf16.msra.mxu0 0
    %1076 = vmatprep.subr.bf16.mxu0 0
    %1077 = vmatpush2.bf16.msra.mxu0 0
    %1078 = vmatprep.subr.bf16.mxu0 0
    %1079 = vmatpush2.bf16.msra.mxu0 0
    %1080 = vmatprep.subr.bf16.mxu0 0
    %1081 = vmatpush2.bf16.msra.mxu0 0
    %1082 = vmatprep.mubr.bf16.mxu0 0
    %1083 = vmatmul.mubr.bf16.gmra.mxu0 %v115
    %v1084 = vpop.f32.mrf.mxu0
    %v1085 = vadd.f32 %v267, %v1084
    %v1086 = vpop.f32.mrf.mxu0
    %v1087 = vadd.f32 %v271, %v1086
    %v1088 = vpop.f32.mrf.mxu0
    %v1089 = vpop.f32.mrf.mxu0
    %1090 = vdwg.mxu0
    %1091 = vmatprep.subr.bf16.mxu0 %v831
    %1092 = vmatpush1.bf16.msra.mxu0 %v830
    %1093 = vmatprep.subr.bf16.mxu0 %v815
    %1094 = vmatpush1.bf16.msra.mxu0 %v814
    %1095 = vmatprep.subr.bf16.mxu0 %v799
    %1096 = vmatpush1.bf16.msra.mxu0 %v798
    %1097 = vmatprep.subr.bf16.mxu0 %v783
    %1098 = vmatpush1.bf16.msra.mxu0 %v782
    %1099 = vmatprep.subr.bf16.mxu0 %v767
    %1100 = vmatpush1.bf16.msra.mxu0 %v766
    %1101 = vmatprep.subr.bf16.mxu0 %v751
    %1102 = vmatpush1.bf16.msra.mxu0 %v750
    %1103 = vmatprep.subr.bf16.mxu0 %v735
    %1104 = vmatpush1.bf16.msra.mxu0 %v734
    %1105 = vmatprep.subr.bf16.mxu0 %v719
    %1106 = vmatpush1.bf16.msra.mxu0 %v718
    %1107 = vmatprep.subr.bf16.mxu0 0
    %1108 = vmatpush2.bf16.msra.mxu0 0
    %1109 = vmatprep.subr.bf16.mxu0 0
    %1110 = vmatpush2.bf16.msra.mxu0 0
    %1111 = vmatprep.subr.bf16.mxu0 0
    %1112 = vmatpush2.bf16.msra.mxu0 0
    %1113 = vmatprep.subr.bf16.mxu0 0
    %1114 = vmatpush2.bf16.msra.mxu0 0
    %1115 = vmatprep.subr.bf16.mxu0 0
    %1116 = vmatpush2.bf16.msra.mxu0 0
    %1117 = vmatprep.subr.bf16.mxu0 0
    %1118 = vmatpush2.bf16.msra.mxu0 0
    %1119 = vmatprep.subr.bf16.mxu0 0
    %1120 = vmatpush2.bf16.msra.mxu0 0
    %1121 = vmatprep.subr.bf16.mxu0 0
    %1122 = vmatpush2.bf16.msra.mxu0 0
    %1123 = vmatprep.mubr.bf16.mxu0 0
    %1124 = vmatmul.mubr.bf16.gmra.mxu0 %v115
    %v1125 = vpop.f32.mrf.mxu0
    %v1126 = vadd.f32 %v275, %v1125
    %v1127 = vpop.f32.mrf.mxu0
    %v1128 = vadd.f32 %v279, %v1127
    %v1129 = vpop.f32.mrf.mxu0
    %v1130 = vpop.f32.mrf.mxu0
    %1131 = vdwg.mxu0
    %1132 = vmatprep.subr.bf16.mxu0 %v833
    %1133 = vmatpush1.bf16.msra.mxu0 %v832
    %1134 = vmatprep.subr.bf16.mxu0 %v817
    %1135 = vmatpush1.bf16.msra.mxu0 %v816
    %1136 = vmatprep.subr.bf16.mxu0 %v801
    %1137 = vmatpush1.bf16.msra.mxu0 %v800
    %1138 = vmatprep.subr.bf16.mxu0 %v785
    %1139 = vmatpush1.bf16.msra.mxu0 %v784
    %1140 = vmatprep.subr.bf16.mxu0 %v769
    %1141 = vmatpush1.bf16.msra.mxu0 %v768
    %1142 = vmatprep.subr.bf16.mxu0 %v753
    %1143 = vmatpush1.bf16.msra.mxu0 %v752
    %1144 = vmatprep.subr.bf16.mxu0 %v737
    %1145 = vmatpush1.bf16.msra.mxu0 %v736
    %1146 = vmatprep.subr.bf16.mxu0 %v721
    %1147 = vmatpush1.bf16.msra.mxu0 %v720
    %1148 = vmatprep.subr.bf16.mxu0 0
    %1149 = vmatpush2.bf16.msra.mxu0 0
    %1150 = vmatprep.subr.bf16.mxu0 0
    %1151 = vmatpush2.bf16.msra.mxu0 0
    %1152 = vmatprep.subr.bf16.mxu0 0
    %1153 = vmatpush2.bf16.msra.mxu0 0
    %1154 = vmatprep.subr.bf16.mxu0 0
    %1155 = vmatpush2.bf16.msra.mxu0 0
    %1156 = vmatprep.subr.bf16.mxu0 0
    %1157 = vmatpush2.bf16.msra.mxu0 0
    %1158 = vmatprep.subr.bf16.mxu0 0
    %1159 = vmatpush2.bf16.msra.mxu0 0
    %1160 = vmatprep.subr.bf16.mxu0 0
    %1161 = vmatpush2.bf16.msra.mxu0 0
    %1162 = vmatprep.subr.bf16.mxu0 0
    %1163 = vmatpush2.bf16.msra.mxu0 0
    %1164 = vmatprep.mubr.bf16.mxu0 0
    %1165 = vmatmul.mubr.bf16.gmra.mxu0 %v115
    %v1166 = vpop.f32.mrf.mxu0
    %v1167 = vadd.f32 %v283, %v1166
    %v1168 = vpop.f32.mrf.mxu0
    %v1169 = vadd.f32 %v287, %v1168
    %v1170 = vpop.f32.mrf.mxu0
    %v1171 = vpop.f32.mrf.mxu0
    %1172 = vdwg.mxu0
    %1173 = vmatprep.subr.bf16.mxu0 %v835
    %1174 = vmatpush1.bf16.msra.mxu0 %v834
    %1175 = vmatprep.subr.bf16.mxu0 %v819
    %1176 = vmatpush1.bf16.msra.mxu0 %v818
    %1177 = vmatprep.subr.bf16.mxu0 %v803
    %1178 = vmatpush1.bf16.msra.mxu0 %v802
    %1179 = vmatprep.subr.bf16.mxu0 %v787
    %1180 = vmatpush1.bf16.msra.mxu0 %v786
    %1181 = vmatprep.subr.bf16.mxu0 %v771
    %1182 = vmatpush1.bf16.msra.mxu0 %v770
    %1183 = vmatprep.subr.bf16.mxu0 %v755
    %1184 = vmatpush1.bf16.msra.mxu0 %v754
    %1185 = vmatprep.subr.bf16.mxu0 %v739
    %1186 = vmatpush1.bf16.msra.mxu0 %v738
    %1187 = vmatprep.subr.bf16.mxu0 %v723
    %1188 = vmatpush1.bf16.msra.mxu0 %v722
    %1189 = vmatprep.subr.bf16.mxu0 0
    %1190 = vmatpush2.bf16.msra.mxu0 0
    %1191 = vmatprep.subr.bf16.mxu0 0
    %1192 = vmatpush2.bf16.msra.mxu0 0
    %1193 = vmatprep.subr.bf16.mxu0 0
    %1194 = vmatpush2.bf16.msra.mxu0 0
    %1195 = vmatprep.subr.bf16.mxu0 0
    %1196 = vmatpush2.bf16.msra.mxu0 0
    %1197 = vmatprep.subr.bf16.mxu0 0
    %1198 = vmatpush2.bf16.msra.mxu0 0
    %1199 = vmatprep.subr.bf16.mxu0 0
    %1200 = vmatpush2.bf16.msra.mxu0 0
    %1201 = vmatprep.subr.bf16.mxu0 0
    %1202 = vmatpush2.bf16.msra.mxu0 0
    %1203 = vmatprep.subr.bf16.mxu0 0
    %1204 = vmatpush2.bf16.msra.mxu0 0
    %1205 = vmatprep.mubr.bf16.mxu0 0
    %1206 = vmatmul.mubr.bf16.gmra.mxu0 %v115
    %v1207 = vpop.f32.mrf.mxu0
    %v1208 = vadd.f32 %v291, %v1207
    %v1209 = vpop.f32.mrf.mxu0
    %v1210 = vadd.f32 %v295, %v1209
    %v1211 = vpop.f32.mrf.mxu0
    %v1212 = vpop.f32.mrf.mxu0
    %1213 = vdwg.mxu0
    %1214 = vmatprep.subr.bf16.mxu0 %v837
    %1215 = vmatpush1.bf16.msra.mxu0 %v836
    %1216 = vmatprep.subr.bf16.mxu0 %v821
    %1217 = vmatpush1.bf16.msra.mxu0 %v820
    %1218 = vmatprep.subr.bf16.mxu0 %v805
    %1219 = vmatpush1.bf16.msra.mxu0 %v804
    %1220 = vmatprep.subr.bf16.mxu0 %v789
    %1221 = vmatpush1.bf16.msra.mxu0 %v788
    %1222 = vmatprep.subr.bf16.mxu0 %v773
    %1223 = vmatpush1.bf16.msra.mxu0 %v772
    %1224 = vmatprep.subr.bf16.mxu0 %v757
    %1225 = vmatpush1.bf16.msra.mxu0 %v756
    %1226 = vmatprep.subr.bf16.mxu0 %v741
    %1227 = vmatpush1.bf16.msra.mxu0 %v740
    %1228 = vmatprep.subr.bf16.mxu0 %v725
    %1229 = vmatpush1.bf16.msra.mxu0 %v724
    %1230 = vmatprep.subr.bf16.mxu0 0
    %1231 = vmatpush2.bf16.msra.mxu0 0
    %1232 = vmatprep.subr.bf16.mxu0 0
    %1233 = vmatpush2.bf16.msra.mxu0 0
    %1234 = vmatprep.subr.bf16.mxu0 0
    %1235 = vmatpush2.bf16.msra.mxu0 0
    %1236 = vmatprep.subr.bf16.mxu0 0
    %1237 = vmatpush2.bf16.msra.mxu0 0
    %1238 = vmatprep.subr.bf16.mxu0 0
    %1239 = vmatpush2.bf16.msra.mxu0 0
    %1240 = vmatprep.subr.bf16.mxu0 0
    %1241 = vmatpush2.bf16.msra.mxu0 0
    %1242 = vmatprep.subr.bf16.mxu0 0
    %1243 = vmatpush2.bf16.msra.mxu0 0
    %1244 = vmatprep.subr.bf16.mxu0 0
    %1245 = vmatpush2.bf16.msra.mxu0 0
    %1246 = vmatprep.mubr.bf16.mxu0 0
    %1247 = vmatmul.mubr.bf16.gmra.mxu0 %v115
    %v1248 = vpop.f32.mrf.mxu0
    %v1249 = vadd.f32 %v299, %v1248
    %v1250 = vpop.f32.mrf.mxu0
    %v1251 = vadd.f32 %v303, %v1250
    %v1252 = vpop.f32.mrf.mxu0
    %v1253 = vpop.f32.mrf.mxu0
    %1254 = vdwg.mxu0
    %1255 = vmatprep.subr.bf16.mxu0 %v839
    %1256 = vmatpush1.bf16.msra.mxu0 %v838
    %1257 = vmatprep.subr.bf16.mxu0 %v823
    %1258 = vmatpush1.bf16.msra.mxu0 %v822
    %1259 = vmatprep.subr.bf16.mxu0 %v807
    %1260 = vmatpush1.bf16.msra.mxu0 %v806
    %1261 = vmatprep.subr.bf16.mxu0 %v791
    %1262 = vmatpush1.bf16.msra.mxu0 %v790
    %1263 = vmatprep.subr.bf16.mxu0 %v775
    %1264 = vmatpush1.bf16.msra.mxu0 %v774
    %1265 = vmatprep.subr.bf16.mxu0 %v759
    %1266 = vmatpush1.bf16.msra.mxu0 %v758
    %1267 = vmatprep.subr.bf16.mxu0 %v743
    %1268 = vmatpush1.bf16.msra.mxu0 %v742
    %1269 = vmatprep.subr.bf16.mxu0 %v727
    %1270 = vmatpush1.bf16.msra.mxu0 %v726
    %1271 = vmatprep.subr.bf16.mxu0 0
    %1272 = vmatpush2.bf16.msra.mxu0 0
    %1273 = vmatprep.subr.bf16.mxu0 0
    %1274 = vmatpush2.bf16.msra.mxu0 0
    %1275 = vmatprep.subr.bf16.mxu0 0
    %1276 = vmatpush2.bf16.msra.mxu0 0
    %1277 = vmatprep.subr.bf16.mxu0 0
    %1278 = vmatpush2.bf16.msra.mxu0 0
    %1279 = vmatprep.subr.bf16.mxu0 0
    %1280 = vmatpush2.bf16.msra.mxu0 0
    %1281 = vmatprep.subr.bf16.mxu0 0
    %1282 = vmatpush2.bf16.msra.mxu0 0
    %1283 = vmatprep.subr.bf16.mxu0 0
    %1284 = vmatpush2.bf16.msra.mxu0 0
    %1285 = vmatprep.subr.bf16.mxu0 0
    %1286 = vmatpush2.bf16.msra.mxu0 0
    %1287 = vmatprep.mubr.bf16.mxu0 0
    %1288 = vmatmul.mubr.bf16.gmra.mxu0 %v115
    %v1289 = vpop.f32.mrf.mxu0
    %v1290 = vadd.f32 %v307, %v1289
    %v1291 = vpop.f32.mrf.mxu0
    %v1292 = vadd.f32 %v311, %v1291
    %v1293 = vpop.f32.mrf.mxu0
    %v1294 = vpop.f32.mrf.mxu0
    %1295 = vdwg.mxu0
    %v1296 = vpack.c.bf16 %v1003, %v1003
    %v1297 = vpack.c.bf16 %v1005, %v1005
    %v1298 = vpack.c.bf16 %v1044, %v1044
    %v1299 = vpack.c.bf16 %v1046, %v1046
    %v1300 = vpack.c.bf16 %v1085, %v1085
    %v1301 = vpack.c.bf16 %v1087, %v1087
    %v1302 = vpack.c.bf16 %v1126, %v1126
    %v1303 = vpack.c.bf16 %v1128, %v1128
    %v1304 = vpack.c.bf16 %v1167, %v1167
    %v1305 = vpack.c.bf16 %v1169, %v1169
    %v1306 = vpack.c.bf16 %v1208, %v1208
    %v1307 = vpack.c.bf16 %v1210, %v1210
    %v1308 = vpack.c.bf16 %v1249, %v1249
    %v1309 = vpack.c.bf16 %v1251, %v1251
    %v1310 = vpack.c.bf16 %v1290, %v1290
    %v1311 = vpack.c.bf16 %v1292, %v1292
    %v1312 = vld [vmem:[#allocation8] sm:$0xff]
    %v1313 = vld [vmem:[#allocation8 + $0x8] sm:$0xff]
    %v1314 = vld [vmem:[#allocation8 + $0x10] sm:$0xff]
    %v1315 = vld [vmem:[#allocation8 + $0x18] sm:$0xff]
    %v1316 = vld [vmem:[#allocation8 + $0x20] sm:$0xff]
    %v1317 = vld [vmem:[#allocation8 + $0x28] sm:$0xff]
    %v1318 = vld [vmem:[#allocation8 + $0x30] sm:$0xff]
    %v1319 = vld [vmem:[#allocation8 + $0x38] sm:$0xff]
    %v1320 = vld [vmem:[#allocation8 + $0x40] sm:$0xff]
    %v1321 = vld [vmem:[#allocation8 + $0x48] sm:$0xff]
    %v1322 = vld [vmem:[#allocation8 + $0x50] sm:$0xff]
    %v1323 = vld [vmem:[#allocation8 + $0x58] sm:$0xff]
    %v1324 = vld [vmem:[#allocation8 + $0x60] sm:$0xff]
    %v1325 = vld [vmem:[#allocation8 + $0x68] sm:$0xff]
    %v1326 = vld [vmem:[#allocation8 + $0x70] sm:$0xff]
    %v1327 = vld [vmem:[#allocation8 + $0x78] sm:$0xff]
    %v1328 = vld [vmem:[#allocation8 + $0x80] sm:$0xff]
    %v1329 = vld [vmem:[#allocation8 + $0x88] sm:$0xff]
    %v1330 = vld [vmem:[#allocation8 + $0x90] sm:$0xff]
    %v1331 = vld [vmem:[#allocation8 + $0x98] sm:$0xff]
    %v1332 = vld [vmem:[#allocation8 + $0xa0] sm:$0xff]
    %v1333 = vld [vmem:[#allocation8 + $0xa8] sm:$0xff]
    %v1334 = vld [vmem:[#allocation8 + $0xb0] sm:$0xff]
    %v1335 = vld [vmem:[#allocation8 + $0xb8] sm:$0xff]
    %v1336 = vld [vmem:[#allocation8 + $0xc0] sm:$0xff]
    %v1337 = vld [vmem:[#allocation8 + $0xc8] sm:$0xff]
    %v1338 = vld [vmem:[#allocation8 + $0xd0] sm:$0xff]
    %v1339 = vld [vmem:[#allocation8 + $0xd8] sm:$0xff]
    %v1340 = vld [vmem:[#allocation8 + $0xe0] sm:$0xff]
    %v1341 = vld [vmem:[#allocation8 + $0xe8] sm:$0xff]
    %v1342 = vld [vmem:[#allocation8 + $0xf0] sm:$0xff]
    %v1343 = vld [vmem:[#allocation8 + $0xf8] sm:$0xff]
    %v1344 = vld [vmem:[#allocation8 + $0x100] sm:$0xff]
    %v1345 = vld [vmem:[#allocation8 + $0x108] sm:$0xff]
    %v1346 = vld [vmem:[#allocation8 + $0x110] sm:$0xff]
    %v1347 = vld [vmem:[#allocation8 + $0x118] sm:$0xff]
    %v1348 = vld [vmem:[#allocation8 + $0x120] sm:$0xff]
    %v1349 = vld [vmem:[#allocation8 + $0x128] sm:$0xff]
    %v1350 = vld [vmem:[#allocation8 + $0x130] sm:$0xff]
    %v1351 = vld [vmem:[#allocation8 + $0x138] sm:$0xff]
    %v1352 = vld [vmem:[#allocation8 + $0x140] sm:$0xff]
    %v1353 = vld [vmem:[#allocation8 + $0x148] sm:$0xff]
    %v1354 = vld [vmem:[#allocation8 + $0x150] sm:$0xff]
    %v1355 = vld [vmem:[#allocation8 + $0x158] sm:$0xff]
    %v1356 = vld [vmem:[#allocation8 + $0x160] sm:$0xff]
    %v1357 = vld [vmem:[#allocation8 + $0x168] sm:$0xff]
    %v1358 = vld [vmem:[#allocation8 + $0x170] sm:$0xff]
    %v1359 = vld [vmem:[#allocation8 + $0x178] sm:$0xff]
    %v1360 = vld [vmem:[#allocation8 + $0x180] sm:$0xff]
    %v1361 = vld [vmem:[#allocation8 + $0x188] sm:$0xff]
    %v1362 = vld [vmem:[#allocation8 + $0x190] sm:$0xff]
    %v1363 = vld [vmem:[#allocation8 + $0x198] sm:$0xff]
    %v1364 = vld [vmem:[#allocation8 + $0x1a0] sm:$0xff]
    %v1365 = vld [vmem:[#allocation8 + $0x1a8] sm:$0xff]
    %v1366 = vld [vmem:[#allocation8 + $0x1b0] sm:$0xff]
    %v1367 = vld [vmem:[#allocation8 + $0x1b8] sm:$0xff]
    %v1368 = vld [vmem:[#allocation8 + $0x1c0] sm:$0xff]
    %v1369 = vld [vmem:[#allocation8 + $0x1c8] sm:$0xff]
    %v1370 = vld [vmem:[#allocation8 + $0x1d0] sm:$0xff]
    %v1371 = vld [vmem:[#allocation8 + $0x1d8] sm:$0xff]
    %v1372 = vld [vmem:[#allocation8 + $0x1e0] sm:$0xff]
    %v1373 = vld [vmem:[#allocation8 + $0x1e8] sm:$0xff]
    %v1374 = vld [vmem:[#allocation8 + $0x1f0] sm:$0xff]
    %v1375 = vld [vmem:[#allocation8 + $0x1f8] sm:$0xff]
    %v1376 = vld [vmem:[#allocation8 + $0x200] sm:$0xff]
    %v1377 = vld [vmem:[#allocation8 + $0x208] sm:$0xff]
    %v1378 = vld [vmem:[#allocation8 + $0x210] sm:$0xff]
    %v1379 = vld [vmem:[#allocation8 + $0x218] sm:$0xff]
    %v1380 = vld [vmem:[#allocation8 + $0x220] sm:$0xff]
    %v1381 = vld [vmem:[#allocation8 + $0x228] sm:$0xff]
    %v1382 = vld [vmem:[#allocation8 + $0x230] sm:$0xff]
    %v1383 = vld [vmem:[#allocation8 + $0x238] sm:$0xff]
    %v1384 = vld [vmem:[#allocation8 + $0x240] sm:$0xff]
    %v1385 = vld [vmem:[#allocation8 + $0x248] sm:$0xff]
    %v1386 = vld [vmem:[#allocation8 + $0x250] sm:$0xff]
    %v1387 = vld [vmem:[#allocation8 + $0x258] sm:$0xff]
    %v1388 = vld [vmem:[#allocation8 + $0x260] sm:$0xff]
    %v1389 = vld [vmem:[#allocation8 + $0x268] sm:$0xff]
    %v1390 = vld [vmem:[#allocation8 + $0x270] sm:$0xff]
    %v1391 = vld [vmem:[#allocation8 + $0x278] sm:$0xff]
    %v1392 = vld [vmem:[#allocation8 + $0x280] sm:$0xff]
    %v1393 = vld [vmem:[#allocation8 + $0x288] sm:$0xff]
    %v1394 = vld [vmem:[#allocation8 + $0x290] sm:$0xff]
    %v1395 = vld [vmem:[#allocation8 + $0x298] sm:$0xff]
    %v1396 = vld [vmem:[#allocation8 + $0x2a0] sm:$0xff]
    %v1397 = vld [vmem:[#allocation8 + $0x2a8] sm:$0xff]
    %v1398 = vld [vmem:[#allocation8 + $0x2b0] sm:$0xff]
    %v1399 = vld [vmem:[#allocation8 + $0x2b8] sm:$0xff]
    %v1400 = vld [vmem:[#allocation8 + $0x2c0] sm:$0xff]
    %v1401 = vld [vmem:[#allocation8 + $0x2c8] sm:$0xff]
    %v1402 = vld [vmem:[#allocation8 + $0x2d0] sm:$0xff]
    %v1403 = vld [vmem:[#allocation8 + $0x2d8] sm:$0xff]
    %v1404 = vld [vmem:[#allocation8 + $0x2e0] sm:$0xff]
    %v1405 = vld [vmem:[#allocation8 + $0x2e8] sm:$0xff]
    %v1406 = vld [vmem:[#allocation8 + $0x2f0] sm:$0xff]
    %v1407 = vld [vmem:[#allocation8 + $0x2f8] sm:$0xff]
    %v1408 = vld [vmem:[#allocation8 + $0x300] sm:$0xff]
    %v1409 = vld [vmem:[#allocation8 + $0x308] sm:$0xff]
    %v1410 = vld [vmem:[#allocation8 + $0x310] sm:$0xff]
    %v1411 = vld [vmem:[#allocation8 + $0x318] sm:$0xff]
    %v1412 = vld [vmem:[#allocation8 + $0x320] sm:$0xff]
    %v1413 = vld [vmem:[#allocation8 + $0x328] sm:$0xff]
    %v1414 = vld [vmem:[#allocation8 + $0x330] sm:$0xff]
    %v1415 = vld [vmem:[#allocation8 + $0x338] sm:$0xff]
    %v1416 = vld [vmem:[#allocation8 + $0x340] sm:$0xff]
    %v1417 = vld [vmem:[#allocation8 + $0x348] sm:$0xff]
    %v1418 = vld [vmem:[#allocation8 + $0x350] sm:$0xff]
    %v1419 = vld [vmem:[#allocation8 + $0x358] sm:$0xff]
    %v1420 = vld [vmem:[#allocation8 + $0x360] sm:$0xff]
    %v1421 = vld [vmem:[#allocation8 + $0x368] sm:$0xff]
    %v1422 = vld [vmem:[#allocation8 + $0x370] sm:$0xff]
    %v1423 = vld [vmem:[#allocation8 + $0x378] sm:$0xff]
    %v1424 = vld [vmem:[#allocation8 + $0x380] sm:$0xff]
    %v1425 = vld [vmem:[#allocation8 + $0x388] sm:$0xff]
    %v1426 = vld [vmem:[#allocation8 + $0x390] sm:$0xff]
    %v1427 = vld [vmem:[#allocation8 + $0x398] sm:$0xff]
    %v1428 = vld [vmem:[#allocation8 + $0x3a0] sm:$0xff]
    %v1429 = vld [vmem:[#allocation8 + $0x3a8] sm:$0xff]
    %v1430 = vld [vmem:[#allocation8 + $0x3b0] sm:$0xff]
    %v1431 = vld [vmem:[#allocation8 + $0x3b8] sm:$0xff]
    %v1432 = vld [vmem:[#allocation8 + $0x3c0] sm:$0xff]
    %v1433 = vld [vmem:[#allocation8 + $0x3c8] sm:$0xff]
    %v1434 = vld [vmem:[#allocation8 + $0x3d0] sm:$0xff]
    %v1435 = vld [vmem:[#allocation8 + $0x3d8] sm:$0xff]
    %v1436 = vld [vmem:[#allocation8 + $0x3e0] sm:$0xff]
    %v1437 = vld [vmem:[#allocation8 + $0x3e8] sm:$0xff]
    %v1438 = vld [vmem:[#allocation8 + $0x3f0] sm:$0xff]
    %v1439 = vld [vmem:[#allocation8 + $0x3f8] sm:$0xff]
    %v1440 = vld [vmem:[#allocation8 + $0x400] sm:$0xff]
    %v1441 = vld [vmem:[#allocation8 + $0x408] sm:$0xff]
    %v1442 = vld [vmem:[#allocation8 + $0x410] sm:$0xff]
    %v1443 = vld [vmem:[#allocation8 + $0x418] sm:$0xff]
    %v1444 = vld [vmem:[#allocation8 + $0x420] sm:$0xff]
    %v1445 = vld [vmem:[#allocation8 + $0x428] sm:$0xff]
    %v1446 = vld [vmem:[#allocation8 + $0x430] sm:$0xff]
    %v1447 = vld [vmem:[#allocation8 + $0x438] sm:$0xff]
    %v1448 = vld [vmem:[#allocation8 + $0x440] sm:$0xff]
    %v1449 = vld [vmem:[#allocation8 + $0x448] sm:$0xff]
    %v1450 = vld [vmem:[#allocation8 + $0x450] sm:$0xff]
    %v1451 = vld [vmem:[#allocation8 + $0x458] sm:$0xff]
    %v1452 = vld [vmem:[#allocation8 + $0x460] sm:$0xff]
    %v1453 = vld [vmem:[#allocation8 + $0x468] sm:$0xff]
    %v1454 = vld [vmem:[#allocation8 + $0x470] sm:$0xff]
    %v1455 = vld [vmem:[#allocation8 + $0x478] sm:$0xff]
    %v1456 = vld [vmem:[#allocation8 + $0x480] sm:$0xff]
    %v1457 = vld [vmem:[#allocation8 + $0x488] sm:$0xff]
    %v1458 = vld [vmem:[#allocation8 + $0x490] sm:$0xff]
    %v1459 = vld [vmem:[#allocation8 + $0x498] sm:$0xff]
    %v1460 = vld [vmem:[#allocation8 + $0x4a0] sm:$0xff]
    %v1461 = vld [vmem:[#allocation8 + $0x4a8] sm:$0xff]
    %v1462 = vld [vmem:[#allocation8 + $0x4b0] sm:$0xff]
    %v1463 = vld [vmem:[#allocation8 + $0x4b8] sm:$0xff]
    %v1464 = vld [vmem:[#allocation8 + $0x4c0] sm:$0xff]
    %v1465 = vld [vmem:[#allocation8 + $0x4c8] sm:$0xff]
    %v1466 = vld [vmem:[#allocation8 + $0x4d0] sm:$0xff]
    %v1467 = vld [vmem:[#allocation8 + $0x4d8] sm:$0xff]
    %v1468 = vld [vmem:[#allocation8 + $0x4e0] sm:$0xff]
    %v1469 = vld [vmem:[#allocation8 + $0x4e8] sm:$0xff]
    %v1470 = vld [vmem:[#allocation8 + $0x4f0] sm:$0xff]
    %v1471 = vld [vmem:[#allocation8 + $0x4f8] sm:$0xff]
    %v1472 = vld [vmem:[#allocation8 + $0x500] sm:$0xff]
    %v1473 = vld [vmem:[#allocation8 + $0x508] sm:$0xff]
    %v1474 = vld [vmem:[#allocation8 + $0x510] sm:$0xff]
    %v1475 = vld [vmem:[#allocation8 + $0x518] sm:$0xff]
    %v1476 = vld [vmem:[#allocation8 + $0x520] sm:$0xff]
    %v1477 = vld [vmem:[#allocation8 + $0x528] sm:$0xff]
    %v1478 = vld [vmem:[#allocation8 + $0x530] sm:$0xff]
    %v1479 = vld [vmem:[#allocation8 + $0x538] sm:$0xff]
    %v1480 = vld [vmem:[#allocation8 + $0x540] sm:$0xff]
    %v1481 = vld [vmem:[#allocation8 + $0x548] sm:$0xff]
    %v1482 = vld [vmem:[#allocation8 + $0x550] sm:$0xff]
    %v1483 = vld [vmem:[#allocation8 + $0x558] sm:$0xff]
    %v1484 = vld [vmem:[#allocation8 + $0x560] sm:$0xff]
    %v1485 = vld [vmem:[#allocation8 + $0x568] sm:$0xff]
    %v1486 = vld [vmem:[#allocation8 + $0x570] sm:$0xff]
    %v1487 = vld [vmem:[#allocation8 + $0x578] sm:$0xff]
    %v1488 = vld [vmem:[#allocation8 + $0x580] sm:$0xff]
    %v1489 = vld [vmem:[#allocation8 + $0x588] sm:$0xff]
    %v1490 = vld [vmem:[#allocation8 + $0x590] sm:$0xff]
    %v1491 = vld [vmem:[#allocation8 + $0x598] sm:$0xff]
    %v1492 = vld [vmem:[#allocation8 + $0x5a0] sm:$0xff]
    %v1493 = vld [vmem:[#allocation8 + $0x5a8] sm:$0xff]
    %v1494 = vld [vmem:[#allocation8 + $0x5b0] sm:$0xff]
    %v1495 = vld [vmem:[#allocation8 + $0x5b8] sm:$0xff]
    %v1496 = vld [vmem:[#allocation8 + $0x5c0] sm:$0xff]
    %v1497 = vld [vmem:[#allocation8 + $0x5c8] sm:$0xff]
    %v1498 = vld [vmem:[#allocation8 + $0x5d0] sm:$0xff]
    %v1499 = vld [vmem:[#allocation8 + $0x5d8] sm:$0xff]
    %v1500 = vld [vmem:[#allocation8 + $0x5e0] sm:$0xff]
    %v1501 = vld [vmem:[#allocation8 + $0x5e8] sm:$0xff]
    %v1502 = vld [vmem:[#allocation8 + $0x5f0] sm:$0xff]
    %v1503 = vld [vmem:[#allocation8 + $0x5f8] sm:$0xff]
    %v1504 = vld [vmem:[#allocation8 + $0x600] sm:$0xff]
    %v1505 = vld [vmem:[#allocation8 + $0x608] sm:$0xff]
    %v1506 = vld [vmem:[#allocation8 + $0x610] sm:$0xff]
    %v1507 = vld [vmem:[#allocation8 + $0x618] sm:$0xff]
    %v1508 = vld [vmem:[#allocation8 + $0x620] sm:$0xff]
    %v1509 = vld [vmem:[#allocation8 + $0x628] sm:$0xff]
    %v1510 = vld [vmem:[#allocation8 + $0x630] sm:$0xff]
    %v1511 = vld [vmem:[#allocation8 + $0x638] sm:$0xff]
    %v1512 = vld [vmem:[#allocation8 + $0x640] sm:$0xff]
    %v1513 = vld [vmem:[#allocation8 + $0x648] sm:$0xff]
    %v1514 = vld [vmem:[#allocation8 + $0x650] sm:$0xff]
    %v1515 = vld [vmem:[#allocation8 + $0x658] sm:$0xff]
    %v1516 = vld [vmem:[#allocation8 + $0x660] sm:$0xff]
    %v1517 = vld [vmem:[#allocation8 + $0x668] sm:$0xff]
    %v1518 = vld [vmem:[#allocation8 + $0x670] sm:$0xff]
    %v1519 = vld [vmem:[#allocation8 + $0x678] sm:$0xff]
    %v1520 = vld [vmem:[#allocation8 + $0x680] sm:$0xff]
    %v1521 = vld [vmem:[#allocation8 + $0x688] sm:$0xff]
    %v1522 = vld [vmem:[#allocation8 + $0x690] sm:$0xff]
    %v1523 = vld [vmem:[#allocation8 + $0x698] sm:$0xff]
    %v1524 = vld [vmem:[#allocation8 + $0x6a0] sm:$0xff]
    %v1525 = vld [vmem:[#allocation8 + $0x6a8] sm:$0xff]
    %v1526 = vld [vmem:[#allocation8 + $0x6b0] sm:$0xff]
    %v1527 = vld [vmem:[#allocation8 + $0x6b8] sm:$0xff]
    %v1528 = vld [vmem:[#allocation8 + $0x6c0] sm:$0xff]
    %v1529 = vld [vmem:[#allocation8 + $0x6c8] sm:$0xff]
    %v1530 = vld [vmem:[#allocation8 + $0x6d0] sm:$0xff]
    %v1531 = vld [vmem:[#allocation8 + $0x6d8] sm:$0xff]
    %v1532 = vld [vmem:[#allocation8 + $0x6e0] sm:$0xff]
    %v1533 = vld [vmem:[#allocation8 + $0x6e8] sm:$0xff]
    %v1534 = vld [vmem:[#allocation8 + $0x6f0] sm:$0xff]
    %v1535 = vld [vmem:[#allocation8 + $0x6f8] sm:$0xff]
    %v1536 = vld [vmem:[#allocation8 + $0x700] sm:$0xff]
    %v1537 = vld [vmem:[#allocation8 + $0x708] sm:$0xff]
    %v1538 = vld [vmem:[#allocation8 + $0x710] sm:$0xff]
    %v1539 = vld [vmem:[#allocation8 + $0x718] sm:$0xff]
    %v1540 = vld [vmem:[#allocation8 + $0x720] sm:$0xff]
    %v1541 = vld [vmem:[#allocation8 + $0x728] sm:$0xff]
    %v1542 = vld [vmem:[#allocation8 + $0x730] sm:$0xff]
    %v1543 = vld [vmem:[#allocation8 + $0x738] sm:$0xff]
    %v1544 = vld [vmem:[#allocation8 + $0x740] sm:$0xff]
    %v1545 = vld [vmem:[#allocation8 + $0x748] sm:$0xff]
    %v1546 = vld [vmem:[#allocation8 + $0x750] sm:$0xff]
    %v1547 = vld [vmem:[#allocation8 + $0x758] sm:$0xff]
    %v1548 = vld [vmem:[#allocation8 + $0x760] sm:$0xff]
    %v1549 = vld [vmem:[#allocation8 + $0x768] sm:$0xff]
    %v1550 = vld [vmem:[#allocation8 + $0x770] sm:$0xff]
    %v1551 = vld [vmem:[#allocation8 + $0x778] sm:$0xff]
    %v1552 = vld [vmem:[#allocation8 + $0x780] sm:$0xff]
    %v1553 = vld [vmem:[#allocation8 + $0x788] sm:$0xff]
    %v1554 = vld [vmem:[#allocation8 + $0x790] sm:$0xff]
    %v1555 = vld [vmem:[#allocation8 + $0x798] sm:$0xff]
    %v1556 = vld [vmem:[#allocation8 + $0x7a0] sm:$0xff]
    %v1557 = vld [vmem:[#allocation8 + $0x7a8] sm:$0xff]
    %v1558 = vld [vmem:[#allocation8 + $0x7b0] sm:$0xff]
    %v1559 = vld [vmem:[#allocation8 + $0x7b8] sm:$0xff]
    %v1560 = vld [vmem:[#allocation8 + $0x7c0] sm:$0xff]
    %v1561 = vld [vmem:[#allocation8 + $0x7c8] sm:$0xff]
    %v1562 = vld [vmem:[#allocation8 + $0x7d0] sm:$0xff]
    %v1563 = vld [vmem:[#allocation8 + $0x7d8] sm:$0xff]
    %v1564 = vld [vmem:[#allocation8 + $0x7e0] sm:$0xff]
    %v1565 = vld [vmem:[#allocation8 + $0x7e8] sm:$0xff]
    %v1566 = vld [vmem:[#allocation8 + $0x7f0] sm:$0xff]
    %v1567 = vld [vmem:[#allocation8 + $0x7f8] sm:$0xff]
    %v1568 = vld [vmem:[#allocation8 + $0x800] sm:$0xff]
    %v1569 = vld [vmem:[#allocation8 + $0x808] sm:$0xff]
    %v1570 = vld [vmem:[#allocation8 + $0x810] sm:$0xff]
    %v1571 = vld [vmem:[#allocation8 + $0x818] sm:$0xff]
    %v1572 = vld [vmem:[#allocation8 + $0x820] sm:$0xff]
    %v1573 = vld [vmem:[#allocation8 + $0x828] sm:$0xff]
    %v1574 = vld [vmem:[#allocation8 + $0x830] sm:$0xff]
    %v1575 = vld [vmem:[#allocation8 + $0x838] sm:$0xff]
    %v1576 = vld [vmem:[#allocation8 + $0x840] sm:$0xff]
    %v1577 = vld [vmem:[#allocation8 + $0x848] sm:$0xff]
    %v1578 = vld [vmem:[#allocation8 + $0x850] sm:$0xff]
    %v1579 = vld [vmem:[#allocation8 + $0x858] sm:$0xff]
    %v1580 = vld [vmem:[#allocation8 + $0x860] sm:$0xff]
    %v1581 = vld [vmem:[#allocation8 + $0x868] sm:$0xff]
    %v1582 = vld [vmem:[#allocation8 + $0x870] sm:$0xff]
    %v1583 = vld [vmem:[#allocation8 + $0x878] sm:$0xff]
    %v1584 = vld [vmem:[#allocation8 + $0x880] sm:$0xff]
    %v1585 = vld [vmem:[#allocation8 + $0x888] sm:$0xff]
    %v1586 = vld [vmem:[#allocation8 + $0x890] sm:$0xff]
    %v1587 = vld [vmem:[#allocation8 + $0x898] sm:$0xff]
    %v1588 = vld [vmem:[#allocation8 + $0x8a0] sm:$0xff]
    %v1589 = vld [vmem:[#allocation8 + $0x8a8] sm:$0xff]
    %v1590 = vld [vmem:[#allocation8 + $0x8b0] sm:$0xff]
    %v1591 = vld [vmem:[#allocation8 + $0x8b8] sm:$0xff]
    %v1592 = vld [vmem:[#allocation8 + $0x8c0] sm:$0xff]
    %v1593 = vld [vmem:[#allocation8 + $0x8c8] sm:$0xff]
    %v1594 = vld [vmem:[#allocation8 + $0x8d0] sm:$0xff]
    %v1595 = vld [vmem:[#allocation8 + $0x8d8] sm:$0xff]
    %v1596 = vld [vmem:[#allocation8 + $0x8e0] sm:$0xff]
    %v1597 = vld [vmem:[#allocation8 + $0x8e8] sm:$0xff]
    %v1598 = vld [vmem:[#allocation8 + $0x8f0] sm:$0xff]
    %v1599 = vld [vmem:[#allocation8 + $0x8f8] sm:$0xff]
    %v1600 = vld [vmem:[#allocation8 + $0x900] sm:$0xff]
    %v1601 = vld [vmem:[#allocation8 + $0x908] sm:$0xff]
    %v1602 = vld [vmem:[#allocation8 + $0x910] sm:$0xff]
    %v1603 = vld [vmem:[#allocation8 + $0x918] sm:$0xff]
    %v1604 = vld [vmem:[#allocation8 + $0x920] sm:$0xff]
    %v1605 = vld [vmem:[#allocation8 + $0x928] sm:$0xff]
    %v1606 = vld [vmem:[#allocation8 + $0x930] sm:$0xff]
    %v1607 = vld [vmem:[#allocation8 + $0x938] sm:$0xff]
    %v1608 = vld [vmem:[#allocation8 + $0x940] sm:$0xff]
    %v1609 = vld [vmem:[#allocation8 + $0x948] sm:$0xff]
    %v1610 = vld [vmem:[#allocation8 + $0x950] sm:$0xff]
    %v1611 = vld [vmem:[#allocation8 + $0x958] sm:$0xff]
    %v1612 = vld [vmem:[#allocation8 + $0x960] sm:$0xff]
    %v1613 = vld [vmem:[#allocation8 + $0x968] sm:$0xff]
    %v1614 = vld [vmem:[#allocation8 + $0x970] sm:$0xff]
    %v1615 = vld [vmem:[#allocation8 + $0x978] sm:$0xff]
    %v1616 = vld [vmem:[#allocation8 + $0x980] sm:$0xff]
    %v1617 = vld [vmem:[#allocation8 + $0x988] sm:$0xff]
    %v1618 = vld [vmem:[#allocation8 + $0x990] sm:$0xff]
    %v1619 = vld [vmem:[#allocation8 + $0x998] sm:$0xff]
    %v1620 = vld [vmem:[#allocation8 + $0x9a0] sm:$0xff]
    %v1621 = vld [vmem:[#allocation8 + $0x9a8] sm:$0xff]
    %v1622 = vld [vmem:[#allocation8 + $0x9b0] sm:$0xff]
    %v1623 = vld [vmem:[#allocation8 + $0x9b8] sm:$0xff]
    %v1624 = vld [vmem:[#allocation8 + $0x9c0] sm:$0xff]
    %v1625 = vld [vmem:[#allocation8 + $0x9c8] sm:$0xff]
    %v1626 = vld [vmem:[#allocation8 + $0x9d0] sm:$0xff]
    %v1627 = vld [vmem:[#allocation8 + $0x9d8] sm:$0xff]
    %v1628 = vld [vmem:[#allocation8 + $0x9e0] sm:$0xff]
    %v1629 = vld [vmem:[#allocation8 + $0x9e8] sm:$0xff]
    %v1630 = vld [vmem:[#allocation8 + $0x9f0] sm:$0xff]
    %v1631 = vld [vmem:[#allocation8 + $0x9f8] sm:$0xff]
    %v1632 = vld [vmem:[#allocation8 + $0xa00] sm:$0xff]
    %v1633 = vld [vmem:[#allocation8 + $0xa08] sm:$0xff]
    %v1634 = vld [vmem:[#allocation8 + $0xa10] sm:$0xff]
    %v1635 = vld [vmem:[#allocation8 + $0xa18] sm:$0xff]
    %v1636 = vld [vmem:[#allocation8 + $0xa20] sm:$0xff]
    %v1637 = vld [vmem:[#allocation8 + $0xa28] sm:$0xff]
    %v1638 = vld [vmem:[#allocation8 + $0xa30] sm:$0xff]
    %v1639 = vld [vmem:[#allocation8 + $0xa38] sm:$0xff]
    %v1640 = vld [vmem:[#allocation8 + $0xa40] sm:$0xff]
    %v1641 = vld [vmem:[#allocation8 + $0xa48] sm:$0xff]
    %v1642 = vld [vmem:[#allocation8 + $0xa50] sm:$0xff]
    %v1643 = vld [vmem:[#allocation8 + $0xa58] sm:$0xff]
    %v1644 = vld [vmem:[#allocation8 + $0xa60] sm:$0xff]
    %v1645 = vld [vmem:[#allocation8 + $0xa68] sm:$0xff]
    %v1646 = vld [vmem:[#allocation8 + $0xa70] sm:$0xff]
    %v1647 = vld [vmem:[#allocation8 + $0xa78] sm:$0xff]
    %v1648 = vld [vmem:[#allocation8 + $0xa80] sm:$0xff]
    %v1649 = vld [vmem:[#allocation8 + $0xa88] sm:$0xff]
    %v1650 = vld [vmem:[#allocation8 + $0xa90] sm:$0xff]
    %v1651 = vld [vmem:[#allocation8 + $0xa98] sm:$0xff]
    %v1652 = vld [vmem:[#allocation8 + $0xaa0] sm:$0xff]
    %v1653 = vld [vmem:[#allocation8 + $0xaa8] sm:$0xff]
    %v1654 = vld [vmem:[#allocation8 + $0xab0] sm:$0xff]
    %v1655 = vld [vmem:[#allocation8 + $0xab8] sm:$0xff]
    %v1656 = vld [vmem:[#allocation8 + $0xac0] sm:$0xff]
    %v1657 = vld [vmem:[#allocation8 + $0xac8] sm:$0xff]
    %v1658 = vld [vmem:[#allocation8 + $0xad0] sm:$0xff]
    %v1659 = vld [vmem:[#allocation8 + $0xad8] sm:$0xff]
    %v1660 = vld [vmem:[#allocation8 + $0xae0] sm:$0xff]
    %v1661 = vld [vmem:[#allocation8 + $0xae8] sm:$0xff]
    %v1662 = vld [vmem:[#allocation8 + $0xaf0] sm:$0xff]
    %v1663 = vld [vmem:[#allocation8 + $0xaf8] sm:$0xff]
    %v1664 = vld [vmem:[#allocation8 + $0xb00] sm:$0xff]
    %v1665 = vld [vmem:[#allocation8 + $0xb08] sm:$0xff]
    %v1666 = vld [vmem:[#allocation8 + $0xb10] sm:$0xff]
    %v1667 = vld [vmem:[#allocation8 + $0xb18] sm:$0xff]
    %v1668 = vld [vmem:[#allocation8 + $0xb20] sm:$0xff]
    %v1669 = vld [vmem:[#allocation8 + $0xb28] sm:$0xff]
    %v1670 = vld [vmem:[#allocation8 + $0xb30] sm:$0xff]
    %v1671 = vld [vmem:[#allocation8 + $0xb38] sm:$0xff]
    %v1672 = vld [vmem:[#allocation8 + $0xb40] sm:$0xff]
    %v1673 = vld [vmem:[#allocation8 + $0xb48] sm:$0xff]
    %v1674 = vld [vmem:[#allocation8 + $0xb50] sm:$0xff]
    %v1675 = vld [vmem:[#allocation8 + $0xb58] sm:$0xff]
    %v1676 = vld [vmem:[#allocation8 + $0xb60] sm:$0xff]
    %v1677 = vld [vmem:[#allocation8 + $0xb68] sm:$0xff]
    %v1678 = vld [vmem:[#allocation8 + $0xb70] sm:$0xff]
    %v1679 = vld [vmem:[#allocation8 + $0xb78] sm:$0xff]
    %v1680 = vld [vmem:[#allocation8 + $0xb80] sm:$0xff]
    %v1681 = vld [vmem:[#allocation8 + $0xb88] sm:$0xff]
    %v1682 = vld [vmem:[#allocation8 + $0xb90] sm:$0xff]
    %v1683 = vld [vmem:[#allocation8 + $0xb98] sm:$0xff]
    %v1684 = vld [vmem:[#allocation8 + $0xba0] sm:$0xff]
    %v1685 = vld [vmem:[#allocation8 + $0xba8] sm:$0xff]
    %v1686 = vld [vmem:[#allocation8 + $0xbb0] sm:$0xff]
    %v1687 = vld [vmem:[#allocation8 + $0xbb8] sm:$0xff]
    %v1688 = vld [vmem:[#allocation8 + $0xbc0] sm:$0xff]
    %v1689 = vld [vmem:[#allocation8 + $0xbc8] sm:$0xff]
    %v1690 = vld [vmem:[#allocation8 + $0xbd0] sm:$0xff]
    %v1691 = vld [vmem:[#allocation8 + $0xbd8] sm:$0xff]
    %v1692 = vld [vmem:[#allocation8 + $0xbe0] sm:$0xff]
    %v1693 = vld [vmem:[#allocation8 + $0xbe8] sm:$0xff]
    %v1694 = vld [vmem:[#allocation8 + $0xbf0] sm:$0xff]
    %v1695 = vld [vmem:[#allocation8 + $0xbf8] sm:$0xff]
    %v1696 = vld [vmem:[#allocation8 + $0xc00] sm:$0xff]
    %v1697 = vld [vmem:[#allocation8 + $0xc08] sm:$0xff]
    %v1698 = vld [vmem:[#allocation8 + $0xc10] sm:$0xff]
    %v1699 = vld [vmem:[#allocation8 + $0xc18] sm:$0xff]
    %v1700 = vld [vmem:[#allocation8 + $0xc20] sm:$0xff]
    %v1701 = vld [vmem:[#allocation8 + $0xc28] sm:$0xff]
    %v1702 = vld [vmem:[#allocation8 + $0xc30] sm:$0xff]
    %v1703 = vld [vmem:[#allocation8 + $0xc38] sm:$0xff]
    %v1704 = vld [vmem:[#allocation8 + $0xc40] sm:$0xff]
    %v1705 = vld [vmem:[#allocation8 + $0xc48] sm:$0xff]
    %v1706 = vld [vmem:[#allocation8 + $0xc50] sm:$0xff]
    %v1707 = vld [vmem:[#allocation8 + $0xc58] sm:$0xff]
    %v1708 = vld [vmem:[#allocation8 + $0xc60] sm:$0xff]
    %v1709 = vld [vmem:[#allocation8 + $0xc68] sm:$0xff]
    %v1710 = vld [vmem:[#allocation8 + $0xc70] sm:$0xff]
    %v1711 = vld [vmem:[#allocation8 + $0xc78] sm:$0xff]
    %v1712 = vld [vmem:[#allocation8 + $0xc80] sm:$0xff]
    %v1713 = vld [vmem:[#allocation8 + $0xc88] sm:$0xff]
    %v1714 = vld [vmem:[#allocation8 + $0xc90] sm:$0xff]
    %v1715 = vld [vmem:[#allocation8 + $0xc98] sm:$0xff]
    %v1716 = vld [vmem:[#allocation8 + $0xca0] sm:$0xff]
    %v1717 = vld [vmem:[#allocation8 + $0xca8] sm:$0xff]
    %v1718 = vld [vmem:[#allocation8 + $0xcb0] sm:$0xff]
    %v1719 = vld [vmem:[#allocation8 + $0xcb8] sm:$0xff]
    %v1720 = vld [vmem:[#allocation8 + $0xcc0] sm:$0xff]
    %v1721 = vld [vmem:[#allocation8 + $0xcc8] sm:$0xff]
    %v1722 = vld [vmem:[#allocation8 + $0xcd0] sm:$0xff]
    %v1723 = vld [vmem:[#allocation8 + $0xcd8] sm:$0xff]
    %v1724 = vld [vmem:[#allocation8 + $0xce0] sm:$0xff]
    %v1725 = vld [vmem:[#allocation8 + $0xce8] sm:$0xff]
    %v1726 = vld [vmem:[#allocation8 + $0xcf0] sm:$0xff]
    %v1727 = vld [vmem:[#allocation8 + $0xcf8] sm:$0xff]
    %v1728 = vld [vmem:[#allocation8 + $0xd00] sm:$0xff]
    %v1729 = vld [vmem:[#allocation8 + $0xd08] sm:$0xff]
    %v1730 = vld [vmem:[#allocation8 + $0xd10] sm:$0xff]
    %v1731 = vld [vmem:[#allocation8 + $0xd18] sm:$0xff]
    %v1732 = vld [vmem:[#allocation8 + $0xd20] sm:$0xff]
    %v1733 = vld [vmem:[#allocation8 + $0xd28] sm:$0xff]
    %v1734 = vld [vmem:[#allocation8 + $0xd30] sm:$0xff]
    %v1735 = vld [vmem:[#allocation8 + $0xd38] sm:$0xff]
    %v1736 = vld [vmem:[#allocation8 + $0xd40] sm:$0xff]
    %v1737 = vld [vmem:[#allocation8 + $0xd48] sm:$0xff]
    %v1738 = vld [vmem:[#allocation8 + $0xd50] sm:$0xff]
    %v1739 = vld [vmem:[#allocation8 + $0xd58] sm:$0xff]
    %v1740 = vld [vmem:[#allocation8 + $0xd60] sm:$0xff]
    %v1741 = vld [vmem:[#allocation8 + $0xd68] sm:$0xff]
    %v1742 = vld [vmem:[#allocation8 + $0xd70] sm:$0xff]
    %v1743 = vld [vmem:[#allocation8 + $0xd78] sm:$0xff]
    %v1744 = vld [vmem:[#allocation8 + $0xd80] sm:$0xff]
    %v1745 = vld [vmem:[#allocation8 + $0xd88] sm:$0xff]
    %v1746 = vld [vmem:[#allocation8 + $0xd90] sm:$0xff]
    %v1747 = vld [vmem:[#allocation8 + $0xd98] sm:$0xff]
    %v1748 = vld [vmem:[#allocation8 + $0xda0] sm:$0xff]
    %v1749 = vld [vmem:[#allocation8 + $0xda8] sm:$0xff]
    %v1750 = vld [vmem:[#allocation8 + $0xdb0] sm:$0xff]
    %v1751 = vld [vmem:[#allocation8 + $0xdb8] sm:$0xff]
    %v1752 = vld [vmem:[#allocation8 + $0xdc0] sm:$0xff]
    %v1753 = vld [vmem:[#allocation8 + $0xdc8] sm:$0xff]
    %v1754 = vld [vmem:[#allocation8 + $0xdd0] sm:$0xff]
    %v1755 = vld [vmem:[#allocation8 + $0xdd8] sm:$0xff]
    %v1756 = vld [vmem:[#allocation8 + $0xde0] sm:$0xff]
    %v1757 = vld [vmem:[#allocation8 + $0xde8] sm:$0xff]
    %v1758 = vld [vmem:[#allocation8 + $0xdf0] sm:$0xff]
    %v1759 = vld [vmem:[#allocation8 + $0xdf8] sm:$0xff]
    %v1760 = vld [vmem:[#allocation8 + $0xe00] sm:$0xff]
    %v1761 = vld [vmem:[#allocation8 + $0xe08] sm:$0xff]
    %v1762 = vld [vmem:[#allocation8 + $0xe10] sm:$0xff]
    %v1763 = vld [vmem:[#allocation8 + $0xe18] sm:$0xff]
    %v1764 = vld [vmem:[#allocation8 + $0xe20] sm:$0xff]
    %v1765 = vld [vmem:[#allocation8 + $0xe28] sm:$0xff]
    %v1766 = vld [vmem:[#allocation8 + $0xe30] sm:$0xff]
    %v1767 = vld [vmem:[#allocation8 + $0xe38] sm:$0xff]
    %v1768 = vld [vmem:[#allocation8 + $0xe40] sm:$0xff]
    %v1769 = vld [vmem:[#allocation8 + $0xe48] sm:$0xff]
    %v1770 = vld [vmem:[#allocation8 + $0xe50] sm:$0xff]
    %v1771 = vld [vmem:[#allocation8 + $0xe58] sm:$0xff]
    %v1772 = vld [vmem:[#allocation8 + $0xe60] sm:$0xff]
    %v1773 = vld [vmem:[#allocation8 + $0xe68] sm:$0xff]
    %v1774 = vld [vmem:[#allocation8 + $0xe70] sm:$0xff]
    %v1775 = vld [vmem:[#allocation8 + $0xe78] sm:$0xff]
    %v1776 = vld [vmem:[#allocation8 + $0xe80] sm:$0xff]
    %v1777 = vld [vmem:[#allocation8 + $0xe88] sm:$0xff]
    %v1778 = vld [vmem:[#allocation8 + $0xe90] sm:$0xff]
    %v1779 = vld [vmem:[#allocation8 + $0xe98] sm:$0xff]
    %v1780 = vld [vmem:[#allocation8 + $0xea0] sm:$0xff]
    %v1781 = vld [vmem:[#allocation8 + $0xea8] sm:$0xff]
    %v1782 = vld [vmem:[#allocation8 + $0xeb0] sm:$0xff]
    %v1783 = vld [vmem:[#allocation8 + $0xeb8] sm:$0xff]
    %v1784 = vld [vmem:[#allocation8 + $0xec0] sm:$0xff]
    %v1785 = vld [vmem:[#allocation8 + $0xec8] sm:$0xff]
    %v1786 = vld [vmem:[#allocation8 + $0xed0] sm:$0xff]
    %v1787 = vld [vmem:[#allocation8 + $0xed8] sm:$0xff]
    %v1788 = vld [vmem:[#allocation8 + $0xee0] sm:$0xff]
    %v1789 = vld [vmem:[#allocation8 + $0xee8] sm:$0xff]
    %v1790 = vld [vmem:[#allocation8 + $0xef0] sm:$0xff]
    %v1791 = vld [vmem:[#allocation8 + $0xef8] sm:$0xff]
    %v1792 = vld [vmem:[#allocation8 + $0xf00] sm:$0xff]
    %v1793 = vld [vmem:[#allocation8 + $0xf08] sm:$0xff]
    %v1794 = vld [vmem:[#allocation8 + $0xf10] sm:$0xff]
    %v1795 = vld [vmem:[#allocation8 + $0xf18] sm:$0xff]
    %v1796 = vld [vmem:[#allocation8 + $0xf20] sm:$0xff]
    %v1797 = vld [vmem:[#allocation8 + $0xf28] sm:$0xff]
    %v1798 = vld [vmem:[#allocation8 + $0xf30] sm:$0xff]
    %v1799 = vld [vmem:[#allocation8 + $0xf38] sm:$0xff]
    %v1800 = vld [vmem:[#allocation8 + $0xf40] sm:$0xff]
    %v1801 = vld [vmem:[#allocation8 + $0xf48] sm:$0xff]
    %v1802 = vld [vmem:[#allocation8 + $0xf50] sm:$0xff]
    %v1803 = vld [vmem:[#allocation8 + $0xf58] sm:$0xff]
    %v1804 = vld [vmem:[#allocation8 + $0xf60] sm:$0xff]
    %v1805 = vld [vmem:[#allocation8 + $0xf68] sm:$0xff]
    %v1806 = vld [vmem:[#allocation8 + $0xf70] sm:$0xff]
    %v1807 = vld [vmem:[#allocation8 + $0xf78] sm:$0xff]
    %v1808 = vld [vmem:[#allocation8 + $0xf80] sm:$0xff]
    %v1809 = vld [vmem:[#allocation8 + $0xf88] sm:$0xff]
    %v1810 = vld [vmem:[#allocation8 + $0xf90] sm:$0xff]
    %v1811 = vld [vmem:[#allocation8 + $0xf98] sm:$0xff]
    %v1812 = vld [vmem:[#allocation8 + $0xfa0] sm:$0xff]
    %v1813 = vld [vmem:[#allocation8 + $0xfa8] sm:$0xff]
    %v1814 = vld [vmem:[#allocation8 + $0xfb0] sm:$0xff]
    %v1815 = vld [vmem:[#allocation8 + $0xfb8] sm:$0xff]
    %v1816 = vld [vmem:[#allocation8 + $0xfc0] sm:$0xff]
    %v1817 = vld [vmem:[#allocation8 + $0xfc8] sm:$0xff]
    %v1818 = vld [vmem:[#allocation8 + $0xfd0] sm:$0xff]
    %v1819 = vld [vmem:[#allocation8 + $0xfd8] sm:$0xff]
    %v1820 = vld [vmem:[#allocation8 + $0xfe0] sm:$0xff]
    %v1821 = vld [vmem:[#allocation8 + $0xfe8] sm:$0xff]
    %v1822 = vld [vmem:[#allocation8 + $0xff0] sm:$0xff]
    %v1823 = vld [vmem:[#allocation8 + $0xff8] sm:$0xff]
    %v1824 = vld [vmem:[#allocation10] sm:$0xf]
    %v1826 = vlaneseq
    %v1827 = vshrl.u32 %v1826, 7
    %v1828 = vsub.s32 0, %v1827
    %v1829 = vrot.slane %v1824, %v1828
    %v1830 = vlaneseq
    %v1831 = vshrl.u32 %v1830, 7
    %v1832 = vsub.s32 1, %v1831
    %v1833 = vrot.slane %v1824, %v1832
    %v1834 = vlaneseq
    %v1835 = vshrl.u32 %v1834, 7
    %v1836 = vsub.s32 2, %v1835
    %v1837 = vrot.slane %v1824, %v1836
    %v1838 = vlaneseq
    %v1839 = vshrl.u32 %v1838, 7
    %v1840 = vsub.s32 3, %v1839
    %v1841 = vrot.slane %v1824, %v1840
    %v2358 = vunpack.c.l.b16 %v1312
    %v2359 = vunpack.c.h.b16 %v1312
    %v2360 = vunpack.c.l.b16 %v1313
    %v2361 = vunpack.c.h.b16 %v1313
    %v2362 = vunpack.c.l.b16 %v1314
    %v2363 = vunpack.c.h.b16 %v1314
    %v2364 = vunpack.c.l.b16 %v1315
    %v2365 = vunpack.c.h.b16 %v1315
    %v2366 = vunpack.c.l.b16 %v1316
    %v2367 = vunpack.c.h.b16 %v1316
    %v2368 = vunpack.c.l.b16 %v1317
    %v2369 = vunpack.c.h.b16 %v1317
    %v2370 = vunpack.c.l.b16 %v1318
    %v2371 = vunpack.c.h.b16 %v1318
    %v2372 = vunpack.c.l.b16 %v1319
    %v2373 = vunpack.c.h.b16 %v1319
    %v2374 = vunpack.c.l.b16 %v1320
    %v2375 = vunpack.c.h.b16 %v1320
    %v2376 = vunpack.c.l.b16 %v1321
    %v2377 = vunpack.c.h.b16 %v1321
    %v2378 = vunpack.c.l.b16 %v1322
    %v2379 = vunpack.c.h.b16 %v1322
    %v2380 = vunpack.c.l.b16 %v1323
    %v2381 = vunpack.c.h.b16 %v1323
    %v2382 = vunpack.c.l.b16 %v1324
    %v2383 = vunpack.c.h.b16 %v1324
    %v2384 = vunpack.c.l.b16 %v1325
    %v2385 = vunpack.c.h.b16 %v1325
    %v2386 = vunpack.c.l.b16 %v1326
    %v2387 = vunpack.c.h.b16 %v1326
    %v2388 = vunpack.c.l.b16 %v1327
    %v2389 = vunpack.c.h.b16 %v1327
    %v2390 = vunpack.c.l.b16 %v1328
    %v2391 = vunpack.c.h.b16 %v1328
    %v2392 = vunpack.c.l.b16 %v1329
    %v2393 = vunpack.c.h.b16 %v1329
    %v2394 = vunpack.c.l.b16 %v1330
    %v2395 = vunpack.c.h.b16 %v1330
    %v2396 = vunpack.c.l.b16 %v1331
    %v2397 = vunpack.c.h.b16 %v1331
    %v2398 = vunpack.c.l.b16 %v1332
    %v2399 = vunpack.c.h.b16 %v1332
    %v2400 = vunpack.c.l.b16 %v1333
    %v2401 = vunpack.c.h.b16 %v1333
    %v2402 = vunpack.c.l.b16 %v1334
    %v2403 = vunpack.c.h.b16 %v1334
    %v2404 = vunpack.c.l.b16 %v1335
    %v2405 = vunpack.c.h.b16 %v1335
    %v2406 = vunpack.c.l.b16 %v1336
    %v2407 = vunpack.c.h.b16 %v1336
    %v2408 = vunpack.c.l.b16 %v1337
    %v2409 = vunpack.c.h.b16 %v1337
    %v2410 = vunpack.c.l.b16 %v1338
    %v2411 = vunpack.c.h.b16 %v1338
    %v2412 = vunpack.c.l.b16 %v1339
    %v2413 = vunpack.c.h.b16 %v1339
    %v2414 = vunpack.c.l.b16 %v1340
    %v2415 = vunpack.c.h.b16 %v1340
    %v2416 = vunpack.c.l.b16 %v1341
    %v2417 = vunpack.c.h.b16 %v1341
    %v2418 = vunpack.c.l.b16 %v1342
    %v2419 = vunpack.c.h.b16 %v1342
    %v2420 = vunpack.c.l.b16 %v1343
    %v2421 = vunpack.c.h.b16 %v1343
    %v2422 = vunpack.c.l.b16 %v1344
    %v2423 = vunpack.c.h.b16 %v1344
    %v2424 = vunpack.c.l.b16 %v1345
    %v2425 = vunpack.c.h.b16 %v1345
    %v2426 = vunpack.c.l.b16 %v1346
    %v2427 = vunpack.c.h.b16 %v1346
    %v2428 = vunpack.c.l.b16 %v1347
    %v2429 = vunpack.c.h.b16 %v1347
    %v2430 = vunpack.c.l.b16 %v1348
    %v2431 = vunpack.c.h.b16 %v1348
    %v2432 = vunpack.c.l.b16 %v1349
    %v2433 = vunpack.c.h.b16 %v1349
    %v2434 = vunpack.c.l.b16 %v1350
    %v2435 = vunpack.c.h.b16 %v1350
    %v2436 = vunpack.c.l.b16 %v1351
    %v2437 = vunpack.c.h.b16 %v1351
    %v2438 = vunpack.c.l.b16 %v1352
    %v2439 = vunpack.c.h.b16 %v1352
    %v2440 = vunpack.c.l.b16 %v1353
    %v2441 = vunpack.c.h.b16 %v1353
    %v2442 = vunpack.c.l.b16 %v1354
    %v2443 = vunpack.c.h.b16 %v1354
    %v2444 = vunpack.c.l.b16 %v1355
    %v2445 = vunpack.c.h.b16 %v1355
    %v2446 = vunpack.c.l.b16 %v1356
    %v2447 = vunpack.c.h.b16 %v1356
    %v2448 = vunpack.c.l.b16 %v1357
    %v2449 = vunpack.c.h.b16 %v1357
    %v2450 = vunpack.c.l.b16 %v1358
    %v2451 = vunpack.c.h.b16 %v1358
    %v2452 = vunpack.c.l.b16 %v1359
    %v2453 = vunpack.c.h.b16 %v1359
    %v2454 = vunpack.c.l.b16 %v1360
    %v2455 = vunpack.c.h.b16 %v1360
    %v2456 = vunpack.c.l.b16 %v1361
    %v2457 = vunpack.c.h.b16 %v1361
    %v2458 = vunpack.c.l.b16 %v1362
    %v2459 = vunpack.c.h.b16 %v1362
    %v2460 = vunpack.c.l.b16 %v1363
    %v2461 = vunpack.c.h.b16 %v1363
    %v2462 = vunpack.c.l.b16 %v1364
    %v2463 = vunpack.c.h.b16 %v1364
    %v2464 = vunpack.c.l.b16 %v1365
    %v2465 = vunpack.c.h.b16 %v1365
    %v2466 = vunpack.c.l.b16 %v1366
    %v2467 = vunpack.c.h.b16 %v1366
    %v2468 = vunpack.c.l.b16 %v1367
    %v2469 = vunpack.c.h.b16 %v1367
    %v2470 = vunpack.c.l.b16 %v1368
    %v2471 = vunpack.c.h.b16 %v1368
    %v2472 = vunpack.c.l.b16 %v1369
    %v2473 = vunpack.c.h.b16 %v1369
    %v2474 = vunpack.c.l.b16 %v1370
    %v2475 = vunpack.c.h.b16 %v1370
    %v2476 = vunpack.c.l.b16 %v1371
    %v2477 = vunpack.c.h.b16 %v1371
    %v2478 = vunpack.c.l.b16 %v1372
    %v2479 = vunpack.c.h.b16 %v1372
    %v2480 = vunpack.c.l.b16 %v1373
    %v2481 = vunpack.c.h.b16 %v1373
    %v2482 = vunpack.c.l.b16 %v1374
    %v2483 = vunpack.c.h.b16 %v1374
    %v2484 = vunpack.c.l.b16 %v1375
    %v2485 = vunpack.c.h.b16 %v1375
    %v2486 = vunpack.c.l.b16 %v1376
    %v2487 = vunpack.c.h.b16 %v1376
    %v2488 = vunpack.c.l.b16 %v1377
    %v2489 = vunpack.c.h.b16 %v1377
    %v2490 = vunpack.c.l.b16 %v1378
    %v2491 = vunpack.c.h.b16 %v1378
    %v2492 = vunpack.c.l.b16 %v1379
    %v2493 = vunpack.c.h.b16 %v1379
    %v2494 = vunpack.c.l.b16 %v1380
    %v2495 = vunpack.c.h.b16 %v1380
    %v2496 = vunpack.c.l.b16 %v1381
    %v2497 = vunpack.c.h.b16 %v1381
    %v2498 = vunpack.c.l.b16 %v1382
    %v2499 = vunpack.c.h.b16 %v1382
    %v2500 = vunpack.c.l.b16 %v1383
    %v2501 = vunpack.c.h.b16 %v1383
    %v2502 = vunpack.c.l.b16 %v1384
    %v2503 = vunpack.c.h.b16 %v1384
    %v2504 = vunpack.c.l.b16 %v1385
    %v2505 = vunpack.c.h.b16 %v1385
    %v2506 = vunpack.c.l.b16 %v1386
    %v2507 = vunpack.c.h.b16 %v1386
    %v2508 = vunpack.c.l.b16 %v1387
    %v2509 = vunpack.c.h.b16 %v1387
    %v2510 = vunpack.c.l.b16 %v1388
    %v2511 = vunpack.c.h.b16 %v1388
    %v2512 = vunpack.c.l.b16 %v1389
    %v2513 = vunpack.c.h.b16 %v1389
    %v2514 = vunpack.c.l.b16 %v1390
    %v2515 = vunpack.c.h.b16 %v1390
    %v2516 = vunpack.c.l.b16 %v1391
    %v2517 = vunpack.c.h.b16 %v1391
    %v2518 = vunpack.c.l.b16 %v1392
    %v2519 = vunpack.c.h.b16 %v1392
    %v2520 = vunpack.c.l.b16 %v1393
    %v2521 = vunpack.c.h.b16 %v1393
    %v2522 = vunpack.c.l.b16 %v1394
    %v2523 = vunpack.c.h.b16 %v1394
    %v2524 = vunpack.c.l.b16 %v1395
    %v2525 = vunpack.c.h.b16 %v1395
    %v2526 = vunpack.c.l.b16 %v1396
    %v2527 = vunpack.c.h.b16 %v1396
    %v2528 = vunpack.c.l.b16 %v1397
    %v2529 = vunpack.c.h.b16 %v1397
    %v2530 = vunpack.c.l.b16 %v1398
    %v2531 = vunpack.c.h.b16 %v1398
    %v2532 = vunpack.c.l.b16 %v1399
    %v2533 = vunpack.c.h.b16 %v1399
    %v2534 = vunpack.c.l.b16 %v1400
    %v2535 = vunpack.c.h.b16 %v1400
    %v2536 = vunpack.c.l.b16 %v1401
    %v2537 = vunpack.c.h.b16 %v1401
    %v2538 = vunpack.c.l.b16 %v1402
    %v2539 = vunpack.c.h.b16 %v1402
    %v2540 = vunpack.c.l.b16 %v1403
    %v2541 = vunpack.c.h.b16 %v1403
    %v2542 = vunpack.c.l.b16 %v1404
    %v2543 = vunpack.c.h.b16 %v1404
    %v2544 = vunpack.c.l.b16 %v1405
    %v2545 = vunpack.c.h.b16 %v1405
    %v2546 = vunpack.c.l.b16 %v1406
    %v2547 = vunpack.c.h.b16 %v1406
    %v2548 = vunpack.c.l.b16 %v1407
    %v2549 = vunpack.c.h.b16 %v1407
    %v2550 = vunpack.c.l.b16 %v1408
    %v2551 = vunpack.c.h.b16 %v1408
    %v2552 = vunpack.c.l.b16 %v1409
    %v2553 = vunpack.c.h.b16 %v1409
    %v2554 = vunpack.c.l.b16 %v1410
    %v2555 = vunpack.c.h.b16 %v1410
    %v2556 = vunpack.c.l.b16 %v1411
    %v2557 = vunpack.c.h.b16 %v1411
    %v2558 = vunpack.c.l.b16 %v1412
    %v2559 = vunpack.c.h.b16 %v1412
    %v2560 = vunpack.c.l.b16 %v1413
    %v2561 = vunpack.c.h.b16 %v1413
    %v2562 = vunpack.c.l.b16 %v1414
    %v2563 = vunpack.c.h.b16 %v1414
    %v2564 = vunpack.c.l.b16 %v1415
    %v2565 = vunpack.c.h.b16 %v1415
    %v2566 = vunpack.c.l.b16 %v1416
    %v2567 = vunpack.c.h.b16 %v1416
    %v2568 = vunpack.c.l.b16 %v1417
    %v2569 = vunpack.c.h.b16 %v1417
    %v2570 = vunpack.c.l.b16 %v1418
    %v2571 = vunpack.c.h.b16 %v1418
    %v2572 = vunpack.c.l.b16 %v1419
    %v2573 = vunpack.c.h.b16 %v1419
    %v2574 = vunpack.c.l.b16 %v1420
    %v2575 = vunpack.c.h.b16 %v1420
    %v2576 = vunpack.c.l.b16 %v1421
    %v2577 = vunpack.c.h.b16 %v1421
    %v2578 = vunpack.c.l.b16 %v1422
    %v2579 = vunpack.c.h.b16 %v1422
    %v2580 = vunpack.c.l.b16 %v1423
    %v2581 = vunpack.c.h.b16 %v1423
    %v2582 = vunpack.c.l.b16 %v1424
    %v2583 = vunpack.c.h.b16 %v1424
    %v2584 = vunpack.c.l.b16 %v1425
    %v2585 = vunpack.c.h.b16 %v1425
    %v2586 = vunpack.c.l.b16 %v1426
    %v2587 = vunpack.c.h.b16 %v1426
    %v2588 = vunpack.c.l.b16 %v1427
    %v2589 = vunpack.c.h.b16 %v1427
    %v2590 = vunpack.c.l.b16 %v1428
    %v2591 = vunpack.c.h.b16 %v1428
    %v2592 = vunpack.c.l.b16 %v1429
    %v2593 = vunpack.c.h.b16 %v1429
    %v2594 = vunpack.c.l.b16 %v1430
    %v2595 = vunpack.c.h.b16 %v1430
    %v2596 = vunpack.c.l.b16 %v1431
    %v2597 = vunpack.c.h.b16 %v1431
    %v2598 = vunpack.c.l.b16 %v1432
    %v2599 = vunpack.c.h.b16 %v1432
    %v2600 = vunpack.c.l.b16 %v1433
    %v2601 = vunpack.c.h.b16 %v1433
    %v2602 = vunpack.c.l.b16 %v1434
    %v2603 = vunpack.c.h.b16 %v1434
    %v2604 = vunpack.c.l.b16 %v1435
    %v2605 = vunpack.c.h.b16 %v1435
    %v2606 = vunpack.c.l.b16 %v1436
    %v2607 = vunpack.c.h.b16 %v1436
    %v2608 = vunpack.c.l.b16 %v1437
    %v2609 = vunpack.c.h.b16 %v1437
    %v2610 = vunpack.c.l.b16 %v1438
    %v2611 = vunpack.c.h.b16 %v1438
    %v2612 = vunpack.c.l.b16 %v1439
    %v2613 = vunpack.c.h.b16 %v1439
    %v2614 = vunpack.c.l.b16 %v1440
    %v2615 = vunpack.c.h.b16 %v1440
    %v2616 = vunpack.c.l.b16 %v1441
    %v2617 = vunpack.c.h.b16 %v1441
    %v2618 = vunpack.c.l.b16 %v1442
    %v2619 = vunpack.c.h.b16 %v1442
    %v2620 = vunpack.c.l.b16 %v1443
    %v2621 = vunpack.c.h.b16 %v1443
    %v2622 = vunpack.c.l.b16 %v1444
    %v2623 = vunpack.c.h.b16 %v1444
    %v2624 = vunpack.c.l.b16 %v1445
    %v2625 = vunpack.c.h.b16 %v1445
    %v2626 = vunpack.c.l.b16 %v1446
    %v2627 = vunpack.c.h.b16 %v1446
    %v2628 = vunpack.c.l.b16 %v1447
    %v2629 = vunpack.c.h.b16 %v1447
    %v2630 = vunpack.c.l.b16 %v1448
    %v2631 = vunpack.c.h.b16 %v1448
    %v2632 = vunpack.c.l.b16 %v1449
    %v2633 = vunpack.c.h.b16 %v1449
    %v2634 = vunpack.c.l.b16 %v1450
    %v2635 = vunpack.c.h.b16 %v1450
    %v2636 = vunpack.c.l.b16 %v1451
    %v2637 = vunpack.c.h.b16 %v1451
    %v2638 = vunpack.c.l.b16 %v1452
    %v2639 = vunpack.c.h.b16 %v1452
    %v2640 = vunpack.c.l.b16 %v1453
    %v2641 = vunpack.c.h.b16 %v1453
    %v2642 = vunpack.c.l.b16 %v1454
    %v2643 = vunpack.c.h.b16 %v1454
    %v2644 = vunpack.c.l.b16 %v1455
    %v2645 = vunpack.c.h.b16 %v1455
    %v2646 = vunpack.c.l.b16 %v1456
    %v2647 = vunpack.c.h.b16 %v1456
    %v2648 = vunpack.c.l.b16 %v1457
    %v2649 = vunpack.c.h.b16 %v1457
    %v2650 = vunpack.c.l.b16 %v1458
    %v2651 = vunpack.c.h.b16 %v1458
    %v2652 = vunpack.c.l.b16 %v1459
    %v2653 = vunpack.c.h.b16 %v1459
    %v2654 = vunpack.c.l.b16 %v1460
    %v2655 = vunpack.c.h.b16 %v1460
    %v2656 = vunpack.c.l.b16 %v1461
    %v2657 = vunpack.c.h.b16 %v1461
    %v2658 = vunpack.c.l.b16 %v1462
    %v2659 = vunpack.c.h.b16 %v1462
    %v2660 = vunpack.c.l.b16 %v1463
    %v2661 = vunpack.c.h.b16 %v1463
    %v2662 = vunpack.c.l.b16 %v1464
    %v2663 = vunpack.c.h.b16 %v1464
    %v2664 = vunpack.c.l.b16 %v1465
    %v2665 = vunpack.c.h.b16 %v1465
    %v2666 = vunpack.c.l.b16 %v1466
    %v2667 = vunpack.c.h.b16 %v1466
    %v2668 = vunpack.c.l.b16 %v1467
    %v2669 = vunpack.c.h.b16 %v1467
    %v2670 = vunpack.c.l.b16 %v1468
    %v2671 = vunpack.c.h.b16 %v1468
    %v2672 = vunpack.c.l.b16 %v1469
    %v2673 = vunpack.c.h.b16 %v1469
    %v2674 = vunpack.c.l.b16 %v1470
    %v2675 = vunpack.c.h.b16 %v1470
    %v2676 = vunpack.c.l.b16 %v1471
    %v2677 = vunpack.c.h.b16 %v1471
    %v2678 = vunpack.c.l.b16 %v1472
    %v2679 = vunpack.c.h.b16 %v1472
    %v2680 = vunpack.c.l.b16 %v1473
    %v2681 = vunpack.c.h.b16 %v1473
    %v2682 = vunpack.c.l.b16 %v1474
    %v2683 = vunpack.c.h.b16 %v1474
    %v2684 = vunpack.c.l.b16 %v1475
    %v2685 = vunpack.c.h.b16 %v1475
    %v2686 = vunpack.c.l.b16 %v1476
    %v2687 = vunpack.c.h.b16 %v1476
    %v2688 = vunpack.c.l.b16 %v1477
    %v2689 = vunpack.c.h.b16 %v1477
    %v2690 = vunpack.c.l.b16 %v1478
    %v2691 = vunpack.c.h.b16 %v1478
    %v2692 = vunpack.c.l.b16 %v1479
    %v2693 = vunpack.c.h.b16 %v1479
    %v2694 = vunpack.c.l.b16 %v1480
    %v2695 = vunpack.c.h.b16 %v1480
    %v2696 = vunpack.c.l.b16 %v1481
    %v2697 = vunpack.c.h.b16 %v1481
    %v2698 = vunpack.c.l.b16 %v1482
    %v2699 = vunpack.c.h.b16 %v1482
    %v2700 = vunpack.c.l.b16 %v1483
    %v2701 = vunpack.c.h.b16 %v1483
    %v2702 = vunpack.c.l.b16 %v1484
    %v2703 = vunpack.c.h.b16 %v1484
    %v2704 = vunpack.c.l.b16 %v1485
    %v2705 = vunpack.c.h.b16 %v1485
    %v2706 = vunpack.c.l.b16 %v1486
    %v2707 = vunpack.c.h.b16 %v1486
    %v2708 = vunpack.c.l.b16 %v1487
    %v2709 = vunpack.c.h.b16 %v1487
    %v2710 = vunpack.c.l.b16 %v1488
    %v2711 = vunpack.c.h.b16 %v1488
    %v2712 = vunpack.c.l.b16 %v1489
    %v2713 = vunpack.c.h.b16 %v1489
    %v2714 = vunpack.c.l.b16 %v1490
    %v2715 = vunpack.c.h.b16 %v1490
    %v2716 = vunpack.c.l.b16 %v1491
    %v2717 = vunpack.c.h.b16 %v1491
    %v2718 = vunpack.c.l.b16 %v1492
    %v2719 = vunpack.c.h.b16 %v1492
    %v2720 = vunpack.c.l.b16 %v1493
    %v2721 = vunpack.c.h.b16 %v1493
    %v2722 = vunpack.c.l.b16 %v1494
    %v2723 = vunpack.c.h.b16 %v1494
    %v2724 = vunpack.c.l.b16 %v1495
    %v2725 = vunpack.c.h.b16 %v1495
    %v2726 = vunpack.c.l.b16 %v1496
    %v2727 = vunpack.c.h.b16 %v1496
    %v2728 = vunpack.c.l.b16 %v1497
    %v2729 = vunpack.c.h.b16 %v1497
    %v2730 = vunpack.c.l.b16 %v1498
    %v2731 = vunpack.c.h.b16 %v1498
    %v2732 = vunpack.c.l.b16 %v1499
    %v2733 = vunpack.c.h.b16 %v1499
    %v2734 = vunpack.c.l.b16 %v1500
    %v2735 = vunpack.c.h.b16 %v1500
    %v2736 = vunpack.c.l.b16 %v1501
    %v2737 = vunpack.c.h.b16 %v1501
    %v2738 = vunpack.c.l.b16 %v1502
    %v2739 = vunpack.c.h.b16 %v1502
    %v2740 = vunpack.c.l.b16 %v1503
    %v2741 = vunpack.c.h.b16 %v1503
    %v2742 = vunpack.c.l.b16 %v1504
    %v2743 = vunpack.c.h.b16 %v1504
    %v2744 = vunpack.c.l.b16 %v1505
    %v2745 = vunpack.c.h.b16 %v1505
    %v2746 = vunpack.c.l.b16 %v1506
    %v2747 = vunpack.c.h.b16 %v1506
    %v2748 = vunpack.c.l.b16 %v1507
    %v2749 = vunpack.c.h.b16 %v1507
    %v2750 = vunpack.c.l.b16 %v1508
    %v2751 = vunpack.c.h.b16 %v1508
    %v2752 = vunpack.c.l.b16 %v1509
    %v2753 = vunpack.c.h.b16 %v1509
    %v2754 = vunpack.c.l.b16 %v1510
    %v2755 = vunpack.c.h.b16 %v1510
    %v2756 = vunpack.c.l.b16 %v1511
    %v2757 = vunpack.c.h.b16 %v1511
    %v2758 = vunpack.c.l.b16 %v1512
    %v2759 = vunpack.c.h.b16 %v1512
    %v2760 = vunpack.c.l.b16 %v1513
    %v2761 = vunpack.c.h.b16 %v1513
    %v2762 = vunpack.c.l.b16 %v1514
    %v2763 = vunpack.c.h.b16 %v1514
    %v2764 = vunpack.c.l.b16 %v1515
    %v2765 = vunpack.c.h.b16 %v1515
    %v2766 = vunpack.c.l.b16 %v1516
    %v2767 = vunpack.c.h.b16 %v1516
    %v2768 = vunpack.c.l.b16 %v1517
    %v2769 = vunpack.c.h.b16 %v1517
    %v2770 = vunpack.c.l.b16 %v1518
    %v2771 = vunpack.c.h.b16 %v1518
    %v2772 = vunpack.c.l.b16 %v1519
    %v2773 = vunpack.c.h.b16 %v1519
    %v2774 = vunpack.c.l.b16 %v1520
    %v2775 = vunpack.c.h.b16 %v1520
    %v2776 = vunpack.c.l.b16 %v1521
    %v2777 = vunpack.c.h.b16 %v1521
    %v2778 = vunpack.c.l.b16 %v1522
    %v2779 = vunpack.c.h.b16 %v1522
    %v2780 = vunpack.c.l.b16 %v1523
    %v2781 = vunpack.c.h.b16 %v1523
    %v2782 = vunpack.c.l.b16 %v1524
    %v2783 = vunpack.c.h.b16 %v1524
    %v2784 = vunpack.c.l.b16 %v1525
    %v2785 = vunpack.c.h.b16 %v1525
    %v2786 = vunpack.c.l.b16 %v1526
    %v2787 = vunpack.c.h.b16 %v1526
    %v2788 = vunpack.c.l.b16 %v1527
    %v2789 = vunpack.c.h.b16 %v1527
    %v2790 = vunpack.c.l.b16 %v1528
    %v2791 = vunpack.c.h.b16 %v1528
    %v2792 = vunpack.c.l.b16 %v1529
    %v2793 = vunpack.c.h.b16 %v1529
    %v2794 = vunpack.c.l.b16 %v1530
    %v2795 = vunpack.c.h.b16 %v1530
    %v2796 = vunpack.c.l.b16 %v1531
    %v2797 = vunpack.c.h.b16 %v1531
    %v2798 = vunpack.c.l.b16 %v1532
    %v2799 = vunpack.c.h.b16 %v1532
    %v2800 = vunpack.c.l.b16 %v1533
    %v2801 = vunpack.c.h.b16 %v1533
    %v2802 = vunpack.c.l.b16 %v1534
    %v2803 = vunpack.c.h.b16 %v1534
    %v2804 = vunpack.c.l.b16 %v1535
    %v2805 = vunpack.c.h.b16 %v1535
    %v2806 = vunpack.c.l.b16 %v1536
    %v2807 = vunpack.c.h.b16 %v1536
    %v2808 = vunpack.c.l.b16 %v1537
    %v2809 = vunpack.c.h.b16 %v1537
    %v2810 = vunpack.c.l.b16 %v1538
    %v2811 = vunpack.c.h.b16 %v1538
    %v2812 = vunpack.c.l.b16 %v1539
    %v2813 = vunpack.c.h.b16 %v1539
    %v2814 = vunpack.c.l.b16 %v1540
    %v2815 = vunpack.c.h.b16 %v1540
    %v2816 = vunpack.c.l.b16 %v1541
    %v2817 = vunpack.c.h.b16 %v1541
    %v2818 = vunpack.c.l.b16 %v1542
    %v2819 = vunpack.c.h.b16 %v1542
    %v2820 = vunpack.c.l.b16 %v1543
    %v2821 = vunpack.c.h.b16 %v1543
    %v2822 = vunpack.c.l.b16 %v1544
    %v2823 = vunpack.c.h.b16 %v1544
    %v2824 = vunpack.c.l.b16 %v1545
    %v2825 = vunpack.c.h.b16 %v1545
    %v2826 = vunpack.c.l.b16 %v1546
    %v2827 = vunpack.c.h.b16 %v1546
    %v2828 = vunpack.c.l.b16 %v1547
    %v2829 = vunpack.c.h.b16 %v1547
    %v2830 = vunpack.c.l.b16 %v1548
    %v2831 = vunpack.c.h.b16 %v1548
    %v2832 = vunpack.c.l.b16 %v1549
    %v2833 = vunpack.c.h.b16 %v1549
    %v2834 = vunpack.c.l.b16 %v1550
    %v2835 = vunpack.c.h.b16 %v1550
    %v2836 = vunpack.c.l.b16 %v1551
    %v2837 = vunpack.c.h.b16 %v1551
    %v2838 = vunpack.c.l.b16 %v1552
    %v2839 = vunpack.c.h.b16 %v1552
    %v2840 = vunpack.c.l.b16 %v1553
    %v2841 = vunpack.c.h.b16 %v1553
    %v2842 = vunpack.c.l.b16 %v1554
    %v2843 = vunpack.c.h.b16 %v1554
    %v2844 = vunpack.c.l.b16 %v1555
    %v2845 = vunpack.c.h.b16 %v1555
    %v2846 = vunpack.c.l.b16 %v1556
    %v2847 = vunpack.c.h.b16 %v1556
    %v2848 = vunpack.c.l.b16 %v1557
    %v2849 = vunpack.c.h.b16 %v1557
    %v2850 = vunpack.c.l.b16 %v1558
    %v2851 = vunpack.c.h.b16 %v1558
    %v2852 = vunpack.c.l.b16 %v1559
    %v2853 = vunpack.c.h.b16 %v1559
    %v2854 = vunpack.c.l.b16 %v1560
    %v2855 = vunpack.c.h.b16 %v1560
    %v2856 = vunpack.c.l.b16 %v1561
    %v2857 = vunpack.c.h.b16 %v1561
    %v2858 = vunpack.c.l.b16 %v1562
    %v2859 = vunpack.c.h.b16 %v1562
    %v2860 = vunpack.c.l.b16 %v1563
    %v2861 = vunpack.c.h.b16 %v1563
    %v2862 = vunpack.c.l.b16 %v1564
    %v2863 = vunpack.c.h.b16 %v1564
    %v2864 = vunpack.c.l.b16 %v1565
    %v2865 = vunpack.c.h.b16 %v1565
    %v2866 = vunpack.c.l.b16 %v1566
    %v2867 = vunpack.c.h.b16 %v1566
    %v2868 = vunpack.c.l.b16 %v1567
    %v2869 = vunpack.c.h.b16 %v1567
    %v2870 = vunpack.c.l.b16 %v1568
    %v2871 = vunpack.c.h.b16 %v1568
    %v2872 = vunpack.c.l.b16 %v1569
    %v2873 = vunpack.c.h.b16 %v1569
    %v2874 = vunpack.c.l.b16 %v1570
    %v2875 = vunpack.c.h.b16 %v1570
    %v2876 = vunpack.c.l.b16 %v1571
    %v2877 = vunpack.c.h.b16 %v1571
    %v2878 = vunpack.c.l.b16 %v1572
    %v2879 = vunpack.c.h.b16 %v1572
    %v2880 = vunpack.c.l.b16 %v1573
    %v2881 = vunpack.c.h.b16 %v1573
    %v2882 = vunpack.c.l.b16 %v1574
    %v2883 = vunpack.c.h.b16 %v1574
    %v2884 = vunpack.c.l.b16 %v1575
    %v2885 = vunpack.c.h.b16 %v1575
    %v2886 = vunpack.c.l.b16 %v1576
    %v2887 = vunpack.c.h.b16 %v1576
    %v2888 = vunpack.c.l.b16 %v1577
    %v2889 = vunpack.c.h.b16 %v1577
    %v2890 = vunpack.c.l.b16 %v1578
    %v2891 = vunpack.c.h.b16 %v1578
    %v2892 = vunpack.c.l.b16 %v1579
    %v2893 = vunpack.c.h.b16 %v1579
    %v2894 = vunpack.c.l.b16 %v1580
    %v2895 = vunpack.c.h.b16 %v1580
    %v2896 = vunpack.c.l.b16 %v1581
    %v2897 = vunpack.c.h.b16 %v1581
    %v2898 = vunpack.c.l.b16 %v1582
    %v2899 = vunpack.c.h.b16 %v1582
    %v2900 = vunpack.c.l.b16 %v1583
    %v2901 = vunpack.c.h.b16 %v1583
    %v2902 = vunpack.c.l.b16 %v1584
    %v2903 = vunpack.c.h.b16 %v1584
    %v2904 = vunpack.c.l.b16 %v1585
    %v2905 = vunpack.c.h.b16 %v1585
    %v2906 = vunpack.c.l.b16 %v1586
    %v2907 = vunpack.c.h.b16 %v1586
    %v2908 = vunpack.c.l.b16 %v1587
    %v2909 = vunpack.c.h.b16 %v1587
    %v2910 = vunpack.c.l.b16 %v1588
    %v2911 = vunpack.c.h.b16 %v1588
    %v2912 = vunpack.c.l.b16 %v1589
    %v2913 = vunpack.c.h.b16 %v1589
    %v2914 = vunpack.c.l.b16 %v1590
    %v2915 = vunpack.c.h.b16 %v1590
    %v2916 = vunpack.c.l.b16 %v1591
    %v2917 = vunpack.c.h.b16 %v1591
    %v2918 = vunpack.c.l.b16 %v1592
    %v2919 = vunpack.c.h.b16 %v1592
    %v2920 = vunpack.c.l.b16 %v1593
    %v2921 = vunpack.c.h.b16 %v1593
    %v2922 = vunpack.c.l.b16 %v1594
    %v2923 = vunpack.c.h.b16 %v1594
    %v2924 = vunpack.c.l.b16 %v1595
    %v2925 = vunpack.c.h.b16 %v1595
    %v2926 = vunpack.c.l.b16 %v1596
    %v2927 = vunpack.c.h.b16 %v1596
    %v2928 = vunpack.c.l.b16 %v1597
    %v2929 = vunpack.c.h.b16 %v1597
    %v2930 = vunpack.c.l.b16 %v1598
    %v2931 = vunpack.c.h.b16 %v1598
    %v2932 = vunpack.c.l.b16 %v1599
    %v2933 = vunpack.c.h.b16 %v1599
    %v2934 = vunpack.c.l.b16 %v1600
    %v2935 = vunpack.c.h.b16 %v1600
    %v2936 = vunpack.c.l.b16 %v1601
    %v2937 = vunpack.c.h.b16 %v1601
    %v2938 = vunpack.c.l.b16 %v1602
    %v2939 = vunpack.c.h.b16 %v1602
    %v2940 = vunpack.c.l.b16 %v1603
    %v2941 = vunpack.c.h.b16 %v1603
    %v2942 = vunpack.c.l.b16 %v1604
    %v2943 = vunpack.c.h.b16 %v1604
    %v2944 = vunpack.c.l.b16 %v1605
    %v2945 = vunpack.c.h.b16 %v1605
    %v2946 = vunpack.c.l.b16 %v1606
    %v2947 = vunpack.c.h.b16 %v1606
    %v2948 = vunpack.c.l.b16 %v1607
    %v2949 = vunpack.c.h.b16 %v1607
    %v2950 = vunpack.c.l.b16 %v1608
    %v2951 = vunpack.c.h.b16 %v1608
    %v2952 = vunpack.c.l.b16 %v1609
    %v2953 = vunpack.c.h.b16 %v1609
    %v2954 = vunpack.c.l.b16 %v1610
    %v2955 = vunpack.c.h.b16 %v1610
    %v2956 = vunpack.c.l.b16 %v1611
    %v2957 = vunpack.c.h.b16 %v1611
    %v2958 = vunpack.c.l.b16 %v1612
    %v2959 = vunpack.c.h.b16 %v1612
    %v2960 = vunpack.c.l.b16 %v1613
    %v2961 = vunpack.c.h.b16 %v1613
    %v2962 = vunpack.c.l.b16 %v1614
    %v2963 = vunpack.c.h.b16 %v1614
    %v2964 = vunpack.c.l.b16 %v1615
    %v2965 = vunpack.c.h.b16 %v1615
    %v2966 = vunpack.c.l.b16 %v1616
    %v2967 = vunpack.c.h.b16 %v1616
    %v2968 = vunpack.c.l.b16 %v1617
    %v2969 = vunpack.c.h.b16 %v1617
    %v2970 = vunpack.c.l.b16 %v1618
    %v2971 = vunpack.c.h.b16 %v1618
    %v2972 = vunpack.c.l.b16 %v1619
    %v2973 = vunpack.c.h.b16 %v1619
    %v2974 = vunpack.c.l.b16 %v1620
    %v2975 = vunpack.c.h.b16 %v1620
    %v2976 = vunpack.c.l.b16 %v1621
    %v2977 = vunpack.c.h.b16 %v1621
    %v2978 = vunpack.c.l.b16 %v1622
    %v2979 = vunpack.c.h.b16 %v1622
    %v2980 = vunpack.c.l.b16 %v1623
    %v2981 = vunpack.c.h.b16 %v1623
    %v2982 = vunpack.c.l.b16 %v1624
    %v2983 = vunpack.c.h.b16 %v1624
    %v2984 = vunpack.c.l.b16 %v1625
    %v2985 = vunpack.c.h.b16 %v1625
    %v2986 = vunpack.c.l.b16 %v1626
    %v2987 = vunpack.c.h.b16 %v1626
    %v2988 = vunpack.c.l.b16 %v1627
    %v2989 = vunpack.c.h.b16 %v1627
    %v2990 = vunpack.c.l.b16 %v1628
    %v2991 = vunpack.c.h.b16 %v1628
    %v2992 = vunpack.c.l.b16 %v1629
    %v2993 = vunpack.c.h.b16 %v1629
    %v2994 = vunpack.c.l.b16 %v1630
    %v2995 = vunpack.c.h.b16 %v1630
    %v2996 = vunpack.c.l.b16 %v1631
    %v2997 = vunpack.c.h.b16 %v1631
    %v2998 = vunpack.c.l.b16 %v1632
    %v2999 = vunpack.c.h.b16 %v1632
    %v3000 = vunpack.c.l.b16 %v1633
    %v3001 = vunpack.c.h.b16 %v1633
    %v3002 = vunpack.c.l.b16 %v1634
    %v3003 = vunpack.c.h.b16 %v1634
    %v3004 = vunpack.c.l.b16 %v1635
    %v3005 = vunpack.c.h.b16 %v1635
    %v3006 = vunpack.c.l.b16 %v1636
    %v3007 = vunpack.c.h.b16 %v1636
    %v3008 = vunpack.c.l.b16 %v1637
    %v3009 = vunpack.c.h.b16 %v1637
    %v3010 = vunpack.c.l.b16 %v1638
    %v3011 = vunpack.c.h.b16 %v1638
    %v3012 = vunpack.c.l.b16 %v1639
    %v3013 = vunpack.c.h.b16 %v1639
    %v3014 = vunpack.c.l.b16 %v1640
    %v3015 = vunpack.c.h.b16 %v1640
    %v3016 = vunpack.c.l.b16 %v1641
    %v3017 = vunpack.c.h.b16 %v1641
    %v3018 = vunpack.c.l.b16 %v1642
    %v3019 = vunpack.c.h.b16 %v1642
    %v3020 = vunpack.c.l.b16 %v1643
    %v3021 = vunpack.c.h.b16 %v1643
    %v3022 = vunpack.c.l.b16 %v1644
    %v3023 = vunpack.c.h.b16 %v1644
    %v3024 = vunpack.c.l.b16 %v1645
    %v3025 = vunpack.c.h.b16 %v1645
    %v3026 = vunpack.c.l.b16 %v1646
    %v3027 = vunpack.c.h.b16 %v1646
    %v3028 = vunpack.c.l.b16 %v1647
    %v3029 = vunpack.c.h.b16 %v1647
    %v3030 = vunpack.c.l.b16 %v1648
    %v3031 = vunpack.c.h.b16 %v1648
    %v3032 = vunpack.c.l.b16 %v1649
    %v3033 = vunpack.c.h.b16 %v1649
    %v3034 = vunpack.c.l.b16 %v1650
    %v3035 = vunpack.c.h.b16 %v1650
    %v3036 = vunpack.c.l.b16 %v1651
    %v3037 = vunpack.c.h.b16 %v1651
    %v3038 = vunpack.c.l.b16 %v1652
    %v3039 = vunpack.c.h.b16 %v1652
    %v3040 = vunpack.c.l.b16 %v1653
    %v3041 = vunpack.c.h.b16 %v1653
    %v3042 = vunpack.c.l.b16 %v1654
    %v3043 = vunpack.c.h.b16 %v1654
    %v3044 = vunpack.c.l.b16 %v1655
    %v3045 = vunpack.c.h.b16 %v1655
    %v3046 = vunpack.c.l.b16 %v1656
    %v3047 = vunpack.c.h.b16 %v1656
    %v3048 = vunpack.c.l.b16 %v1657
    %v3049 = vunpack.c.h.b16 %v1657
    %v3050 = vunpack.c.l.b16 %v1658
    %v3051 = vunpack.c.h.b16 %v1658
    %v3052 = vunpack.c.l.b16 %v1659
    %v3053 = vunpack.c.h.b16 %v1659
    %v3054 = vunpack.c.l.b16 %v1660
    %v3055 = vunpack.c.h.b16 %v1660
    %v3056 = vunpack.c.l.b16 %v1661
    %v3057 = vunpack.c.h.b16 %v1661
    %v3058 = vunpack.c.l.b16 %v1662
    %v3059 = vunpack.c.h.b16 %v1662
    %v3060 = vunpack.c.l.b16 %v1663
    %v3061 = vunpack.c.h.b16 %v1663
    %v3062 = vunpack.c.l.b16 %v1664
    %v3063 = vunpack.c.h.b16 %v1664
    %v3064 = vunpack.c.l.b16 %v1665
    %v3065 = vunpack.c.h.b16 %v1665
    %v3066 = vunpack.c.l.b16 %v1666
    %v3067 = vunpack.c.h.b16 %v1666
    %v3068 = vunpack.c.l.b16 %v1667
    %v3069 = vunpack.c.h.b16 %v1667
    %v3070 = vunpack.c.l.b16 %v1668
    %v3071 = vunpack.c.h.b16 %v1668
    %v3072 = vunpack.c.l.b16 %v1669
    %v3073 = vunpack.c.h.b16 %v1669
    %v3074 = vunpack.c.l.b16 %v1670
    %v3075 = vunpack.c.h.b16 %v1670
    %v3076 = vunpack.c.l.b16 %v1671
    %v3077 = vunpack.c.h.b16 %v1671
    %v3078 = vunpack.c.l.b16 %v1672
    %v3079 = vunpack.c.h.b16 %v1672
    %v3080 = vunpack.c.l.b16 %v1673
    %v3081 = vunpack.c.h.b16 %v1673
    %v3082 = vunpack.c.l.b16 %v1674
    %v3083 = vunpack.c.h.b16 %v1674
    %v3084 = vunpack.c.l.b16 %v1675
    %v3085 = vunpack.c.h.b16 %v1675
    %v3086 = vunpack.c.l.b16 %v1676
    %v3087 = vunpack.c.h.b16 %v1676
    %v3088 = vunpack.c.l.b16 %v1677
    %v3089 = vunpack.c.h.b16 %v1677
    %v3090 = vunpack.c.l.b16 %v1678
    %v3091 = vunpack.c.h.b16 %v1678
    %v3092 = vunpack.c.l.b16 %v1679
    %v3093 = vunpack.c.h.b16 %v1679
    %v3094 = vunpack.c.l.b16 %v1680
    %v3095 = vunpack.c.h.b16 %v1680
    %v3096 = vunpack.c.l.b16 %v1681
    %v3097 = vunpack.c.h.b16 %v1681
    %v3098 = vunpack.c.l.b16 %v1682
    %v3099 = vunpack.c.h.b16 %v1682
    %v3100 = vunpack.c.l.b16 %v1683
    %v3101 = vunpack.c.h.b16 %v1683
    %v3102 = vunpack.c.l.b16 %v1684
    %v3103 = vunpack.c.h.b16 %v1684
    %v3104 = vunpack.c.l.b16 %v1685
    %v3105 = vunpack.c.h.b16 %v1685
    %v3106 = vunpack.c.l.b16 %v1686
    %v3107 = vunpack.c.h.b16 %v1686
    %v3108 = vunpack.c.l.b16 %v1687
    %v3109 = vunpack.c.h.b16 %v1687
    %v3110 = vunpack.c.l.b16 %v1688
    %v3111 = vunpack.c.h.b16 %v1688
    %v3112 = vunpack.c.l.b16 %v1689
    %v3113 = vunpack.c.h.b16 %v1689
    %v3114 = vunpack.c.l.b16 %v1690
    %v3115 = vunpack.c.h.b16 %v1690
    %v3116 = vunpack.c.l.b16 %v1691
    %v3117 = vunpack.c.h.b16 %v1691
    %v3118 = vunpack.c.l.b16 %v1692
    %v3119 = vunpack.c.h.b16 %v1692
    %v3120 = vunpack.c.l.b16 %v1693
    %v3121 = vunpack.c.h.b16 %v1693
    %v3122 = vunpack.c.l.b16 %v1694
    %v3123 = vunpack.c.h.b16 %v1694
    %v3124 = vunpack.c.l.b16 %v1695
    %v3125 = vunpack.c.h.b16 %v1695
    %v3126 = vunpack.c.l.b16 %v1696
    %v3127 = vunpack.c.h.b16 %v1696
    %v3128 = vunpack.c.l.b16 %v1697
    %v3129 = vunpack.c.h.b16 %v1697
    %v3130 = vunpack.c.l.b16 %v1698
    %v3131 = vunpack.c.h.b16 %v1698
    %v3132 = vunpack.c.l.b16 %v1699
    %v3133 = vunpack.c.h.b16 %v1699
    %v3134 = vunpack.c.l.b16 %v1700
    %v3135 = vunpack.c.h.b16 %v1700
    %v3136 = vunpack.c.l.b16 %v1701
    %v3137 = vunpack.c.h.b16 %v1701
    %v3138 = vunpack.c.l.b16 %v1702
    %v3139 = vunpack.c.h.b16 %v1702
    %v3140 = vunpack.c.l.b16 %v1703
    %v3141 = vunpack.c.h.b16 %v1703
    %v3142 = vunpack.c.l.b16 %v1704
    %v3143 = vunpack.c.h.b16 %v1704
    %v3144 = vunpack.c.l.b16 %v1705
    %v3145 = vunpack.c.h.b16 %v1705
    %v3146 = vunpack.c.l.b16 %v1706
    %v3147 = vunpack.c.h.b16 %v1706
    %v3148 = vunpack.c.l.b16 %v1707
    %v3149 = vunpack.c.h.b16 %v1707
    %v3150 = vunpack.c.l.b16 %v1708
    %v3151 = vunpack.c.h.b16 %v1708
    %v3152 = vunpack.c.l.b16 %v1709
    %v3153 = vunpack.c.h.b16 %v1709
    %v3154 = vunpack.c.l.b16 %v1710
    %v3155 = vunpack.c.h.b16 %v1710
    %v3156 = vunpack.c.l.b16 %v1711
    %v3157 = vunpack.c.h.b16 %v1711
    %v3158 = vunpack.c.l.b16 %v1712
    %v3159 = vunpack.c.h.b16 %v1712
    %v3160 = vunpack.c.l.b16 %v1713
    %v3161 = vunpack.c.h.b16 %v1713
    %v3162 = vunpack.c.l.b16 %v1714
    %v3163 = vunpack.c.h.b16 %v1714
    %v3164 = vunpack.c.l.b16 %v1715
    %v3165 = vunpack.c.h.b16 %v1715
    %v3166 = vunpack.c.l.b16 %v1716
    %v3167 = vunpack.c.h.b16 %v1716
    %v3168 = vunpack.c.l.b16 %v1717
    %v3169 = vunpack.c.h.b16 %v1717
    %v3170 = vunpack.c.l.b16 %v1718
    %v3171 = vunpack.c.h.b16 %v1718
    %v3172 = vunpack.c.l.b16 %v1719
    %v3173 = vunpack.c.h.b16 %v1719
    %v3174 = vunpack.c.l.b16 %v1720
    %v3175 = vunpack.c.h.b16 %v1720
    %v3176 = vunpack.c.l.b16 %v1721
    %v3177 = vunpack.c.h.b16 %v1721
    %v3178 = vunpack.c.l.b16 %v1722
    %v3179 = vunpack.c.h.b16 %v1722
    %v3180 = vunpack.c.l.b16 %v1723
    %v3181 = vunpack.c.h.b16 %v1723
    %v3182 = vunpack.c.l.b16 %v1724
    %v3183 = vunpack.c.h.b16 %v1724
    %v3184 = vunpack.c.l.b16 %v1725
    %v3185 = vunpack.c.h.b16 %v1725
    %v3186 = vunpack.c.l.b16 %v1726
    %v3187 = vunpack.c.h.b16 %v1726
    %v3188 = vunpack.c.l.b16 %v1727
    %v3189 = vunpack.c.h.b16 %v1727
    %v3190 = vunpack.c.l.b16 %v1728
    %v3191 = vunpack.c.h.b16 %v1728
    %v3192 = vunpack.c.l.b16 %v1729
    %v3193 = vunpack.c.h.b16 %v1729
    %v3194 = vunpack.c.l.b16 %v1730
    %v3195 = vunpack.c.h.b16 %v1730
    %v3196 = vunpack.c.l.b16 %v1731
    %v3197 = vunpack.c.h.b16 %v1731
    %v3198 = vunpack.c.l.b16 %v1732
    %v3199 = vunpack.c.h.b16 %v1732
    %v3200 = vunpack.c.l.b16 %v1733
    %v3201 = vunpack.c.h.b16 %v1733
    %v3202 = vunpack.c.l.b16 %v1734
    %v3203 = vunpack.c.h.b16 %v1734
    %v3204 = vunpack.c.l.b16 %v1735
    %v3205 = vunpack.c.h.b16 %v1735
    %v3206 = vunpack.c.l.b16 %v1736
    %v3207 = vunpack.c.h.b16 %v1736
    %v3208 = vunpack.c.l.b16 %v1737
    %v3209 = vunpack.c.h.b16 %v1737
    %v3210 = vunpack.c.l.b16 %v1738
    %v3211 = vunpack.c.h.b16 %v1738
    %v3212 = vunpack.c.l.b16 %v1739
    %v3213 = vunpack.c.h.b16 %v1739
    %v3214 = vunpack.c.l.b16 %v1740
    %v3215 = vunpack.c.h.b16 %v1740
    %v3216 = vunpack.c.l.b16 %v1741
    %v3217 = vunpack.c.h.b16 %v1741
    %v3218 = vunpack.c.l.b16 %v1742
    %v3219 = vunpack.c.h.b16 %v1742
    %v3220 = vunpack.c.l.b16 %v1743
    %v3221 = vunpack.c.h.b16 %v1743
    %v3222 = vunpack.c.l.b16 %v1744
    %v3223 = vunpack.c.h.b16 %v1744
    %v3224 = vunpack.c.l.b16 %v1745
    %v3225 = vunpack.c.h.b16 %v1745
    %v3226 = vunpack.c.l.b16 %v1746
    %v3227 = vunpack.c.h.b16 %v1746
    %v3228 = vunpack.c.l.b16 %v1747
    %v3229 = vunpack.c.h.b16 %v1747
    %v3230 = vunpack.c.l.b16 %v1748
    %v3231 = vunpack.c.h.b16 %v1748
    %v3232 = vunpack.c.l.b16 %v1749
    %v3233 = vunpack.c.h.b16 %v1749
    %v3234 = vunpack.c.l.b16 %v1750
    %v3235 = vunpack.c.h.b16 %v1750
    %v3236 = vunpack.c.l.b16 %v1751
    %v3237 = vunpack.c.h.b16 %v1751
    %v3238 = vunpack.c.l.b16 %v1752
    %v3239 = vunpack.c.h.b16 %v1752
    %v3240 = vunpack.c.l.b16 %v1753
    %v3241 = vunpack.c.h.b16 %v1753
    %v3242 = vunpack.c.l.b16 %v1754
    %v3243 = vunpack.c.h.b16 %v1754
    %v3244 = vunpack.c.l.b16 %v1755
    %v3245 = vunpack.c.h.b16 %v1755
    %v3246 = vunpack.c.l.b16 %v1756
    %v3247 = vunpack.c.h.b16 %v1756
    %v3248 = vunpack.c.l.b16 %v1757
    %v3249 = vunpack.c.h.b16 %v1757
    %v3250 = vunpack.c.l.b16 %v1758
    %v3251 = vunpack.c.h.b16 %v1758
    %v3252 = vunpack.c.l.b16 %v1759
    %v3253 = vunpack.c.h.b16 %v1759
    %v3254 = vunpack.c.l.b16 %v1760
    %v3255 = vunpack.c.h.b16 %v1760
    %v3256 = vunpack.c.l.b16 %v1761
    %v3257 = vunpack.c.h.b16 %v1761
    %v3258 = vunpack.c.l.b16 %v1762
    %v3259 = vunpack.c.h.b16 %v1762
    %v3260 = vunpack.c.l.b16 %v1763
    %v3261 = vunpack.c.h.b16 %v1763
    %v3262 = vunpack.c.l.b16 %v1764
    %v3263 = vunpack.c.h.b16 %v1764
    %v3264 = vunpack.c.l.b16 %v1765
    %v3265 = vunpack.c.h.b16 %v1765
    %v3266 = vunpack.c.l.b16 %v1766
    %v3267 = vunpack.c.h.b16 %v1766
    %v3268 = vunpack.c.l.b16 %v1767
    %v3269 = vunpack.c.h.b16 %v1767
    %v3270 = vunpack.c.l.b16 %v1768
    %v3271 = vunpack.c.h.b16 %v1768
    %v3272 = vunpack.c.l.b16 %v1769
    %v3273 = vunpack.c.h.b16 %v1769
    %v3274 = vunpack.c.l.b16 %v1770
    %v3275 = vunpack.c.h.b16 %v1770
    %v3276 = vunpack.c.l.b16 %v1771
    %v3277 = vunpack.c.h.b16 %v1771
    %v3278 = vunpack.c.l.b16 %v1772
    %v3279 = vunpack.c.h.b16 %v1772
    %v3280 = vunpack.c.l.b16 %v1773
    %v3281 = vunpack.c.h.b16 %v1773
    %v3282 = vunpack.c.l.b16 %v1774
    %v3283 = vunpack.c.h.b16 %v1774
    %v3284 = vunpack.c.l.b16 %v1775
    %v3285 = vunpack.c.h.b16 %v1775
    %v3286 = vunpack.c.l.b16 %v1776
    %v3287 = vunpack.c.h.b16 %v1776
    %v3288 = vunpack.c.l.b16 %v1777
    %v3289 = vunpack.c.h.b16 %v1777
    %v3290 = vunpack.c.l.b16 %v1778
    %v3291 = vunpack.c.h.b16 %v1778
    %v3292 = vunpack.c.l.b16 %v1779
    %v3293 = vunpack.c.h.b16 %v1779
    %v3294 = vunpack.c.l.b16 %v1780
    %v3295 = vunpack.c.h.b16 %v1780
    %v3296 = vunpack.c.l.b16 %v1781
    %v3297 = vunpack.c.h.b16 %v1781
    %v3298 = vunpack.c.l.b16 %v1782
    %v3299 = vunpack.c.h.b16 %v1782
    %v3300 = vunpack.c.l.b16 %v1783
    %v3301 = vunpack.c.h.b16 %v1783
    %v3302 = vunpack.c.l.b16 %v1784
    %v3303 = vunpack.c.h.b16 %v1784
    %v3304 = vunpack.c.l.b16 %v1785
    %v3305 = vunpack.c.h.b16 %v1785
    %v3306 = vunpack.c.l.b16 %v1786
    %v3307 = vunpack.c.h.b16 %v1786
    %v3308 = vunpack.c.l.b16 %v1787
    %v3309 = vunpack.c.h.b16 %v1787
    %v3310 = vunpack.c.l.b16 %v1788
    %v3311 = vunpack.c.h.b16 %v1788
    %v3312 = vunpack.c.l.b16 %v1789
    %v3313 = vunpack.c.h.b16 %v1789
    %v3314 = vunpack.c.l.b16 %v1790
    %v3315 = vunpack.c.h.b16 %v1790
    %v3316 = vunpack.c.l.b16 %v1791
    %v3317 = vunpack.c.h.b16 %v1791
    %v3318 = vunpack.c.l.b16 %v1792
    %v3319 = vunpack.c.h.b16 %v1792
    %v3320 = vunpack.c.l.b16 %v1793
    %v3321 = vunpack.c.h.b16 %v1793
    %v3322 = vunpack.c.l.b16 %v1794
    %v3323 = vunpack.c.h.b16 %v1794
    %v3324 = vunpack.c.l.b16 %v1795
    %v3325 = vunpack.c.h.b16 %v1795
    %v3326 = vunpack.c.l.b16 %v1796
    %v3327 = vunpack.c.h.b16 %v1796
    %v3328 = vunpack.c.l.b16 %v1797
    %v3329 = vunpack.c.h.b16 %v1797
    %v3330 = vunpack.c.l.b16 %v1798
    %v3331 = vunpack.c.h.b16 %v1798
    %v3332 = vunpack.c.l.b16 %v1799
    %v3333 = vunpack.c.h.b16 %v1799
    %v3334 = vunpack.c.l.b16 %v1800
    %v3335 = vunpack.c.h.b16 %v1800
    %v3336 = vunpack.c.l.b16 %v1801
    %v3337 = vunpack.c.h.b16 %v1801
    %v3338 = vunpack.c.l.b16 %v1802
    %v3339 = vunpack.c.h.b16 %v1802
    %v3340 = vunpack.c.l.b16 %v1803
    %v3341 = vunpack.c.h.b16 %v1803
    %v3342 = vunpack.c.l.b16 %v1804
    %v3343 = vunpack.c.h.b16 %v1804
    %v3344 = vunpack.c.l.b16 %v1805
    %v3345 = vunpack.c.h.b16 %v1805
    %v3346 = vunpack.c.l.b16 %v1806
    %v3347 = vunpack.c.h.b16 %v1806
    %v3348 = vunpack.c.l.b16 %v1807
    %v3349 = vunpack.c.h.b16 %v1807
    %v3350 = vunpack.c.l.b16 %v1808
    %v3351 = vunpack.c.h.b16 %v1808
    %v3352 = vunpack.c.l.b16 %v1809
    %v3353 = vunpack.c.h.b16 %v1809
    %v3354 = vunpack.c.l.b16 %v1810
    %v3355 = vunpack.c.h.b16 %v1810
    %v3356 = vunpack.c.l.b16 %v1811
    %v3357 = vunpack.c.h.b16 %v1811
    %v3358 = vunpack.c.l.b16 %v1812
    %v3359 = vunpack.c.h.b16 %v1812
    %v3360 = vunpack.c.l.b16 %v1813
    %v3361 = vunpack.c.h.b16 %v1813
    %v3362 = vunpack.c.l.b16 %v1814
    %v3363 = vunpack.c.h.b16 %v1814
    %v3364 = vunpack.c.l.b16 %v1815
    %v3365 = vunpack.c.h.b16 %v1815
    %v3366 = vunpack.c.l.b16 %v1816
    %v3367 = vunpack.c.h.b16 %v1816
    %v3368 = vunpack.c.l.b16 %v1817
    %v3369 = vunpack.c.h.b16 %v1817
    %v3370 = vunpack.c.l.b16 %v1818
    %v3371 = vunpack.c.h.b16 %v1818
    %v3372 = vunpack.c.l.b16 %v1819
    %v3373 = vunpack.c.h.b16 %v1819
    %v3374 = vunpack.c.l.b16 %v1820
    %v3375 = vunpack.c.h.b16 %v1820
    %v3376 = vunpack.c.l.b16 %v1821
    %v3377 = vunpack.c.h.b16 %v1821
    %v3378 = vunpack.c.l.b16 %v1822
    %v3379 = vunpack.c.h.b16 %v1822
    %v3380 = vunpack.c.l.b16 %v1823
    %v3381 = vunpack.c.h.b16 %v1823
    %v3382 = vpack.c.b16 %v2362, %v2358
    %v3383 = vpack.c.b16 %v2363, %v2359
    %v3384 = vpack.c.b16 %v2364, %v2360
    %v3385 = vpack.c.b16 %v2365, %v2361
    %v3386 = vpack.c.b16 %v2370, %v2366
    %v3387 = vpack.c.b16 %v2371, %v2367
    %v3388 = vpack.c.b16 %v2372, %v2368
    %v3389 = vpack.c.b16 %v2373, %v2369
    %v3390 = vpack.c.b16 %v2378, %v2374
    %v3391 = vpack.c.b16 %v2379, %v2375
    %v3392 = vpack.c.b16 %v2380, %v2376
    %v3393 = vpack.c.b16 %v2381, %v2377
    %v3394 = vpack.c.b16 %v2386, %v2382
    %v3395 = vpack.c.b16 %v2387, %v2383
    %v3396 = vpack.c.b16 %v2388, %v2384
    %v3397 = vpack.c.b16 %v2389, %v2385
    %v3398 = vpack.c.b16 %v2394, %v2390
    %v3399 = vpack.c.b16 %v2395, %v2391
    %v3400 = vpack.c.b16 %v2396, %v2392
    %v3401 = vpack.c.b16 %v2397, %v2393
    %v3402 = vpack.c.b16 %v2402, %v2398
    %v3403 = vpack.c.b16 %v2403, %v2399
    %v3404 = vpack.c.b16 %v2404, %v2400
    %v3405 = vpack.c.b16 %v2405, %v2401
    %v3406 = vpack.c.b16 %v2410, %v2406
    %v3407 = vpack.c.b16 %v2411, %v2407
    %v3408 = vpack.c.b16 %v2412, %v2408
    %v3409 = vpack.c.b16 %v2413, %v2409
    %v3410 = vpack.c.b16 %v2418, %v2414
    %v3411 = vpack.c.b16 %v2419, %v2415
    %v3412 = vpack.c.b16 %v2420, %v2416
    %v3413 = vpack.c.b16 %v2421, %v2417
    %v3414 = vpack.c.b16 %v2426, %v2422
    %v3415 = vpack.c.b16 %v2427, %v2423
    %v3416 = vpack.c.b16 %v2428, %v2424
    %v3417 = vpack.c.b16 %v2429, %v2425
    %v3418 = vpack.c.b16 %v2434, %v2430
    %v3419 = vpack.c.b16 %v2435, %v2431
    %v3420 = vpack.c.b16 %v2436, %v2432
    %v3421 = vpack.c.b16 %v2437, %v2433
    %v3422 = vpack.c.b16 %v2442, %v2438
    %v3423 = vpack.c.b16 %v2443, %v2439
    %v3424 = vpack.c.b16 %v2444, %v2440
    %v3425 = vpack.c.b16 %v2445, %v2441
    %v3426 = vpack.c.b16 %v2450, %v2446
    %v3427 = vpack.c.b16 %v2451, %v2447
    %v3428 = vpack.c.b16 %v2452, %v2448
    %v3429 = vpack.c.b16 %v2453, %v2449
    %v3430 = vpack.c.b16 %v2458, %v2454
    %v3431 = vpack.c.b16 %v2459, %v2455
    %v3432 = vpack.c.b16 %v2460, %v2456
    %v3433 = vpack.c.b16 %v2461, %v2457
    %v3434 = vpack.c.b16 %v2466, %v2462
    %v3435 = vpack.c.b16 %v2467, %v2463
    %v3436 = vpack.c.b16 %v2468, %v2464
    %v3437 = vpack.c.b16 %v2469, %v2465
    %v3438 = vpack.c.b16 %v2474, %v2470
    %v3439 = vpack.c.b16 %v2475, %v2471
    %v3440 = vpack.c.b16 %v2476, %v2472
    %v3441 = vpack.c.b16 %v2477, %v2473
    %v3442 = vpack.c.b16 %v2482, %v2478
    %v3443 = vpack.c.b16 %v2483, %v2479
    %v3444 = vpack.c.b16 %v2484, %v2480
    %v3445 = vpack.c.b16 %v2485, %v2481
    %v3446 = vpack.c.b16 %v2490, %v2486
    %v3447 = vpack.c.b16 %v2491, %v2487
    %v3448 = vpack.c.b16 %v2492, %v2488
    %v3449 = vpack.c.b16 %v2493, %v2489
    %v3450 = vpack.c.b16 %v2498, %v2494
    %v3451 = vpack.c.b16 %v2499, %v2495
    %v3452 = vpack.c.b16 %v2500, %v2496
    %v3453 = vpack.c.b16 %v2501, %v2497
    %v3454 = vpack.c.b16 %v2506, %v2502
    %v3455 = vpack.c.b16 %v2507, %v2503
    %v3456 = vpack.c.b16 %v2508, %v2504
    %v3457 = vpack.c.b16 %v2509, %v2505
    %v3458 = vpack.c.b16 %v2514, %v2510
    %v3459 = vpack.c.b16 %v2515, %v2511
    %v3460 = vpack.c.b16 %v2516, %v2512
    %v3461 = vpack.c.b16 %v2517, %v2513
    %v3462 = vpack.c.b16 %v2522, %v2518
    %v3463 = vpack.c.b16 %v2523, %v2519
    %v3464 = vpack.c.b16 %v2524, %v2520
    %v3465 = vpack.c.b16 %v2525, %v2521
    %v3466 = vpack.c.b16 %v2530, %v2526
    %v3467 = vpack.c.b16 %v2531, %v2527
    %v3468 = vpack.c.b16 %v2532, %v2528
    %v3469 = vpack.c.b16 %v2533, %v2529
    %v3470 = vpack.c.b16 %v2538, %v2534
    %v3471 = vpack.c.b16 %v2539, %v2535
    %v3472 = vpack.c.b16 %v2540, %v2536
    %v3473 = vpack.c.b16 %v2541, %v2537
    %v3474 = vpack.c.b16 %v2546, %v2542
    %v3475 = vpack.c.b16 %v2547, %v2543
    %v3476 = vpack.c.b16 %v2548, %v2544
    %v3477 = vpack.c.b16 %v2549, %v2545
    %v3478 = vpack.c.b16 %v2554, %v2550
    %v3479 = vpack.c.b16 %v2555, %v2551
    %v3480 = vpack.c.b16 %v2556, %v2552
    %v3481 = vpack.c.b16 %v2557, %v2553
    %v3482 = vpack.c.b16 %v2562, %v2558
    %v3483 = vpack.c.b16 %v2563, %v2559
    %v3484 = vpack.c.b16 %v2564, %v2560
    %v3485 = vpack.c.b16 %v2565, %v2561
    %v3486 = vpack.c.b16 %v2570, %v2566
    %v3487 = vpack.c.b16 %v2571, %v2567
    %v3488 = vpack.c.b16 %v2572, %v2568
    %v3489 = vpack.c.b16 %v2573, %v2569
    %v3490 = vpack.c.b16 %v2578, %v2574
    %v3491 = vpack.c.b16 %v2579, %v2575
    %v3492 = vpack.c.b16 %v2580, %v2576
    %v3493 = vpack.c.b16 %v2581, %v2577
    %v3494 = vpack.c.b16 %v2586, %v2582
    %v3495 = vpack.c.b16 %v2587, %v2583
    %v3496 = vpack.c.b16 %v2588, %v2584
    %v3497 = vpack.c.b16 %v2589, %v2585
    %v3498 = vpack.c.b16 %v2594, %v2590
    %v3499 = vpack.c.b16 %v2595, %v2591
    %v3500 = vpack.c.b16 %v2596, %v2592
    %v3501 = vpack.c.b16 %v2597, %v2593
    %v3502 = vpack.c.b16 %v2602, %v2598
    %v3503 = vpack.c.b16 %v2603, %v2599
    %v3504 = vpack.c.b16 %v2604, %v2600
    %v3505 = vpack.c.b16 %v2605, %v2601
    %v3506 = vpack.c.b16 %v2610, %v2606
    %v3507 = vpack.c.b16 %v2611, %v2607
    %v3508 = vpack.c.b16 %v2612, %v2608
    %v3509 = vpack.c.b16 %v2613, %v2609
    %v3510 = vpack.c.b16 %v2618, %v2614
    %v3511 = vpack.c.b16 %v2619, %v2615
    %v3512 = vpack.c.b16 %v2620, %v2616
    %v3513 = vpack.c.b16 %v2621, %v2617
    %v3514 = vpack.c.b16 %v2626, %v2622
    %v3515 = vpack.c.b16 %v2627, %v2623
    %v3516 = vpack.c.b16 %v2628, %v2624
    %v3517 = vpack.c.b16 %v2629, %v2625
    %v3518 = vpack.c.b16 %v2634, %v2630
    %v3519 = vpack.c.b16 %v2635, %v2631
    %v3520 = vpack.c.b16 %v2636, %v2632
    %v3521 = vpack.c.b16 %v2637, %v2633
    %v3522 = vpack.c.b16 %v2642, %v2638
    %v3523 = vpack.c.b16 %v2643, %v2639
    %v3524 = vpack.c.b16 %v2644, %v2640
    %v3525 = vpack.c.b16 %v2645, %v2641
    %v3526 = vpack.c.b16 %v2650, %v2646
    %v3527 = vpack.c.b16 %v2651, %v2647
    %v3528 = vpack.c.b16 %v2652, %v2648
    %v3529 = vpack.c.b16 %v2653, %v2649
    %v3530 = vpack.c.b16 %v2658, %v2654
    %v3531 = vpack.c.b16 %v2659, %v2655
    %v3532 = vpack.c.b16 %v2660, %v2656
    %v3533 = vpack.c.b16 %v2661, %v2657
    %v3534 = vpack.c.b16 %v2666, %v2662
    %v3535 = vpack.c.b16 %v2667, %v2663
    %v3536 = vpack.c.b16 %v2668, %v2664
    %v3537 = vpack.c.b16 %v2669, %v2665
    %v3538 = vpack.c.b16 %v2674, %v2670
    %v3539 = vpack.c.b16 %v2675, %v2671
    %v3540 = vpack.c.b16 %v2676, %v2672
    %v3541 = vpack.c.b16 %v2677, %v2673
    %v3542 = vpack.c.b16 %v2682, %v2678
    %v3543 = vpack.c.b16 %v2683, %v2679
    %v3544 = vpack.c.b16 %v2684, %v2680
    %v3545 = vpack.c.b16 %v2685, %v2681
    %v3546 = vpack.c.b16 %v2690, %v2686
    %v3547 = vpack.c.b16 %v2691, %v2687
    %v3548 = vpack.c.b16 %v2692, %v2688
    %v3549 = vpack.c.b16 %v2693, %v2689
    %v3550 = vpack.c.b16 %v2698, %v2694
    %v3551 = vpack.c.b16 %v2699, %v2695
    %v3552 = vpack.c.b16 %v2700, %v2696
    %v3553 = vpack.c.b16 %v2701, %v2697
    %v3554 = vpack.c.b16 %v2706, %v2702
    %v3555 = vpack.c.b16 %v2707, %v2703
    %v3556 = vpack.c.b16 %v2708, %v2704
    %v3557 = vpack.c.b16 %v2709, %v2705
    %v3558 = vpack.c.b16 %v2714, %v2710
    %v3559 = vpack.c.b16 %v2715, %v2711
    %v3560 = vpack.c.b16 %v2716, %v2712
    %v3561 = vpack.c.b16 %v2717, %v2713
    %v3562 = vpack.c.b16 %v2722, %v2718
    %v3563 = vpack.c.b16 %v2723, %v2719
    %v3564 = vpack.c.b16 %v2724, %v2720
    %v3565 = vpack.c.b16 %v2725, %v2721
    %v3566 = vpack.c.b16 %v2730, %v2726
    %v3567 = vpack.c.b16 %v2731, %v2727
    %v3568 = vpack.c.b16 %v2732, %v2728
    %v3569 = vpack.c.b16 %v2733, %v2729
    %v3570 = vpack.c.b16 %v2738, %v2734
    %v3571 = vpack.c.b16 %v2739, %v2735
    %v3572 = vpack.c.b16 %v2740, %v2736
    %v3573 = vpack.c.b16 %v2741, %v2737
    %v3574 = vpack.c.b16 %v2746, %v2742
    %v3575 = vpack.c.b16 %v2747, %v2743
    %v3576 = vpack.c.b16 %v2748, %v2744
    %v3577 = vpack.c.b16 %v2749, %v2745
    %v3578 = vpack.c.b16 %v2754, %v2750
    %v3579 = vpack.c.b16 %v2755, %v2751
    %v3580 = vpack.c.b16 %v2756, %v2752
    %v3581 = vpack.c.b16 %v2757, %v2753
    %v3582 = vpack.c.b16 %v2762, %v2758
    %v3583 = vpack.c.b16 %v2763, %v2759
    %v3584 = vpack.c.b16 %v2764, %v2760
    %v3585 = vpack.c.b16 %v2765, %v2761
    %v3586 = vpack.c.b16 %v2770, %v2766
    %v3587 = vpack.c.b16 %v2771, %v2767
    %v3588 = vpack.c.b16 %v2772, %v2768
    %v3589 = vpack.c.b16 %v2773, %v2769
    %v3590 = vpack.c.b16 %v2778, %v2774
    %v3591 = vpack.c.b16 %v2779, %v2775
    %v3592 = vpack.c.b16 %v2780, %v2776
    %v3593 = vpack.c.b16 %v2781, %v2777
    %v3594 = vpack.c.b16 %v2786, %v2782
    %v3595 = vpack.c.b16 %v2787, %v2783
    %v3596 = vpack.c.b16 %v2788, %v2784
    %v3597 = vpack.c.b16 %v2789, %v2785
    %v3598 = vpack.c.b16 %v2794, %v2790
    %v3599 = vpack.c.b16 %v2795, %v2791
    %v3600 = vpack.c.b16 %v2796, %v2792
    %v3601 = vpack.c.b16 %v2797, %v2793
    %v3602 = vpack.c.b16 %v2802, %v2798
    %v3603 = vpack.c.b16 %v2803, %v2799
    %v3604 = vpack.c.b16 %v2804, %v2800
    %v3605 = vpack.c.b16 %v2805, %v2801
    %v3606 = vpack.c.b16 %v2810, %v2806
    %v3607 = vpack.c.b16 %v2811, %v2807
    %v3608 = vpack.c.b16 %v2812, %v2808
    %v3609 = vpack.c.b16 %v2813, %v2809
    %v3610 = vpack.c.b16 %v2818, %v2814
    %v3611 = vpack.c.b16 %v2819, %v2815
    %v3612 = vpack.c.b16 %v2820, %v2816
    %v3613 = vpack.c.b16 %v2821, %v2817
    %v3614 = vpack.c.b16 %v2826, %v2822
    %v3615 = vpack.c.b16 %v2827, %v2823
    %v3616 = vpack.c.b16 %v2828, %v2824
    %v3617 = vpack.c.b16 %v2829, %v2825
    %v3618 = vpack.c.b16 %v2834, %v2830
    %v3619 = vpack.c.b16 %v2835, %v2831
    %v3620 = vpack.c.b16 %v2836, %v2832
    %v3621 = vpack.c.b16 %v2837, %v2833
    %v3622 = vpack.c.b16 %v2842, %v2838
    %v3623 = vpack.c.b16 %v2843, %v2839
    %v3624 = vpack.c.b16 %v2844, %v2840
    %v3625 = vpack.c.b16 %v2845, %v2841
    %v3626 = vpack.c.b16 %v2850, %v2846
    %v3627 = vpack.c.b16 %v2851, %v2847
    %v3628 = vpack.c.b16 %v2852, %v2848
    %v3629 = vpack.c.b16 %v2853, %v2849
    %v3630 = vpack.c.b16 %v2858, %v2854
    %v3631 = vpack.c.b16 %v2859, %v2855
    %v3632 = vpack.c.b16 %v2860, %v2856
    %v3633 = vpack.c.b16 %v2861, %v2857
    %v3634 = vpack.c.b16 %v2866, %v2862
    %v3635 = vpack.c.b16 %v2867, %v2863
    %v3636 = vpack.c.b16 %v2868, %v2864
    %v3637 = vpack.c.b16 %v2869, %v2865
    %v3638 = vpack.c.b16 %v2874, %v2870
    %v3639 = vpack.c.b16 %v2875, %v2871
    %v3640 = vpack.c.b16 %v2876, %v2872
    %v3641 = vpack.c.b16 %v2877, %v2873
    %v3642 = vpack.c.b16 %v2882, %v2878
    %v3643 = vpack.c.b16 %v2883, %v2879
    %v3644 = vpack.c.b16 %v2884, %v2880
    %v3645 = vpack.c.b16 %v2885, %v2881
    %v3646 = vpack.c.b16 %v2890, %v2886
    %v3647 = vpack.c.b16 %v2891, %v2887
    %v3648 = vpack.c.b16 %v2892, %v2888
    %v3649 = vpack.c.b16 %v2893, %v2889
    %v3650 = vpack.c.b16 %v2898, %v2894
    %v3651 = vpack.c.b16 %v2899, %v2895
    %v3652 = vpack.c.b16 %v2900, %v2896
    %v3653 = vpack.c.b16 %v2901, %v2897
    %v3654 = vpack.c.b16 %v2906, %v2902
    %v3655 = vpack.c.b16 %v2907, %v2903
    %v3656 = vpack.c.b16 %v2908, %v2904
    %v3657 = vpack.c.b16 %v2909, %v2905
    %v3658 = vpack.c.b16 %v2914, %v2910
    %v3659 = vpack.c.b16 %v2915, %v2911
    %v3660 = vpack.c.b16 %v2916, %v2912
    %v3661 = vpack.c.b16 %v2917, %v2913
    %v3662 = vpack.c.b16 %v2922, %v2918
    %v3663 = vpack.c.b16 %v2923, %v2919
    %v3664 = vpack.c.b16 %v2924, %v2920
    %v3665 = vpack.c.b16 %v2925, %v2921
    %v3666 = vpack.c.b16 %v2930, %v2926
    %v3667 = vpack.c.b16 %v2931, %v2927
    %v3668 = vpack.c.b16 %v2932, %v2928
    %v3669 = vpack.c.b16 %v2933, %v2929
    %v3670 = vpack.c.b16 %v2938, %v2934
    %v3671 = vpack.c.b16 %v2939, %v2935
    %v3672 = vpack.c.b16 %v2940, %v2936
    %v3673 = vpack.c.b16 %v2941, %v2937
    %v3674 = vpack.c.b16 %v2946, %v2942
    %v3675 = vpack.c.b16 %v2947, %v2943
    %v3676 = vpack.c.b16 %v2948, %v2944
    %v3677 = vpack.c.b16 %v2949, %v2945
    %v3678 = vpack.c.b16 %v2954, %v2950
    %v3679 = vpack.c.b16 %v2955, %v2951
    %v3680 = vpack.c.b16 %v2956, %v2952
    %v3681 = vpack.c.b16 %v2957, %v2953
    %v3682 = vpack.c.b16 %v2962, %v2958
    %v3683 = vpack.c.b16 %v2963, %v2959
    %v3684 = vpack.c.b16 %v2964, %v2960
    %v3685 = vpack.c.b16 %v2965, %v2961
    %v3686 = vpack.c.b16 %v2970, %v2966
    %v3687 = vpack.c.b16 %v2971, %v2967
    %v3688 = vpack.c.b16 %v2972, %v2968
    %v3689 = vpack.c.b16 %v2973, %v2969
    %v3690 = vpack.c.b16 %v2978, %v2974
    %v3691 = vpack.c.b16 %v2979, %v2975
    %v3692 = vpack.c.b16 %v2980, %v2976
    %v3693 = vpack.c.b16 %v2981, %v2977
    %v3694 = vpack.c.b16 %v2986, %v2982
    %v3695 = vpack.c.b16 %v2987, %v2983
    %v3696 = vpack.c.b16 %v2988, %v2984
    %v3697 = vpack.c.b16 %v2989, %v2985
    %v3698 = vpack.c.b16 %v2994, %v2990
    %v3699 = vpack.c.b16 %v2995, %v2991
    %v3700 = vpack.c.b16 %v2996, %v2992
    %v3701 = vpack.c.b16 %v2997, %v2993
    %v3702 = vpack.c.b16 %v3002, %v2998
    %v3703 = vpack.c.b16 %v3003, %v2999
    %v3704 = vpack.c.b16 %v3004, %v3000
    %v3705 = vpack.c.b16 %v3005, %v3001
    %v3706 = vpack.c.b16 %v3010, %v3006
    %v3707 = vpack.c.b16 %v3011, %v3007
    %v3708 = vpack.c.b16 %v3012, %v3008
    %v3709 = vpack.c.b16 %v3013, %v3009
    %v3710 = vpack.c.b16 %v3018, %v3014
    %v3711 = vpack.c.b16 %v3019, %v3015
    %v3712 = vpack.c.b16 %v3020, %v3016
    %v3713 = vpack.c.b16 %v3021, %v3017
    %v3714 = vpack.c.b16 %v3026, %v3022
    %v3715 = vpack.c.b16 %v3027, %v3023
    %v3716 = vpack.c.b16 %v3028, %v3024
    %v3717 = vpack.c.b16 %v3029, %v3025
    %v3718 = vpack.c.b16 %v3034, %v3030
    %v3719 = vpack.c.b16 %v3035, %v3031
    %v3720 = vpack.c.b16 %v3036, %v3032
    %v3721 = vpack.c.b16 %v3037, %v3033
    %v3722 = vpack.c.b16 %v3042, %v3038
    %v3723 = vpack.c.b16 %v3043, %v3039
    %v3724 = vpack.c.b16 %v3044, %v3040
    %v3725 = vpack.c.b16 %v3045, %v3041
    %v3726 = vpack.c.b16 %v3050, %v3046
    %v3727 = vpack.c.b16 %v3051, %v3047
    %v3728 = vpack.c.b16 %v3052, %v3048
    %v3729 = vpack.c.b16 %v3053, %v3049
    %v3730 = vpack.c.b16 %v3058, %v3054
    %v3731 = vpack.c.b16 %v3059, %v3055
    %v3732 = vpack.c.b16 %v3060, %v3056
    %v3733 = vpack.c.b16 %v3061, %v3057
    %v3734 = vpack.c.b16 %v3066, %v3062
    %v3735 = vpack.c.b16 %v3067, %v3063
    %v3736 = vpack.c.b16 %v3068, %v3064
    %v3737 = vpack.c.b16 %v3069, %v3065
    %v3738 = vpack.c.b16 %v3074, %v3070
    %v3739 = vpack.c.b16 %v3075, %v3071
    %v3740 = vpack.c.b16 %v3076, %v3072
    %v3741 = vpack.c.b16 %v3077, %v3073
    %v3742 = vpack.c.b16 %v3082, %v3078
    %v3743 = vpack.c.b16 %v3083, %v3079
    %v3744 = vpack.c.b16 %v3084, %v3080
    %v3745 = vpack.c.b16 %v3085, %v3081
    %v3746 = vpack.c.b16 %v3090, %v3086
    %v3747 = vpack.c.b16 %v3091, %v3087
    %v3748 = vpack.c.b16 %v3092, %v3088
    %v3749 = vpack.c.b16 %v3093, %v3089
    %v3750 = vpack.c.b16 %v3098, %v3094
    %v3751 = vpack.c.b16 %v3099, %v3095
    %v3752 = vpack.c.b16 %v3100, %v3096
    %v3753 = vpack.c.b16 %v3101, %v3097
    %v3754 = vpack.c.b16 %v3106, %v3102
    %v3755 = vpack.c.b16 %v3107, %v3103
    %v3756 = vpack.c.b16 %v3108, %v3104
    %v3757 = vpack.c.b16 %v3109, %v3105
    %v3758 = vpack.c.b16 %v3114, %v3110
    %v3759 = vpack.c.b16 %v3115, %v3111
    %v3760 = vpack.c.b16 %v3116, %v3112
    %v3761 = vpack.c.b16 %v3117, %v3113
    %v3762 = vpack.c.b16 %v3122, %v3118
    %v3763 = vpack.c.b16 %v3123, %v3119
    %v3764 = vpack.c.b16 %v3124, %v3120
    %v3765 = vpack.c.b16 %v3125, %v3121
    %v3766 = vpack.c.b16 %v3130, %v3126
    %v3767 = vpack.c.b16 %v3131, %v3127
    %v3768 = vpack.c.b16 %v3132, %v3128
    %v3769 = vpack.c.b16 %v3133, %v3129
    %v3770 = vpack.c.b16 %v3138, %v3134
    %v3771 = vpack.c.b16 %v3139, %v3135
    %v3772 = vpack.c.b16 %v3140, %v3136
    %v3773 = vpack.c.b16 %v3141, %v3137
    %v3774 = vpack.c.b16 %v3146, %v3142
    %v3775 = vpack.c.b16 %v3147, %v3143
    %v3776 = vpack.c.b16 %v3148, %v3144
    %v3777 = vpack.c.b16 %v3149, %v3145
    %v3778 = vpack.c.b16 %v3154, %v3150
    %v3779 = vpack.c.b16 %v3155, %v3151
    %v3780 = vpack.c.b16 %v3156, %v3152
    %v3781 = vpack.c.b16 %v3157, %v3153
    %v3782 = vpack.c.b16 %v3162, %v3158
    %v3783 = vpack.c.b16 %v3163, %v3159
    %v3784 = vpack.c.b16 %v3164, %v3160
    %v3785 = vpack.c.b16 %v3165, %v3161
    %v3786 = vpack.c.b16 %v3170, %v3166
    %v3787 = vpack.c.b16 %v3171, %v3167
    %v3788 = vpack.c.b16 %v3172, %v3168
    %v3789 = vpack.c.b16 %v3173, %v3169
    %v3790 = vpack.c.b16 %v3178, %v3174
    %v3791 = vpack.c.b16 %v3179, %v3175
    %v3792 = vpack.c.b16 %v3180, %v3176
    %v3793 = vpack.c.b16 %v3181, %v3177
    %v3794 = vpack.c.b16 %v3186, %v3182
    %v3795 = vpack.c.b16 %v3187, %v3183
    %v3796 = vpack.c.b16 %v3188, %v3184
    %v3797 = vpack.c.b16 %v3189, %v3185
    %v3798 = vpack.c.b16 %v3194, %v3190
    %v3799 = vpack.c.b16 %v3195, %v3191
    %v3800 = vpack.c.b16 %v3196, %v3192
    %v3801 = vpack.c.b16 %v3197, %v3193
    %v3802 = vpack.c.b16 %v3202, %v3198
    %v3803 = vpack.c.b16 %v3203, %v3199
    %v3804 = vpack.c.b16 %v3204, %v3200
    %v3805 = vpack.c.b16 %v3205, %v3201
    %v3806 = vpack.c.b16 %v3210, %v3206
    %v3807 = vpack.c.b16 %v3211, %v3207
    %v3808 = vpack.c.b16 %v3212, %v3208
    %v3809 = vpack.c.b16 %v3213, %v3209
    %v3810 = vpack.c.b16 %v3218, %v3214
    %v3811 = vpack.c.b16 %v3219, %v3215
    %v3812 = vpack.c.b16 %v3220, %v3216
    %v3813 = vpack.c.b16 %v3221, %v3217
    %v3814 = vpack.c.b16 %v3226, %v3222
    %v3815 = vpack.c.b16 %v3227, %v3223
    %v3816 = vpack.c.b16 %v3228, %v3224
    %v3817 = vpack.c.b16 %v3229, %v3225
    %v3818 = vpack.c.b16 %v3234, %v3230
    %v3819 = vpack.c.b16 %v3235, %v3231
    %v3820 = vpack.c.b16 %v3236, %v3232
    %v3821 = vpack.c.b16 %v3237, %v3233
    %v3822 = vpack.c.b16 %v3242, %v3238
    %v3823 = vpack.c.b16 %v3243, %v3239
    %v3824 = vpack.c.b16 %v3244, %v3240
    %v3825 = vpack.c.b16 %v3245, %v3241
    %v3826 = vpack.c.b16 %v3250, %v3246
    %v3827 = vpack.c.b16 %v3251, %v3247
    %v3828 = vpack.c.b16 %v3252, %v3248
    %v3829 = vpack.c.b16 %v3253, %v3249
    %v3830 = vpack.c.b16 %v3258, %v3254
    %v3831 = vpack.c.b16 %v3259, %v3255
    %v3832 = vpack.c.b16 %v3260, %v3256
    %v3833 = vpack.c.b16 %v3261, %v3257
    %v3834 = vpack.c.b16 %v3266, %v3262
    %v3835 = vpack.c.b16 %v3267, %v3263
    %v3836 = vpack.c.b16 %v3268, %v3264
    %v3837 = vpack.c.b16 %v3269, %v3265
    %v3838 = vpack.c.b16 %v3274, %v3270
    %v3839 = vpack.c.b16 %v3275, %v3271
    %v3840 = vpack.c.b16 %v3276, %v3272
    %v3841 = vpack.c.b16 %v3277, %v3273
    %v3842 = vpack.c.b16 %v3282, %v3278
    %v3843 = vpack.c.b16 %v3283, %v3279
    %v3844 = vpack.c.b16 %v3284, %v3280
    %v3845 = vpack.c.b16 %v3285, %v3281
    %v3846 = vpack.c.b16 %v3290, %v3286
    %v3847 = vpack.c.b16 %v3291, %v3287
    %v3848 = vpack.c.b16 %v3292, %v3288
    %v3849 = vpack.c.b16 %v3293, %v3289
    %v3850 = vpack.c.b16 %v3298, %v3294
    %v3851 = vpack.c.b16 %v3299, %v3295
    %v3852 = vpack.c.b16 %v3300, %v3296
    %v3853 = vpack.c.b16 %v3301, %v3297
    %v3854 = vpack.c.b16 %v3306, %v3302
    %v3855 = vpack.c.b16 %v3307, %v3303
    %v3856 = vpack.c.b16 %v3308, %v3304
    %v3857 = vpack.c.b16 %v3309, %v3305
    %v3858 = vpack.c.b16 %v3314, %v3310
    %v3859 = vpack.c.b16 %v3315, %v3311
    %v3860 = vpack.c.b16 %v3316, %v3312
    %v3861 = vpack.c.b16 %v3317, %v3313
    %v3862 = vpack.c.b16 %v3322, %v3318
    %v3863 = vpack.c.b16 %v3323, %v3319
    %v3864 = vpack.c.b16 %v3324, %v3320
    %v3865 = vpack.c.b16 %v3325, %v3321
    %v3866 = vpack.c.b16 %v3330, %v3326
    %v3867 = vpack.c.b16 %v3331, %v3327
    %v3868 = vpack.c.b16 %v3332, %v3328
    %v3869 = vpack.c.b16 %v3333, %v3329
    %v3870 = vpack.c.b16 %v3338, %v3334
    %v3871 = vpack.c.b16 %v3339, %v3335
    %v3872 = vpack.c.b16 %v3340, %v3336
    %v3873 = vpack.c.b16 %v3341, %v3337
    %v3874 = vpack.c.b16 %v3346, %v3342
    %v3875 = vpack.c.b16 %v3347, %v3343
    %v3876 = vpack.c.b16 %v3348, %v3344
    %v3877 = vpack.c.b16 %v3349, %v3345
    %v3878 = vpack.c.b16 %v3354, %v3350
    %v3879 = vpack.c.b16 %v3355, %v3351
    %v3880 = vpack.c.b16 %v3356, %v3352
    %v3881 = vpack.c.b16 %v3357, %v3353
    %v3882 = vpack.c.b16 %v3362, %v3358
    %v3883 = vpack.c.b16 %v3363, %v3359
    %v3884 = vpack.c.b16 %v3364, %v3360
    %v3885 = vpack.c.b16 %v3365, %v3361
    %v3886 = vpack.c.b16 %v3370, %v3366
    %v3887 = vpack.c.b16 %v3371, %v3367
    %v3888 = vpack.c.b16 %v3372, %v3368
    %v3889 = vpack.c.b16 %v3373, %v3369
    %v3890 = vpack.c.b16 %v3378, %v3374
    %v3891 = vpack.c.b16 %v3379, %v3375
    %v3892 = vpack.c.b16 %v3380, %v3376
    %v3893 = vpack.c.b16 %v3381, %v3377
    %4406 = vmatprep.subr.bf16.mxu0 %v3411
    %4407 = vmatpush1.bf16.msra.mxu0 %v3410
    %4408 = vmatprep.subr.bf16.mxu0 %v3407
    %4409 = vmatpush1.bf16.msra.mxu0 %v3406
    %4410 = vmatprep.subr.bf16.mxu0 %v3403
    %4411 = vmatpush1.bf16.msra.mxu0 %v3402
    %4412 = vmatprep.subr.bf16.mxu0 %v3399
    %4413 = vmatpush1.bf16.msra.mxu0 %v3398
    %4414 = vmatprep.subr.bf16.mxu0 %v3395
    %4415 = vmatpush1.bf16.msra.mxu0 %v3394
    %4416 = vmatprep.subr.bf16.mxu0 %v3391
    %4417 = vmatpush1.bf16.msra.mxu0 %v3390
    %4418 = vmatprep.subr.bf16.mxu0 %v3387
    %4419 = vmatpush1.bf16.msra.mxu0 %v3386
    %4420 = vmatprep.subr.bf16.mxu0 %v3383
    %4421 = vmatpush1.bf16.msra.mxu0 %v3382
    %4422 = vmatprep.subr.bf16.mxu0 %v3443
    %4423 = vmatpush2.bf16.msra.mxu0 %v3442
    %4424 = vmatprep.subr.bf16.mxu0 %v3439
    %4425 = vmatpush2.bf16.msra.mxu0 %v3438
    %4426 = vmatprep.subr.bf16.mxu0 %v3435
    %4427 = vmatpush2.bf16.msra.mxu0 %v3434
    %4428 = vmatprep.subr.bf16.mxu0 %v3431
    %4429 = vmatpush2.bf16.msra.mxu0 %v3430
    %4430 = vmatprep.subr.bf16.mxu0 %v3427
    %4431 = vmatpush2.bf16.msra.mxu0 %v3426
    %4432 = vmatprep.subr.bf16.mxu0 %v3423
    %4433 = vmatpush2.bf16.msra.mxu0 %v3422
    %4434 = vmatprep.subr.bf16.mxu0 %v3419
    %4435 = vmatpush2.bf16.msra.mxu0 %v3418
    %4436 = vmatprep.subr.bf16.mxu0 %v3415
    %4437 = vmatpush2.bf16.msra.mxu0 %v3414
    %4438 = vmatprep.mubr.bf16.mxu0 %v1297
    %4439 = vmatmul.mubr.bf16.gmra.mxu0 %v1296
    %v4440 = vpop.f32.mrf.mxu0
    %v4441 = vadd.f32 %v1829, %v4440
    %v4442 = vpop.f32.mrf.mxu0
    %v4443 = vadd.f32 %v1833, %v4442
    %v4444 = vpop.f32.mrf.mxu0
    %v4445 = vpop.f32.mrf.mxu0
    %4446 = vdwg.mxu0
    %4447 = vmatprep.subr.bf16.mxu0 %v3475
    %4448 = vmatpush1.bf16.msra.mxu0 %v3474
    %4449 = vmatprep.subr.bf16.mxu0 %v3471
    %4450 = vmatpush1.bf16.msra.mxu0 %v3470
    %4451 = vmatprep.subr.bf16.mxu0 %v3467
    %4452 = vmatpush1.bf16.msra.mxu0 %v3466
    %4453 = vmatprep.subr.bf16.mxu0 %v3463
    %4454 = vmatpush1.bf16.msra.mxu0 %v3462
    %4455 = vmatprep.subr.bf16.mxu0 %v3459
    %4456 = vmatpush1.bf16.msra.mxu0 %v3458
    %4457 = vmatprep.subr.bf16.mxu0 %v3455
    %4458 = vmatpush1.bf16.msra.mxu0 %v3454
    %4459 = vmatprep.subr.bf16.mxu0 %v3451
    %4460 = vmatpush1.bf16.msra.mxu0 %v3450
    %4461 = vmatprep.subr.bf16.mxu0 %v3447
    %4462 = vmatpush1.bf16.msra.mxu0 %v3446
    %4463 = vmatprep.subr.bf16.mxu0 %v3507
    %4464 = vmatpush2.bf16.msra.mxu0 %v3506
    %4465 = vmatprep.subr.bf16.mxu0 %v3503
    %4466 = vmatpush2.bf16.msra.mxu0 %v3502
    %4467 = vmatprep.subr.bf16.mxu0 %v3499
    %4468 = vmatpush2.bf16.msra.mxu0 %v3498
    %4469 = vmatprep.subr.bf16.mxu0 %v3495
    %4470 = vmatpush2.bf16.msra.mxu0 %v3494
    %4471 = vmatprep.subr.bf16.mxu0 %v3491
    %4472 = vmatpush2.bf16.msra.mxu0 %v3490
    %4473 = vmatprep.subr.bf16.mxu0 %v3487
    %4474 = vmatpush2.bf16.msra.mxu0 %v3486
    %4475 = vmatprep.subr.bf16.mxu0 %v3483
    %4476 = vmatpush2.bf16.msra.mxu0 %v3482
    %4477 = vmatprep.subr.bf16.mxu0 %v3479
    %4478 = vmatpush2.bf16.msra.mxu0 %v3478
    %4479 = vmatprep.mubr.bf16.mxu0 %v1299
    %4480 = vmatmul.mubr.bf16.gmra.mxu0 %v1298
    %v4481 = vpop.f32.mrf.mxu0
    %v4482 = vadd.f32 %v4441, %v4481
    %v4483 = vpop.f32.mrf.mxu0
    %v4484 = vadd.f32 %v4443, %v4483
    %v4485 = vpop.f32.mrf.mxu0
    %v4486 = vpop.f32.mrf.mxu0
    %4487 = vdwg.mxu0
    %4488 = vmatprep.subr.bf16.mxu0 %v3539
    %4489 = vmatpush1.bf16.msra.mxu0 %v3538
    %4490 = vmatprep.subr.bf16.mxu0 %v3535
    %4491 = vmatpush1.bf16.msra.mxu0 %v3534
    %4492 = vmatprep.subr.bf16.mxu0 %v3531
    %4493 = vmatpush1.bf16.msra.mxu0 %v3530
    %4494 = vmatprep.subr.bf16.mxu0 %v3527
    %4495 = vmatpush1.bf16.msra.mxu0 %v3526
    %4496 = vmatprep.subr.bf16.mxu0 %v3523
    %4497 = vmatpush1.bf16.msra.mxu0 %v3522
    %4498 = vmatprep.subr.bf16.mxu0 %v3519
    %4499 = vmatpush1.bf16.msra.mxu0 %v3518
    %4500 = vmatprep.subr.bf16.mxu0 %v3515
    %4501 = vmatpush1.bf16.msra.mxu0 %v3514
    %4502 = vmatprep.subr.bf16.mxu0 %v3511
    %4503 = vmatpush1.bf16.msra.mxu0 %v3510
    %4504 = vmatprep.subr.bf16.mxu0 %v3571
    %4505 = vmatpush2.bf16.msra.mxu0 %v3570
    %4506 = vmatprep.subr.bf16.mxu0 %v3567
    %4507 = vmatpush2.bf16.msra.mxu0 %v3566
    %4508 = vmatprep.subr.bf16.mxu0 %v3563
    %4509 = vmatpush2.bf16.msra.mxu0 %v3562
    %4510 = vmatprep.subr.bf16.mxu0 %v3559
    %4511 = vmatpush2.bf16.msra.mxu0 %v3558
    %4512 = vmatprep.subr.bf16.mxu0 %v3555
    %4513 = vmatpush2.bf16.msra.mxu0 %v3554
    %4514 = vmatprep.subr.bf16.mxu0 %v3551
    %4515 = vmatpush2.bf16.msra.mxu0 %v3550
    %4516 = vmatprep.subr.bf16.mxu0 %v3547
    %4517 = vmatpush2.bf16.msra.mxu0 %v3546
    %4518 = vmatprep.subr.bf16.mxu0 %v3543
    %4519 = vmatpush2.bf16.msra.mxu0 %v3542
    %4520 = vmatprep.mubr.bf16.mxu0 %v1301
    %4521 = vmatmul.mubr.bf16.gmra.mxu0 %v1300
    %v4522 = vpop.f32.mrf.mxu0
    %v4523 = vadd.f32 %v4482, %v4522
    %v4524 = vpop.f32.mrf.mxu0
    %v4525 = vadd.f32 %v4484, %v4524
    %v4526 = vpop.f32.mrf.mxu0
    %v4527 = vpop.f32.mrf.mxu0
    %4528 = vdwg.mxu0
    %4529 = vmatprep.subr.bf16.mxu0 %v3603
    %4530 = vmatpush1.bf16.msra.mxu0 %v3602
    %4531 = vmatprep.subr.bf16.mxu0 %v3599
    %4532 = vmatpush1.bf16.msra.mxu0 %v3598
    %4533 = vmatprep.subr.bf16.mxu0 %v3595
    %4534 = vmatpush1.bf16.msra.mxu0 %v3594
    %4535 = vmatprep.subr.bf16.mxu0 %v3591
    %4536 = vmatpush1.bf16.msra.mxu0 %v3590
    %4537 = vmatprep.subr.bf16.mxu0 %v3587
    %4538 = vmatpush1.bf16.msra.mxu0 %v3586
    %4539 = vmatprep.subr.bf16.mxu0 %v3583
    %4540 = vmatpush1.bf16.msra.mxu0 %v3582
    %4541 = vmatprep.subr.bf16.mxu0 %v3579
    %4542 = vmatpush1.bf16.msra.mxu0 %v3578
    %4543 = vmatprep.subr.bf16.mxu0 %v3575
    %4544 = vmatpush1.bf16.msra.mxu0 %v3574
    %4545 = vmatprep.subr.bf16.mxu0 %v3635
    %4546 = vmatpush2.bf16.msra.mxu0 %v3634
    %4547 = vmatprep.subr.bf16.mxu0 %v3631
    %4548 = vmatpush2.bf16.msra.mxu0 %v3630
    %4549 = vmatprep.subr.bf16.mxu0 %v3627
    %4550 = vmatpush2.bf16.msra.mxu0 %v3626
    %4551 = vmatprep.subr.bf16.mxu0 %v3623
    %4552 = vmatpush2.bf16.msra.mxu0 %v3622
    %4553 = vmatprep.subr.bf16.mxu0 %v3619
    %4554 = vmatpush2.bf16.msra.mxu0 %v3618
    %4555 = vmatprep.subr.bf16.mxu0 %v3615
    %4556 = vmatpush2.bf16.msra.mxu0 %v3614
    %4557 = vmatprep.subr.bf16.mxu0 %v3611
    %4558 = vmatpush2.bf16.msra.mxu0 %v3610
    %4559 = vmatprep.subr.bf16.mxu0 %v3607
    %4560 = vmatpush2.bf16.msra.mxu0 %v3606
    %4561 = vmatprep.mubr.bf16.mxu0 %v1303
    %4562 = vmatmul.mubr.bf16.gmra.mxu0 %v1302
    %v4563 = vpop.f32.mrf.mxu0
    %v4564 = vadd.f32 %v4523, %v4563
    %v4565 = vpop.f32.mrf.mxu0
    %v4566 = vadd.f32 %v4525, %v4565
    %v4567 = vpop.f32.mrf.mxu0
    %v4568 = vpop.f32.mrf.mxu0
    %4569 = vdwg.mxu0
    %4570 = vmatprep.subr.bf16.mxu0 %v3667
    %4571 = vmatpush1.bf16.msra.mxu0 %v3666
    %4572 = vmatprep.subr.bf16.mxu0 %v3663
    %4573 = vmatpush1.bf16.msra.mxu0 %v3662
    %4574 = vmatprep.subr.bf16.mxu0 %v3659
    %4575 = vmatpush1.bf16.msra.mxu0 %v3658
    %4576 = vmatprep.subr.bf16.mxu0 %v3655
    %4577 = vmatpush1.bf16.msra.mxu0 %v3654
    %4578 = vmatprep.subr.bf16.mxu0 %v3651
    %4579 = vmatpush1.bf16.msra.mxu0 %v3650
    %4580 = vmatprep.subr.bf16.mxu0 %v3647
    %4581 = vmatpush1.bf16.msra.mxu0 %v3646
    %4582 = vmatprep.subr.bf16.mxu0 %v3643
    %4583 = vmatpush1.bf16.msra.mxu0 %v3642
    %4584 = vmatprep.subr.bf16.mxu0 %v3639
    %4585 = vmatpush1.bf16.msra.mxu0 %v3638
    %4586 = vmatprep.subr.bf16.mxu0 %v3699
    %4587 = vmatpush2.bf16.msra.mxu0 %v3698
    %4588 = vmatprep.subr.bf16.mxu0 %v3695
    %4589 = vmatpush2.bf16.msra.mxu0 %v3694
    %4590 = vmatprep.subr.bf16.mxu0 %v3691
    %4591 = vmatpush2.bf16.msra.mxu0 %v3690
    %4592 = vmatprep.subr.bf16.mxu0 %v3687
    %4593 = vmatpush2.bf16.msra.mxu0 %v3686
    %4594 = vmatprep.subr.bf16.mxu0 %v3683
    %4595 = vmatpush2.bf16.msra.mxu0 %v3682
    %4596 = vmatprep.subr.bf16.mxu0 %v3679
    %4597 = vmatpush2.bf16.msra.mxu0 %v3678
    %4598 = vmatprep.subr.bf16.mxu0 %v3675
    %4599 = vmatpush2.bf16.msra.mxu0 %v3674
    %4600 = vmatprep.subr.bf16.mxu0 %v3671
    %4601 = vmatpush2.bf16.msra.mxu0 %v3670
    %4602 = vmatprep.mubr.bf16.mxu0 %v1305
    %4603 = vmatmul.mubr.bf16.gmra.mxu0 %v1304
    %v4604 = vpop.f32.mrf.mxu0
    %v4605 = vadd.f32 %v4564, %v4604
    %v4606 = vpop.f32.mrf.mxu0
    %v4607 = vadd.f32 %v4566, %v4606
    %v4608 = vpop.f32.mrf.mxu0
    %v4609 = vpop.f32.mrf.mxu0
    %4610 = vdwg.mxu0
    %4611 = vmatprep.subr.bf16.mxu0 %v3731
    %4612 = vmatpush1.bf16.msra.mxu0 %v3730
    %4613 = vmatprep.subr.bf16.mxu0 %v3727
    %4614 = vmatpush1.bf16.msra.mxu0 %v3726
    %4615 = vmatprep.subr.bf16.mxu0 %v3723
    %4616 = vmatpush1.bf16.msra.mxu0 %v3722
    %4617 = vmatprep.subr.bf16.mxu0 %v3719
    %4618 = vmatpush1.bf16.msra.mxu0 %v3718
    %4619 = vmatprep.subr.bf16.mxu0 %v3715
    %4620 = vmatpush1.bf16.msra.mxu0 %v3714
    %4621 = vmatprep.subr.bf16.mxu0 %v3711
    %4622 = vmatpush1.bf16.msra.mxu0 %v3710
    %4623 = vmatprep.subr.bf16.mxu0 %v3707
    %4624 = vmatpush1.bf16.msra.mxu0 %v3706
    %4625 = vmatprep.subr.bf16.mxu0 %v3703
    %4626 = vmatpush1.bf16.msra.mxu0 %v3702
    %4627 = vmatprep.subr.bf16.mxu0 %v3763
    %4628 = vmatpush2.bf16.msra.mxu0 %v3762
    %4629 = vmatprep.subr.bf16.mxu0 %v3759
    %4630 = vmatpush2.bf16.msra.mxu0 %v3758
    %4631 = vmatprep.subr.bf16.mxu0 %v3755
    %4632 = vmatpush2.bf16.msra.mxu0 %v3754
    %4633 = vmatprep.subr.bf16.mxu0 %v3751
    %4634 = vmatpush2.bf16.msra.mxu0 %v3750
    %4635 = vmatprep.subr.bf16.mxu0 %v3747
    %4636 = vmatpush2.bf16.msra.mxu0 %v3746
    %4637 = vmatprep.subr.bf16.mxu0 %v3743
    %4638 = vmatpush2.bf16.msra.mxu0 %v3742
    %4639 = vmatprep.subr.bf16.mxu0 %v3739
    %4640 = vmatpush2.bf16.msra.mxu0 %v3738
    %4641 = vmatprep.subr.bf16.mxu0 %v3735
    %4642 = vmatpush2.bf16.msra.mxu0 %v3734
    %4643 = vmatprep.mubr.bf16.mxu0 %v1307
    %4644 = vmatmul.mubr.bf16.gmra.mxu0 %v1306
    %v4645 = vpop.f32.mrf.mxu0
    %v4646 = vadd.f32 %v4605, %v4645
    %v4647 = vpop.f32.mrf.mxu0
    %v4648 = vadd.f32 %v4607, %v4647
    %v4649 = vpop.f32.mrf.mxu0
    %v4650 = vpop.f32.mrf.mxu0
    %4651 = vdwg.mxu0
    %4652 = vmatprep.subr.bf16.mxu0 %v3795
    %4653 = vmatpush1.bf16.msra.mxu0 %v3794
    %4654 = vmatprep.subr.bf16.mxu0 %v3791
    %4655 = vmatpush1.bf16.msra.mxu0 %v3790
    %4656 = vmatprep.subr.bf16.mxu0 %v3787
    %4657 = vmatpush1.bf16.msra.mxu0 %v3786
    %4658 = vmatprep.subr.bf16.mxu0 %v3783
    %4659 = vmatpush1.bf16.msra.mxu0 %v3782
    %4660 = vmatprep.subr.bf16.mxu0 %v3779
    %4661 = vmatpush1.bf16.msra.mxu0 %v3778
    %4662 = vmatprep.subr.bf16.mxu0 %v3775
    %4663 = vmatpush1.bf16.msra.mxu0 %v3774
    %4664 = vmatprep.subr.bf16.mxu0 %v3771
    %4665 = vmatpush1.bf16.msra.mxu0 %v3770
    %4666 = vmatprep.subr.bf16.mxu0 %v3767
    %4667 = vmatpush1.bf16.msra.mxu0 %v3766
    %4668 = vmatprep.subr.bf16.mxu0 %v3827
    %4669 = vmatpush2.bf16.msra.mxu0 %v3826
    %4670 = vmatprep.subr.bf16.mxu0 %v3823
    %4671 = vmatpush2.bf16.msra.mxu0 %v3822
    %4672 = vmatprep.subr.bf16.mxu0 %v3819
    %4673 = vmatpush2.bf16.msra.mxu0 %v3818
    %4674 = vmatprep.subr.bf16.mxu0 %v3815
    %4675 = vmatpush2.bf16.msra.mxu0 %v3814
    %4676 = vmatprep.subr.bf16.mxu0 %v3811
    %4677 = vmatpush2.bf16.msra.mxu0 %v3810
    %4678 = vmatprep.subr.bf16.mxu0 %v3807
    %4679 = vmatpush2.bf16.msra.mxu0 %v3806
    %4680 = vmatprep.subr.bf16.mxu0 %v3803
    %4681 = vmatpush2.bf16.msra.mxu0 %v3802
    %4682 = vmatprep.subr.bf16.mxu0 %v3799
    %4683 = vmatpush2.bf16.msra.mxu0 %v3798
    %4684 = vmatprep.mubr.bf16.mxu0 %v1309
    %4685 = vmatmul.mubr.bf16.gmra.mxu0 %v1308
    %v4686 = vpop.f32.mrf.mxu0
    %v4687 = vadd.f32 %v4646, %v4686
    %v4688 = vpop.f32.mrf.mxu0
    %v4689 = vadd.f32 %v4648, %v4688
    %v4690 = vpop.f32.mrf.mxu0
    %v4691 = vpop.f32.mrf.mxu0
    %4692 = vdwg.mxu0
    %4693 = vmatprep.subr.bf16.mxu0 %v3859
    %4694 = vmatpush1.bf16.msra.mxu0 %v3858
    %4695 = vmatprep.subr.bf16.mxu0 %v3855
    %4696 = vmatpush1.bf16.msra.mxu0 %v3854
    %4697 = vmatprep.subr.bf16.mxu0 %v3851
    %4698 = vmatpush1.bf16.msra.mxu0 %v3850
    %4699 = vmatprep.subr.bf16.mxu0 %v3847
    %4700 = vmatpush1.bf16.msra.mxu0 %v3846
    %4701 = vmatprep.subr.bf16.mxu0 %v3843
    %4702 = vmatpush1.bf16.msra.mxu0 %v3842
    %4703 = vmatprep.subr.bf16.mxu0 %v3839
    %4704 = vmatpush1.bf16.msra.mxu0 %v3838
    %4705 = vmatprep.subr.bf16.mxu0 %v3835
    %4706 = vmatpush1.bf16.msra.mxu0 %v3834
    %4707 = vmatprep.subr.bf16.mxu0 %v3831
    %4708 = vmatpush1.bf16.msra.mxu0 %v3830
    %4709 = vmatprep.subr.bf16.mxu0 %v3891
    %4710 = vmatpush2.bf16.msra.mxu0 %v3890
    %4711 = vmatprep.subr.bf16.mxu0 %v3887
    %4712 = vmatpush2.bf16.msra.mxu0 %v3886
    %4713 = vmatprep.subr.bf16.mxu0 %v3883
    %4714 = vmatpush2.bf16.msra.mxu0 %v3882
    %4715 = vmatprep.subr.bf16.mxu0 %v3879
    %4716 = vmatpush2.bf16.msra.mxu0 %v3878
    %4717 = vmatprep.subr.bf16.mxu0 %v3875
    %4718 = vmatpush2.bf16.msra.mxu0 %v3874
    %4719 = vmatprep.subr.bf16.mxu0 %v3871
    %4720 = vmatpush2.bf16.msra.mxu0 %v3870
    %4721 = vmatprep.subr.bf16.mxu0 %v3867
    %4722 = vmatpush2.bf16.msra.mxu0 %v3866
    %4723 = vmatprep.subr.bf16.mxu0 %v3863
    %4724 = vmatpush2.bf16.msra.mxu0 %v3862
    %4725 = vmatprep.mubr.bf16.mxu0 %v1311
    %4726 = vmatmul.mubr.bf16.gmra.mxu0 %v1310
    %v4727 = vpop.f32.mrf.mxu0
    %v4728 = vadd.f32 %v4687, %v4727
    %v4729 = vpop.f32.mrf.mxu0
    %v4730 = vadd.f32 %v4689, %v4729
    %v4731 = vpop.f32.mrf.mxu0
    %v4732 = vpop.f32.mrf.mxu0
    %4733 = vdwg.mxu0
    %4734 = vmatprep.subr.bf16.mxu0 %v3413
    %4735 = vmatpush1.bf16.msra.mxu0 %v3412
    %4736 = vmatprep.subr.bf16.mxu0 %v3409
    %4737 = vmatpush1.bf16.msra.mxu0 %v3408
    %4738 = vmatprep.subr.bf16.mxu0 %v3405
    %4739 = vmatpush1.bf16.msra.mxu0 %v3404
    %4740 = vmatprep.subr.bf16.mxu0 %v3401
    %4741 = vmatpush1.bf16.msra.mxu0 %v3400
    %4742 = vmatprep.subr.bf16.mxu0 %v3397
    %4743 = vmatpush1.bf16.msra.mxu0 %v3396
    %4744 = vmatprep.subr.bf16.mxu0 %v3393
    %4745 = vmatpush1.bf16.msra.mxu0 %v3392
    %4746 = vmatprep.subr.bf16.mxu0 %v3389
    %4747 = vmatpush1.bf16.msra.mxu0 %v3388
    %4748 = vmatprep.subr.bf16.mxu0 %v3385
    %4749 = vmatpush1.bf16.msra.mxu0 %v3384
    %4750 = vmatprep.subr.bf16.mxu0 %v3445
    %4751 = vmatpush2.bf16.msra.mxu0 %v3444
    %4752 = vmatprep.subr.bf16.mxu0 %v3441
    %4753 = vmatpush2.bf16.msra.mxu0 %v3440
    %4754 = vmatprep.subr.bf16.mxu0 %v3437
    %4755 = vmatpush2.bf16.msra.mxu0 %v3436
    %4756 = vmatprep.subr.bf16.mxu0 %v3433
    %4757 = vmatpush2.bf16.msra.mxu0 %v3432
    %4758 = vmatprep.subr.bf16.mxu0 %v3429
    %4759 = vmatpush2.bf16.msra.mxu0 %v3428
    %4760 = vmatprep.subr.bf16.mxu0 %v3425
    %4761 = vmatpush2.bf16.msra.mxu0 %v3424
    %4762 = vmatprep.subr.bf16.mxu0 %v3421
    %4763 = vmatpush2.bf16.msra.mxu0 %v3420
    %4764 = vmatprep.subr.bf16.mxu0 %v3417
    %4765 = vmatpush2.bf16.msra.mxu0 %v3416
    %4766 = vmatprep.mubr.bf16.mxu0 %v1297
    %4767 = vmatmul.mubr.bf16.gmra.mxu0 %v1296
    %v4768 = vpop.f32.mrf.mxu0
    %v4769 = vadd.f32 %v1837, %v4768
    %v4770 = vpop.f32.mrf.mxu0
    %v4771 = vadd.f32 %v1841, %v4770
    %v4772 = vpop.f32.mrf.mxu0
    %v4773 = vpop.f32.mrf.mxu0
    %4774 = vdwg.mxu0
    %4775 = vmatprep.subr.bf16.mxu0 %v3477
    %4776 = vmatpush1.bf16.msra.mxu0 %v3476
    %4777 = vmatprep.subr.bf16.mxu0 %v3473
    %4778 = vmatpush1.bf16.msra.mxu0 %v3472
    %4779 = vmatprep.subr.bf16.mxu0 %v3469
    %4780 = vmatpush1.bf16.msra.mxu0 %v3468
    %4781 = vmatprep.subr.bf16.mxu0 %v3465
    %4782 = vmatpush1.bf16.msra.mxu0 %v3464
    %4783 = vmatprep.subr.bf16.mxu0 %v3461
    %4784 = vmatpush1.bf16.msra.mxu0 %v3460
    %4785 = vmatprep.subr.bf16.mxu0 %v3457
    %4786 = vmatpush1.bf16.msra.mxu0 %v3456
    %4787 = vmatprep.subr.bf16.mxu0 %v3453
    %4788 = vmatpush1.bf16.msra.mxu0 %v3452
    %4789 = vmatprep.subr.bf16.mxu0 %v3449
    %4790 = vmatpush1.bf16.msra.mxu0 %v3448
    %4791 = vmatprep.subr.bf16.mxu0 %v3509
    %4792 = vmatpush2.bf16.msra.mxu0 %v3508
    %4793 = vmatprep.subr.bf16.mxu0 %v3505
    %4794 = vmatpush2.bf16.msra.mxu0 %v3504
    %4795 = vmatprep.subr.bf16.mxu0 %v3501
    %4796 = vmatpush2.bf16.msra.mxu0 %v3500
    %4797 = vmatprep.subr.bf16.mxu0 %v3497
    %4798 = vmatpush2.bf16.msra.mxu0 %v3496
    %4799 = vmatprep.subr.bf16.mxu0 %v3493
    %4800 = vmatpush2.bf16.msra.mxu0 %v3492
    %4801 = vmatprep.subr.bf16.mxu0 %v3489
    %4802 = vmatpush2.bf16.msra.mxu0 %v3488
    %4803 = vmatprep.subr.bf16.mxu0 %v3485
    %4804 = vmatpush2.bf16.msra.mxu0 %v3484
    %4805 = vmatprep.subr.bf16.mxu0 %v3481
    %4806 = vmatpush2.bf16.msra.mxu0 %v3480
    %4807 = vmatprep.mubr.bf16.mxu0 %v1299
    %4808 = vmatmul.mubr.bf16.gmra.mxu0 %v1298
    %v4809 = vpop.f32.mrf.mxu0
    %v4810 = vadd.f32 %v4769, %v4809
    %v4811 = vpop.f32.mrf.mxu0
    %v4812 = vadd.f32 %v4771, %v4811
    %v4813 = vpop.f32.mrf.mxu0
    %v4814 = vpop.f32.mrf.mxu0
    %4815 = vdwg.mxu0
    %4816 = vmatprep.subr.bf16.mxu0 %v3541
    %4817 = vmatpush1.bf16.msra.mxu0 %v3540
    %4818 = vmatprep.subr.bf16.mxu0 %v3537
    %4819 = vmatpush1.bf16.msra.mxu0 %v3536
    %4820 = vmatprep.subr.bf16.mxu0 %v3533
    %4821 = vmatpush1.bf16.msra.mxu0 %v3532
    %4822 = vmatprep.subr.bf16.mxu0 %v3529
    %4823 = vmatpush1.bf16.msra.mxu0 %v3528
    %4824 = vmatprep.subr.bf16.mxu0 %v3525
    %4825 = vmatpush1.bf16.msra.mxu0 %v3524
    %4826 = vmatprep.subr.bf16.mxu0 %v3521
    %4827 = vmatpush1.bf16.msra.mxu0 %v3520
    %4828 = vmatprep.subr.bf16.mxu0 %v3517
    %4829 = vmatpush1.bf16.msra.mxu0 %v3516
    %4830 = vmatprep.subr.bf16.mxu0 %v3513
    %4831 = vmatpush1.bf16.msra.mxu0 %v3512
    %4832 = vmatprep.subr.bf16.mxu0 %v3573
    %4833 = vmatpush2.bf16.msra.mxu0 %v3572
    %4834 = vmatprep.subr.bf16.mxu0 %v3569
    %4835 = vmatpush2.bf16.msra.mxu0 %v3568
    %4836 = vmatprep.subr.bf16.mxu0 %v3565
    %4837 = vmatpush2.bf16.msra.mxu0 %v3564
    %4838 = vmatprep.subr.bf16.mxu0 %v3561
    %4839 = vmatpush2.bf16.msra.mxu0 %v3560
    %4840 = vmatprep.subr.bf16.mxu0 %v3557
    %4841 = vmatpush2.bf16.msra.mxu0 %v3556
    %4842 = vmatprep.subr.bf16.mxu0 %v3553
    %4843 = vmatpush2.bf16.msra.mxu0 %v3552
    %4844 = vmatprep.subr.bf16.mxu0 %v3549
    %4845 = vmatpush2.bf16.msra.mxu0 %v3548
    %4846 = vmatprep.subr.bf16.mxu0 %v3545
    %4847 = vmatpush2.bf16.msra.mxu0 %v3544
    %4848 = vmatprep.mubr.bf16.mxu0 %v1301
    %4849 = vmatmul.mubr.bf16.gmra.mxu0 %v1300
    %v4850 = vpop.f32.mrf.mxu0
    %v4851 = vadd.f32 %v4810, %v4850
    %v4852 = vpop.f32.mrf.mxu0
    %v4853 = vadd.f32 %v4812, %v4852
    %v4854 = vpop.f32.mrf.mxu0
    %v4855 = vpop.f32.mrf.mxu0
    %4856 = vdwg.mxu0
    %4857 = vmatprep.subr.bf16.mxu0 %v3605
    %4858 = vmatpush1.bf16.msra.mxu0 %v3604
    %4859 = vmatprep.subr.bf16.mxu0 %v3601
    %4860 = vmatpush1.bf16.msra.mxu0 %v3600
    %4861 = vmatprep.subr.bf16.mxu0 %v3597
    %4862 = vmatpush1.bf16.msra.mxu0 %v3596
    %4863 = vmatprep.subr.bf16.mxu0 %v3593
    %4864 = vmatpush1.bf16.msra.mxu0 %v3592
    %4865 = vmatprep.subr.bf16.mxu0 %v3589
    %4866 = vmatpush1.bf16.msra.mxu0 %v3588
    %4867 = vmatprep.subr.bf16.mxu0 %v3585
    %4868 = vmatpush1.bf16.msra.mxu0 %v3584
    %4869 = vmatprep.subr.bf16.mxu0 %v3581
    %4870 = vmatpush1.bf16.msra.mxu0 %v3580
    %4871 = vmatprep.subr.bf16.mxu0 %v3577
    %4872 = vmatpush1.bf16.msra.mxu0 %v3576
    %4873 = vmatprep.subr.bf16.mxu0 %v3637
    %4874 = vmatpush2.bf16.msra.mxu0 %v3636
    %4875 = vmatprep.subr.bf16.mxu0 %v3633
    %4876 = vmatpush2.bf16.msra.mxu0 %v3632
    %4877 = vmatprep.subr.bf16.mxu0 %v3629
    %4878 = vmatpush2.bf16.msra.mxu0 %v3628
    %4879 = vmatprep.subr.bf16.mxu0 %v3625
    %4880 = vmatpush2.bf16.msra.mxu0 %v3624
    %4881 = vmatprep.subr.bf16.mxu0 %v3621
    %4882 = vmatpush2.bf16.msra.mxu0 %v3620
    %4883 = vmatprep.subr.bf16.mxu0 %v3617
    %4884 = vmatpush2.bf16.msra.mxu0 %v3616
    %4885 = vmatprep.subr.bf16.mxu0 %v3613
    %4886 = vmatpush2.bf16.msra.mxu0 %v3612
    %4887 = vmatprep.subr.bf16.mxu0 %v3609
    %4888 = vmatpush2.bf16.msra.mxu0 %v3608
    %4889 = vmatprep.mubr.bf16.mxu0 %v1303
    %4890 = vmatmul.mubr.bf16.gmra.mxu0 %v1302
    %v4891 = vpop.f32.mrf.mxu0
    %v4892 = vadd.f32 %v4851, %v4891
    %v4893 = vpop.f32.mrf.mxu0
    %v4894 = vadd.f32 %v4853, %v4893
    %v4895 = vpop.f32.mrf.mxu0
    %v4896 = vpop.f32.mrf.mxu0
    %4897 = vdwg.mxu0
    %4898 = vmatprep.subr.bf16.mxu0 %v3669
    %4899 = vmatpush1.bf16.msra.mxu0 %v3668
    %4900 = vmatprep.subr.bf16.mxu0 %v3665
    %4901 = vmatpush1.bf16.msra.mxu0 %v3664
    %4902 = vmatprep.subr.bf16.mxu0 %v3661
    %4903 = vmatpush1.bf16.msra.mxu0 %v3660
    %4904 = vmatprep.subr.bf16.mxu0 %v3657
    %4905 = vmatpush1.bf16.msra.mxu0 %v3656
    %4906 = vmatprep.subr.bf16.mxu0 %v3653
    %4907 = vmatpush1.bf16.msra.mxu0 %v3652
    %4908 = vmatprep.subr.bf16.mxu0 %v3649
    %4909 = vmatpush1.bf16.msra.mxu0 %v3648
    %4910 = vmatprep.subr.bf16.mxu0 %v3645
    %4911 = vmatpush1.bf16.msra.mxu0 %v3644
    %4912 = vmatprep.subr.bf16.mxu0 %v3641
    %4913 = vmatpush1.bf16.msra.mxu0 %v3640
    %4914 = vmatprep.subr.bf16.mxu0 %v3701
    %4915 = vmatpush2.bf16.msra.mxu0 %v3700
    %4916 = vmatprep.subr.bf16.mxu0 %v3697
    %4917 = vmatpush2.bf16.msra.mxu0 %v3696
    %4918 = vmatprep.subr.bf16.mxu0 %v3693
    %4919 = vmatpush2.bf16.msra.mxu0 %v3692
    %4920 = vmatprep.subr.bf16.mxu0 %v3689
    %4921 = vmatpush2.bf16.msra.mxu0 %v3688
    %4922 = vmatprep.subr.bf16.mxu0 %v3685
    %4923 = vmatpush2.bf16.msra.mxu0 %v3684
    %4924 = vmatprep.subr.bf16.mxu0 %v3681
    %4925 = vmatpush2.bf16.msra.mxu0 %v3680
    %4926 = vmatprep.subr.bf16.mxu0 %v3677
    %4927 = vmatpush2.bf16.msra.mxu0 %v3676
    %4928 = vmatprep.subr.bf16.mxu0 %v3673
    %4929 = vmatpush2.bf16.msra.mxu0 %v3672
    %4930 = vmatprep.mubr.bf16.mxu0 %v1305
    %4931 = vmatmul.mubr.bf16.gmra.mxu0 %v1304
    %v4932 = vpop.f32.mrf.mxu0
    %v4933 = vadd.f32 %v4892, %v4932
    %v4934 = vpop.f32.mrf.mxu0
    %v4935 = vadd.f32 %v4894, %v4934
    %v4936 = vpop.f32.mrf.mxu0
    %v4937 = vpop.f32.mrf.mxu0
    %4938 = vdwg.mxu0
    %4939 = vmatprep.subr.bf16.mxu0 %v3733
    %4940 = vmatpush1.bf16.msra.mxu0 %v3732
    %4941 = vmatprep.subr.bf16.mxu0 %v3729
    %4942 = vmatpush1.bf16.msra.mxu0 %v3728
    %4943 = vmatprep.subr.bf16.mxu0 %v3725
    %4944 = vmatpush1.bf16.msra.mxu0 %v3724
    %4945 = vmatprep.subr.bf16.mxu0 %v3721
    %4946 = vmatpush1.bf16.msra.mxu0 %v3720
    %4947 = vmatprep.subr.bf16.mxu0 %v3717
    %4948 = vmatpush1.bf16.msra.mxu0 %v3716
    %4949 = vmatprep.subr.bf16.mxu0 %v3713
    %4950 = vmatpush1.bf16.msra.mxu0 %v3712
    %4951 = vmatprep.subr.bf16.mxu0 %v3709
    %4952 = vmatpush1.bf16.msra.mxu0 %v3708
    %4953 = vmatprep.subr.bf16.mxu0 %v3705
    %4954 = vmatpush1.bf16.msra.mxu0 %v3704
    %4955 = vmatprep.subr.bf16.mxu0 %v3765
    %4956 = vmatpush2.bf16.msra.mxu0 %v3764
    %4957 = vmatprep.subr.bf16.mxu0 %v3761
    %4958 = vmatpush2.bf16.msra.mxu0 %v3760
    %4959 = vmatprep.subr.bf16.mxu0 %v3757
    %4960 = vmatpush2.bf16.msra.mxu0 %v3756
    %4961 = vmatprep.subr.bf16.mxu0 %v3753
    %4962 = vmatpush2.bf16.msra.mxu0 %v3752
    %4963 = vmatprep.subr.bf16.mxu0 %v3749
    %4964 = vmatpush2.bf16.msra.mxu0 %v3748
    %4965 = vmatprep.subr.bf16.mxu0 %v3745
    %4966 = vmatpush2.bf16.msra.mxu0 %v3744
    %4967 = vmatprep.subr.bf16.mxu0 %v3741
    %4968 = vmatpush2.bf16.msra.mxu0 %v3740
    %4969 = vmatprep.subr.bf16.mxu0 %v3737
    %4970 = vmatpush2.bf16.msra.mxu0 %v3736
    %4971 = vmatprep.mubr.bf16.mxu0 %v1307
    %4972 = vmatmul.mubr.bf16.gmra.mxu0 %v1306
    %v4973 = vpop.f32.mrf.mxu0
    %v4974 = vadd.f32 %v4933, %v4973
    %v4975 = vpop.f32.mrf.mxu0
    %v4976 = vadd.f32 %v4935, %v4975
    %v4977 = vpop.f32.mrf.mxu0
    %v4978 = vpop.f32.mrf.mxu0
    %4979 = vdwg.mxu0
    %4980 = vmatprep.subr.bf16.mxu0 %v3797
    %4981 = vmatpush1.bf16.msra.mxu0 %v3796
    %4982 = vmatprep.subr.bf16.mxu0 %v3793
    %4983 = vmatpush1.bf16.msra.mxu0 %v3792
    %4984 = vmatprep.subr.bf16.mxu0 %v3789
    %4985 = vmatpush1.bf16.msra.mxu0 %v3788
    %4986 = vmatprep.subr.bf16.mxu0 %v3785
    %4987 = vmatpush1.bf16.msra.mxu0 %v3784
    %4988 = vmatprep.subr.bf16.mxu0 %v3781
    %4989 = vmatpush1.bf16.msra.mxu0 %v3780
    %4990 = vmatprep.subr.bf16.mxu0 %v3777
    %4991 = vmatpush1.bf16.msra.mxu0 %v3776
    %4992 = vmatprep.subr.bf16.mxu0 %v3773
    %4993 = vmatpush1.bf16.msra.mxu0 %v3772
    %4994 = vmatprep.subr.bf16.mxu0 %v3769
    %4995 = vmatpush1.bf16.msra.mxu0 %v3768
    %4996 = vmatprep.subr.bf16.mxu0 %v3829
    %4997 = vmatpush2.bf16.msra.mxu0 %v3828
    %4998 = vmatprep.subr.bf16.mxu0 %v3825
    %4999 = vmatpush2.bf16.msra.mxu0 %v3824
    %5000 = vmatprep.subr.bf16.mxu0 %v3821
    %5001 = vmatpush2.bf16.msra.mxu0 %v3820
    %5002 = vmatprep.subr.bf16.mxu0 %v3817
    %5003 = vmatpush2.bf16.msra.mxu0 %v3816
    %5004 = vmatprep.subr.bf16.mxu0 %v3813
    %5005 = vmatpush2.bf16.msra.mxu0 %v3812
    %5006 = vmatprep.subr.bf16.mxu0 %v3809
    %5007 = vmatpush2.bf16.msra.mxu0 %v3808
    %5008 = vmatprep.subr.bf16.mxu0 %v3805
    %5009 = vmatpush2.bf16.msra.mxu0 %v3804
    %5010 = vmatprep.subr.bf16.mxu0 %v3801
    %5011 = vmatpush2.bf16.msra.mxu0 %v3800
    %5012 = vmatprep.mubr.bf16.mxu0 %v1309
    %5013 = vmatmul.mubr.bf16.gmra.mxu0 %v1308
    %v5014 = vpop.f32.mrf.mxu0
    %v5015 = vadd.f32 %v4974, %v5014
    %v5016 = vpop.f32.mrf.mxu0
    %v5017 = vadd.f32 %v4976, %v5016
    %v5018 = vpop.f32.mrf.mxu0
    %v5019 = vpop.f32.mrf.mxu0
    %5020 = vdwg.mxu0
    %5021 = vmatprep.subr.bf16.mxu0 %v3861
    %5022 = vmatpush1.bf16.msra.mxu0 %v3860
    %5023 = vmatprep.subr.bf16.mxu0 %v3857
    %5024 = vmatpush1.bf16.msra.mxu0 %v3856
    %5025 = vmatprep.subr.bf16.mxu0 %v3853
    %5026 = vmatpush1.bf16.msra.mxu0 %v3852
    %5027 = vmatprep.subr.bf16.mxu0 %v3849
    %5028 = vmatpush1.bf16.msra.mxu0 %v3848
    %5029 = vmatprep.subr.bf16.mxu0 %v3845
    %5030 = vmatpush1.bf16.msra.mxu0 %v3844
    %5031 = vmatprep.subr.bf16.mxu0 %v3841
    %5032 = vmatpush1.bf16.msra.mxu0 %v3840
    %5033 = vmatprep.subr.bf16.mxu0 %v3837
    %5034 = vmatpush1.bf16.msra.mxu0 %v3836
    %5035 = vmatprep.subr.bf16.mxu0 %v3833
    %5036 = vmatpush1.bf16.msra.mxu0 %v3832
    %5037 = vmatprep.subr.bf16.mxu0 %v3893
    %5038 = vmatpush2.bf16.msra.mxu0 %v3892
    %5039 = vmatprep.subr.bf16.mxu0 %v3889
    %5040 = vmatpush2.bf16.msra.mxu0 %v3888
    %5041 = vmatprep.subr.bf16.mxu0 %v3885
    %5042 = vmatpush2.bf16.msra.mxu0 %v3884
    %5043 = vmatprep.subr.bf16.mxu0 %v3881
    %5044 = vmatpush2.bf16.msra.mxu0 %v3880
    %5045 = vmatprep.subr.bf16.mxu0 %v3877
    %5046 = vmatpush2.bf16.msra.mxu0 %v3876
    %5047 = vmatprep.subr.bf16.mxu0 %v3873
    %5048 = vmatpush2.bf16.msra.mxu0 %v3872
    %5049 = vmatprep.subr.bf16.mxu0 %v3869
    %5050 = vmatpush2.bf16.msra.mxu0 %v3868
    %5051 = vmatprep.subr.bf16.mxu0 %v3865
    %5052 = vmatpush2.bf16.msra.mxu0 %v3864
    %5053 = vmatprep.mubr.bf16.mxu0 %v1311
    %5054 = vmatmul.mubr.bf16.gmra.mxu0 %v1310
    %v5055 = vpop.f32.mrf.mxu0
    %v5056 = vadd.f32 %v5015, %v5055
    %v5057 = vpop.f32.mrf.mxu0
    %v5058 = vadd.f32 %v5017, %v5057
    %v5059 = vpop.f32.mrf.mxu0
    %v5060 = vpop.f32.mrf.mxu0
    %5061 = vdwg.mxu0
    %v5062 = vmax.f32 %v4728, 0.0
    %v5063 = vmax.f32 %v4730, 0.0
    %v5064 = vmax.f32 %v5056, 0.0
    %v5065 = vmax.f32 %v5058, 0.0
    %v5066 = vpack.c.bf16 %v5062, %v5062
    %v5067 = vpack.c.bf16 %v5063, %v5063
    %v5068 = vpack.c.bf16 %v5064, %v5064
    %v5069 = vpack.c.bf16 %v5065, %v5065
    %v5070 = vld [vmem:[#allocation11] sm:$0xf]
    %v5071 = vld [vmem:[#allocation11 + $0x4] sm:$0xf]
    %v5072 = vld [vmem:[#allocation11 + $0x8] sm:$0xf]
    %v5073 = vld [vmem:[#allocation11 + $0xc] sm:$0xf]
    %v5074 = vld [vmem:[#allocation11 + $0x10] sm:$0xf]
    %v5075 = vld [vmem:[#allocation11 + $0x14] sm:$0xf]
    %v5076 = vld [vmem:[#allocation11 + $0x18] sm:$0xf]
    %v5077 = vld [vmem:[#allocation11 + $0x1c] sm:$0xf]
    %v5078 = vld [vmem:[#allocation11 + $0x20] sm:$0xf]
    %v5079 = vld [vmem:[#allocation11 + $0x24] sm:$0xf]
    %v5080 = vld [vmem:[#allocation11 + $0x28] sm:$0xf]
    %v5081 = vld [vmem:[#allocation11 + $0x2c] sm:$0xf]
    %v5082 = vld [vmem:[#allocation11 + $0x30] sm:$0xf]
    %v5083 = vld [vmem:[#allocation11 + $0x34] sm:$0xf]
    %v5084 = vld [vmem:[#allocation11 + $0x38] sm:$0xf]
    %v5085 = vld [vmem:[#allocation11 + $0x3c] sm:$0xf]
    %v5086 = vld [vmem:[#allocation11 + $0x40] sm:$0xf]
    %v5087 = vld [vmem:[#allocation11 + $0x44] sm:$0xf]
    %v5088 = vld [vmem:[#allocation11 + $0x48] sm:$0xf]
    %v5089 = vld [vmem:[#allocation11 + $0x4c] sm:$0xf]
    %v5090 = vld [vmem:[#allocation11 + $0x50] sm:$0xf]
    %v5091 = vld [vmem:[#allocation11 + $0x54] sm:$0xf]
    %v5092 = vld [vmem:[#allocation11 + $0x58] sm:$0xf]
    %v5093 = vld [vmem:[#allocation11 + $0x5c] sm:$0xf]
    %v5094 = vld [vmem:[#allocation11 + $0x60] sm:$0xf]
    %v5095 = vld [vmem:[#allocation11 + $0x64] sm:$0xf]
    %v5096 = vld [vmem:[#allocation11 + $0x68] sm:$0xf]
    %v5097 = vld [vmem:[#allocation11 + $0x6c] sm:$0xf]
    %v5098 = vld [vmem:[#allocation11 + $0x70] sm:$0xf]
    %v5099 = vld [vmem:[#allocation11 + $0x74] sm:$0xf]
    %v5100 = vld [vmem:[#allocation11 + $0x78] sm:$0xf]
    %v5101 = vld [vmem:[#allocation11 + $0x7c] sm:$0xf]
    %v5102 = vld [vmem:[#allocation11 + $0x80] sm:$0xf]
    %v5103 = vld [vmem:[#allocation11 + $0x84] sm:$0xf]
    %v5104 = vld [vmem:[#allocation11 + $0x88] sm:$0xf]
    %v5105 = vld [vmem:[#allocation11 + $0x8c] sm:$0xf]
    %v5106 = vld [vmem:[#allocation11 + $0x90] sm:$0xf]
    %v5107 = vld [vmem:[#allocation11 + $0x94] sm:$0xf]
    %v5108 = vld [vmem:[#allocation11 + $0x98] sm:$0xf]
    %v5109 = vld [vmem:[#allocation11 + $0x9c] sm:$0xf]
    %v5110 = vld [vmem:[#allocation11 + $0xa0] sm:$0xf]
    %v5111 = vld [vmem:[#allocation11 + $0xa4] sm:$0xf]
    %v5112 = vld [vmem:[#allocation11 + $0xa8] sm:$0xf]
    %v5113 = vld [vmem:[#allocation11 + $0xac] sm:$0xf]
    %v5114 = vld [vmem:[#allocation11 + $0xb0] sm:$0xf]
    %v5115 = vld [vmem:[#allocation11 + $0xb4] sm:$0xf]
    %v5116 = vld [vmem:[#allocation11 + $0xb8] sm:$0xf]
    %v5117 = vld [vmem:[#allocation11 + $0xbc] sm:$0xf]
    %v5118 = vld [vmem:[#allocation11 + $0xc0] sm:$0xf]
    %v5119 = vld [vmem:[#allocation11 + $0xc4] sm:$0xf]
    %v5120 = vld [vmem:[#allocation11 + $0xc8] sm:$0xf]
    %v5121 = vld [vmem:[#allocation11 + $0xcc] sm:$0xf]
    %v5122 = vld [vmem:[#allocation11 + $0xd0] sm:$0xf]
    %v5123 = vld [vmem:[#allocation11 + $0xd4] sm:$0xf]
    %v5124 = vld [vmem:[#allocation11 + $0xd8] sm:$0xf]
    %v5125 = vld [vmem:[#allocation11 + $0xdc] sm:$0xf]
    %v5126 = vld [vmem:[#allocation11 + $0xe0] sm:$0xf]
    %v5127 = vld [vmem:[#allocation11 + $0xe4] sm:$0xf]
    %v5128 = vld [vmem:[#allocation11 + $0xe8] sm:$0xf]
    %v5129 = vld [vmem:[#allocation11 + $0xec] sm:$0xf]
    %v5130 = vld [vmem:[#allocation11 + $0xf0] sm:$0xf]
    %v5131 = vld [vmem:[#allocation11 + $0xf4] sm:$0xf]
    %v5132 = vld [vmem:[#allocation11 + $0xf8] sm:$0xf]
    %v5133 = vld [vmem:[#allocation11 + $0xfc] sm:$0xf]
    %v5134 = vld [vmem:[#allocation13] sm:$0x1]
    %v5136 = vlaneseq
    %v5137 = vshrl.u32 %v5136, 7
    %v5138 = vsub.s32 0, %v5137
    %v5139 = vrot.slane %v5134, %v5138
    %v5205 = vunpack.c.l.b16 %v5070
    %v5206 = vunpack.c.l.b16 %v5071
    %v5207 = vunpack.c.l.b16 %v5072
    %v5208 = vunpack.c.l.b16 %v5073
    %v5209 = vunpack.c.l.b16 %v5074
    %v5210 = vunpack.c.l.b16 %v5075
    %v5211 = vunpack.c.l.b16 %v5076
    %v5212 = vunpack.c.l.b16 %v5077
    %v5213 = vunpack.c.l.b16 %v5078
    %v5214 = vunpack.c.l.b16 %v5079
    %v5215 = vunpack.c.l.b16 %v5080
    %v5216 = vunpack.c.l.b16 %v5081
    %v5217 = vunpack.c.l.b16 %v5082
    %v5218 = vunpack.c.l.b16 %v5083
    %v5219 = vunpack.c.l.b16 %v5084
    %v5220 = vunpack.c.l.b16 %v5085
    %v5221 = vunpack.c.l.b16 %v5086
    %v5222 = vunpack.c.l.b16 %v5087
    %v5223 = vunpack.c.l.b16 %v5088
    %v5224 = vunpack.c.l.b16 %v5089
    %v5225 = vunpack.c.l.b16 %v5090
    %v5226 = vunpack.c.l.b16 %v5091
    %v5227 = vunpack.c.l.b16 %v5092
    %v5228 = vunpack.c.l.b16 %v5093
    %v5229 = vunpack.c.l.b16 %v5094
    %v5230 = vunpack.c.l.b16 %v5095
    %v5231 = vunpack.c.l.b16 %v5096
    %v5232 = vunpack.c.l.b16 %v5097
    %v5233 = vunpack.c.l.b16 %v5098
    %v5234 = vunpack.c.l.b16 %v5099
    %v5235 = vunpack.c.l.b16 %v5100
    %v5236 = vunpack.c.l.b16 %v5101
    %v5237 = vunpack.c.l.b16 %v5102
    %v5238 = vunpack.c.l.b16 %v5103
    %v5239 = vunpack.c.l.b16 %v5104
    %v5240 = vunpack.c.l.b16 %v5105
    %v5241 = vunpack.c.l.b16 %v5106
    %v5242 = vunpack.c.l.b16 %v5107
    %v5243 = vunpack.c.l.b16 %v5108
    %v5244 = vunpack.c.l.b16 %v5109
    %v5245 = vunpack.c.l.b16 %v5110
    %v5246 = vunpack.c.l.b16 %v5111
    %v5247 = vunpack.c.l.b16 %v5112
    %v5248 = vunpack.c.l.b16 %v5113
    %v5249 = vunpack.c.l.b16 %v5114
    %v5250 = vunpack.c.l.b16 %v5115
    %v5251 = vunpack.c.l.b16 %v5116
    %v5252 = vunpack.c.l.b16 %v5117
    %v5253 = vunpack.c.l.b16 %v5118
    %v5254 = vunpack.c.l.b16 %v5119
    %v5255 = vunpack.c.l.b16 %v5120
    %v5256 = vunpack.c.l.b16 %v5121
    %v5257 = vunpack.c.l.b16 %v5122
    %v5258 = vunpack.c.l.b16 %v5123
    %v5259 = vunpack.c.l.b16 %v5124
    %v5260 = vunpack.c.l.b16 %v5125
    %v5261 = vunpack.c.l.b16 %v5126
    %v5262 = vunpack.c.l.b16 %v5127
    %v5263 = vunpack.c.l.b16 %v5128
    %v5264 = vunpack.c.l.b16 %v5129
    %v5265 = vunpack.c.l.b16 %v5130
    %v5266 = vunpack.c.l.b16 %v5131
    %v5267 = vunpack.c.l.b16 %v5132
    %v5268 = vunpack.c.l.b16 %v5133
    %v5269 = vpack.c.b16 %v5206, %v5205
    %v5270 = vpack.c.b16 %v5208, %v5207
    %v5271 = vpack.c.b16 %v5210, %v5209
    %v5272 = vpack.c.b16 %v5212, %v5211
    %v5273 = vpack.c.b16 %v5214, %v5213
    %v5274 = vpack.c.b16 %v5216, %v5215
    %v5275 = vpack.c.b16 %v5218, %v5217
    %v5276 = vpack.c.b16 %v5220, %v5219
    %v5277 = vpack.c.b16 %v5222, %v5221
    %v5278 = vpack.c.b16 %v5224, %v5223
    %v5279 = vpack.c.b16 %v5226, %v5225
    %v5280 = vpack.c.b16 %v5228, %v5227
    %v5281 = vpack.c.b16 %v5230, %v5229
    %v5282 = vpack.c.b16 %v5232, %v5231
    %v5283 = vpack.c.b16 %v5234, %v5233
    %v5284 = vpack.c.b16 %v5236, %v5235
    %v5285 = vpack.c.b16 %v5238, %v5237
    %v5286 = vpack.c.b16 %v5240, %v5239
    %v5287 = vpack.c.b16 %v5242, %v5241
    %v5288 = vpack.c.b16 %v5244, %v5243
    %v5289 = vpack.c.b16 %v5246, %v5245
    %v5290 = vpack.c.b16 %v5248, %v5247
    %v5291 = vpack.c.b16 %v5250, %v5249
    %v5292 = vpack.c.b16 %v5252, %v5251
    %v5293 = vpack.c.b16 %v5254, %v5253
    %v5294 = vpack.c.b16 %v5256, %v5255
    %v5295 = vpack.c.b16 %v5258, %v5257
    %v5296 = vpack.c.b16 %v5260, %v5259
    %v5297 = vpack.c.b16 %v5262, %v5261
    %v5298 = vpack.c.b16 %v5264, %v5263
    %v5299 = vpack.c.b16 %v5266, %v5265
    %v5300 = vpack.c.b16 %v5268, %v5267
    %5333 = vmatprep.subr.bf16.mxu0 0
    %5334 = vmatpush1.bf16.msra.mxu0 %v5276
    %5335 = vmatprep.subr.bf16.mxu0 0
    %5336 = vmatpush1.bf16.msra.mxu0 %v5275
    %5337 = vmatprep.subr.bf16.mxu0 0
    %5338 = vmatpush1.bf16.msra.mxu0 %v5274
    %5339 = vmatprep.subr.bf16.mxu0 0
    %5340 = vmatpush1.bf16.msra.mxu0 %v5273
    %5341 = vmatprep.subr.bf16.mxu0 0
    %5342 = vmatpush1.bf16.msra.mxu0 %v5272
    %5343 = vmatprep.subr.bf16.mxu0 0
    %5344 = vmatpush1.bf16.msra.mxu0 %v5271
    %5345 = vmatprep.subr.bf16.mxu0 0
    %5346 = vmatpush1.bf16.msra.mxu0 %v5270
    %5347 = vmatprep.subr.bf16.mxu0 0
    %5348 = vmatpush1.bf16.msra.mxu0 %v5269
    %5349 = vmatprep.subr.bf16.mxu0 0
    %5350 = vmatpush2.bf16.msra.mxu0 %v5284
    %5351 = vmatprep.subr.bf16.mxu0 0
    %5352 = vmatpush2.bf16.msra.mxu0 %v5283
    %5353 = vmatprep.subr.bf16.mxu0 0
    %5354 = vmatpush2.bf16.msra.mxu0 %v5282
    %5355 = vmatprep.subr.bf16.mxu0 0
    %5356 = vmatpush2.bf16.msra.mxu0 %v5281
    %5357 = vmatprep.subr.bf16.mxu0 0
    %5358 = vmatpush2.bf16.msra.mxu0 %v5280
    %5359 = vmatprep.subr.bf16.mxu0 0
    %5360 = vmatpush2.bf16.msra.mxu0 %v5279
    %5361 = vmatprep.subr.bf16.mxu0 0
    %5362 = vmatpush2.bf16.msra.mxu0 %v5278
    %5363 = vmatprep.subr.bf16.mxu0 0
    %5364 = vmatpush2.bf16.msra.mxu0 %v5277
    %5365 = vmatprep.mubr.bf16.mxu0 %v5067
    %5366 = vmatmul.mubr.bf16.gmra.mxu0 %v5066
    %v5367 = vpop.f32.mrf.mxu0
    %v5368 = vadd.f32 %v5139, %v5367
    %v5369 = vpop.f32.mrf.mxu0
    %v5370 = vpop.f32.mrf.mxu0
    %v5371 = vpop.f32.mrf.mxu0
    %5372 = vdwg.mxu0
    %5373 = vmatprep.subr.bf16.mxu0 0
    %5374 = vmatpush1.bf16.msra.mxu0 %v5292
    %5375 = vmatprep.subr.bf16.mxu0 0
    %5376 = vmatpush1.bf16.msra.mxu0 %v5291
    %5377 = vmatprep.subr.bf16.mxu0 0
    %5378 = vmatpush1.bf16.msra.mxu0 %v5290
    %5379 = vmatprep.subr.bf16.mxu0 0
    %5380 = vmatpush1.bf16.msra.mxu0 %v5289
    %5381 = vmatprep.subr.bf16.mxu0 0
    %5382 = vmatpush1.bf16.msra.mxu0 %v5288
    %5383 = vmatprep.subr.bf16.mxu0 0
    %5384 = vmatpush1.bf16.msra.mxu0 %v5287
    %5385 = vmatprep.subr.bf16.mxu0 0
    %5386 = vmatpush1.bf16.msra.mxu0 %v5286
    %5387 = vmatprep.subr.bf16.mxu0 0
    %5388 = vmatpush1.bf16.msra.mxu0 %v5285
    %5389 = vmatprep.subr.bf16.mxu0 0
    %5390 = vmatpush2.bf16.msra.mxu0 %v5300
    %5391 = vmatprep.subr.bf16.mxu0 0
    %5392 = vmatpush2.bf16.msra.mxu0 %v5299
    %5393 = vmatprep.subr.bf16.mxu0 0
    %5394 = vmatpush2.bf16.msra.mxu0 %v5298
    %5395 = vmatprep.subr.bf16.mxu0 0
    %5396 = vmatpush2.bf16.msra.mxu0 %v5297
    %5397 = vmatprep.subr.bf16.mxu0 0
    %5398 = vmatpush2.bf16.msra.mxu0 %v5296
    %5399 = vmatprep.subr.bf16.mxu0 0
    %5400 = vmatpush2.bf16.msra.mxu0 %v5295
    %5401 = vmatprep.subr.bf16.mxu0 0
    %5402 = vmatpush2.bf16.msra.mxu0 %v5294
    %5403 = vmatprep.subr.bf16.mxu0 0
    %5404 = vmatpush2.bf16.msra.mxu0 %v5293
    %5405 = vmatprep.mubr.bf16.mxu0 %v5069
    %5406 = vmatmul.mubr.bf16.gmra.mxu0 %v5068
    %v5407 = vpop.f32.mrf.mxu0
    %v5408 = vadd.f32 %v5368, %v5407
    %v5409 = vpop.f32.mrf.mxu0
    %v5410 = vpop.f32.mrf.mxu0
    %v5411 = vpop.f32.mrf.mxu0
    %5412 = vdwg.mxu0
    %v5413 = vxor.u32 %v5408, 2147483648
    %v5414 = vmul.f32 %v5413, 1.442695
    %v5415 = vpow.pop %v5414
    %v5416 = vadd.f32 %v5415, 1.0
    %v5417 = vrcp.pop %v5416
    %v5418 = vmul.f32 1.0, %v5417
    %v5419 = vpack.c.bf16 %v5418, %v5418
    %5420 = vst [vmem:[#allocation14] sm:$0xf] %v5419
    // Predicated region
    $region58: #{tpu_custom_call.1} parent=1 // pred_check
      _
    $region59: #{tpu_custom_call.1} parent=1 // pred_check_branch
      %5422 = sbr.rel (0) target = $region61
    $region60: #{tpu_custom_call.1} parent=1 // pred_region
      %s5424 = ssub.s32 64, 64
      %5425 = vsyncadd [#allocation4], %s5424
      %s5427 = sshll.u32 [#allocation14], 4
      %s5428 = int_to_ptr.vmem [resolvable:$true] %s5427
      %5430 = dma.vmem_to_hbm [thread:$0]  %s5428, 64, %s7, [#allocation4]
    $region61: #{tpu_custom_call.1} parent=1 // pred_fallthru
      _
    // Predicated region
    $region62: #{tpu_custom_call.1} parent=1 // pred_check
      _
    $region63: #{tpu_custom_call.1} parent=1 // pred_check_branch
      %5432 = sbr.rel (0) target = $region65
    $region64: #{tpu_custom_call.1} parent=1 // pred_region
      %5433 = dma.done [#allocation4], 64
    $region65: #{tpu_custom_call.1} parent=1 // pred_fallthru
      _
    %5434 = vsyncpa [#allocation3], 1
    %5435 = vsyncpa [#allocation6], 1
    %5436 = vsyncpa [#allocation9], 1
    %5437 = vsyncpa [#allocation12], 1
    %5438 = vsyncpa [#allocation4], 1

</llo_original>
